<compile_context>
chip_gen: v7x
topology: tpu7x:2x2x1
jax: 0.10.0
libtpu: 0.0.40
codegen_flags: <defaults>
</compile_context>

<pallas_src>
import math

import jax
import jax.numpy as jnp
import numpy as np
from jax.experimental import pallas as pl
from jax.experimental.pallas import tpu as pltpu

EMB = 32      # e
HEADS = 8     # h
SEQ = 8       # t
BATCH = 2     # b


def make_self_attention_kernel(nb, t, e, h):
    """Kernel processing `nb` batch elements (g = nb*h head-groups) per grid step."""
    inv_scale = 1.0 / math.sqrt(float(e))   # (e**-0.25)**2 applied once to scores

    def kernel(x_ref, wq_ref, wk_ref, wv_ref, wu_ref, bu_ref, o_ref):
        # x_ref        : (g, t, e)   head-major broadcast of activations
        # wq/wk/wv_ref : (g, e, e)   per-head projection weights (tiled over nb)
        # wu_ref       : (g, e, e)   per-head unifyheads weights (tiled over nb)
        # bu_ref       : (1, e)
        # o_ref        : (nb*t, e)
        xg = x_ref[...].astype(jnp.float32)

        # Per-head projections as batched matmuls (batch dim = group).  Every
        # operand starts at lane 0 -- no misaligned column slicing anywhere.
        q = jnp.einsum('gte,gef->gtf', xg, wq_ref[...],
                       preferred_element_type=jnp.float32)
        k = jnp.einsum('gte,gef->gtf', xg, wk_ref[...],
                       preferred_element_type=jnp.float32)
        v = jnp.einsum('gte,gef->gtf', xg, wv_ref[...],
                       preferred_element_type=jnp.float32)

        # Scores for all (batch, head) groups at once; single 1/sqrt(e) scale.
        s = jnp.einsum('gqe,gke->gqk', q, k,
                       preferred_element_type=jnp.float32) * inv_scale

        # One vectorized, numerically-stable softmax pass over the whole slab
        # (replaces 16 serial max/exp/sum/reciprocal sequences).
        s = s - jnp.max(s, axis=-1, keepdims=True)
        p = jnp.exp(s)
        # Exact reciprocal keeps the 1e-5 self-check; approx=True would route
        # to the EUP but change numerics.
        p = p * pl.reciprocal(jnp.sum(p, axis=-1, keepdims=True))

        # Attention-weighted values and per-head unifyheads contributions.
        ctx = jnp.einsum('gqk,gke->gqe', p, v,
                         preferred_element_type=jnp.float32)
        u = jnp.einsum('gte,gef->gtf', ctx, wu_ref[...],
                       preferred_element_type=jnp.float32)

        bias = bu_ref[...]                                   # (1, e)
        for bb in range(nb):          # nb is 1 or 2: trivial static loop
            head_sum = jnp.sum(u[bb * h:(bb + 1) * h], axis=0)        # (t, e)
            o_ref[bb * t:(bb + 1) * t, :] = (head_sum + bias).astype(o_ref.dtype)

    return kernel


def _num_grid_blocks(b, t):
    """Split across TensorCores (v7x) only when each core gets >= ~512 rows."""
    try:
        kind = jax.devices()[0].device_kind.lower()
        if ("v7" in kind or "7x" in kind) and b % 2 == 0 and (b // 2) * t >= 512:
            return 2
    except Exception:
        pass
    return 1


def self_attention(x, wq, wk, wv, wu, bu, *, num_blocks=None):
    b, t, e = x.shape
    he = wq.shape[1]            # h * e
    h = he // e
    if num_blocks is None:
        num_blocks = _num_grid_blocks(b, t)
    assert b % num_blocks == 0
    nb = b // num_blocks        # batch elements per grid step
    rows = nb * t
    g_blk = nb * h              # head-groups per grid step

    # Head-major activations: group g = bb*h + hh reads batch element bb.
    # (Layout plumbing in the wrapper; x is tiny so the extra bytes are noise.)
    x_hm = jnp.broadcast_to(x[:, None, :, :], (b, h, t, e)).reshape(b * h, t, e)

    def per_head(w):            # (e, h*e) -> (h, e, e)
        return jnp.transpose(w.reshape(e, h, e), (1, 0, 2))

    def tile_groups(w3):        # (h, e, e) -> (nb*h, e, e), repeated per batch in block
        return jnp.broadcast_to(w3[None], (nb, h, e, e)).reshape(nb * h, e, e)

    wq_g = tile_groups(per_head(wq))
    wk_g = tile_groups(per_head(wk))
    wv_g = tile_groups(per_head(wv))
    wu_g = tile_groups(wu.reshape(h, e, e))

    out = pl.pallas_call(
        make_self_attention_kernel(nb, t, e, h),
        out_shape=jax.ShapeDtypeStruct((b * t, e), x.dtype),
        grid_spec=pltpu.PrefetchScalarGridSpec(
            num_scalar_prefetch=0,
            grid=(num_blocks,),
            in_specs=[
                pl.BlockSpec((g_blk, t, e), lambda i: (i, 0, 0)),   # x head-major
                pl.BlockSpec((g_blk, e, e), lambda i: (0, 0, 0)),   # Wq per head
                pl.BlockSpec((g_blk, e, e), lambda i: (0, 0, 0)),   # Wk per head
                pl.BlockSpec((g_blk, e, e), lambda i: (0, 0, 0)),   # Wv per head
                pl.BlockSpec((g_blk, e, e), lambda i: (0, 0, 0)),   # Wu per head
                pl.BlockSpec((1, e), lambda i: (0, 0)),             # bias
            ],
            out_specs=pl.BlockSpec((rows, e), lambda i: (i, 0)),
        ),
        compiler_params=pltpu.CompilerParams(
            dimension_semantics=("parallel",)),
    )(x_hm, wq_g, wk_g, wv_g, wu_g, bu)
    return out.reshape(b, t, e)


def reference(x, wq, wk, wv, wu, bu):
    """Pure-JAX replica of the PyTorch forward (mask=False)."""
    b, t, e = x.shape
    h = wq.shape[1] // e
    keys = (x @ wk).reshape(b, t, h, e).transpose(0, 2, 1, 3).reshape(b * h, t, e)
    queries = (x @ wq).reshape(b, t, h, e).transpose(0, 2, 1, 3).reshape(b * h, t, e)
    values = (x @ wv).reshape(b, t, h, e).transpose(0, 2, 1, 3).reshape(b * h, t, e)
    queries = queries / e ** 0.25
    keys = keys / e ** 0.25
    dot = jnp.einsum('bqe,bke->bqk', queries, keys)
    dot = jax.nn.softmax(dot, axis=2)
    out = jnp.einsum('bqk,bke->bqe', dot, values).reshape(b, h, t, e)
    out = out.transpose(0, 2, 1, 3).reshape(b, t, h * e)
    return out @ wu + bu


if __name__ == "__main__":
    key = jax.random.PRNGKey(0)
    kx, kq, kk, kv, ku, kb = jax.random.split(key, 6)

    b, t, e, h = BATCH, SEQ, EMB, HEADS

    # Deterministic parameter init (uniform, roughly matching nn.Linear default scale).
    lim_in = 1.0 / np.sqrt(e)
    lim_u = 1.0 / np.sqrt(h * e)
    x = jax.random.normal(kx, (b, t, e), dtype=jnp.float32)
    wq = jax.random.uniform(kq, (e, h * e), jnp.float32, -lim_in, lim_in)
    wk = jax.random.uniform(kk, (e, h * e), jnp.float32, -lim_in, lim_in)
    wv = jax.random.uniform(kv, (e, h * e), jnp.float32, -lim_in, lim_in)
    wu = jax.random.uniform(ku, (h * e, e), jnp.float32, -lim_u, lim_u)
    bu = jax.random.uniform(kb, (1, e), jnp.float32, -lim_u, lim_u)

    # TODO(synk): the `mask=True` / mask=='first' branches of the module are not
    # implemented (module default is mask=False, which is what this kernel covers).

    out = self_attention(x, wq, wk, wv, wu, bu)
    out = jax.block_until_ready(out)

    ref = jax.block_until_ready(reference(x, wq, wk, wv, wu, bu))
    if not np.allclose(np.asarray(out), np.asarray(ref), atol=1e-5, rtol=1e-5):
        raise AssertionError("Pallas kernel does not match reference")

    print("KERNEL_OK")
</pallas_src>

<mosaic_0001>
module attributes {stable_mosaic.version = 11 : i64} {
  func.func @kernel(%arg0: i32, %arg1: memref<16x8x32xf32, #tpu.memory_space<vmem>>, %arg2: memref<16x32x32xf32, #tpu.memory_space<vmem>>, %arg3: memref<16x32x32xf32, #tpu.memory_space<vmem>>, %arg4: memref<16x32x32xf32, #tpu.memory_space<vmem>>, %arg5: memref<16x32x32xf32, #tpu.memory_space<vmem>>, %arg6: memref<1x32xf32, #tpu.memory_space<vmem>>, %arg7: memref<16x32xf32, #tpu.memory_space<vmem>>) attributes {dimension_semantics = [#tpu.dimension_semantics<parallel>], iteration_bounds = array<i64: 1>, scalar_prefetch = 0 : i64, scratch_operands = 0 : i64, tpu.core_type = #tpu.core_type<tc>, window_params = [{transform_indices = @transform_0, window_bounds = array<i64: 16, 8, 32>}, {pipeline_mode = #tpu.pipeline_mode<synchronous>, transform_indices = @transform_1, window_bounds = array<i64: 16, 32, 32>}, {pipeline_mode = #tpu.pipeline_mode<synchronous>, transform_indices = @transform_2, window_bounds = array<i64: 16, 32, 32>}, {pipeline_mode = #tpu.pipeline_mode<synchronous>, transform_indices = @transform_3, window_bounds = array<i64: 16, 32, 32>}, {pipeline_mode = #tpu.pipeline_mode<synchronous>, transform_indices = @transform_4, window_bounds = array<i64: 16, 32, 32>}, {pipeline_mode = #tpu.pipeline_mode<synchronous>, transform_indices = @transform_5, window_bounds = array<i64: 1, 32>}, {transform_indices = @transform_6, window_bounds = array<i64: 16, 32>}]} {
    %c0 = arith.constant 0 : index
    %c0_0 = arith.constant 0 : index
    %c0_1 = arith.constant 0 : index
    %0 = vector.load %arg1[%c0, %c0_0, %c0_1] : memref<16x8x32xf32, #tpu.memory_space<vmem>>, vector<16x8x32xf32>
    %c0_2 = arith.constant 0 : index
    %c0_3 = arith.constant 0 : index
    %c0_4 = arith.constant 0 : index
    %1 = vector.load %arg2[%c0_2, %c0_3, %c0_4] : memref<16x32x32xf32, #tpu.memory_space<vmem>>, vector<16x32x32xf32>
    "tpu.trace_start"() <{level = 10 : i32, message = "gte,gef->gtf"}> : () -> ()
    %cst = arith.constant dense<0.000000e+00> : vector<16x8x32xf32>
    %2 = tpu.matmul %0, %1, %cst {dimension_numbers = #tpu.dot_dimension_numbers<[2], [1], [1], [2], [0, 0, 0, 1, 1, 2], [0], [0]>} : vector<16x8x32xf32>, vector<16x32x32xf32>, vector<16x8x32xf32> -> vector<16x8x32xf32>
    "tpu.trace_stop"() : () -> ()
    %c0_5 = arith.constant 0 : index
    %c0_6 = arith.constant 0 : index
    %c0_7 = arith.constant 0 : index
    %3 = vector.load %arg3[%c0_5, %c0_6, %c0_7] : memref<16x32x32xf32, #tpu.memory_space<vmem>>, vector<16x32x32xf32>
    "tpu.trace_start"() <{level = 10 : i32, message = "gte,gef->gtf"}> : () -> ()
    %cst_8 = arith.constant dense<0.000000e+00> : vector<16x8x32xf32>
    %4 = tpu.matmul %0, %3, %cst_8 {dimension_numbers = #tpu.dot_dimension_numbers<[2], [1], [1], [2], [0, 0, 0, 1, 1, 2], [0], [0]>} : vector<16x8x32xf32>, vector<16x32x32xf32>, vector<16x8x32xf32> -> vector<16x8x32xf32>
    "tpu.trace_stop"() : () -> ()
    %c0_9 = arith.constant 0 : index
    %c0_10 = arith.constant 0 : index
    %c0_11 = arith.constant 0 : index
    %5 = vector.load %arg4[%c0_9, %c0_10, %c0_11] : memref<16x32x32xf32, #tpu.memory_space<vmem>>, vector<16x32x32xf32>
    "tpu.trace_start"() <{level = 10 : i32, message = "gte,gef->gtf"}> : () -> ()
    %cst_12 = arith.constant dense<0.000000e+00> : vector<16x8x32xf32>
    %6 = tpu.matmul %0, %5, %cst_12 {dimension_numbers = #tpu.dot_dimension_numbers<[2], [1], [1], [2], [0, 0, 0, 1, 1, 2], [0], [0]>} : vector<16x8x32xf32>, vector<16x32x32xf32>, vector<16x8x32xf32> -> vector<16x8x32xf32>
    "tpu.trace_stop"() : () -> ()
    "tpu.trace_start"() <{level = 10 : i32, message = "gqe,gke->gqk"}> : () -> ()
    %cst_13 = arith.constant dense<0.000000e+00> : vector<16x8x8xf32>
    %7 = tpu.matmul %2, %4, %cst_13 {dimension_numbers = #tpu.dot_dimension_numbers<[2], [2], [1], [1], [0, 0, 0, 1, 1, 1], [0], [0]>} : vector<16x8x32xf32>, vector<16x8x32xf32>, vector<16x8x8xf32> -> vector<16x8x8xf32>
    "tpu.trace_stop"() : () -> ()
    %cst_14 = arith.constant 0.176776692 : f32
    %8 = vector.broadcast %cst_14 : f32 to vector<16x8x8xf32>
    %9 = arith.mulf %7, %8 : vector<16x8x8xf32>
    %cst_15 = arith.constant dense<0xFF800000> : vector<16x8xf32>
    %10 = vector.multi_reduction <maximumf>, %9, %cst_15 [2] : vector<16x8x8xf32> to vector<16x8xf32>
    %11 = vector.shape_cast %10 : vector<16x8xf32> to vector<16x8x1xf32>
    %12 = vector.broadcast %11 : vector<16x8x1xf32> to vector<16x8x8xf32>
    %13 = arith.subf %9, %12 : vector<16x8x8xf32>
    %14 = math.exp %13 : vector<16x8x8xf32>
    %cst_16 = arith.constant dense<0.000000e+00> : vector<16x8xf32>
    %15 = vector.multi_reduction <add>, %14, %cst_16 [2] : vector<16x8x8xf32> to vector<16x8xf32>
    %16 = vector.shape_cast %15 : vector<16x8xf32> to vector<16x8x1xf32>
    %17 = tpu.reciprocal %16 : vector<16x8x1xf32> -> vector<16x8x1xf32>
    %18 = vector.broadcast %17 : vector<16x8x1xf32> to vector<16x8x8xf32>
    %19 = arith.mulf %14, %18 : vector<16x8x8xf32>
    "tpu.trace_start"() <{level = 10 : i32, message = "gqk,gke->gqe"}> : () -> ()
    %cst_17 = arith.constant dense<0.000000e+00> : vector<16x8x32xf32>
    %20 = tpu.matmul %19, %6, %cst_17 {dimension_numbers = #tpu.dot_dimension_numbers<[2], [1], [1], [2], [0, 0, 0, 1, 1, 2], [0], [0]>} : vector<16x8x8xf32>, vector<16x8x32xf32>, vector<16x8x32xf32> -> vector<16x8x32xf32>
    "tpu.trace_stop"() : () -> ()
    %c0_18 = arith.constant 0 : index
    %c0_19 = arith.constant 0 : index
    %c0_20 = arith.constant 0 : index
    %21 = vector.load %arg5[%c0_18, %c0_19, %c0_20] : memref<16x32x32xf32, #tpu.memory_space<vmem>>, vector<16x32x32xf32>
    "tpu.trace_start"() <{level = 10 : i32, message = "gte,gef->gtf"}> : () -> ()
    %cst_21 = arith.constant dense<0.000000e+00> : vector<16x8x32xf32>
    %22 = tpu.matmul %20, %21, %cst_21 {dimension_numbers = #tpu.dot_dimension_numbers<[2], [1], [1], [2], [0, 0, 0, 1, 1, 2], [0], [0]>} : vector<16x8x32xf32>, vector<16x32x32xf32>, vector<16x8x32xf32> -> vector<16x8x32xf32>
    "tpu.trace_stop"() : () -> ()
    %c0_22 = arith.constant 0 : index
    %c0_23 = arith.constant 0 : index
    %23 = vector.load %arg6[%c0_22, %c0_23] : memref<1x32xf32, #tpu.memory_space<vmem>>, vector<1x32xf32>
    %24 = vector.extract_strided_slice %22 {offsets = [0, 0, 0], sizes = [8, 8, 32], strides = [1, 1, 1]} : vector<16x8x32xf32> to vector<8x8x32xf32>
    %cst_24 = arith.constant dense<0.000000e+00> : vector<8x32xf32>
    %25 = vector.multi_reduction <add>, %24, %cst_24 [0] : vector<8x8x32xf32> to vector<8x32xf32>
    %26 = vector.broadcast %23 : vector<1x32xf32> to vector<8x32xf32>
    %27 = arith.addf %25, %26 : vector<8x32xf32>
    %c0_25 = arith.constant 0 : index
    %c0_26 = arith.constant 0 : index
    %28 = vector.load %arg7[%c0_25, %c0_26] : memref<16x32xf32, #tpu.memory_space<vmem>>, vector<8x32xf32>
    tpu.vector_store %arg7[%c0_25, %c0_26], %27 {strides = array<i32>} : memref<16x32xf32, #tpu.memory_space<vmem>>, vector<8x32xf32>,
    %29 = vector.extract_strided_slice %22 {offsets = [8, 0, 0], sizes = [8, 8, 32], strides = [1, 1, 1]} : vector<16x8x32xf32> to vector<8x8x32xf32>
    %cst_27 = arith.constant dense<0.000000e+00> : vector<8x32xf32>
    %30 = vector.multi_reduction <add>, %29, %cst_27 [0] : vector<8x8x32xf32> to vector<8x32xf32>
    %31 = vector.broadcast %23 : vector<1x32xf32> to vector<8x32xf32>
    %32 = arith.addf %30, %31 : vector<8x32xf32>
    %c8 = arith.constant 8 : index
    %c0_28 = arith.constant 0 : index
    %33 = vector.load %arg7[%c8, %c0_28] : memref<16x32xf32, #tpu.memory_space<vmem>>, vector<8x32xf32>
    tpu.vector_store %arg7[%c8, %c0_28], %32 {strides = array<i32>} : memref<16x32xf32, #tpu.memory_space<vmem>>, vector<8x32xf32>,
    return
  }
  func.func @transform_0(%arg0: i32) -> (i32, i32, i32) {
    %c0_i32 = arith.constant 0 : i32
    %c0_i32_0 = arith.constant 0 : i32
    %c0_i32_1 = arith.constant 0 : i32
    return %arg0, %c0_i32, %c0_i32_0 : i32, i32, i32
  }
  func.func @transform_1(%arg0: i32) -> (i32, i32, i32) {
    %c0_i32 = arith.constant 0 : i32
    %c0_i32_0 = arith.constant 0 : i32
    %c0_i32_1 = arith.constant 0 : i32
    %c0_i32_2 = arith.constant 0 : i32
    return %c0_i32, %c0_i32_0, %c0_i32_1 : i32, i32, i32
  }
  func.func @transform_2(%arg0: i32) -> (i32, i32, i32) {
    %c0_i32 = arith.constant 0 : i32
    %c0_i32_0 = arith.constant 0 : i32
    %c0_i32_1 = arith.constant 0 : i32
    %c0_i32_2 = arith.constant 0 : i32
    return %c0_i32, %c0_i32_0, %c0_i32_1 : i32, i32, i32
  }
  func.func @transform_3(%arg0: i32) -> (i32, i32, i32) {
    %c0_i32 = arith.constant 0 : i32
    %c0_i32_0 = arith.constant 0 : i32
    %c0_i32_1 = arith.constant 0 : i32
    %c0_i32_2 = arith.constant 0 : i32
    return %c0_i32, %c0_i32_0, %c0_i32_1 : i32, i32, i32
  }
  func.func @transform_4(%arg0: i32) -> (i32, i32, i32) {
    %c0_i32 = arith.constant 0 : i32
    %c0_i32_0 = arith.constant 0 : i32
    %c0_i32_1 = arith.constant 0 : i32
    %c0_i32_2 = arith.constant 0 : i32
    return %c0_i32, %c0_i32_0, %c0_i32_1 : i32, i32, i32
  }
  func.func @transform_5(%arg0: i32) -> (i32, i32) {
    %c0_i32 = arith.constant 0 : i32
    %c0_i32_0 = arith.constant 0 : i32
    %c0_i32_1 = arith.constant 0 : i32
    return %c0_i32, %c0_i32_0 : i32, i32
  }
  func.func @transform_6(%arg0: i32) -> (i32, i32) {
    %c0_i32 = arith.constant 0 : i32
    %c0_i32_0 = arith.constant 0 : i32
    return %arg0, %c0_i32 : i32, i32
  }
}

</mosaic_0001>

<llo_original>
// kernel: tpu_custom_call.1
$region0: #{tpu_custom_call.1}
  #allocation0 [shape = 'u32[]', space=smem, size = 0x4, offset = 0x4, fixed_abs, tag = 'smem constant byte address 0x4 - core index']
  #allocation1 [shape = 'u32[144,128]{1,0:T(1,128)}', space=vmem, size = 0x12000, scoped, tag = 'internal scratch']
  %s0 = inlined_call_operand.hbm [shape: f32[16,8,32], index: 0, kind: input, shape index: {}]
  %s1 = inlined_call_operand.hbm [shape: f32[16,32,32], index: 1, kind: input, shape index: {}]
  %s2 = inlined_call_operand.hbm [shape: f32[16,32,32], index: 2, kind: input, shape index: {}]
  %s3 = inlined_call_operand.hbm [shape: f32[16,32,32], index: 3, kind: input, shape index: {}]
  %s4 = inlined_call_operand.hbm [shape: f32[16,32,32], index: 4, kind: input, shape index: {}]
  %s5 = inlined_call_operand.vmem [shape: f32[1,32], index: 5, kind: input, shape index: {}]
  %s6 = inlined_call_operand.hbm [shape: f32[16,32], index: 6, kind: output, shape index: {}]
  %s7 = sld [smem:[#allocation0]]
  $region54: #{tpu_custom_call.1} parent=0
    _
  %s9 = ssub.s32 1, %s7
  %s10 = scalar_select 0, %s9, %s7
  $region1: #{tpu_custom_call.1} parent=0
    #allocation2 [shape = 'u8[65536]{0}', space=vmem, size = 0x10000, scoped, tag = 'input window, operand 0, single buffered']
    #allocation3 [shape = 's32[1]{0}', space=sflag, size = 0x4, scoped, tag = 'scoped memory for tpu_custom_call.1']
    #allocation4 [shape = 's32[1]{0}', space=sflag, size = 0x4, scoped, tag = 'scoped memory for tpu_custom_call.1']
    #allocation5 [shape = 'u8[262144]{0}', space=vmem, size = 0x40000, scoped, tag = 'input window, operand 1, single buffered']
    #allocation6 [shape = 's32[1]{0}', space=sflag, size = 0x4, scoped, tag = 'scoped memory for tpu_custom_call.1']
    #allocation7 [shape = 'u8[262144]{0}', space=vmem, size = 0x40000, scoped, tag = 'input window, operand 2, single buffered']
    #allocation8 [shape = 'u8[262144]{0}', space=vmem, size = 0x40000, scoped, tag = 'input window, operand 3, single buffered']
    #allocation9 [shape = 's32[1]{0}', space=sflag, size = 0x4, scoped, tag = 'scoped memory for tpu_custom_call.1']
    #allocation10 [shape = 'u8[262144]{0}', space=vmem, size = 0x40000, scoped, tag = 'input window, operand 4, single buffered']
    #allocation11 [shape = 'u8[8192]{0}', space=vmem, size = 0x2000, scoped, tag = 'output window, operand 0, single buffered']
    %11 = vsyncpa [#allocation3], 0
    %12 = vsyncpa [#allocation6], 0
    %13 = vsyncpa [#allocation9], 0
    %14 = vsyncpa [#allocation4], 0
    // Predicated region
    $region2: #{tpu_custom_call.1} parent=1 // pred_check
      _
    $region3: #{tpu_custom_call.1} parent=1 // pred_check_branch
      %16 = sbr.rel (0) target = $region5
    $region4: #{tpu_custom_call.1} parent=1 // pred_region
      %s18 = ssub.s32 2048, 2048
      %19 = vsyncadd [#allocation3], %s18
      %s20 = sshll.u32 [#allocation2], 4
      %s21 = int_to_ptr.vmem [resolvable:$true] %s20
      %26 = dma.hbm_to_vmem [thread:$0]  %s0, 2048, %s21, [#allocation3], 128, 128, 8
    $region5: #{tpu_custom_call.1} parent=1 // pred_fallthru
      _
    // Predicated region
    $region6: #{tpu_custom_call.1} parent=1 // pred_check
      _
    $region7: #{tpu_custom_call.1} parent=1 // pred_check_branch
      %28 = sbr.rel (0) target = $region9
    $region8: #{tpu_custom_call.1} parent=1 // pred_region
      %s30 = ssub.s32 8192, 8192
      %31 = vsyncadd [#allocation6], %s30
      %s32 = sshll.u32 [#allocation5], 4
      %s33 = int_to_ptr.vmem [resolvable:$true] %s32
      %38 = dma.hbm_to_vmem [thread:$0]  %s1, 8192, %s33, [#allocation6], 128, 128, 8
    $region9: #{tpu_custom_call.1} parent=1 // pred_fallthru
      _
    // Predicated region
    $region10: #{tpu_custom_call.1} parent=1 // pred_check
      _
    $region11: #{tpu_custom_call.1} parent=1 // pred_check_branch
      %40 = sbr.rel (0) target = $region13
    $region12: #{tpu_custom_call.1} parent=1 // pred_region
      %s42 = ssub.s32 8192, 8192
      %43 = vsyncadd [#allocation6], %s42
      %s44 = sshll.u32 [#allocation7], 4
      %s45 = int_to_ptr.vmem [resolvable:$true] %s44
      %50 = dma.hbm_to_vmem [thread:$0]  %s2, 8192, %s45, [#allocation6], 128, 128, 8
    $region13: #{tpu_custom_call.1} parent=1 // pred_fallthru
      _
    // Predicated region
    $region14: #{tpu_custom_call.1} parent=1 // pred_check
      _
    $region15: #{tpu_custom_call.1} parent=1 // pred_check_branch
      %52 = sbr.rel (0) target = $region17
    $region16: #{tpu_custom_call.1} parent=1 // pred_region
      %s54 = ssub.s32 8192, 8192
      %55 = vsyncadd [#allocation9], %s54
      %s56 = sshll.u32 [#allocation8], 4
      %s57 = int_to_ptr.vmem [resolvable:$true] %s56
      %62 = dma.hbm_to_vmem [thread:$0]  %s3, 8192, %s57, [#allocation9], 128, 128, 8
    $region17: #{tpu_custom_call.1} parent=1 // pred_fallthru
      _
    // Predicated region
    $region18: #{tpu_custom_call.1} parent=1 // pred_check
      _
    $region19: #{tpu_custom_call.1} parent=1 // pred_check_branch
      %64 = sbr.rel (0) target = $region21
    $region20: #{tpu_custom_call.1} parent=1 // pred_region
      %s66 = ssub.s32 8192, 8192
      %67 = vsyncadd [#allocation9], %s66
      %s68 = sshll.u32 [#allocation10], 4
      %s69 = int_to_ptr.vmem [resolvable:$true] %s68
      %74 = dma.hbm_to_vmem [thread:$0]  %s4, 8192, %s69, [#allocation9], 128, 128, 8
    $region21: #{tpu_custom_call.1} parent=1 // pred_fallthru
      _
    // Predicated region
    $region22: #{tpu_custom_call.1} parent=1 // pred_check
      _
    $region23: #{tpu_custom_call.1} parent=1 // pred_check_branch
      %76 = sbr.rel (0) target = $region25
    $region24: #{tpu_custom_call.1} parent=1 // pred_region
      _
    $region25: #{tpu_custom_call.1} parent=1 // pred_fallthru
      _
    // Predicated region
    $region26: #{tpu_custom_call.1} parent=1 // pred_check
      _
    $region27: #{tpu_custom_call.1} parent=1 // pred_check_branch
      %78 = sbr.rel (0) target = $region29
    $region28: #{tpu_custom_call.1} parent=1 // pred_region
      %79 = dma.done [#allocation3], 2048
    $region29: #{tpu_custom_call.1} parent=1 // pred_fallthru
      _
    // Predicated region
    $region30: #{tpu_custom_call.1} parent=1 // pred_check
      _
    $region31: #{tpu_custom_call.1} parent=1 // pred_check_branch
      %81 = sbr.rel (0) target = $region33
    $region32: #{tpu_custom_call.1} parent=1 // pred_region
      %82 = dma.done [#allocation6], 8192
    $region33: #{tpu_custom_call.1} parent=1 // pred_fallthru
      _
    // Predicated region
    $region34: #{tpu_custom_call.1} parent=1 // pred_check
      _
    $region35: #{tpu_custom_call.1} parent=1 // pred_check_branch
      %84 = sbr.rel (0) target = $region37
    $region36: #{tpu_custom_call.1} parent=1 // pred_region
      %85 = dma.done [#allocation6], 8192
    $region37: #{tpu_custom_call.1} parent=1 // pred_fallthru
      _
    // Predicated region
    $region38: #{tpu_custom_call.1} parent=1 // pred_check
      _
    $region39: #{tpu_custom_call.1} parent=1 // pred_check_branch
      %87 = sbr.rel (0) target = $region41
    $region40: #{tpu_custom_call.1} parent=1 // pred_region
      %88 = dma.done [#allocation9], 8192
    $region41: #{tpu_custom_call.1} parent=1 // pred_fallthru
      _
    // Predicated region
    $region42: #{tpu_custom_call.1} parent=1 // pred_check
      _
    $region43: #{tpu_custom_call.1} parent=1 // pred_check_branch
      %90 = sbr.rel (0) target = $region45
    $region44: #{tpu_custom_call.1} parent=1 // pred_region
      %91 = dma.done [#allocation9], 8192
    $region45: #{tpu_custom_call.1} parent=1 // pred_fallthru
      _
    %v92 = vld [vmem:[#allocation2] sm:$0xff]
    %v93 = vld [vmem:[#allocation2 + $0x8] sm:$0xff]
    %v94 = vld [vmem:[#allocation2 + $0x10] sm:$0xff]
    %v95 = vld [vmem:[#allocation2 + $0x18] sm:$0xff]
    %v96 = vld [vmem:[#allocation2 + $0x20] sm:$0xff]
    %v97 = vld [vmem:[#allocation2 + $0x28] sm:$0xff]
    %v98 = vld [vmem:[#allocation2 + $0x30] sm:$0xff]
    %v99 = vld [vmem:[#allocation2 + $0x38] sm:$0xff]
    %v100 = vld [vmem:[#allocation2 + $0x40] sm:$0xff]
    %v101 = vld [vmem:[#allocation2 + $0x48] sm:$0xff]
    %v102 = vld [vmem:[#allocation2 + $0x50] sm:$0xff]
    %v103 = vld [vmem:[#allocation2 + $0x58] sm:$0xff]
    %v104 = vld [vmem:[#allocation2 + $0x60] sm:$0xff]
    %v105 = vld [vmem:[#allocation2 + $0x68] sm:$0xff]
    %v106 = vld [vmem:[#allocation2 + $0x70] sm:$0xff]
    %v107 = vld [vmem:[#allocation2 + $0x78] sm:$0xff]
    %v108 = vld [vmem:[#allocation5] sm:$0xff]
    %v109 = vld [vmem:[#allocation5 + $0x8] sm:$0xff]
    %v110 = vld [vmem:[#allocation5 + $0x10] sm:$0xff]
    %v111 = vld [vmem:[#allocation5 + $0x18] sm:$0xff]
    %v112 = vld [vmem:[#allocation5 + $0x20] sm:$0xff]
    %v113 = vld [vmem:[#allocation5 + $0x28] sm:$0xff]
    %v114 = vld [vmem:[#allocation5 + $0x30] sm:$0xff]
    %v115 = vld [vmem:[#allocation5 + $0x38] sm:$0xff]
    %v116 = vld [vmem:[#allocation5 + $0x40] sm:$0xff]
    %v117 = vld [vmem:[#allocation5 + $0x48] sm:$0xff]
    %v118 = vld [vmem:[#allocation5 + $0x50] sm:$0xff]
    %v119 = vld [vmem:[#allocation5 + $0x58] sm:$0xff]
    %v120 = vld [vmem:[#allocation5 + $0x60] sm:$0xff]
    %v121 = vld [vmem:[#allocation5 + $0x68] sm:$0xff]
    %v122 = vld [vmem:[#allocation5 + $0x70] sm:$0xff]
    %v123 = vld [vmem:[#allocation5 + $0x78] sm:$0xff]
    %v124 = vld [vmem:[#allocation5 + $0x80] sm:$0xff]
    %v125 = vld [vmem:[#allocation5 + $0x88] sm:$0xff]
    %v126 = vld [vmem:[#allocation5 + $0x90] sm:$0xff]
    %v127 = vld [vmem:[#allocation5 + $0x98] sm:$0xff]
    %v128 = vld [vmem:[#allocation5 + $0xa0] sm:$0xff]
    %v129 = vld [vmem:[#allocation5 + $0xa8] sm:$0xff]
    %v130 = vld [vmem:[#allocation5 + $0xb0] sm:$0xff]
    %v131 = vld [vmem:[#allocation5 + $0xb8] sm:$0xff]
    %v132 = vld [vmem:[#allocation5 + $0xc0] sm:$0xff]
    %v133 = vld [vmem:[#allocation5 + $0xc8] sm:$0xff]
    %v134 = vld [vmem:[#allocation5 + $0xd0] sm:$0xff]
    %v135 = vld [vmem:[#allocation5 + $0xd8] sm:$0xff]
    %v136 = vld [vmem:[#allocation5 + $0xe0] sm:$0xff]
    %v137 = vld [vmem:[#allocation5 + $0xe8] sm:$0xff]
    %v138 = vld [vmem:[#allocation5 + $0xf0] sm:$0xff]
    %v139 = vld [vmem:[#allocation5 + $0xf8] sm:$0xff]
    %v140 = vld [vmem:[#allocation5 + $0x100] sm:$0xff]
    %v141 = vld [vmem:[#allocation5 + $0x108] sm:$0xff]
    %v142 = vld [vmem:[#allocation5 + $0x110] sm:$0xff]
    %v143 = vld [vmem:[#allocation5 + $0x118] sm:$0xff]
    %v144 = vld [vmem:[#allocation5 + $0x120] sm:$0xff]
    %v145 = vld [vmem:[#allocation5 + $0x128] sm:$0xff]
    %v146 = vld [vmem:[#allocation5 + $0x130] sm:$0xff]
    %v147 = vld [vmem:[#allocation5 + $0x138] sm:$0xff]
    %v148 = vld [vmem:[#allocation5 + $0x140] sm:$0xff]
    %v149 = vld [vmem:[#allocation5 + $0x148] sm:$0xff]
    %v150 = vld [vmem:[#allocation5 + $0x150] sm:$0xff]
    %v151 = vld [vmem:[#allocation5 + $0x158] sm:$0xff]
    %v152 = vld [vmem:[#allocation5 + $0x160] sm:$0xff]
    %v153 = vld [vmem:[#allocation5 + $0x168] sm:$0xff]
    %v154 = vld [vmem:[#allocation5 + $0x170] sm:$0xff]
    %v155 = vld [vmem:[#allocation5 + $0x178] sm:$0xff]
    %v156 = vld [vmem:[#allocation5 + $0x180] sm:$0xff]
    %v157 = vld [vmem:[#allocation5 + $0x188] sm:$0xff]
    %v158 = vld [vmem:[#allocation5 + $0x190] sm:$0xff]
    %v159 = vld [vmem:[#allocation5 + $0x198] sm:$0xff]
    %v160 = vld [vmem:[#allocation5 + $0x1a0] sm:$0xff]
    %v161 = vld [vmem:[#allocation5 + $0x1a8] sm:$0xff]
    %v162 = vld [vmem:[#allocation5 + $0x1b0] sm:$0xff]
    %v163 = vld [vmem:[#allocation5 + $0x1b8] sm:$0xff]
    %v164 = vld [vmem:[#allocation5 + $0x1c0] sm:$0xff]
    %v165 = vld [vmem:[#allocation5 + $0x1c8] sm:$0xff]
    %v166 = vld [vmem:[#allocation5 + $0x1d0] sm:$0xff]
    %v167 = vld [vmem:[#allocation5 + $0x1d8] sm:$0xff]
    %v168 = vld [vmem:[#allocation5 + $0x1e0] sm:$0xff]
    %v169 = vld [vmem:[#allocation5 + $0x1e8] sm:$0xff]
    %v170 = vld [vmem:[#allocation5 + $0x1f0] sm:$0xff]
    %v171 = vld [vmem:[#allocation5 + $0x1f8] sm:$0xff]
    %vm172 = vcmask 261120
    %v174 = vsel %vm172, %v92, 0
    %176 = vmatprep.subr.mxu0 0.0
    %177 = vmatpush1.msra.mxu0 %v108
    %178 = vmatprep.subr.mxu0 0.0
    %179 = vmatpush1.msra.mxu0 %v109
    %180 = vmatprep.subr.mxu0 0.0
    %181 = vmatpush1.msra.mxu0 %v110
    %182 = vmatprep.subr.mxu0 0.0
    %183 = vmatpush1.msra.mxu0 %v111
    %184 = vmatprep.subr.mxu0 0.0
    %185 = vmatpush1.msra.mxu0 0.0
    %186 = vmatprep.subr.mxu0 0.0
    %187 = vmatpush1.msra.mxu0 0.0
    %188 = vmatprep.subr.mxu0 0.0
    %189 = vmatpush1.msra.mxu0 0.0
    %190 = vmatprep.subr.mxu0 0.0
    %191 = vmatpush1.msra.mxu0 0.0
    %192 = vmatprep.subr.mxu0 0.0
    %193 = vmatpush1.msra.mxu0 0.0
    %194 = vmatprep.subr.mxu0 0.0
    %195 = vmatpush1.msra.mxu0 0.0
    %196 = vmatprep.subr.mxu0 0.0
    %197 = vmatpush1.msra.mxu0 0.0
    %198 = vmatprep.subr.mxu0 0.0
    %199 = vmatpush1.msra.mxu0 0.0
    %200 = vmatprep.subr.mxu0 0.0
    %201 = vmatpush1.msra.mxu0 0.0
    %202 = vmatprep.subr.mxu0 0.0
    %203 = vmatpush1.msra.mxu0 0.0
    %204 = vmatprep.subr.mxu0 0.0
    %205 = vmatpush1.msra.mxu0 0.0
    %206 = vmatprep.subr.mxu0 0.0
    %207 = vmatpush1.msra.mxu0 0.0
    %208 = vmatprep.subr.mxu0 0.0
    %209 = vmatpush1.msra.mxu0 0.0
    %210 = vmatprep.subr.mxu0 0.0
    %211 = vmatpush1.msra.mxu0 0.0
    %212 = vmatprep.subr.mxu0 0.0
    %213 = vmatpush1.msra.mxu0 0.0
    %214 = vmatprep.subr.mxu0 0.0
    %215 = vmatpush1.msra.mxu0 0.0
    %216 = vmatprep.subr.mxu0 0.0
    %217 = vmatpush1.msra.mxu0 0.0
    %218 = vmatprep.subr.mxu0 0.0
    %219 = vmatpush1.msra.mxu0 0.0
    %220 = vmatprep.subr.mxu0 0.0
    %221 = vmatpush1.msra.mxu0 0.0
    %222 = vmatprep.subr.mxu0 0.0
    %223 = vmatpush1.msra.mxu0 0.0
    %224 = vmatprep.subr.mxu0 0.0
    %225 = vmatpush1.msra.mxu0 0.0
    %226 = vmatprep.subr.mxu0 0.0
    %227 = vmatpush1.msra.mxu0 0.0
    %228 = vmatprep.subr.mxu0 0.0
    %229 = vmatpush1.msra.mxu0 0.0
    %230 = vmatprep.subr.mxu0 0.0
    %231 = vmatpush1.msra.mxu0 0.0
    %232 = vmatprep.subr.mxu0 0.0
    %233 = vmatpush1.msra.mxu0 0.0
    %234 = vmatprep.subr.mxu0 0.0
    %235 = vmatpush1.msra.mxu0 0.0
    %236 = vmatprep.subr.mxu0 0.0
    %237 = vmatpush1.msra.mxu0 0.0
    %238 = vmatprep.subr.mxu0 0.0
    %239 = vmatpush1.msra.mxu0 0.0
    %240 = vmatprep.mubr.f32.mxu0 0.0
    %241 = vmatmul.mubr.f32.gmra.mrb[0].mxu0 %v174
    %v242 = vpop.f32.mrb[0].mxu0
    %v243 = vadd.f32 0.0, %v242
    %v244 = vpop.f32.mrb[0].mxu0
    %245 = vdwg.mxu0
    %v247 = vsel %vm172, %v93, 0
    %249 = vmatprep.subr.mxu0 0.0
    %250 = vmatpush1.msra.mxu0 %v112
    %251 = vmatprep.subr.mxu0 0.0
    %252 = vmatpush1.msra.mxu0 %v113
    %253 = vmatprep.subr.mxu0 0.0
    %254 = vmatpush1.msra.mxu0 %v114
    %255 = vmatprep.subr.mxu0 0.0
    %256 = vmatpush1.msra.mxu0 %v115
    %257 = vmatprep.subr.mxu0 0.0
    %258 = vmatpush1.msra.mxu0 0.0
    %259 = vmatprep.subr.mxu0 0.0
    %260 = vmatpush1.msra.mxu0 0.0
    %261 = vmatprep.subr.mxu0 0.0
    %262 = vmatpush1.msra.mxu0 0.0
    %263 = vmatprep.subr.mxu0 0.0
    %264 = vmatpush1.msra.mxu0 0.0
    %265 = vmatprep.subr.mxu0 0.0
    %266 = vmatpush1.msra.mxu0 0.0
    %267 = vmatprep.subr.mxu0 0.0
    %268 = vmatpush1.msra.mxu0 0.0
    %269 = vmatprep.subr.mxu0 0.0
    %270 = vmatpush1.msra.mxu0 0.0
    %271 = vmatprep.subr.mxu0 0.0
    %272 = vmatpush1.msra.mxu0 0.0
    %273 = vmatprep.subr.mxu0 0.0
    %274 = vmatpush1.msra.mxu0 0.0
    %275 = vmatprep.subr.mxu0 0.0
    %276 = vmatpush1.msra.mxu0 0.0
    %277 = vmatprep.subr.mxu0 0.0
    %278 = vmatpush1.msra.mxu0 0.0
    %279 = vmatprep.subr.mxu0 0.0
    %280 = vmatpush1.msra.mxu0 0.0
    %281 = vmatprep.subr.mxu0 0.0
    %282 = vmatpush1.msra.mxu0 0.0
    %283 = vmatprep.subr.mxu0 0.0
    %284 = vmatpush1.msra.mxu0 0.0
    %285 = vmatprep.subr.mxu0 0.0
    %286 = vmatpush1.msra.mxu0 0.0
    %287 = vmatprep.subr.mxu0 0.0
    %288 = vmatpush1.msra.mxu0 0.0
    %289 = vmatprep.subr.mxu0 0.0
    %290 = vmatpush1.msra.mxu0 0.0
    %291 = vmatprep.subr.mxu0 0.0
    %292 = vmatpush1.msra.mxu0 0.0
    %293 = vmatprep.subr.mxu0 0.0
    %294 = vmatpush1.msra.mxu0 0.0
    %295 = vmatprep.subr.mxu0 0.0
    %296 = vmatpush1.msra.mxu0 0.0
    %297 = vmatprep.subr.mxu0 0.0
    %298 = vmatpush1.msra.mxu0 0.0
    %299 = vmatprep.subr.mxu0 0.0
    %300 = vmatpush1.msra.mxu0 0.0
    %301 = vmatprep.subr.mxu0 0.0
    %302 = vmatpush1.msra.mxu0 0.0
    %303 = vmatprep.subr.mxu0 0.0
    %304 = vmatpush1.msra.mxu0 0.0
    %305 = vmatprep.subr.mxu0 0.0
    %306 = vmatpush1.msra.mxu0 0.0
    %307 = vmatprep.subr.mxu0 0.0
    %308 = vmatpush1.msra.mxu0 0.0
    %309 = vmatprep.subr.mxu0 0.0
    %310 = vmatpush1.msra.mxu0 0.0
    %311 = vmatprep.subr.mxu0 0.0
    %312 = vmatpush1.msra.mxu0 0.0
    %313 = vmatprep.mubr.f32.mxu0 0.0
    %314 = vmatmul.mubr.f32.gmra.mrb[0].mxu0 %v247
    %v315 = vpop.f32.mrb[0].mxu0
    %v316 = vadd.f32 0.0, %v315
    %v317 = vpop.f32.mrb[0].mxu0
    %318 = vdwg.mxu0
    %v320 = vsel %vm172, %v94, 0
    %322 = vmatprep.subr.mxu0 0.0
    %323 = vmatpush1.msra.mxu0 %v116
    %324 = vmatprep.subr.mxu0 0.0
    %325 = vmatpush1.msra.mxu0 %v117
    %326 = vmatprep.subr.mxu0 0.0
    %327 = vmatpush1.msra.mxu0 %v118
    %328 = vmatprep.subr.mxu0 0.0
    %329 = vmatpush1.msra.mxu0 %v119
    %330 = vmatprep.subr.mxu0 0.0
    %331 = vmatpush1.msra.mxu0 0.0
    %332 = vmatprep.subr.mxu0 0.0
    %333 = vmatpush1.msra.mxu0 0.0
    %334 = vmatprep.subr.mxu0 0.0
    %335 = vmatpush1.msra.mxu0 0.0
    %336 = vmatprep.subr.mxu0 0.0
    %337 = vmatpush1.msra.mxu0 0.0
    %338 = vmatprep.subr.mxu0 0.0
    %339 = vmatpush1.msra.mxu0 0.0
    %340 = vmatprep.subr.mxu0 0.0
    %341 = vmatpush1.msra.mxu0 0.0
    %342 = vmatprep.subr.mxu0 0.0
    %343 = vmatpush1.msra.mxu0 0.0
    %344 = vmatprep.subr.mxu0 0.0
    %345 = vmatpush1.msra.mxu0 0.0
    %346 = vmatprep.subr.mxu0 0.0
    %347 = vmatpush1.msra.mxu0 0.0
    %348 = vmatprep.subr.mxu0 0.0
    %349 = vmatpush1.msra.mxu0 0.0
    %350 = vmatprep.subr.mxu0 0.0
    %351 = vmatpush1.msra.mxu0 0.0
    %352 = vmatprep.subr.mxu0 0.0
    %353 = vmatpush1.msra.mxu0 0.0
    %354 = vmatprep.subr.mxu0 0.0
    %355 = vmatpush1.msra.mxu0 0.0
    %356 = vmatprep.subr.mxu0 0.0
    %357 = vmatpush1.msra.mxu0 0.0
    %358 = vmatprep.subr.mxu0 0.0
    %359 = vmatpush1.msra.mxu0 0.0
    %360 = vmatprep.subr.mxu0 0.0
    %361 = vmatpush1.msra.mxu0 0.0
    %362 = vmatprep.subr.mxu0 0.0
    %363 = vmatpush1.msra.mxu0 0.0
    %364 = vmatprep.subr.mxu0 0.0
    %365 = vmatpush1.msra.mxu0 0.0
    %366 = vmatprep.subr.mxu0 0.0
    %367 = vmatpush1.msra.mxu0 0.0
    %368 = vmatprep.subr.mxu0 0.0
    %369 = vmatpush1.msra.mxu0 0.0
    %370 = vmatprep.subr.mxu0 0.0
    %371 = vmatpush1.msra.mxu0 0.0
    %372 = vmatprep.subr.mxu0 0.0
    %373 = vmatpush1.msra.mxu0 0.0
    %374 = vmatprep.subr.mxu0 0.0
    %375 = vmatpush1.msra.mxu0 0.0
    %376 = vmatprep.subr.mxu0 0.0
    %377 = vmatpush1.msra.mxu0 0.0
    %378 = vmatprep.subr.mxu0 0.0
    %379 = vmatpush1.msra.mxu0 0.0
    %380 = vmatprep.subr.mxu0 0.0
    %381 = vmatpush1.msra.mxu0 0.0
    %382 = vmatprep.subr.mxu0 0.0
    %383 = vmatpush1.msra.mxu0 0.0
    %384 = vmatprep.subr.mxu0 0.0
    %385 = vmatpush1.msra.mxu0 0.0
    %386 = vmatprep.mubr.f32.mxu0 0.0
    %387 = vmatmul.mubr.f32.gmra.mrb[0].mxu0 %v320
    %v388 = vpop.f32.mrb[0].mxu0
    %v389 = vadd.f32 0.0, %v388
    %v390 = vpop.f32.mrb[0].mxu0
    %391 = vdwg.mxu0
    %v393 = vsel %vm172, %v95, 0
    %395 = vmatprep.subr.mxu0 0.0
    %396 = vmatpush1.msra.mxu0 %v120
    %397 = vmatprep.subr.mxu0 0.0
    %398 = vmatpush1.msra.mxu0 %v121
    %399 = vmatprep.subr.mxu0 0.0
    %400 = vmatpush1.msra.mxu0 %v122
    %401 = vmatprep.subr.mxu0 0.0
    %402 = vmatpush1.msra.mxu0 %v123
    %403 = vmatprep.subr.mxu0 0.0
    %404 = vmatpush1.msra.mxu0 0.0
    %405 = vmatprep.subr.mxu0 0.0
    %406 = vmatpush1.msra.mxu0 0.0
    %407 = vmatprep.subr.mxu0 0.0
    %408 = vmatpush1.msra.mxu0 0.0
    %409 = vmatprep.subr.mxu0 0.0
    %410 = vmatpush1.msra.mxu0 0.0
    %411 = vmatprep.subr.mxu0 0.0
    %412 = vmatpush1.msra.mxu0 0.0
    %413 = vmatprep.subr.mxu0 0.0
    %414 = vmatpush1.msra.mxu0 0.0
    %415 = vmatprep.subr.mxu0 0.0
    %416 = vmatpush1.msra.mxu0 0.0
    %417 = vmatprep.subr.mxu0 0.0
    %418 = vmatpush1.msra.mxu0 0.0
    %419 = vmatprep.subr.mxu0 0.0
    %420 = vmatpush1.msra.mxu0 0.0
    %421 = vmatprep.subr.mxu0 0.0
    %422 = vmatpush1.msra.mxu0 0.0
    %423 = vmatprep.subr.mxu0 0.0
    %424 = vmatpush1.msra.mxu0 0.0
    %425 = vmatprep.subr.mxu0 0.0
    %426 = vmatpush1.msra.mxu0 0.0
    %427 = vmatprep.subr.mxu0 0.0
    %428 = vmatpush1.msra.mxu0 0.0
    %429 = vmatprep.subr.mxu0 0.0
    %430 = vmatpush1.msra.mxu0 0.0
    %431 = vmatprep.subr.mxu0 0.0
    %432 = vmatpush1.msra.mxu0 0.0
    %433 = vmatprep.subr.mxu0 0.0
    %434 = vmatpush1.msra.mxu0 0.0
    %435 = vmatprep.subr.mxu0 0.0
    %436 = vmatpush1.msra.mxu0 0.0
    %437 = vmatprep.subr.mxu0 0.0
    %438 = vmatpush1.msra.mxu0 0.0
    %439 = vmatprep.subr.mxu0 0.0
    %440 = vmatpush1.msra.mxu0 0.0
    %441 = vmatprep.subr.mxu0 0.0
    %442 = vmatpush1.msra.mxu0 0.0
    %443 = vmatprep.subr.mxu0 0.0
    %444 = vmatpush1.msra.mxu0 0.0
    %445 = vmatprep.subr.mxu0 0.0
    %446 = vmatpush1.msra.mxu0 0.0
    %447 = vmatprep.subr.mxu0 0.0
    %448 = vmatpush1.msra.mxu0 0.0
    %449 = vmatprep.subr.mxu0 0.0
    %450 = vmatpush1.msra.mxu0 0.0
    %451 = vmatprep.subr.mxu0 0.0
    %452 = vmatpush1.msra.mxu0 0.0
    %453 = vmatprep.subr.mxu0 0.0
    %454 = vmatpush1.msra.mxu0 0.0
    %455 = vmatprep.subr.mxu0 0.0
    %456 = vmatpush1.msra.mxu0 0.0
    %457 = vmatprep.subr.mxu0 0.0
    %458 = vmatpush1.msra.mxu0 0.0
    %459 = vmatprep.mubr.f32.mxu0 0.0
    %460 = vmatmul.mubr.f32.gmra.mrb[0].mxu0 %v393
    %v461 = vpop.f32.mrb[0].mxu0
    %v462 = vadd.f32 0.0, %v461
    %v463 = vpop.f32.mrb[0].mxu0
    %464 = vdwg.mxu0
    %v466 = vsel %vm172, %v96, 0
    %468 = vmatprep.subr.mxu0 0.0
    %469 = vmatpush1.msra.mxu0 %v124
    %470 = vmatprep.subr.mxu0 0.0
    %471 = vmatpush1.msra.mxu0 %v125
    %472 = vmatprep.subr.mxu0 0.0
    %473 = vmatpush1.msra.mxu0 %v126
    %474 = vmatprep.subr.mxu0 0.0
    %475 = vmatpush1.msra.mxu0 %v127
    %476 = vmatprep.subr.mxu0 0.0
    %477 = vmatpush1.msra.mxu0 0.0
    %478 = vmatprep.subr.mxu0 0.0
    %479 = vmatpush1.msra.mxu0 0.0
    %480 = vmatprep.subr.mxu0 0.0
    %481 = vmatpush1.msra.mxu0 0.0
    %482 = vmatprep.subr.mxu0 0.0
    %483 = vmatpush1.msra.mxu0 0.0
    %484 = vmatprep.subr.mxu0 0.0
    %485 = vmatpush1.msra.mxu0 0.0
    %486 = vmatprep.subr.mxu0 0.0
    %487 = vmatpush1.msra.mxu0 0.0
    %488 = vmatprep.subr.mxu0 0.0
    %489 = vmatpush1.msra.mxu0 0.0
    %490 = vmatprep.subr.mxu0 0.0
    %491 = vmatpush1.msra.mxu0 0.0
    %492 = vmatprep.subr.mxu0 0.0
    %493 = vmatpush1.msra.mxu0 0.0
    %494 = vmatprep.subr.mxu0 0.0
    %495 = vmatpush1.msra.mxu0 0.0
    %496 = vmatprep.subr.mxu0 0.0
    %497 = vmatpush1.msra.mxu0 0.0
    %498 = vmatprep.subr.mxu0 0.0
    %499 = vmatpush1.msra.mxu0 0.0
    %500 = vmatprep.subr.mxu0 0.0
    %501 = vmatpush1.msra.mxu0 0.0
    %502 = vmatprep.subr.mxu0 0.0
    %503 = vmatpush1.msra.mxu0 0.0
    %504 = vmatprep.subr.mxu0 0.0
    %505 = vmatpush1.msra.mxu0 0.0
    %506 = vmatprep.subr.mxu0 0.0
    %507 = vmatpush1.msra.mxu0 0.0
    %508 = vmatprep.subr.mxu0 0.0
    %509 = vmatpush1.msra.mxu0 0.0
    %510 = vmatprep.subr.mxu0 0.0
    %511 = vmatpush1.msra.mxu0 0.0
    %512 = vmatprep.subr.mxu0 0.0
    %513 = vmatpush1.msra.mxu0 0.0
    %514 = vmatprep.subr.mxu0 0.0
    %515 = vmatpush1.msra.mxu0 0.0
    %516 = vmatprep.subr.mxu0 0.0
    %517 = vmatpush1.msra.mxu0 0.0
    %518 = vmatprep.subr.mxu0 0.0
    %519 = vmatpush1.msra.mxu0 0.0
    %520 = vmatprep.subr.mxu0 0.0
    %521 = vmatpush1.msra.mxu0 0.0
    %522 = vmatprep.subr.mxu0 0.0
    %523 = vmatpush1.msra.mxu0 0.0
    %524 = vmatprep.subr.mxu0 0.0
    %525 = vmatpush1.msra.mxu0 0.0
    %526 = vmatprep.subr.mxu0 0.0
    %527 = vmatpush1.msra.mxu0 0.0
    %528 = vmatprep.subr.mxu0 0.0
    %529 = vmatpush1.msra.mxu0 0.0
    %530 = vmatprep.subr.mxu0 0.0
    %531 = vmatpush1.msra.mxu0 0.0
    %532 = vmatprep.mubr.f32.mxu0 0.0
    %533 = vmatmul.mubr.f32.gmra.mrb[0].mxu0 %v466
    %v534 = vpop.f32.mrb[0].mxu0
    %v535 = vadd.f32 0.0, %v534
    %v536 = vpop.f32.mrb[0].mxu0
    %537 = vdwg.mxu0
    %v539 = vsel %vm172, %v97, 0
    %541 = vmatprep.subr.mxu0 0.0
    %542 = vmatpush1.msra.mxu0 %v128
    %543 = vmatprep.subr.mxu0 0.0
    %544 = vmatpush1.msra.mxu0 %v129
    %545 = vmatprep.subr.mxu0 0.0
    %546 = vmatpush1.msra.mxu0 %v130
    %547 = vmatprep.subr.mxu0 0.0
    %548 = vmatpush1.msra.mxu0 %v131
    %549 = vmatprep.subr.mxu0 0.0
    %550 = vmatpush1.msra.mxu0 0.0
    %551 = vmatprep.subr.mxu0 0.0
    %552 = vmatpush1.msra.mxu0 0.0
    %553 = vmatprep.subr.mxu0 0.0
    %554 = vmatpush1.msra.mxu0 0.0
    %555 = vmatprep.subr.mxu0 0.0
    %556 = vmatpush1.msra.mxu0 0.0
    %557 = vmatprep.subr.mxu0 0.0
    %558 = vmatpush1.msra.mxu0 0.0
    %559 = vmatprep.subr.mxu0 0.0
    %560 = vmatpush1.msra.mxu0 0.0
    %561 = vmatprep.subr.mxu0 0.0
    %562 = vmatpush1.msra.mxu0 0.0
    %563 = vmatprep.subr.mxu0 0.0
    %564 = vmatpush1.msra.mxu0 0.0
    %565 = vmatprep.subr.mxu0 0.0
    %566 = vmatpush1.msra.mxu0 0.0
    %567 = vmatprep.subr.mxu0 0.0
    %568 = vmatpush1.msra.mxu0 0.0
    %569 = vmatprep.subr.mxu0 0.0
    %570 = vmatpush1.msra.mxu0 0.0
    %571 = vmatprep.subr.mxu0 0.0
    %572 = vmatpush1.msra.mxu0 0.0
    %573 = vmatprep.subr.mxu0 0.0
    %574 = vmatpush1.msra.mxu0 0.0
    %575 = vmatprep.subr.mxu0 0.0
    %576 = vmatpush1.msra.mxu0 0.0
    %577 = vmatprep.subr.mxu0 0.0
    %578 = vmatpush1.msra.mxu0 0.0
    %579 = vmatprep.subr.mxu0 0.0
    %580 = vmatpush1.msra.mxu0 0.0
    %581 = vmatprep.subr.mxu0 0.0
    %582 = vmatpush1.msra.mxu0 0.0
    %583 = vmatprep.subr.mxu0 0.0
    %584 = vmatpush1.msra.mxu0 0.0
    %585 = vmatprep.subr.mxu0 0.0
    %586 = vmatpush1.msra.mxu0 0.0
    %587 = vmatprep.subr.mxu0 0.0
    %588 = vmatpush1.msra.mxu0 0.0
    %589 = vmatprep.subr.mxu0 0.0
    %590 = vmatpush1.msra.mxu0 0.0
    %591 = vmatprep.subr.mxu0 0.0
    %592 = vmatpush1.msra.mxu0 0.0
    %593 = vmatprep.subr.mxu0 0.0
    %594 = vmatpush1.msra.mxu0 0.0
    %595 = vmatprep.subr.mxu0 0.0
    %596 = vmatpush1.msra.mxu0 0.0
    %597 = vmatprep.subr.mxu0 0.0
    %598 = vmatpush1.msra.mxu0 0.0
    %599 = vmatprep.subr.mxu0 0.0
    %600 = vmatpush1.msra.mxu0 0.0
    %601 = vmatprep.subr.mxu0 0.0
    %602 = vmatpush1.msra.mxu0 0.0
    %603 = vmatprep.subr.mxu0 0.0
    %604 = vmatpush1.msra.mxu0 0.0
    %605 = vmatprep.mubr.f32.mxu0 0.0
    %606 = vmatmul.mubr.f32.gmra.mrb[0].mxu0 %v539
    %v607 = vpop.f32.mrb[0].mxu0
    %v608 = vadd.f32 0.0, %v607
    %v609 = vpop.f32.mrb[0].mxu0
    %610 = vdwg.mxu0
    %v612 = vsel %vm172, %v98, 0
    %614 = vmatprep.subr.mxu0 0.0
    %615 = vmatpush1.msra.mxu0 %v132
    %616 = vmatprep.subr.mxu0 0.0
    %617 = vmatpush1.msra.mxu0 %v133
    %618 = vmatprep.subr.mxu0 0.0
    %619 = vmatpush1.msra.mxu0 %v134
    %620 = vmatprep.subr.mxu0 0.0
    %621 = vmatpush1.msra.mxu0 %v135
    %622 = vmatprep.subr.mxu0 0.0
    %623 = vmatpush1.msra.mxu0 0.0
    %624 = vmatprep.subr.mxu0 0.0
    %625 = vmatpush1.msra.mxu0 0.0
    %626 = vmatprep.subr.mxu0 0.0
    %627 = vmatpush1.msra.mxu0 0.0
    %628 = vmatprep.subr.mxu0 0.0
    %629 = vmatpush1.msra.mxu0 0.0
    %630 = vmatprep.subr.mxu0 0.0
    %631 = vmatpush1.msra.mxu0 0.0
    %632 = vmatprep.subr.mxu0 0.0
    %633 = vmatpush1.msra.mxu0 0.0
    %634 = vmatprep.subr.mxu0 0.0
    %635 = vmatpush1.msra.mxu0 0.0
    %636 = vmatprep.subr.mxu0 0.0
    %637 = vmatpush1.msra.mxu0 0.0
    %638 = vmatprep.subr.mxu0 0.0
    %639 = vmatpush1.msra.mxu0 0.0
    %640 = vmatprep.subr.mxu0 0.0
    %641 = vmatpush1.msra.mxu0 0.0
    %642 = vmatprep.subr.mxu0 0.0
    %643 = vmatpush1.msra.mxu0 0.0
    %644 = vmatprep.subr.mxu0 0.0
    %645 = vmatpush1.msra.mxu0 0.0
    %646 = vmatprep.subr.mxu0 0.0
    %647 = vmatpush1.msra.mxu0 0.0
    %648 = vmatprep.subr.mxu0 0.0
    %649 = vmatpush1.msra.mxu0 0.0
    %650 = vmatprep.subr.mxu0 0.0
    %651 = vmatpush1.msra.mxu0 0.0
    %652 = vmatprep.subr.mxu0 0.0
    %653 = vmatpush1.msra.mxu0 0.0
    %654 = vmatprep.subr.mxu0 0.0
    %655 = vmatpush1.msra.mxu0 0.0
    %656 = vmatprep.subr.mxu0 0.0
    %657 = vmatpush1.msra.mxu0 0.0
    %658 = vmatprep.subr.mxu0 0.0
    %659 = vmatpush1.msra.mxu0 0.0
    %660 = vmatprep.subr.mxu0 0.0
    %661 = vmatpush1.msra.mxu0 0.0
    %662 = vmatprep.subr.mxu0 0.0
    %663 = vmatpush1.msra.mxu0 0.0
    %664 = vmatprep.subr.mxu0 0.0
    %665 = vmatpush1.msra.mxu0 0.0
    %666 = vmatprep.subr.mxu0 0.0
    %667 = vmatpush1.msra.mxu0 0.0
    %668 = vmatprep.subr.mxu0 0.0
    %669 = vmatpush1.msra.mxu0 0.0
    %670 = vmatprep.subr.mxu0 0.0
    %671 = vmatpush1.msra.mxu0 0.0
    %672 = vmatprep.subr.mxu0 0.0
    %673 = vmatpush1.msra.mxu0 0.0
    %674 = vmatprep.subr.mxu0 0.0
    %675 = vmatpush1.msra.mxu0 0.0
    %676 = vmatprep.subr.mxu0 0.0
    %677 = vmatpush1.msra.mxu0 0.0
    %678 = vmatprep.mubr.f32.mxu0 0.0
    %679 = vmatmul.mubr.f32.gmra.mrb[0].mxu0 %v612
    %v680 = vpop.f32.mrb[0].mxu0
    %v681 = vadd.f32 0.0, %v680
    %v682 = vpop.f32.mrb[0].mxu0
    %683 = vdwg.mxu0
    %v685 = vsel %vm172, %v99, 0
    %687 = vmatprep.subr.mxu0 0.0
    %688 = vmatpush1.msra.mxu0 %v136
    %689 = vmatprep.subr.mxu0 0.0
    %690 = vmatpush1.msra.mxu0 %v137
    %691 = vmatprep.subr.mxu0 0.0
    %692 = vmatpush1.msra.mxu0 %v138
    %693 = vmatprep.subr.mxu0 0.0
    %694 = vmatpush1.msra.mxu0 %v139
    %695 = vmatprep.subr.mxu0 0.0
    %696 = vmatpush1.msra.mxu0 0.0
    %697 = vmatprep.subr.mxu0 0.0
    %698 = vmatpush1.msra.mxu0 0.0
    %699 = vmatprep.subr.mxu0 0.0
    %700 = vmatpush1.msra.mxu0 0.0
    %701 = vmatprep.subr.mxu0 0.0
    %702 = vmatpush1.msra.mxu0 0.0
    %703 = vmatprep.subr.mxu0 0.0
    %704 = vmatpush1.msra.mxu0 0.0
    %705 = vmatprep.subr.mxu0 0.0
    %706 = vmatpush1.msra.mxu0 0.0
    %707 = vmatprep.subr.mxu0 0.0
    %708 = vmatpush1.msra.mxu0 0.0
    %709 = vmatprep.subr.mxu0 0.0
    %710 = vmatpush1.msra.mxu0 0.0
    %711 = vmatprep.subr.mxu0 0.0
    %712 = vmatpush1.msra.mxu0 0.0
    %713 = vmatprep.subr.mxu0 0.0
    %714 = vmatpush1.msra.mxu0 0.0
    %715 = vmatprep.subr.mxu0 0.0
    %716 = vmatpush1.msra.mxu0 0.0
    %717 = vmatprep.subr.mxu0 0.0
    %718 = vmatpush1.msra.mxu0 0.0
    %719 = vmatprep.subr.mxu0 0.0
    %720 = vmatpush1.msra.mxu0 0.0
    %721 = vmatprep.subr.mxu0 0.0
    %722 = vmatpush1.msra.mxu0 0.0
    %723 = vmatprep.subr.mxu0 0.0
    %724 = vmatpush1.msra.mxu0 0.0
    %725 = vmatprep.subr.mxu0 0.0
    %726 = vmatpush1.msra.mxu0 0.0
    %727 = vmatprep.subr.mxu0 0.0
    %728 = vmatpush1.msra.mxu0 0.0
    %729 = vmatprep.subr.mxu0 0.0
    %730 = vmatpush1.msra.mxu0 0.0
    %731 = vmatprep.subr.mxu0 0.0
    %732 = vmatpush1.msra.mxu0 0.0
    %733 = vmatprep.subr.mxu0 0.0
    %734 = vmatpush1.msra.mxu0 0.0
    %735 = vmatprep.subr.mxu0 0.0
    %736 = vmatpush1.msra.mxu0 0.0
    %737 = vmatprep.subr.mxu0 0.0
    %738 = vmatpush1.msra.mxu0 0.0
    %739 = vmatprep.subr.mxu0 0.0
    %740 = vmatpush1.msra.mxu0 0.0
    %741 = vmatprep.subr.mxu0 0.0
    %742 = vmatpush1.msra.mxu0 0.0
    %743 = vmatprep.subr.mxu0 0.0
    %744 = vmatpush1.msra.mxu0 0.0
    %745 = vmatprep.subr.mxu0 0.0
    %746 = vmatpush1.msra.mxu0 0.0
    %747 = vmatprep.subr.mxu0 0.0
    %748 = vmatpush1.msra.mxu0 0.0
    %749 = vmatprep.subr.mxu0 0.0
    %750 = vmatpush1.msra.mxu0 0.0
    %751 = vmatprep.mubr.f32.mxu0 0.0
    %752 = vmatmul.mubr.f32.gmra.mrb[0].mxu0 %v685
    %v753 = vpop.f32.mrb[0].mxu0
    %v754 = vadd.f32 0.0, %v753
    %v755 = vpop.f32.mrb[0].mxu0
    %756 = vdwg.mxu0
    %v758 = vsel %vm172, %v100, 0
    %760 = vmatprep.subr.mxu0 0.0
    %761 = vmatpush1.msra.mxu0 %v140
    %762 = vmatprep.subr.mxu0 0.0
    %763 = vmatpush1.msra.mxu0 %v141
    %764 = vmatprep.subr.mxu0 0.0
    %765 = vmatpush1.msra.mxu0 %v142
    %766 = vmatprep.subr.mxu0 0.0
    %767 = vmatpush1.msra.mxu0 %v143
    %768 = vmatprep.subr.mxu0 0.0
    %769 = vmatpush1.msra.mxu0 0.0
    %770 = vmatprep.subr.mxu0 0.0
    %771 = vmatpush1.msra.mxu0 0.0
    %772 = vmatprep.subr.mxu0 0.0
    %773 = vmatpush1.msra.mxu0 0.0
    %774 = vmatprep.subr.mxu0 0.0
    %775 = vmatpush1.msra.mxu0 0.0
    %776 = vmatprep.subr.mxu0 0.0
    %777 = vmatpush1.msra.mxu0 0.0
    %778 = vmatprep.subr.mxu0 0.0
    %779 = vmatpush1.msra.mxu0 0.0
    %780 = vmatprep.subr.mxu0 0.0
    %781 = vmatpush1.msra.mxu0 0.0
    %782 = vmatprep.subr.mxu0 0.0
    %783 = vmatpush1.msra.mxu0 0.0
    %784 = vmatprep.subr.mxu0 0.0
    %785 = vmatpush1.msra.mxu0 0.0
    %786 = vmatprep.subr.mxu0 0.0
    %787 = vmatpush1.msra.mxu0 0.0
    %788 = vmatprep.subr.mxu0 0.0
    %789 = vmatpush1.msra.mxu0 0.0
    %790 = vmatprep.subr.mxu0 0.0
    %791 = vmatpush1.msra.mxu0 0.0
    %792 = vmatprep.subr.mxu0 0.0
    %793 = vmatpush1.msra.mxu0 0.0
    %794 = vmatprep.subr.mxu0 0.0
    %795 = vmatpush1.msra.mxu0 0.0
    %796 = vmatprep.subr.mxu0 0.0
    %797 = vmatpush1.msra.mxu0 0.0
    %798 = vmatprep.subr.mxu0 0.0
    %799 = vmatpush1.msra.mxu0 0.0
    %800 = vmatprep.subr.mxu0 0.0
    %801 = vmatpush1.msra.mxu0 0.0
    %802 = vmatprep.subr.mxu0 0.0
    %803 = vmatpush1.msra.mxu0 0.0
    %804 = vmatprep.subr.mxu0 0.0
    %805 = vmatpush1.msra.mxu0 0.0
    %806 = vmatprep.subr.mxu0 0.0
    %807 = vmatpush1.msra.mxu0 0.0
    %808 = vmatprep.subr.mxu0 0.0
    %809 = vmatpush1.msra.mxu0 0.0
    %810 = vmatprep.subr.mxu0 0.0
    %811 = vmatpush1.msra.mxu0 0.0
    %812 = vmatprep.subr.mxu0 0.0
    %813 = vmatpush1.msra.mxu0 0.0
    %814 = vmatprep.subr.mxu0 0.0
    %815 = vmatpush1.msra.mxu0 0.0
    %816 = vmatprep.subr.mxu0 0.0
    %817 = vmatpush1.msra.mxu0 0.0
    %818 = vmatprep.subr.mxu0 0.0
    %819 = vmatpush1.msra.mxu0 0.0
    %820 = vmatprep.subr.mxu0 0.0
    %821 = vmatpush1.msra.mxu0 0.0
    %822 = vmatprep.subr.mxu0 0.0
    %823 = vmatpush1.msra.mxu0 0.0
    %824 = vmatprep.mubr.f32.mxu0 0.0
    %825 = vmatmul.mubr.f32.gmra.mrb[0].mxu0 %v758
    %v826 = vpop.f32.mrb[0].mxu0
    %v827 = vadd.f32 0.0, %v826
    %v828 = vpop.f32.mrb[0].mxu0
    %829 = vdwg.mxu0
    %v831 = vsel %vm172, %v101, 0
    %833 = vmatprep.subr.mxu0 0.0
    %834 = vmatpush1.msra.mxu0 %v144
    %835 = vmatprep.subr.mxu0 0.0
    %836 = vmatpush1.msra.mxu0 %v145
    %837 = vmatprep.subr.mxu0 0.0
    %838 = vmatpush1.msra.mxu0 %v146
    %839 = vmatprep.subr.mxu0 0.0
    %840 = vmatpush1.msra.mxu0 %v147
    %841 = vmatprep.subr.mxu0 0.0
    %842 = vmatpush1.msra.mxu0 0.0
    %843 = vmatprep.subr.mxu0 0.0
    %844 = vmatpush1.msra.mxu0 0.0
    %845 = vmatprep.subr.mxu0 0.0
    %846 = vmatpush1.msra.mxu0 0.0
    %847 = vmatprep.subr.mxu0 0.0
    %848 = vmatpush1.msra.mxu0 0.0
    %849 = vmatprep.subr.mxu0 0.0
    %850 = vmatpush1.msra.mxu0 0.0
    %851 = vmatprep.subr.mxu0 0.0
    %852 = vmatpush1.msra.mxu0 0.0
    %853 = vmatprep.subr.mxu0 0.0
    %854 = vmatpush1.msra.mxu0 0.0
    %855 = vmatprep.subr.mxu0 0.0
    %856 = vmatpush1.msra.mxu0 0.0
    %857 = vmatprep.subr.mxu0 0.0
    %858 = vmatpush1.msra.mxu0 0.0
    %859 = vmatprep.subr.mxu0 0.0
    %860 = vmatpush1.msra.mxu0 0.0
    %861 = vmatprep.subr.mxu0 0.0
    %862 = vmatpush1.msra.mxu0 0.0
    %863 = vmatprep.subr.mxu0 0.0
    %864 = vmatpush1.msra.mxu0 0.0
    %865 = vmatprep.subr.mxu0 0.0
    %866 = vmatpush1.msra.mxu0 0.0
    %867 = vmatprep.subr.mxu0 0.0
    %868 = vmatpush1.msra.mxu0 0.0
    %869 = vmatprep.subr.mxu0 0.0
    %870 = vmatpush1.msra.mxu0 0.0
    %871 = vmatprep.subr.mxu0 0.0
    %872 = vmatpush1.msra.mxu0 0.0
    %873 = vmatprep.subr.mxu0 0.0
    %874 = vmatpush1.msra.mxu0 0.0
    %875 = vmatprep.subr.mxu0 0.0
    %876 = vmatpush1.msra.mxu0 0.0
    %877 = vmatprep.subr.mxu0 0.0
    %878 = vmatpush1.msra.mxu0 0.0
    %879 = vmatprep.subr.mxu0 0.0
    %880 = vmatpush1.msra.mxu0 0.0
    %881 = vmatprep.subr.mxu0 0.0
    %882 = vmatpush1.msra.mxu0 0.0
    %883 = vmatprep.subr.mxu0 0.0
    %884 = vmatpush1.msra.mxu0 0.0
    %885 = vmatprep.subr.mxu0 0.0
    %886 = vmatpush1.msra.mxu0 0.0
    %887 = vmatprep.subr.mxu0 0.0
    %888 = vmatpush1.msra.mxu0 0.0
    %889 = vmatprep.subr.mxu0 0.0
    %890 = vmatpush1.msra.mxu0 0.0
    %891 = vmatprep.subr.mxu0 0.0
    %892 = vmatpush1.msra.mxu0 0.0
    %893 = vmatprep.subr.mxu0 0.0
    %894 = vmatpush1.msra.mxu0 0.0
    %895 = vmatprep.subr.mxu0 0.0
    %896 = vmatpush1.msra.mxu0 0.0
    %897 = vmatprep.mubr.f32.mxu0 0.0
    %898 = vmatmul.mubr.f32.gmra.mrb[0].mxu0 %v831
    %v899 = vpop.f32.mrb[0].mxu0
    %v900 = vadd.f32 0.0, %v899
    %v901 = vpop.f32.mrb[0].mxu0
    %902 = vdwg.mxu0
    %v904 = vsel %vm172, %v102, 0
    %906 = vmatprep.subr.mxu0 0.0
    %907 = vmatpush1.msra.mxu0 %v148
    %908 = vmatprep.subr.mxu0 0.0
    %909 = vmatpush1.msra.mxu0 %v149
    %910 = vmatprep.subr.mxu0 0.0
    %911 = vmatpush1.msra.mxu0 %v150
    %912 = vmatprep.subr.mxu0 0.0
    %913 = vmatpush1.msra.mxu0 %v151
    %914 = vmatprep.subr.mxu0 0.0
    %915 = vmatpush1.msra.mxu0 0.0
    %916 = vmatprep.subr.mxu0 0.0
    %917 = vmatpush1.msra.mxu0 0.0
    %918 = vmatprep.subr.mxu0 0.0
    %919 = vmatpush1.msra.mxu0 0.0
    %920 = vmatprep.subr.mxu0 0.0
    %921 = vmatpush1.msra.mxu0 0.0
    %922 = vmatprep.subr.mxu0 0.0
    %923 = vmatpush1.msra.mxu0 0.0
    %924 = vmatprep.subr.mxu0 0.0
    %925 = vmatpush1.msra.mxu0 0.0
    %926 = vmatprep.subr.mxu0 0.0
    %927 = vmatpush1.msra.mxu0 0.0
    %928 = vmatprep.subr.mxu0 0.0
    %929 = vmatpush1.msra.mxu0 0.0
    %930 = vmatprep.subr.mxu0 0.0
    %931 = vmatpush1.msra.mxu0 0.0
    %932 = vmatprep.subr.mxu0 0.0
    %933 = vmatpush1.msra.mxu0 0.0
    %934 = vmatprep.subr.mxu0 0.0
    %935 = vmatpush1.msra.mxu0 0.0
    %936 = vmatprep.subr.mxu0 0.0
    %937 = vmatpush1.msra.mxu0 0.0
    %938 = vmatprep.subr.mxu0 0.0
    %939 = vmatpush1.msra.mxu0 0.0
    %940 = vmatprep.subr.mxu0 0.0
    %941 = vmatpush1.msra.mxu0 0.0
    %942 = vmatprep.subr.mxu0 0.0
    %943 = vmatpush1.msra.mxu0 0.0
    %944 = vmatprep.subr.mxu0 0.0
    %945 = vmatpush1.msra.mxu0 0.0
    %946 = vmatprep.subr.mxu0 0.0
    %947 = vmatpush1.msra.mxu0 0.0
    %948 = vmatprep.subr.mxu0 0.0
    %949 = vmatpush1.msra.mxu0 0.0
    %950 = vmatprep.subr.mxu0 0.0
    %951 = vmatpush1.msra.mxu0 0.0
    %952 = vmatprep.subr.mxu0 0.0
    %953 = vmatpush1.msra.mxu0 0.0
    %954 = vmatprep.subr.mxu0 0.0
    %955 = vmatpush1.msra.mxu0 0.0
    %956 = vmatprep.subr.mxu0 0.0
    %957 = vmatpush1.msra.mxu0 0.0
    %958 = vmatprep.subr.mxu0 0.0
    %959 = vmatpush1.msra.mxu0 0.0
    %960 = vmatprep.subr.mxu0 0.0
    %961 = vmatpush1.msra.mxu0 0.0
    %962 = vmatprep.subr.mxu0 0.0
    %963 = vmatpush1.msra.mxu0 0.0
    %964 = vmatprep.subr.mxu0 0.0
    %965 = vmatpush1.msra.mxu0 0.0
    %966 = vmatprep.subr.mxu0 0.0
    %967 = vmatpush1.msra.mxu0 0.0
    %968 = vmatprep.subr.mxu0 0.0
    %969 = vmatpush1.msra.mxu0 0.0
    %970 = vmatprep.mubr.f32.mxu0 0.0
    %971 = vmatmul.mubr.f32.gmra.mrb[0].mxu0 %v904
    %v972 = vpop.f32.mrb[0].mxu0
    %v973 = vadd.f32 0.0, %v972
    %v974 = vpop.f32.mrb[0].mxu0
    %975 = vdwg.mxu0
    %v977 = vsel %vm172, %v103, 0
    %979 = vmatprep.subr.mxu0 0.0
    %980 = vmatpush1.msra.mxu0 %v152
    %981 = vmatprep.subr.mxu0 0.0
    %982 = vmatpush1.msra.mxu0 %v153
    %983 = vmatprep.subr.mxu0 0.0
    %984 = vmatpush1.msra.mxu0 %v154
    %985 = vmatprep.subr.mxu0 0.0
    %986 = vmatpush1.msra.mxu0 %v155
    %987 = vmatprep.subr.mxu0 0.0
    %988 = vmatpush1.msra.mxu0 0.0
    %989 = vmatprep.subr.mxu0 0.0
    %990 = vmatpush1.msra.mxu0 0.0
    %991 = vmatprep.subr.mxu0 0.0
    %992 = vmatpush1.msra.mxu0 0.0
    %993 = vmatprep.subr.mxu0 0.0
    %994 = vmatpush1.msra.mxu0 0.0
    %995 = vmatprep.subr.mxu0 0.0
    %996 = vmatpush1.msra.mxu0 0.0
    %997 = vmatprep.subr.mxu0 0.0
    %998 = vmatpush1.msra.mxu0 0.0
    %999 = vmatprep.subr.mxu0 0.0
    %1000 = vmatpush1.msra.mxu0 0.0
    %1001 = vmatprep.subr.mxu0 0.0
    %1002 = vmatpush1.msra.mxu0 0.0
    %1003 = vmatprep.subr.mxu0 0.0
    %1004 = vmatpush1.msra.mxu0 0.0
    %1005 = vmatprep.subr.mxu0 0.0
    %1006 = vmatpush1.msra.mxu0 0.0
    %1007 = vmatprep.subr.mxu0 0.0
    %1008 = vmatpush1.msra.mxu0 0.0
    %1009 = vmatprep.subr.mxu0 0.0
    %1010 = vmatpush1.msra.mxu0 0.0
    %1011 = vmatprep.subr.mxu0 0.0
    %1012 = vmatpush1.msra.mxu0 0.0
    %1013 = vmatprep.subr.mxu0 0.0
    %1014 = vmatpush1.msra.mxu0 0.0
    %1015 = vmatprep.subr.mxu0 0.0
    %1016 = vmatpush1.msra.mxu0 0.0
    %1017 = vmatprep.subr.mxu0 0.0
    %1018 = vmatpush1.msra.mxu0 0.0
    %1019 = vmatprep.subr.mxu0 0.0
    %1020 = vmatpush1.msra.mxu0 0.0
    %1021 = vmatprep.subr.mxu0 0.0
    %1022 = vmatpush1.msra.mxu0 0.0
    %1023 = vmatprep.subr.mxu0 0.0
    %1024 = vmatpush1.msra.mxu0 0.0
    %1025 = vmatprep.subr.mxu0 0.0
    %1026 = vmatpush1.msra.mxu0 0.0
    %1027 = vmatprep.subr.mxu0 0.0
    %1028 = vmatpush1.msra.mxu0 0.0
    %1029 = vmatprep.subr.mxu0 0.0
    %1030 = vmatpush1.msra.mxu0 0.0
    %1031 = vmatprep.subr.mxu0 0.0
    %1032 = vmatpush1.msra.mxu0 0.0
    %1033 = vmatprep.subr.mxu0 0.0
    %1034 = vmatpush1.msra.mxu0 0.0
    %1035 = vmatprep.subr.mxu0 0.0
    %1036 = vmatpush1.msra.mxu0 0.0
    %1037 = vmatprep.subr.mxu0 0.0
    %1038 = vmatpush1.msra.mxu0 0.0
    %1039 = vmatprep.subr.mxu0 0.0
    %1040 = vmatpush1.msra.mxu0 0.0
    %1041 = vmatprep.subr.mxu0 0.0
    %1042 = vmatpush1.msra.mxu0 0.0
    %1043 = vmatprep.mubr.f32.mxu0 0.0
    %1044 = vmatmul.mubr.f32.gmra.mrb[0].mxu0 %v977
    %v1045 = vpop.f32.mrb[0].mxu0
    %v1046 = vadd.f32 0.0, %v1045
    %v1047 = vpop.f32.mrb[0].mxu0
    %1048 = vdwg.mxu0
    %v1050 = vsel %vm172, %v104, 0
    %1052 = vmatprep.subr.mxu0 0.0
    %1053 = vmatpush1.msra.mxu0 %v156
    %1054 = vmatprep.subr.mxu0 0.0
    %1055 = vmatpush1.msra.mxu0 %v157
    %1056 = vmatprep.subr.mxu0 0.0
    %1057 = vmatpush1.msra.mxu0 %v158
    %1058 = vmatprep.subr.mxu0 0.0
    %1059 = vmatpush1.msra.mxu0 %v159
    %1060 = vmatprep.subr.mxu0 0.0
    %1061 = vmatpush1.msra.mxu0 0.0
    %1062 = vmatprep.subr.mxu0 0.0
    %1063 = vmatpush1.msra.mxu0 0.0
    %1064 = vmatprep.subr.mxu0 0.0
    %1065 = vmatpush1.msra.mxu0 0.0
    %1066 = vmatprep.subr.mxu0 0.0
    %1067 = vmatpush1.msra.mxu0 0.0
    %1068 = vmatprep.subr.mxu0 0.0
    %1069 = vmatpush1.msra.mxu0 0.0
    %1070 = vmatprep.subr.mxu0 0.0
    %1071 = vmatpush1.msra.mxu0 0.0
    %1072 = vmatprep.subr.mxu0 0.0
    %1073 = vmatpush1.msra.mxu0 0.0
    %1074 = vmatprep.subr.mxu0 0.0
    %1075 = vmatpush1.msra.mxu0 0.0
    %1076 = vmatprep.subr.mxu0 0.0
    %1077 = vmatpush1.msra.mxu0 0.0
    %1078 = vmatprep.subr.mxu0 0.0
    %1079 = vmatpush1.msra.mxu0 0.0
    %1080 = vmatprep.subr.mxu0 0.0
    %1081 = vmatpush1.msra.mxu0 0.0
    %1082 = vmatprep.subr.mxu0 0.0
    %1083 = vmatpush1.msra.mxu0 0.0
    %1084 = vmatprep.subr.mxu0 0.0
    %1085 = vmatpush1.msra.mxu0 0.0
    %1086 = vmatprep.subr.mxu0 0.0
    %1087 = vmatpush1.msra.mxu0 0.0
    %1088 = vmatprep.subr.mxu0 0.0
    %1089 = vmatpush1.msra.mxu0 0.0
    %1090 = vmatprep.subr.mxu0 0.0
    %1091 = vmatpush1.msra.mxu0 0.0
    %1092 = vmatprep.subr.mxu0 0.0
    %1093 = vmatpush1.msra.mxu0 0.0
    %1094 = vmatprep.subr.mxu0 0.0
    %1095 = vmatpush1.msra.mxu0 0.0
    %1096 = vmatprep.subr.mxu0 0.0
    %1097 = vmatpush1.msra.mxu0 0.0
    %1098 = vmatprep.subr.mxu0 0.0
    %1099 = vmatpush1.msra.mxu0 0.0
    %1100 = vmatprep.subr.mxu0 0.0
    %1101 = vmatpush1.msra.mxu0 0.0
    %1102 = vmatprep.subr.mxu0 0.0
    %1103 = vmatpush1.msra.mxu0 0.0
    %1104 = vmatprep.subr.mxu0 0.0
    %1105 = vmatpush1.msra.mxu0 0.0
    %1106 = vmatprep.subr.mxu0 0.0
    %1107 = vmatpush1.msra.mxu0 0.0
    %1108 = vmatprep.subr.mxu0 0.0
    %1109 = vmatpush1.msra.mxu0 0.0
    %1110 = vmatprep.subr.mxu0 0.0
    %1111 = vmatpush1.msra.mxu0 0.0
    %1112 = vmatprep.subr.mxu0 0.0
    %1113 = vmatpush1.msra.mxu0 0.0
    %1114 = vmatprep.subr.mxu0 0.0
    %1115 = vmatpush1.msra.mxu0 0.0
    %1116 = vmatprep.mubr.f32.mxu0 0.0
    %1117 = vmatmul.mubr.f32.gmra.mrb[0].mxu0 %v1050
    %v1118 = vpop.f32.mrb[0].mxu0
    %v1119 = vadd.f32 0.0, %v1118
    %v1120 = vpop.f32.mrb[0].mxu0
    %1121 = vdwg.mxu0
    %v1123 = vsel %vm172, %v105, 0
    %1125 = vmatprep.subr.mxu0 0.0
    %1126 = vmatpush1.msra.mxu0 %v160
    %1127 = vmatprep.subr.mxu0 0.0
    %1128 = vmatpush1.msra.mxu0 %v161
    %1129 = vmatprep.subr.mxu0 0.0
    %1130 = vmatpush1.msra.mxu0 %v162
    %1131 = vmatprep.subr.mxu0 0.0
    %1132 = vmatpush1.msra.mxu0 %v163
    %1133 = vmatprep.subr.mxu0 0.0
    %1134 = vmatpush1.msra.mxu0 0.0
    %1135 = vmatprep.subr.mxu0 0.0
    %1136 = vmatpush1.msra.mxu0 0.0
    %1137 = vmatprep.subr.mxu0 0.0
    %1138 = vmatpush1.msra.mxu0 0.0
    %1139 = vmatprep.subr.mxu0 0.0
    %1140 = vmatpush1.msra.mxu0 0.0
    %1141 = vmatprep.subr.mxu0 0.0
    %1142 = vmatpush1.msra.mxu0 0.0
    %1143 = vmatprep.subr.mxu0 0.0
    %1144 = vmatpush1.msra.mxu0 0.0
    %1145 = vmatprep.subr.mxu0 0.0
    %1146 = vmatpush1.msra.mxu0 0.0
    %1147 = vmatprep.subr.mxu0 0.0
    %1148 = vmatpush1.msra.mxu0 0.0
    %1149 = vmatprep.subr.mxu0 0.0
    %1150 = vmatpush1.msra.mxu0 0.0
    %1151 = vmatprep.subr.mxu0 0.0
    %1152 = vmatpush1.msra.mxu0 0.0
    %1153 = vmatprep.subr.mxu0 0.0
    %1154 = vmatpush1.msra.mxu0 0.0
    %1155 = vmatprep.subr.mxu0 0.0
    %1156 = vmatpush1.msra.mxu0 0.0
    %1157 = vmatprep.subr.mxu0 0.0
    %1158 = vmatpush1.msra.mxu0 0.0
    %1159 = vmatprep.subr.mxu0 0.0
    %1160 = vmatpush1.msra.mxu0 0.0
    %1161 = vmatprep.subr.mxu0 0.0
    %1162 = vmatpush1.msra.mxu0 0.0
    %1163 = vmatprep.subr.mxu0 0.0
    %1164 = vmatpush1.msra.mxu0 0.0
    %1165 = vmatprep.subr.mxu0 0.0
    %1166 = vmatpush1.msra.mxu0 0.0
    %1167 = vmatprep.subr.mxu0 0.0
    %1168 = vmatpush1.msra.mxu0 0.0
    %1169 = vmatprep.subr.mxu0 0.0
    %1170 = vmatpush1.msra.mxu0 0.0
    %1171 = vmatprep.subr.mxu0 0.0
    %1172 = vmatpush1.msra.mxu0 0.0
    %1173 = vmatprep.subr.mxu0 0.0
    %1174 = vmatpush1.msra.mxu0 0.0
    %1175 = vmatprep.subr.mxu0 0.0
    %1176 = vmatpush1.msra.mxu0 0.0
    %1177 = vmatprep.subr.mxu0 0.0
    %1178 = vmatpush1.msra.mxu0 0.0
    %1179 = vmatprep.subr.mxu0 0.0
    %1180 = vmatpush1.msra.mxu0 0.0
    %1181 = vmatprep.subr.mxu0 0.0
    %1182 = vmatpush1.msra.mxu0 0.0
    %1183 = vmatprep.subr.mxu0 0.0
    %1184 = vmatpush1.msra.mxu0 0.0
    %1185 = vmatprep.subr.mxu0 0.0
    %1186 = vmatpush1.msra.mxu0 0.0
    %1187 = vmatprep.subr.mxu0 0.0
    %1188 = vmatpush1.msra.mxu0 0.0
    %1189 = vmatprep.mubr.f32.mxu0 0.0
    %1190 = vmatmul.mubr.f32.gmra.mrb[0].mxu0 %v1123
    %v1191 = vpop.f32.mrb[0].mxu0
    %v1192 = vadd.f32 0.0, %v1191
    %v1193 = vpop.f32.mrb[0].mxu0
    %1194 = vdwg.mxu0
    %v1196 = vsel %vm172, %v106, 0
    %1198 = vmatprep.subr.mxu0 0.0
    %1199 = vmatpush1.msra.mxu0 %v164
    %1200 = vmatprep.subr.mxu0 0.0
    %1201 = vmatpush1.msra.mxu0 %v165
    %1202 = vmatprep.subr.mxu0 0.0
    %1203 = vmatpush1.msra.mxu0 %v166
    %1204 = vmatprep.subr.mxu0 0.0
    %1205 = vmatpush1.msra.mxu0 %v167
    %1206 = vmatprep.subr.mxu0 0.0
    %1207 = vmatpush1.msra.mxu0 0.0
    %1208 = vmatprep.subr.mxu0 0.0
    %1209 = vmatpush1.msra.mxu0 0.0
    %1210 = vmatprep.subr.mxu0 0.0
    %1211 = vmatpush1.msra.mxu0 0.0
    %1212 = vmatprep.subr.mxu0 0.0
    %1213 = vmatpush1.msra.mxu0 0.0
    %1214 = vmatprep.subr.mxu0 0.0
    %1215 = vmatpush1.msra.mxu0 0.0
    %1216 = vmatprep.subr.mxu0 0.0
    %1217 = vmatpush1.msra.mxu0 0.0
    %1218 = vmatprep.subr.mxu0 0.0
    %1219 = vmatpush1.msra.mxu0 0.0
    %1220 = vmatprep.subr.mxu0 0.0
    %1221 = vmatpush1.msra.mxu0 0.0
    %1222 = vmatprep.subr.mxu0 0.0
    %1223 = vmatpush1.msra.mxu0 0.0
    %1224 = vmatprep.subr.mxu0 0.0
    %1225 = vmatpush1.msra.mxu0 0.0
    %1226 = vmatprep.subr.mxu0 0.0
    %1227 = vmatpush1.msra.mxu0 0.0
    %1228 = vmatprep.subr.mxu0 0.0
    %1229 = vmatpush1.msra.mxu0 0.0
    %1230 = vmatprep.subr.mxu0 0.0
    %1231 = vmatpush1.msra.mxu0 0.0
    %1232 = vmatprep.subr.mxu0 0.0
    %1233 = vmatpush1.msra.mxu0 0.0
    %1234 = vmatprep.subr.mxu0 0.0
    %1235 = vmatpush1.msra.mxu0 0.0
    %1236 = vmatprep.subr.mxu0 0.0
    %1237 = vmatpush1.msra.mxu0 0.0
    %1238 = vmatprep.subr.mxu0 0.0
    %1239 = vmatpush1.msra.mxu0 0.0
    %1240 = vmatprep.subr.mxu0 0.0
    %1241 = vmatpush1.msra.mxu0 0.0
    %1242 = vmatprep.subr.mxu0 0.0
    %1243 = vmatpush1.msra.mxu0 0.0
    %1244 = vmatprep.subr.mxu0 0.0
    %1245 = vmatpush1.msra.mxu0 0.0
    %1246 = vmatprep.subr.mxu0 0.0
    %1247 = vmatpush1.msra.mxu0 0.0
    %1248 = vmatprep.subr.mxu0 0.0
    %1249 = vmatpush1.msra.mxu0 0.0
    %1250 = vmatprep.subr.mxu0 0.0
    %1251 = vmatpush1.msra.mxu0 0.0
    %1252 = vmatprep.subr.mxu0 0.0
    %1253 = vmatpush1.msra.mxu0 0.0
    %1254 = vmatprep.subr.mxu0 0.0
    %1255 = vmatpush1.msra.mxu0 0.0
    %1256 = vmatprep.subr.mxu0 0.0
    %1257 = vmatpush1.msra.mxu0 0.0
    %1258 = vmatprep.subr.mxu0 0.0
    %1259 = vmatpush1.msra.mxu0 0.0
    %1260 = vmatprep.subr.mxu0 0.0
    %1261 = vmatpush1.msra.mxu0 0.0
    %1262 = vmatprep.mubr.f32.mxu0 0.0
    %1263 = vmatmul.mubr.f32.gmra.mrb[0].mxu0 %v1196
    %v1264 = vpop.f32.mrb[0].mxu0
    %v1265 = vadd.f32 0.0, %v1264
    %v1266 = vpop.f32.mrb[0].mxu0
    %1267 = vdwg.mxu0
    %v1269 = vsel %vm172, %v107, 0
    %1271 = vmatprep.subr.mxu0 0.0
    %1272 = vmatpush1.msra.mxu0 %v168
    %1273 = vmatprep.subr.mxu0 0.0
    %1274 = vmatpush1.msra.mxu0 %v169
    %1275 = vmatprep.subr.mxu0 0.0
    %1276 = vmatpush1.msra.mxu0 %v170
    %1277 = vmatprep.subr.mxu0 0.0
    %1278 = vmatpush1.msra.mxu0 %v171
    %1279 = vmatprep.subr.mxu0 0.0
    %1280 = vmatpush1.msra.mxu0 0.0
    %1281 = vmatprep.subr.mxu0 0.0
    %1282 = vmatpush1.msra.mxu0 0.0
    %1283 = vmatprep.subr.mxu0 0.0
    %1284 = vmatpush1.msra.mxu0 0.0
    %1285 = vmatprep.subr.mxu0 0.0
    %1286 = vmatpush1.msra.mxu0 0.0
    %1287 = vmatprep.subr.mxu0 0.0
    %1288 = vmatpush1.msra.mxu0 0.0
    %1289 = vmatprep.subr.mxu0 0.0
    %1290 = vmatpush1.msra.mxu0 0.0
    %1291 = vmatprep.subr.mxu0 0.0
    %1292 = vmatpush1.msra.mxu0 0.0
    %1293 = vmatprep.subr.mxu0 0.0
    %1294 = vmatpush1.msra.mxu0 0.0
    %1295 = vmatprep.subr.mxu0 0.0
    %1296 = vmatpush1.msra.mxu0 0.0
    %1297 = vmatprep.subr.mxu0 0.0
    %1298 = vmatpush1.msra.mxu0 0.0
    %1299 = vmatprep.subr.mxu0 0.0
    %1300 = vmatpush1.msra.mxu0 0.0
    %1301 = vmatprep.subr.mxu0 0.0
    %1302 = vmatpush1.msra.mxu0 0.0
    %1303 = vmatprep.subr.mxu0 0.0
    %1304 = vmatpush1.msra.mxu0 0.0
    %1305 = vmatprep.subr.mxu0 0.0
    %1306 = vmatpush1.msra.mxu0 0.0
    %1307 = vmatprep.subr.mxu0 0.0
    %1308 = vmatpush1.msra.mxu0 0.0
    %1309 = vmatprep.subr.mxu0 0.0
    %1310 = vmatpush1.msra.mxu0 0.0
    %1311 = vmatprep.subr.mxu0 0.0
    %1312 = vmatpush1.msra.mxu0 0.0
    %1313 = vmatprep.subr.mxu0 0.0
    %1314 = vmatpush1.msra.mxu0 0.0
    %1315 = vmatprep.subr.mxu0 0.0
    %1316 = vmatpush1.msra.mxu0 0.0
    %1317 = vmatprep.subr.mxu0 0.0
    %1318 = vmatpush1.msra.mxu0 0.0
    %1319 = vmatprep.subr.mxu0 0.0
    %1320 = vmatpush1.msra.mxu0 0.0
    %1321 = vmatprep.subr.mxu0 0.0
    %1322 = vmatpush1.msra.mxu0 0.0
    %1323 = vmatprep.subr.mxu0 0.0
    %1324 = vmatpush1.msra.mxu0 0.0
    %1325 = vmatprep.subr.mxu0 0.0
    %1326 = vmatpush1.msra.mxu0 0.0
    %1327 = vmatprep.subr.mxu0 0.0
    %1328 = vmatpush1.msra.mxu0 0.0
    %1329 = vmatprep.subr.mxu0 0.0
    %1330 = vmatpush1.msra.mxu0 0.0
    %1331 = vmatprep.subr.mxu0 0.0
    %1332 = vmatpush1.msra.mxu0 0.0
    %1333 = vmatprep.subr.mxu0 0.0
    %1334 = vmatpush1.msra.mxu0 0.0
    %1335 = vmatprep.mubr.f32.mxu0 0.0
    %1336 = vmatmul.mubr.f32.gmra.mrb[0].mxu0 %v1269
    %v1337 = vpop.f32.mrb[0].mxu0
    %v1338 = vadd.f32 0.0, %v1337
    %v1339 = vpop.f32.mrb[0].mxu0
    %1340 = vdwg.mxu0
    %v1341 = vld [vmem:[#allocation7] sm:$0xff]
    %v1342 = vld [vmem:[#allocation7 + $0x8] sm:$0xff]
    %v1343 = vld [vmem:[#allocation7 + $0x10] sm:$0xff]
    %v1344 = vld [vmem:[#allocation7 + $0x18] sm:$0xff]
    %v1345 = vld [vmem:[#allocation7 + $0x20] sm:$0xff]
    %v1346 = vld [vmem:[#allocation7 + $0x28] sm:$0xff]
    %v1347 = vld [vmem:[#allocation7 + $0x30] sm:$0xff]
    %v1348 = vld [vmem:[#allocation7 + $0x38] sm:$0xff]
    %v1349 = vld [vmem:[#allocation7 + $0x40] sm:$0xff]
    %v1350 = vld [vmem:[#allocation7 + $0x48] sm:$0xff]
    %v1351 = vld [vmem:[#allocation7 + $0x50] sm:$0xff]
    %v1352 = vld [vmem:[#allocation7 + $0x58] sm:$0xff]
    %v1353 = vld [vmem:[#allocation7 + $0x60] sm:$0xff]
    %v1354 = vld [vmem:[#allocation7 + $0x68] sm:$0xff]
    %v1355 = vld [vmem:[#allocation7 + $0x70] sm:$0xff]
    %v1356 = vld [vmem:[#allocation7 + $0x78] sm:$0xff]
    %v1357 = vld [vmem:[#allocation7 + $0x80] sm:$0xff]
    %v1358 = vld [vmem:[#allocation7 + $0x88] sm:$0xff]
    %v1359 = vld [vmem:[#allocation7 + $0x90] sm:$0xff]
    %v1360 = vld [vmem:[#allocation7 + $0x98] sm:$0xff]
    %v1361 = vld [vmem:[#allocation7 + $0xa0] sm:$0xff]
    %v1362 = vld [vmem:[#allocation7 + $0xa8] sm:$0xff]
    %v1363 = vld [vmem:[#allocation7 + $0xb0] sm:$0xff]
    %v1364 = vld [vmem:[#allocation7 + $0xb8] sm:$0xff]
    %v1365 = vld [vmem:[#allocation7 + $0xc0] sm:$0xff]
    %v1366 = vld [vmem:[#allocation7 + $0xc8] sm:$0xff]
    %v1367 = vld [vmem:[#allocation7 + $0xd0] sm:$0xff]
    %v1368 = vld [vmem:[#allocation7 + $0xd8] sm:$0xff]
    %v1369 = vld [vmem:[#allocation7 + $0xe0] sm:$0xff]
    %v1370 = vld [vmem:[#allocation7 + $0xe8] sm:$0xff]
    %v1371 = vld [vmem:[#allocation7 + $0xf0] sm:$0xff]
    %v1372 = vld [vmem:[#allocation7 + $0xf8] sm:$0xff]
    %v1373 = vld [vmem:[#allocation7 + $0x100] sm:$0xff]
    %v1374 = vld [vmem:[#allocation7 + $0x108] sm:$0xff]
    %v1375 = vld [vmem:[#allocation7 + $0x110] sm:$0xff]
    %v1376 = vld [vmem:[#allocation7 + $0x118] sm:$0xff]
    %v1377 = vld [vmem:[#allocation7 + $0x120] sm:$0xff]
    %v1378 = vld [vmem:[#allocation7 + $0x128] sm:$0xff]
    %v1379 = vld [vmem:[#allocation7 + $0x130] sm:$0xff]
    %v1380 = vld [vmem:[#allocation7 + $0x138] sm:$0xff]
    %v1381 = vld [vmem:[#allocation7 + $0x140] sm:$0xff]
    %v1382 = vld [vmem:[#allocation7 + $0x148] sm:$0xff]
    %v1383 = vld [vmem:[#allocation7 + $0x150] sm:$0xff]
    %v1384 = vld [vmem:[#allocation7 + $0x158] sm:$0xff]
    %v1385 = vld [vmem:[#allocation7 + $0x160] sm:$0xff]
    %v1386 = vld [vmem:[#allocation7 + $0x168] sm:$0xff]
    %v1387 = vld [vmem:[#allocation7 + $0x170] sm:$0xff]
    %v1388 = vld [vmem:[#allocation7 + $0x178] sm:$0xff]
    %v1389 = vld [vmem:[#allocation7 + $0x180] sm:$0xff]
    %v1390 = vld [vmem:[#allocation7 + $0x188] sm:$0xff]
    %v1391 = vld [vmem:[#allocation7 + $0x190] sm:$0xff]
    %v1392 = vld [vmem:[#allocation7 + $0x198] sm:$0xff]
    %v1393 = vld [vmem:[#allocation7 + $0x1a0] sm:$0xff]
    %v1394 = vld [vmem:[#allocation7 + $0x1a8] sm:$0xff]
    %v1395 = vld [vmem:[#allocation7 + $0x1b0] sm:$0xff]
    %v1396 = vld [vmem:[#allocation7 + $0x1b8] sm:$0xff]
    %v1397 = vld [vmem:[#allocation7 + $0x1c0] sm:$0xff]
    %v1398 = vld [vmem:[#allocation7 + $0x1c8] sm:$0xff]
    %v1399 = vld [vmem:[#allocation7 + $0x1d0] sm:$0xff]
    %v1400 = vld [vmem:[#allocation7 + $0x1d8] sm:$0xff]
    %v1401 = vld [vmem:[#allocation7 + $0x1e0] sm:$0xff]
    %v1402 = vld [vmem:[#allocation7 + $0x1e8] sm:$0xff]
    %v1403 = vld [vmem:[#allocation7 + $0x1f0] sm:$0xff]
    %v1404 = vld [vmem:[#allocation7 + $0x1f8] sm:$0xff]
    %1405 = vmatprep.subr.mxu0 0.0
    %1406 = vmatpush1.msra.mxu0 %v1341
    %1407 = vmatprep.subr.mxu0 0.0
    %1408 = vmatpush1.msra.mxu0 %v1342
    %1409 = vmatprep.subr.mxu0 0.0
    %1410 = vmatpush1.msra.mxu0 %v1343
    %1411 = vmatprep.subr.mxu0 0.0
    %1412 = vmatpush1.msra.mxu0 %v1344
    %1413 = vmatprep.subr.mxu0 0.0
    %1414 = vmatpush1.msra.mxu0 0.0
    %1415 = vmatprep.subr.mxu0 0.0
    %1416 = vmatpush1.msra.mxu0 0.0
    %1417 = vmatprep.subr.mxu0 0.0
    %1418 = vmatpush1.msra.mxu0 0.0
    %1419 = vmatprep.subr.mxu0 0.0
    %1420 = vmatpush1.msra.mxu0 0.0
    %1421 = vmatprep.subr.mxu0 0.0
    %1422 = vmatpush1.msra.mxu0 0.0
    %1423 = vmatprep.subr.mxu0 0.0
    %1424 = vmatpush1.msra.mxu0 0.0
    %1425 = vmatprep.subr.mxu0 0.0
    %1426 = vmatpush1.msra.mxu0 0.0
    %1427 = vmatprep.subr.mxu0 0.0
    %1428 = vmatpush1.msra.mxu0 0.0
    %1429 = vmatprep.subr.mxu0 0.0
    %1430 = vmatpush1.msra.mxu0 0.0
    %1431 = vmatprep.subr.mxu0 0.0
    %1432 = vmatpush1.msra.mxu0 0.0
    %1433 = vmatprep.subr.mxu0 0.0
    %1434 = vmatpush1.msra.mxu0 0.0
    %1435 = vmatprep.subr.mxu0 0.0
    %1436 = vmatpush1.msra.mxu0 0.0
    %1437 = vmatprep.subr.mxu0 0.0
    %1438 = vmatpush1.msra.mxu0 0.0
    %1439 = vmatprep.subr.mxu0 0.0
    %1440 = vmatpush1.msra.mxu0 0.0
    %1441 = vmatprep.subr.mxu0 0.0
    %1442 = vmatpush1.msra.mxu0 0.0
    %1443 = vmatprep.subr.mxu0 0.0
    %1444 = vmatpush1.msra.mxu0 0.0
    %1445 = vmatprep.subr.mxu0 0.0
    %1446 = vmatpush1.msra.mxu0 0.0
    %1447 = vmatprep.subr.mxu0 0.0
    %1448 = vmatpush1.msra.mxu0 0.0
    %1449 = vmatprep.subr.mxu0 0.0
    %1450 = vmatpush1.msra.mxu0 0.0
    %1451 = vmatprep.subr.mxu0 0.0
    %1452 = vmatpush1.msra.mxu0 0.0
    %1453 = vmatprep.subr.mxu0 0.0
    %1454 = vmatpush1.msra.mxu0 0.0
    %1455 = vmatprep.subr.mxu0 0.0
    %1456 = vmatpush1.msra.mxu0 0.0
    %1457 = vmatprep.subr.mxu0 0.0
    %1458 = vmatpush1.msra.mxu0 0.0
    %1459 = vmatprep.subr.mxu0 0.0
    %1460 = vmatpush1.msra.mxu0 0.0
    %1461 = vmatprep.subr.mxu0 0.0
    %1462 = vmatpush1.msra.mxu0 0.0
    %1463 = vmatprep.subr.mxu0 0.0
    %1464 = vmatpush1.msra.mxu0 0.0
    %1465 = vmatprep.subr.mxu0 0.0
    %1466 = vmatpush1.msra.mxu0 0.0
    %1467 = vmatprep.subr.mxu0 0.0
    %1468 = vmatpush1.msra.mxu0 0.0
    %1469 = vmatprep.mubr.f32.mxu0 0.0
    %1470 = vmatmul.mubr.f32.gmra.mrb[0].mxu0 %v174
    %v1471 = vpop.f32.mrb[0].mxu0
    %v1472 = vadd.f32 0.0, %v1471
    %v1473 = vpop.f32.mrb[0].mxu0
    %1474 = vdwg.mxu0
    %1475 = vmatprep.subr.mxu0 0.0
    %1476 = vmatpush1.msra.mxu0 %v1345
    %1477 = vmatprep.subr.mxu0 0.0
    %1478 = vmatpush1.msra.mxu0 %v1346
    %1479 = vmatprep.subr.mxu0 0.0
    %1480 = vmatpush1.msra.mxu0 %v1347
    %1481 = vmatprep.subr.mxu0 0.0
    %1482 = vmatpush1.msra.mxu0 %v1348
    %1483 = vmatprep.subr.mxu0 0.0
    %1484 = vmatpush1.msra.mxu0 0.0
    %1485 = vmatprep.subr.mxu0 0.0
    %1486 = vmatpush1.msra.mxu0 0.0
    %1487 = vmatprep.subr.mxu0 0.0
    %1488 = vmatpush1.msra.mxu0 0.0
    %1489 = vmatprep.subr.mxu0 0.0
    %1490 = vmatpush1.msra.mxu0 0.0
    %1491 = vmatprep.subr.mxu0 0.0
    %1492 = vmatpush1.msra.mxu0 0.0
    %1493 = vmatprep.subr.mxu0 0.0
    %1494 = vmatpush1.msra.mxu0 0.0
    %1495 = vmatprep.subr.mxu0 0.0
    %1496 = vmatpush1.msra.mxu0 0.0
    %1497 = vmatprep.subr.mxu0 0.0
    %1498 = vmatpush1.msra.mxu0 0.0
    %1499 = vmatprep.subr.mxu0 0.0
    %1500 = vmatpush1.msra.mxu0 0.0
    %1501 = vmatprep.subr.mxu0 0.0
    %1502 = vmatpush1.msra.mxu0 0.0
    %1503 = vmatprep.subr.mxu0 0.0
    %1504 = vmatpush1.msra.mxu0 0.0
    %1505 = vmatprep.subr.mxu0 0.0
    %1506 = vmatpush1.msra.mxu0 0.0
    %1507 = vmatprep.subr.mxu0 0.0
    %1508 = vmatpush1.msra.mxu0 0.0
    %1509 = vmatprep.subr.mxu0 0.0
    %1510 = vmatpush1.msra.mxu0 0.0
    %1511 = vmatprep.subr.mxu0 0.0
    %1512 = vmatpush1.msra.mxu0 0.0
    %1513 = vmatprep.subr.mxu0 0.0
    %1514 = vmatpush1.msra.mxu0 0.0
    %1515 = vmatprep.subr.mxu0 0.0
    %1516 = vmatpush1.msra.mxu0 0.0
    %1517 = vmatprep.subr.mxu0 0.0
    %1518 = vmatpush1.msra.mxu0 0.0
    %1519 = vmatprep.subr.mxu0 0.0
    %1520 = vmatpush1.msra.mxu0 0.0
    %1521 = vmatprep.subr.mxu0 0.0
    %1522 = vmatpush1.msra.mxu0 0.0
    %1523 = vmatprep.subr.mxu0 0.0
    %1524 = vmatpush1.msra.mxu0 0.0
    %1525 = vmatprep.subr.mxu0 0.0
    %1526 = vmatpush1.msra.mxu0 0.0
    %1527 = vmatprep.subr.mxu0 0.0
    %1528 = vmatpush1.msra.mxu0 0.0
    %1529 = vmatprep.subr.mxu0 0.0
    %1530 = vmatpush1.msra.mxu0 0.0
    %1531 = vmatprep.subr.mxu0 0.0
    %1532 = vmatpush1.msra.mxu0 0.0
    %1533 = vmatprep.subr.mxu0 0.0
    %1534 = vmatpush1.msra.mxu0 0.0
    %1535 = vmatprep.subr.mxu0 0.0
    %1536 = vmatpush1.msra.mxu0 0.0
    %1537 = vmatprep.subr.mxu0 0.0
    %1538 = vmatpush1.msra.mxu0 0.0
    %1539 = vmatprep.mubr.f32.mxu0 0.0
    %1540 = vmatmul.mubr.f32.gmra.mrb[0].mxu0 %v247
    %v1541 = vpop.f32.mrb[0].mxu0
    %v1542 = vadd.f32 0.0, %v1541
    %v1543 = vpop.f32.mrb[0].mxu0
    %1544 = vdwg.mxu0
    %1545 = vmatprep.subr.mxu0 0.0
    %1546 = vmatpush1.msra.mxu0 %v1349
    %1547 = vmatprep.subr.mxu0 0.0
    %1548 = vmatpush1.msra.mxu0 %v1350
    %1549 = vmatprep.subr.mxu0 0.0
    %1550 = vmatpush1.msra.mxu0 %v1351
    %1551 = vmatprep.subr.mxu0 0.0
    %1552 = vmatpush1.msra.mxu0 %v1352
    %1553 = vmatprep.subr.mxu0 0.0
    %1554 = vmatpush1.msra.mxu0 0.0
    %1555 = vmatprep.subr.mxu0 0.0
    %1556 = vmatpush1.msra.mxu0 0.0
    %1557 = vmatprep.subr.mxu0 0.0
    %1558 = vmatpush1.msra.mxu0 0.0
    %1559 = vmatprep.subr.mxu0 0.0
    %1560 = vmatpush1.msra.mxu0 0.0
    %1561 = vmatprep.subr.mxu0 0.0
    %1562 = vmatpush1.msra.mxu0 0.0
    %1563 = vmatprep.subr.mxu0 0.0
    %1564 = vmatpush1.msra.mxu0 0.0
    %1565 = vmatprep.subr.mxu0 0.0
    %1566 = vmatpush1.msra.mxu0 0.0
    %1567 = vmatprep.subr.mxu0 0.0
    %1568 = vmatpush1.msra.mxu0 0.0
    %1569 = vmatprep.subr.mxu0 0.0
    %1570 = vmatpush1.msra.mxu0 0.0
    %1571 = vmatprep.subr.mxu0 0.0
    %1572 = vmatpush1.msra.mxu0 0.0
    %1573 = vmatprep.subr.mxu0 0.0
    %1574 = vmatpush1.msra.mxu0 0.0
    %1575 = vmatprep.subr.mxu0 0.0
    %1576 = vmatpush1.msra.mxu0 0.0
    %1577 = vmatprep.subr.mxu0 0.0
    %1578 = vmatpush1.msra.mxu0 0.0
    %1579 = vmatprep.subr.mxu0 0.0
    %1580 = vmatpush1.msra.mxu0 0.0
    %1581 = vmatprep.subr.mxu0 0.0
    %1582 = vmatpush1.msra.mxu0 0.0
    %1583 = vmatprep.subr.mxu0 0.0
    %1584 = vmatpush1.msra.mxu0 0.0
    %1585 = vmatprep.subr.mxu0 0.0
    %1586 = vmatpush1.msra.mxu0 0.0
    %1587 = vmatprep.subr.mxu0 0.0
    %1588 = vmatpush1.msra.mxu0 0.0
    %1589 = vmatprep.subr.mxu0 0.0
    %1590 = vmatpush1.msra.mxu0 0.0
    %1591 = vmatprep.subr.mxu0 0.0
    %1592 = vmatpush1.msra.mxu0 0.0
    %1593 = vmatprep.subr.mxu0 0.0
    %1594 = vmatpush1.msra.mxu0 0.0
    %1595 = vmatprep.subr.mxu0 0.0
    %1596 = vmatpush1.msra.mxu0 0.0
    %1597 = vmatprep.subr.mxu0 0.0
    %1598 = vmatpush1.msra.mxu0 0.0
    %1599 = vmatprep.subr.mxu0 0.0
    %1600 = vmatpush1.msra.mxu0 0.0
    %1601 = vmatprep.subr.mxu0 0.0
    %1602 = vmatpush1.msra.mxu0 0.0
    %1603 = vmatprep.subr.mxu0 0.0
    %1604 = vmatpush1.msra.mxu0 0.0
    %1605 = vmatprep.subr.mxu0 0.0
    %1606 = vmatpush1.msra.mxu0 0.0
    %1607 = vmatprep.subr.mxu0 0.0
    %1608 = vmatpush1.msra.mxu0 0.0
    %1609 = vmatprep.mubr.f32.mxu0 0.0
    %1610 = vmatmul.mubr.f32.gmra.mrb[0].mxu0 %v320
    %v1611 = vpop.f32.mrb[0].mxu0
    %v1612 = vadd.f32 0.0, %v1611
    %v1613 = vpop.f32.mrb[0].mxu0
    %1614 = vdwg.mxu0
    %1615 = vmatprep.subr.mxu0 0.0
    %1616 = vmatpush1.msra.mxu0 %v1353
    %1617 = vmatprep.subr.mxu0 0.0
    %1618 = vmatpush1.msra.mxu0 %v1354
    %1619 = vmatprep.subr.mxu0 0.0
    %1620 = vmatpush1.msra.mxu0 %v1355
    %1621 = vmatprep.subr.mxu0 0.0
    %1622 = vmatpush1.msra.mxu0 %v1356
    %1623 = vmatprep.subr.mxu0 0.0
    %1624 = vmatpush1.msra.mxu0 0.0
    %1625 = vmatprep.subr.mxu0 0.0
    %1626 = vmatpush1.msra.mxu0 0.0
    %1627 = vmatprep.subr.mxu0 0.0
    %1628 = vmatpush1.msra.mxu0 0.0
    %1629 = vmatprep.subr.mxu0 0.0
    %1630 = vmatpush1.msra.mxu0 0.0
    %1631 = vmatprep.subr.mxu0 0.0
    %1632 = vmatpush1.msra.mxu0 0.0
    %1633 = vmatprep.subr.mxu0 0.0
    %1634 = vmatpush1.msra.mxu0 0.0
    %1635 = vmatprep.subr.mxu0 0.0
    %1636 = vmatpush1.msra.mxu0 0.0
    %1637 = vmatprep.subr.mxu0 0.0
    %1638 = vmatpush1.msra.mxu0 0.0
    %1639 = vmatprep.subr.mxu0 0.0
    %1640 = vmatpush1.msra.mxu0 0.0
    %1641 = vmatprep.subr.mxu0 0.0
    %1642 = vmatpush1.msra.mxu0 0.0
    %1643 = vmatprep.subr.mxu0 0.0
    %1644 = vmatpush1.msra.mxu0 0.0
    %1645 = vmatprep.subr.mxu0 0.0
    %1646 = vmatpush1.msra.mxu0 0.0
    %1647 = vmatprep.subr.mxu0 0.0
    %1648 = vmatpush1.msra.mxu0 0.0
    %1649 = vmatprep.subr.mxu0 0.0
    %1650 = vmatpush1.msra.mxu0 0.0
    %1651 = vmatprep.subr.mxu0 0.0
    %1652 = vmatpush1.msra.mxu0 0.0
    %1653 = vmatprep.subr.mxu0 0.0
    %1654 = vmatpush1.msra.mxu0 0.0
    %1655 = vmatprep.subr.mxu0 0.0
    %1656 = vmatpush1.msra.mxu0 0.0
    %1657 = vmatprep.subr.mxu0 0.0
    %1658 = vmatpush1.msra.mxu0 0.0
    %1659 = vmatprep.subr.mxu0 0.0
    %1660 = vmatpush1.msra.mxu0 0.0
    %1661 = vmatprep.subr.mxu0 0.0
    %1662 = vmatpush1.msra.mxu0 0.0
    %1663 = vmatprep.subr.mxu0 0.0
    %1664 = vmatpush1.msra.mxu0 0.0
    %1665 = vmatprep.subr.mxu0 0.0
    %1666 = vmatpush1.msra.mxu0 0.0
    %1667 = vmatprep.subr.mxu0 0.0
    %1668 = vmatpush1.msra.mxu0 0.0
    %1669 = vmatprep.subr.mxu0 0.0
    %1670 = vmatpush1.msra.mxu0 0.0
    %1671 = vmatprep.subr.mxu0 0.0
    %1672 = vmatpush1.msra.mxu0 0.0
    %1673 = vmatprep.subr.mxu0 0.0
    %1674 = vmatpush1.msra.mxu0 0.0
    %1675 = vmatprep.subr.mxu0 0.0
    %1676 = vmatpush1.msra.mxu0 0.0
    %1677 = vmatprep.subr.mxu0 0.0
    %1678 = vmatpush1.msra.mxu0 0.0
    %1679 = vmatprep.mubr.f32.mxu0 0.0
    %1680 = vmatmul.mubr.f32.gmra.mrb[0].mxu0 %v393
    %v1681 = vpop.f32.mrb[0].mxu0
    %v1682 = vadd.f32 0.0, %v1681
    %v1683 = vpop.f32.mrb[0].mxu0
    %1684 = vdwg.mxu0
    %1685 = vmatprep.subr.mxu0 0.0
    %1686 = vmatpush1.msra.mxu0 %v1357
    %1687 = vmatprep.subr.mxu0 0.0
    %1688 = vmatpush1.msra.mxu0 %v1358
    %1689 = vmatprep.subr.mxu0 0.0
    %1690 = vmatpush1.msra.mxu0 %v1359
    %1691 = vmatprep.subr.mxu0 0.0
    %1692 = vmatpush1.msra.mxu0 %v1360
    %1693 = vmatprep.subr.mxu0 0.0
    %1694 = vmatpush1.msra.mxu0 0.0
    %1695 = vmatprep.subr.mxu0 0.0
    %1696 = vmatpush1.msra.mxu0 0.0
    %1697 = vmatprep.subr.mxu0 0.0
    %1698 = vmatpush1.msra.mxu0 0.0
    %1699 = vmatprep.subr.mxu0 0.0
    %1700 = vmatpush1.msra.mxu0 0.0
    %1701 = vmatprep.subr.mxu0 0.0
    %1702 = vmatpush1.msra.mxu0 0.0
    %1703 = vmatprep.subr.mxu0 0.0
    %1704 = vmatpush1.msra.mxu0 0.0
    %1705 = vmatprep.subr.mxu0 0.0
    %1706 = vmatpush1.msra.mxu0 0.0
    %1707 = vmatprep.subr.mxu0 0.0
    %1708 = vmatpush1.msra.mxu0 0.0
    %1709 = vmatprep.subr.mxu0 0.0
    %1710 = vmatpush1.msra.mxu0 0.0
    %1711 = vmatprep.subr.mxu0 0.0
    %1712 = vmatpush1.msra.mxu0 0.0
    %1713 = vmatprep.subr.mxu0 0.0
    %1714 = vmatpush1.msra.mxu0 0.0
    %1715 = vmatprep.subr.mxu0 0.0
    %1716 = vmatpush1.msra.mxu0 0.0
    %1717 = vmatprep.subr.mxu0 0.0
    %1718 = vmatpush1.msra.mxu0 0.0
    %1719 = vmatprep.subr.mxu0 0.0
    %1720 = vmatpush1.msra.mxu0 0.0
    %1721 = vmatprep.subr.mxu0 0.0
    %1722 = vmatpush1.msra.mxu0 0.0
    %1723 = vmatprep.subr.mxu0 0.0
    %1724 = vmatpush1.msra.mxu0 0.0
    %1725 = vmatprep.subr.mxu0 0.0
    %1726 = vmatpush1.msra.mxu0 0.0
    %1727 = vmatprep.subr.mxu0 0.0
    %1728 = vmatpush1.msra.mxu0 0.0
    %1729 = vmatprep.subr.mxu0 0.0
    %1730 = vmatpush1.msra.mxu0 0.0
    %1731 = vmatprep.subr.mxu0 0.0
    %1732 = vmatpush1.msra.mxu0 0.0
    %1733 = vmatprep.subr.mxu0 0.0
    %1734 = vmatpush1.msra.mxu0 0.0
    %1735 = vmatprep.subr.mxu0 0.0
    %1736 = vmatpush1.msra.mxu0 0.0
    %1737 = vmatprep.subr.mxu0 0.0
    %1738 = vmatpush1.msra.mxu0 0.0
    %1739 = vmatprep.subr.mxu0 0.0
    %1740 = vmatpush1.msra.mxu0 0.0
    %1741 = vmatprep.subr.mxu0 0.0
    %1742 = vmatpush1.msra.mxu0 0.0
    %1743 = vmatprep.subr.mxu0 0.0
    %1744 = vmatpush1.msra.mxu0 0.0
    %1745 = vmatprep.subr.mxu0 0.0
    %1746 = vmatpush1.msra.mxu0 0.0
    %1747 = vmatprep.subr.mxu0 0.0
    %1748 = vmatpush1.msra.mxu0 0.0
    %1749 = vmatprep.mubr.f32.mxu0 0.0
    %1750 = vmatmul.mubr.f32.gmra.mrb[0].mxu0 %v466
    %v1751 = vpop.f32.mrb[0].mxu0
    %v1752 = vadd.f32 0.0, %v1751
    %v1753 = vpop.f32.mrb[0].mxu0
    %1754 = vdwg.mxu0
    %1755 = vmatprep.subr.mxu0 0.0
    %1756 = vmatpush1.msra.mxu0 %v1361
    %1757 = vmatprep.subr.mxu0 0.0
    %1758 = vmatpush1.msra.mxu0 %v1362
    %1759 = vmatprep.subr.mxu0 0.0
    %1760 = vmatpush1.msra.mxu0 %v1363
    %1761 = vmatprep.subr.mxu0 0.0
    %1762 = vmatpush1.msra.mxu0 %v1364
    %1763 = vmatprep.subr.mxu0 0.0
    %1764 = vmatpush1.msra.mxu0 0.0
    %1765 = vmatprep.subr.mxu0 0.0
    %1766 = vmatpush1.msra.mxu0 0.0
    %1767 = vmatprep.subr.mxu0 0.0
    %1768 = vmatpush1.msra.mxu0 0.0
    %1769 = vmatprep.subr.mxu0 0.0
    %1770 = vmatpush1.msra.mxu0 0.0
    %1771 = vmatprep.subr.mxu0 0.0
    %1772 = vmatpush1.msra.mxu0 0.0
    %1773 = vmatprep.subr.mxu0 0.0
    %1774 = vmatpush1.msra.mxu0 0.0
    %1775 = vmatprep.subr.mxu0 0.0
    %1776 = vmatpush1.msra.mxu0 0.0
    %1777 = vmatprep.subr.mxu0 0.0
    %1778 = vmatpush1.msra.mxu0 0.0
    %1779 = vmatprep.subr.mxu0 0.0
    %1780 = vmatpush1.msra.mxu0 0.0
    %1781 = vmatprep.subr.mxu0 0.0
    %1782 = vmatpush1.msra.mxu0 0.0
    %1783 = vmatprep.subr.mxu0 0.0
    %1784 = vmatpush1.msra.mxu0 0.0
    %1785 = vmatprep.subr.mxu0 0.0
    %1786 = vmatpush1.msra.mxu0 0.0
    %1787 = vmatprep.subr.mxu0 0.0
    %1788 = vmatpush1.msra.mxu0 0.0
    %1789 = vmatprep.subr.mxu0 0.0
    %1790 = vmatpush1.msra.mxu0 0.0
    %1791 = vmatprep.subr.mxu0 0.0
    %1792 = vmatpush1.msra.mxu0 0.0
    %1793 = vmatprep.subr.mxu0 0.0
    %1794 = vmatpush1.msra.mxu0 0.0
    %1795 = vmatprep.subr.mxu0 0.0
    %1796 = vmatpush1.msra.mxu0 0.0
    %1797 = vmatprep.subr.mxu0 0.0
    %1798 = vmatpush1.msra.mxu0 0.0
    %1799 = vmatprep.subr.mxu0 0.0
    %1800 = vmatpush1.msra.mxu0 0.0
    %1801 = vmatprep.subr.mxu0 0.0
    %1802 = vmatpush1.msra.mxu0 0.0
    %1803 = vmatprep.subr.mxu0 0.0
    %1804 = vmatpush1.msra.mxu0 0.0
    %1805 = vmatprep.subr.mxu0 0.0
    %1806 = vmatpush1.msra.mxu0 0.0
    %1807 = vmatprep.subr.mxu0 0.0
    %1808 = vmatpush1.msra.mxu0 0.0
    %1809 = vmatprep.subr.mxu0 0.0
    %1810 = vmatpush1.msra.mxu0 0.0
    %1811 = vmatprep.subr.mxu0 0.0
    %1812 = vmatpush1.msra.mxu0 0.0
    %1813 = vmatprep.subr.mxu0 0.0
    %1814 = vmatpush1.msra.mxu0 0.0
    %1815 = vmatprep.subr.mxu0 0.0
    %1816 = vmatpush1.msra.mxu0 0.0
    %1817 = vmatprep.subr.mxu0 0.0
    %1818 = vmatpush1.msra.mxu0 0.0
    %1819 = vmatprep.mubr.f32.mxu0 0.0
    %1820 = vmatmul.mubr.f32.gmra.mrb[0].mxu0 %v539
    %v1821 = vpop.f32.mrb[0].mxu0
    %v1822 = vadd.f32 0.0, %v1821
    %v1823 = vpop.f32.mrb[0].mxu0
    %1824 = vdwg.mxu0
    %1825 = vmatprep.subr.mxu0 0.0
    %1826 = vmatpush1.msra.mxu0 %v1365
    %1827 = vmatprep.subr.mxu0 0.0
    %1828 = vmatpush1.msra.mxu0 %v1366
    %1829 = vmatprep.subr.mxu0 0.0
    %1830 = vmatpush1.msra.mxu0 %v1367
    %1831 = vmatprep.subr.mxu0 0.0
    %1832 = vmatpush1.msra.mxu0 %v1368
    %1833 = vmatprep.subr.mxu0 0.0
    %1834 = vmatpush1.msra.mxu0 0.0
    %1835 = vmatprep.subr.mxu0 0.0
    %1836 = vmatpush1.msra.mxu0 0.0
    %1837 = vmatprep.subr.mxu0 0.0
    %1838 = vmatpush1.msra.mxu0 0.0
    %1839 = vmatprep.subr.mxu0 0.0
    %1840 = vmatpush1.msra.mxu0 0.0
    %1841 = vmatprep.subr.mxu0 0.0
    %1842 = vmatpush1.msra.mxu0 0.0
    %1843 = vmatprep.subr.mxu0 0.0
    %1844 = vmatpush1.msra.mxu0 0.0
    %1845 = vmatprep.subr.mxu0 0.0
    %1846 = vmatpush1.msra.mxu0 0.0
    %1847 = vmatprep.subr.mxu0 0.0
    %1848 = vmatpush1.msra.mxu0 0.0
    %1849 = vmatprep.subr.mxu0 0.0
    %1850 = vmatpush1.msra.mxu0 0.0
    %1851 = vmatprep.subr.mxu0 0.0
    %1852 = vmatpush1.msra.mxu0 0.0
    %1853 = vmatprep.subr.mxu0 0.0
    %1854 = vmatpush1.msra.mxu0 0.0
    %1855 = vmatprep.subr.mxu0 0.0
    %1856 = vmatpush1.msra.mxu0 0.0
    %1857 = vmatprep.subr.mxu0 0.0
    %1858 = vmatpush1.msra.mxu0 0.0
    %1859 = vmatprep.subr.mxu0 0.0
    %1860 = vmatpush1.msra.mxu0 0.0
    %1861 = vmatprep.subr.mxu0 0.0
    %1862 = vmatpush1.msra.mxu0 0.0
    %1863 = vmatprep.subr.mxu0 0.0
    %1864 = vmatpush1.msra.mxu0 0.0
    %1865 = vmatprep.subr.mxu0 0.0
    %1866 = vmatpush1.msra.mxu0 0.0
    %1867 = vmatprep.subr.mxu0 0.0
    %1868 = vmatpush1.msra.mxu0 0.0
    %1869 = vmatprep.subr.mxu0 0.0
    %1870 = vmatpush1.msra.mxu0 0.0
    %1871 = vmatprep.subr.mxu0 0.0
    %1872 = vmatpush1.msra.mxu0 0.0
    %1873 = vmatprep.subr.mxu0 0.0
    %1874 = vmatpush1.msra.mxu0 0.0
    %1875 = vmatprep.subr.mxu0 0.0
    %1876 = vmatpush1.msra.mxu0 0.0
    %1877 = vmatprep.subr.mxu0 0.0
    %1878 = vmatpush1.msra.mxu0 0.0
    %1879 = vmatprep.subr.mxu0 0.0
    %1880 = vmatpush1.msra.mxu0 0.0
    %1881 = vmatprep.subr.mxu0 0.0
    %1882 = vmatpush1.msra.mxu0 0.0
    %1883 = vmatprep.subr.mxu0 0.0
    %1884 = vmatpush1.msra.mxu0 0.0
    %1885 = vmatprep.subr.mxu0 0.0
    %1886 = vmatpush1.msra.mxu0 0.0
    %1887 = vmatprep.subr.mxu0 0.0
    %1888 = vmatpush1.msra.mxu0 0.0
    %1889 = vmatprep.mubr.f32.mxu0 0.0
    %1890 = vmatmul.mubr.f32.gmra.mrb[0].mxu0 %v612
    %v1891 = vpop.f32.mrb[0].mxu0
    %v1892 = vadd.f32 0.0, %v1891
    %v1893 = vpop.f32.mrb[0].mxu0
    %1894 = vdwg.mxu0
    %1895 = vmatprep.subr.mxu0 0.0
    %1896 = vmatpush1.msra.mxu0 %v1369
    %1897 = vmatprep.subr.mxu0 0.0
    %1898 = vmatpush1.msra.mxu0 %v1370
    %1899 = vmatprep.subr.mxu0 0.0
    %1900 = vmatpush1.msra.mxu0 %v1371
    %1901 = vmatprep.subr.mxu0 0.0
    %1902 = vmatpush1.msra.mxu0 %v1372
    %1903 = vmatprep.subr.mxu0 0.0
    %1904 = vmatpush1.msra.mxu0 0.0
    %1905 = vmatprep.subr.mxu0 0.0
    %1906 = vmatpush1.msra.mxu0 0.0
    %1907 = vmatprep.subr.mxu0 0.0
    %1908 = vmatpush1.msra.mxu0 0.0
    %1909 = vmatprep.subr.mxu0 0.0
    %1910 = vmatpush1.msra.mxu0 0.0
    %1911 = vmatprep.subr.mxu0 0.0
    %1912 = vmatpush1.msra.mxu0 0.0
    %1913 = vmatprep.subr.mxu0 0.0
    %1914 = vmatpush1.msra.mxu0 0.0
    %1915 = vmatprep.subr.mxu0 0.0
    %1916 = vmatpush1.msra.mxu0 0.0
    %1917 = vmatprep.subr.mxu0 0.0
    %1918 = vmatpush1.msra.mxu0 0.0
    %1919 = vmatprep.subr.mxu0 0.0
    %1920 = vmatpush1.msra.mxu0 0.0
    %1921 = vmatprep.subr.mxu0 0.0
    %1922 = vmatpush1.msra.mxu0 0.0
    %1923 = vmatprep.subr.mxu0 0.0
    %1924 = vmatpush1.msra.mxu0 0.0
    %1925 = vmatprep.subr.mxu0 0.0
    %1926 = vmatpush1.msra.mxu0 0.0
    %1927 = vmatprep.subr.mxu0 0.0
    %1928 = vmatpush1.msra.mxu0 0.0
    %1929 = vmatprep.subr.mxu0 0.0
    %1930 = vmatpush1.msra.mxu0 0.0
    %1931 = vmatprep.subr.mxu0 0.0
    %1932 = vmatpush1.msra.mxu0 0.0
    %1933 = vmatprep.subr.mxu0 0.0
    %1934 = vmatpush1.msra.mxu0 0.0
    %1935 = vmatprep.subr.mxu0 0.0
    %1936 = vmatpush1.msra.mxu0 0.0
    %1937 = vmatprep.subr.mxu0 0.0
    %1938 = vmatpush1.msra.mxu0 0.0
    %1939 = vmatprep.subr.mxu0 0.0
    %1940 = vmatpush1.msra.mxu0 0.0
    %1941 = vmatprep.subr.mxu0 0.0
    %1942 = vmatpush1.msra.mxu0 0.0
    %1943 = vmatprep.subr.mxu0 0.0
    %1944 = vmatpush1.msra.mxu0 0.0
    %1945 = vmatprep.subr.mxu0 0.0
    %1946 = vmatpush1.msra.mxu0 0.0
    %1947 = vmatprep.subr.mxu0 0.0
    %1948 = vmatpush1.msra.mxu0 0.0
    %1949 = vmatprep.subr.mxu0 0.0
    %1950 = vmatpush1.msra.mxu0 0.0
    %1951 = vmatprep.subr.mxu0 0.0
    %1952 = vmatpush1.msra.mxu0 0.0
    %1953 = vmatprep.subr.mxu0 0.0
    %1954 = vmatpush1.msra.mxu0 0.0
    %1955 = vmatprep.subr.mxu0 0.0
    %1956 = vmatpush1.msra.mxu0 0.0
    %1957 = vmatprep.subr.mxu0 0.0
    %1958 = vmatpush1.msra.mxu0 0.0
    %1959 = vmatprep.mubr.f32.mxu0 0.0
    %1960 = vmatmul.mubr.f32.gmra.mrb[0].mxu0 %v685
    %v1961 = vpop.f32.mrb[0].mxu0
    %v1962 = vadd.f32 0.0, %v1961
    %v1963 = vpop.f32.mrb[0].mxu0
    %1964 = vdwg.mxu0
    %1965 = vmatprep.subr.mxu0 0.0
    %1966 = vmatpush1.msra.mxu0 %v1373
    %1967 = vmatprep.subr.mxu0 0.0
    %1968 = vmatpush1.msra.mxu0 %v1374
    %1969 = vmatprep.subr.mxu0 0.0
    %1970 = vmatpush1.msra.mxu0 %v1375
    %1971 = vmatprep.subr.mxu0 0.0
    %1972 = vmatpush1.msra.mxu0 %v1376
    %1973 = vmatprep.subr.mxu0 0.0
    %1974 = vmatpush1.msra.mxu0 0.0
    %1975 = vmatprep.subr.mxu0 0.0
    %1976 = vmatpush1.msra.mxu0 0.0
    %1977 = vmatprep.subr.mxu0 0.0
    %1978 = vmatpush1.msra.mxu0 0.0
    %1979 = vmatprep.subr.mxu0 0.0
    %1980 = vmatpush1.msra.mxu0 0.0
    %1981 = vmatprep.subr.mxu0 0.0
    %1982 = vmatpush1.msra.mxu0 0.0
    %1983 = vmatprep.subr.mxu0 0.0
    %1984 = vmatpush1.msra.mxu0 0.0
    %1985 = vmatprep.subr.mxu0 0.0
    %1986 = vmatpush1.msra.mxu0 0.0
    %1987 = vmatprep.subr.mxu0 0.0
    %1988 = vmatpush1.msra.mxu0 0.0
    %1989 = vmatprep.subr.mxu0 0.0
    %1990 = vmatpush1.msra.mxu0 0.0
    %1991 = vmatprep.subr.mxu0 0.0
    %1992 = vmatpush1.msra.mxu0 0.0
    %1993 = vmatprep.subr.mxu0 0.0
    %1994 = vmatpush1.msra.mxu0 0.0
    %1995 = vmatprep.subr.mxu0 0.0
    %1996 = vmatpush1.msra.mxu0 0.0
    %1997 = vmatprep.subr.mxu0 0.0
    %1998 = vmatpush1.msra.mxu0 0.0
    %1999 = vmatprep.subr.mxu0 0.0
    %2000 = vmatpush1.msra.mxu0 0.0
    %2001 = vmatprep.subr.mxu0 0.0
    %2002 = vmatpush1.msra.mxu0 0.0
    %2003 = vmatprep.subr.mxu0 0.0
    %2004 = vmatpush1.msra.mxu0 0.0
    %2005 = vmatprep.subr.mxu0 0.0
    %2006 = vmatpush1.msra.mxu0 0.0
    %2007 = vmatprep.subr.mxu0 0.0
    %2008 = vmatpush1.msra.mxu0 0.0
    %2009 = vmatprep.subr.mxu0 0.0
    %2010 = vmatpush1.msra.mxu0 0.0
    %2011 = vmatprep.subr.mxu0 0.0
    %2012 = vmatpush1.msra.mxu0 0.0
    %2013 = vmatprep.subr.mxu0 0.0
    %2014 = vmatpush1.msra.mxu0 0.0
    %2015 = vmatprep.subr.mxu0 0.0
    %2016 = vmatpush1.msra.mxu0 0.0
    %2017 = vmatprep.subr.mxu0 0.0
    %2018 = vmatpush1.msra.mxu0 0.0
    %2019 = vmatprep.subr.mxu0 0.0
    %2020 = vmatpush1.msra.mxu0 0.0
    %2021 = vmatprep.subr.mxu0 0.0
    %2022 = vmatpush1.msra.mxu0 0.0
    %2023 = vmatprep.subr.mxu0 0.0
    %2024 = vmatpush1.msra.mxu0 0.0
    %2025 = vmatprep.subr.mxu0 0.0
    %2026 = vmatpush1.msra.mxu0 0.0
    %2027 = vmatprep.subr.mxu0 0.0
    %2028 = vmatpush1.msra.mxu0 0.0
    %2029 = vmatprep.mubr.f32.mxu0 0.0
    %2030 = vmatmul.mubr.f32.gmra.mrb[0].mxu0 %v758
    %v2031 = vpop.f32.mrb[0].mxu0
    %v2032 = vadd.f32 0.0, %v2031
    %v2033 = vpop.f32.mrb[0].mxu0
    %2034 = vdwg.mxu0
    %2035 = vmatprep.subr.mxu0 0.0
    %2036 = vmatpush1.msra.mxu0 %v1377
    %2037 = vmatprep.subr.mxu0 0.0
    %2038 = vmatpush1.msra.mxu0 %v1378
    %2039 = vmatprep.subr.mxu0 0.0
    %2040 = vmatpush1.msra.mxu0 %v1379
    %2041 = vmatprep.subr.mxu0 0.0
    %2042 = vmatpush1.msra.mxu0 %v1380
    %2043 = vmatprep.subr.mxu0 0.0
    %2044 = vmatpush1.msra.mxu0 0.0
    %2045 = vmatprep.subr.mxu0 0.0
    %2046 = vmatpush1.msra.mxu0 0.0
    %2047 = vmatprep.subr.mxu0 0.0
    %2048 = vmatpush1.msra.mxu0 0.0
    %2049 = vmatprep.subr.mxu0 0.0
    %2050 = vmatpush1.msra.mxu0 0.0
    %2051 = vmatprep.subr.mxu0 0.0
    %2052 = vmatpush1.msra.mxu0 0.0
    %2053 = vmatprep.subr.mxu0 0.0
    %2054 = vmatpush1.msra.mxu0 0.0
    %2055 = vmatprep.subr.mxu0 0.0
    %2056 = vmatpush1.msra.mxu0 0.0
    %2057 = vmatprep.subr.mxu0 0.0
    %2058 = vmatpush1.msra.mxu0 0.0
    %2059 = vmatprep.subr.mxu0 0.0
    %2060 = vmatpush1.msra.mxu0 0.0
    %2061 = vmatprep.subr.mxu0 0.0
    %2062 = vmatpush1.msra.mxu0 0.0
    %2063 = vmatprep.subr.mxu0 0.0
    %2064 = vmatpush1.msra.mxu0 0.0
    %2065 = vmatprep.subr.mxu0 0.0
    %2066 = vmatpush1.msra.mxu0 0.0
    %2067 = vmatprep.subr.mxu0 0.0
    %2068 = vmatpush1.msra.mxu0 0.0
    %2069 = vmatprep.subr.mxu0 0.0
    %2070 = vmatpush1.msra.mxu0 0.0
    %2071 = vmatprep.subr.mxu0 0.0
    %2072 = vmatpush1.msra.mxu0 0.0
    %2073 = vmatprep.subr.mxu0 0.0
    %2074 = vmatpush1.msra.mxu0 0.0
    %2075 = vmatprep.subr.mxu0 0.0
    %2076 = vmatpush1.msra.mxu0 0.0
    %2077 = vmatprep.subr.mxu0 0.0
    %2078 = vmatpush1.msra.mxu0 0.0
    %2079 = vmatprep.subr.mxu0 0.0
    %2080 = vmatpush1.msra.mxu0 0.0
    %2081 = vmatprep.subr.mxu0 0.0
    %2082 = vmatpush1.msra.mxu0 0.0
    %2083 = vmatprep.subr.mxu0 0.0
    %2084 = vmatpush1.msra.mxu0 0.0
    %2085 = vmatprep.subr.mxu0 0.0
    %2086 = vmatpush1.msra.mxu0 0.0
    %2087 = vmatprep.subr.mxu0 0.0
    %2088 = vmatpush1.msra.mxu0 0.0
    %2089 = vmatprep.subr.mxu0 0.0
    %2090 = vmatpush1.msra.mxu0 0.0
    %2091 = vmatprep.subr.mxu0 0.0
    %2092 = vmatpush1.msra.mxu0 0.0
    %2093 = vmatprep.subr.mxu0 0.0
    %2094 = vmatpush1.msra.mxu0 0.0
    %2095 = vmatprep.subr.mxu0 0.0
    %2096 = vmatpush1.msra.mxu0 0.0
    %2097 = vmatprep.subr.mxu0 0.0
    %2098 = vmatpush1.msra.mxu0 0.0
    %2099 = vmatprep.mubr.f32.mxu0 0.0
    %2100 = vmatmul.mubr.f32.gmra.mrb[0].mxu0 %v831
    %v2101 = vpop.f32.mrb[0].mxu0
    %v2102 = vadd.f32 0.0, %v2101
    %v2103 = vpop.f32.mrb[0].mxu0
    %2104 = vdwg.mxu0
    %2105 = vmatprep.subr.mxu0 0.0
    %2106 = vmatpush1.msra.mxu0 %v1381
    %2107 = vmatprep.subr.mxu0 0.0
    %2108 = vmatpush1.msra.mxu0 %v1382
    %2109 = vmatprep.subr.mxu0 0.0
    %2110 = vmatpush1.msra.mxu0 %v1383
    %2111 = vmatprep.subr.mxu0 0.0
    %2112 = vmatpush1.msra.mxu0 %v1384
    %2113 = vmatprep.subr.mxu0 0.0
    %2114 = vmatpush1.msra.mxu0 0.0
    %2115 = vmatprep.subr.mxu0 0.0
    %2116 = vmatpush1.msra.mxu0 0.0
    %2117 = vmatprep.subr.mxu0 0.0
    %2118 = vmatpush1.msra.mxu0 0.0
    %2119 = vmatprep.subr.mxu0 0.0
    %2120 = vmatpush1.msra.mxu0 0.0
    %2121 = vmatprep.subr.mxu0 0.0
    %2122 = vmatpush1.msra.mxu0 0.0
    %2123 = vmatprep.subr.mxu0 0.0
    %2124 = vmatpush1.msra.mxu0 0.0
    %2125 = vmatprep.subr.mxu0 0.0
    %2126 = vmatpush1.msra.mxu0 0.0
    %2127 = vmatprep.subr.mxu0 0.0
    %2128 = vmatpush1.msra.mxu0 0.0
    %2129 = vmatprep.subr.mxu0 0.0
    %2130 = vmatpush1.msra.mxu0 0.0
    %2131 = vmatprep.subr.mxu0 0.0
    %2132 = vmatpush1.msra.mxu0 0.0
    %2133 = vmatprep.subr.mxu0 0.0
    %2134 = vmatpush1.msra.mxu0 0.0
    %2135 = vmatprep.subr.mxu0 0.0
    %2136 = vmatpush1.msra.mxu0 0.0
    %2137 = vmatprep.subr.mxu0 0.0
    %2138 = vmatpush1.msra.mxu0 0.0
    %2139 = vmatprep.subr.mxu0 0.0
    %2140 = vmatpush1.msra.mxu0 0.0
    %2141 = vmatprep.subr.mxu0 0.0
    %2142 = vmatpush1.msra.mxu0 0.0
    %2143 = vmatprep.subr.mxu0 0.0
    %2144 = vmatpush1.msra.mxu0 0.0
    %2145 = vmatprep.subr.mxu0 0.0
    %2146 = vmatpush1.msra.mxu0 0.0
    %2147 = vmatprep.subr.mxu0 0.0
    %2148 = vmatpush1.msra.mxu0 0.0
    %2149 = vmatprep.subr.mxu0 0.0
    %2150 = vmatpush1.msra.mxu0 0.0
    %2151 = vmatprep.subr.mxu0 0.0
    %2152 = vmatpush1.msra.mxu0 0.0
    %2153 = vmatprep.subr.mxu0 0.0
    %2154 = vmatpush1.msra.mxu0 0.0
    %2155 = vmatprep.subr.mxu0 0.0
    %2156 = vmatpush1.msra.mxu0 0.0
    %2157 = vmatprep.subr.mxu0 0.0
    %2158 = vmatpush1.msra.mxu0 0.0
    %2159 = vmatprep.subr.mxu0 0.0
    %2160 = vmatpush1.msra.mxu0 0.0
    %2161 = vmatprep.subr.mxu0 0.0
    %2162 = vmatpush1.msra.mxu0 0.0
    %2163 = vmatprep.subr.mxu0 0.0
    %2164 = vmatpush1.msra.mxu0 0.0
    %2165 = vmatprep.subr.mxu0 0.0
    %2166 = vmatpush1.msra.mxu0 0.0
    %2167 = vmatprep.subr.mxu0 0.0
    %2168 = vmatpush1.msra.mxu0 0.0
    %2169 = vmatprep.mubr.f32.mxu0 0.0
    %2170 = vmatmul.mubr.f32.gmra.mrb[0].mxu0 %v904
    %v2171 = vpop.f32.mrb[0].mxu0
    %v2172 = vadd.f32 0.0, %v2171
    %v2173 = vpop.f32.mrb[0].mxu0
    %2174 = vdwg.mxu0
    %2175 = vmatprep.subr.mxu0 0.0
    %2176 = vmatpush1.msra.mxu0 %v1385
    %2177 = vmatprep.subr.mxu0 0.0
    %2178 = vmatpush1.msra.mxu0 %v1386
    %2179 = vmatprep.subr.mxu0 0.0
    %2180 = vmatpush1.msra.mxu0 %v1387
    %2181 = vmatprep.subr.mxu0 0.0
    %2182 = vmatpush1.msra.mxu0 %v1388
    %2183 = vmatprep.subr.mxu0 0.0
    %2184 = vmatpush1.msra.mxu0 0.0
    %2185 = vmatprep.subr.mxu0 0.0
    %2186 = vmatpush1.msra.mxu0 0.0
    %2187 = vmatprep.subr.mxu0 0.0
    %2188 = vmatpush1.msra.mxu0 0.0
    %2189 = vmatprep.subr.mxu0 0.0
    %2190 = vmatpush1.msra.mxu0 0.0
    %2191 = vmatprep.subr.mxu0 0.0
    %2192 = vmatpush1.msra.mxu0 0.0
    %2193 = vmatprep.subr.mxu0 0.0
    %2194 = vmatpush1.msra.mxu0 0.0
    %2195 = vmatprep.subr.mxu0 0.0
    %2196 = vmatpush1.msra.mxu0 0.0
    %2197 = vmatprep.subr.mxu0 0.0
    %2198 = vmatpush1.msra.mxu0 0.0
    %2199 = vmatprep.subr.mxu0 0.0
    %2200 = vmatpush1.msra.mxu0 0.0
    %2201 = vmatprep.subr.mxu0 0.0
    %2202 = vmatpush1.msra.mxu0 0.0
    %2203 = vmatprep.subr.mxu0 0.0
    %2204 = vmatpush1.msra.mxu0 0.0
    %2205 = vmatprep.subr.mxu0 0.0
    %2206 = vmatpush1.msra.mxu0 0.0
    %2207 = vmatprep.subr.mxu0 0.0
    %2208 = vmatpush1.msra.mxu0 0.0
    %2209 = vmatprep.subr.mxu0 0.0
    %2210 = vmatpush1.msra.mxu0 0.0
    %2211 = vmatprep.subr.mxu0 0.0
    %2212 = vmatpush1.msra.mxu0 0.0
    %2213 = vmatprep.subr.mxu0 0.0
    %2214 = vmatpush1.msra.mxu0 0.0
    %2215 = vmatprep.subr.mxu0 0.0
    %2216 = vmatpush1.msra.mxu0 0.0
    %2217 = vmatprep.subr.mxu0 0.0
    %2218 = vmatpush1.msra.mxu0 0.0
    %2219 = vmatprep.subr.mxu0 0.0
    %2220 = vmatpush1.msra.mxu0 0.0
    %2221 = vmatprep.subr.mxu0 0.0
    %2222 = vmatpush1.msra.mxu0 0.0
    %2223 = vmatprep.subr.mxu0 0.0
    %2224 = vmatpush1.msra.mxu0 0.0
    %2225 = vmatprep.subr.mxu0 0.0
    %2226 = vmatpush1.msra.mxu0 0.0
    %2227 = vmatprep.subr.mxu0 0.0
    %2228 = vmatpush1.msra.mxu0 0.0
    %2229 = vmatprep.subr.mxu0 0.0
    %2230 = vmatpush1.msra.mxu0 0.0
    %2231 = vmatprep.subr.mxu0 0.0
    %2232 = vmatpush1.msra.mxu0 0.0
    %2233 = vmatprep.subr.mxu0 0.0
    %2234 = vmatpush1.msra.mxu0 0.0
    %2235 = vmatprep.subr.mxu0 0.0
    %2236 = vmatpush1.msra.mxu0 0.0
    %2237 = vmatprep.subr.mxu0 0.0
    %2238 = vmatpush1.msra.mxu0 0.0
    %2239 = vmatprep.mubr.f32.mxu0 0.0
    %2240 = vmatmul.mubr.f32.gmra.mrb[0].mxu0 %v977
    %v2241 = vpop.f32.mrb[0].mxu0
    %v2242 = vadd.f32 0.0, %v2241
    %v2243 = vpop.f32.mrb[0].mxu0
    %2244 = vdwg.mxu0
    %2245 = vmatprep.subr.mxu0 0.0
    %2246 = vmatpush1.msra.mxu0 %v1389
    %2247 = vmatprep.subr.mxu0 0.0
    %2248 = vmatpush1.msra.mxu0 %v1390
    %2249 = vmatprep.subr.mxu0 0.0
    %2250 = vmatpush1.msra.mxu0 %v1391
    %2251 = vmatprep.subr.mxu0 0.0
    %2252 = vmatpush1.msra.mxu0 %v1392
    %2253 = vmatprep.subr.mxu0 0.0
    %2254 = vmatpush1.msra.mxu0 0.0
    %2255 = vmatprep.subr.mxu0 0.0
    %2256 = vmatpush1.msra.mxu0 0.0
    %2257 = vmatprep.subr.mxu0 0.0
    %2258 = vmatpush1.msra.mxu0 0.0
    %2259 = vmatprep.subr.mxu0 0.0
    %2260 = vmatpush1.msra.mxu0 0.0
    %2261 = vmatprep.subr.mxu0 0.0
    %2262 = vmatpush1.msra.mxu0 0.0
    %2263 = vmatprep.subr.mxu0 0.0
    %2264 = vmatpush1.msra.mxu0 0.0
    %2265 = vmatprep.subr.mxu0 0.0
    %2266 = vmatpush1.msra.mxu0 0.0
    %2267 = vmatprep.subr.mxu0 0.0
    %2268 = vmatpush1.msra.mxu0 0.0
    %2269 = vmatprep.subr.mxu0 0.0
    %2270 = vmatpush1.msra.mxu0 0.0
    %2271 = vmatprep.subr.mxu0 0.0
    %2272 = vmatpush1.msra.mxu0 0.0
    %2273 = vmatprep.subr.mxu0 0.0
    %2274 = vmatpush1.msra.mxu0 0.0
    %2275 = vmatprep.subr.mxu0 0.0
    %2276 = vmatpush1.msra.mxu0 0.0
    %2277 = vmatprep.subr.mxu0 0.0
    %2278 = vmatpush1.msra.mxu0 0.0
    %2279 = vmatprep.subr.mxu0 0.0
    %2280 = vmatpush1.msra.mxu0 0.0
    %2281 = vmatprep.subr.mxu0 0.0
    %2282 = vmatpush1.msra.mxu0 0.0
    %2283 = vmatprep.subr.mxu0 0.0
    %2284 = vmatpush1.msra.mxu0 0.0
    %2285 = vmatprep.subr.mxu0 0.0
    %2286 = vmatpush1.msra.mxu0 0.0
    %2287 = vmatprep.subr.mxu0 0.0
    %2288 = vmatpush1.msra.mxu0 0.0
    %2289 = vmatprep.subr.mxu0 0.0
    %2290 = vmatpush1.msra.mxu0 0.0
    %2291 = vmatprep.subr.mxu0 0.0
    %2292 = vmatpush1.msra.mxu0 0.0
    %2293 = vmatprep.subr.mxu0 0.0
    %2294 = vmatpush1.msra.mxu0 0.0
    %2295 = vmatprep.subr.mxu0 0.0
    %2296 = vmatpush1.msra.mxu0 0.0
    %2297 = vmatprep.subr.mxu0 0.0
    %2298 = vmatpush1.msra.mxu0 0.0
    %2299 = vmatprep.subr.mxu0 0.0
    %2300 = vmatpush1.msra.mxu0 0.0
    %2301 = vmatprep.subr.mxu0 0.0
    %2302 = vmatpush1.msra.mxu0 0.0
    %2303 = vmatprep.subr.mxu0 0.0
    %2304 = vmatpush1.msra.mxu0 0.0
    %2305 = vmatprep.subr.mxu0 0.0
    %2306 = vmatpush1.msra.mxu0 0.0
    %2307 = vmatprep.subr.mxu0 0.0
    %2308 = vmatpush1.msra.mxu0 0.0
    %2309 = vmatprep.mubr.f32.mxu0 0.0
    %2310 = vmatmul.mubr.f32.gmra.mrb[0].mxu0 %v1050
    %v2311 = vpop.f32.mrb[0].mxu0
    %v2312 = vadd.f32 0.0, %v2311
    %v2313 = vpop.f32.mrb[0].mxu0
    %2314 = vdwg.mxu0
    %2315 = vmatprep.subr.mxu0 0.0
    %2316 = vmatpush1.msra.mxu0 %v1393
    %2317 = vmatprep.subr.mxu0 0.0
    %2318 = vmatpush1.msra.mxu0 %v1394
    %2319 = vmatprep.subr.mxu0 0.0
    %2320 = vmatpush1.msra.mxu0 %v1395
    %2321 = vmatprep.subr.mxu0 0.0
    %2322 = vmatpush1.msra.mxu0 %v1396
    %2323 = vmatprep.subr.mxu0 0.0
    %2324 = vmatpush1.msra.mxu0 0.0
    %2325 = vmatprep.subr.mxu0 0.0
    %2326 = vmatpush1.msra.mxu0 0.0
    %2327 = vmatprep.subr.mxu0 0.0
    %2328 = vmatpush1.msra.mxu0 0.0
    %2329 = vmatprep.subr.mxu0 0.0
    %2330 = vmatpush1.msra.mxu0 0.0
    %2331 = vmatprep.subr.mxu0 0.0
    %2332 = vmatpush1.msra.mxu0 0.0
    %2333 = vmatprep.subr.mxu0 0.0
    %2334 = vmatpush1.msra.mxu0 0.0
    %2335 = vmatprep.subr.mxu0 0.0
    %2336 = vmatpush1.msra.mxu0 0.0
    %2337 = vmatprep.subr.mxu0 0.0
    %2338 = vmatpush1.msra.mxu0 0.0
    %2339 = vmatprep.subr.mxu0 0.0
    %2340 = vmatpush1.msra.mxu0 0.0
    %2341 = vmatprep.subr.mxu0 0.0
    %2342 = vmatpush1.msra.mxu0 0.0
    %2343 = vmatprep.subr.mxu0 0.0
    %2344 = vmatpush1.msra.mxu0 0.0
    %2345 = vmatprep.subr.mxu0 0.0
    %2346 = vmatpush1.msra.mxu0 0.0
    %2347 = vmatprep.subr.mxu0 0.0
    %2348 = vmatpush1.msra.mxu0 0.0
    %2349 = vmatprep.subr.mxu0 0.0
    %2350 = vmatpush1.msra.mxu0 0.0
    %2351 = vmatprep.subr.mxu0 0.0
    %2352 = vmatpush1.msra.mxu0 0.0
    %2353 = vmatprep.subr.mxu0 0.0
    %2354 = vmatpush1.msra.mxu0 0.0
    %2355 = vmatprep.subr.mxu0 0.0
    %2356 = vmatpush1.msra.mxu0 0.0
    %2357 = vmatprep.subr.mxu0 0.0
    %2358 = vmatpush1.msra.mxu0 0.0
    %2359 = vmatprep.subr.mxu0 0.0
    %2360 = vmatpush1.msra.mxu0 0.0
    %2361 = vmatprep.subr.mxu0 0.0
    %2362 = vmatpush1.msra.mxu0 0.0
    %2363 = vmatprep.subr.mxu0 0.0
    %2364 = vmatpush1.msra.mxu0 0.0
    %2365 = vmatprep.subr.mxu0 0.0
    %2366 = vmatpush1.msra.mxu0 0.0
    %2367 = vmatprep.subr.mxu0 0.0
    %2368 = vmatpush1.msra.mxu0 0.0
    %2369 = vmatprep.subr.mxu0 0.0
    %2370 = vmatpush1.msra.mxu0 0.0
    %2371 = vmatprep.subr.mxu0 0.0
    %2372 = vmatpush1.msra.mxu0 0.0
    %2373 = vmatprep.subr.mxu0 0.0
    %2374 = vmatpush1.msra.mxu0 0.0
    %2375 = vmatprep.subr.mxu0 0.0
    %2376 = vmatpush1.msra.mxu0 0.0
    %2377 = vmatprep.subr.mxu0 0.0
    %2378 = vmatpush1.msra.mxu0 0.0
    %2379 = vmatprep.mubr.f32.mxu0 0.0
    %2380 = vmatmul.mubr.f32.gmra.mrb[0].mxu0 %v1123
    %v2381 = vpop.f32.mrb[0].mxu0
    %v2382 = vadd.f32 0.0, %v2381
    %v2383 = vpop.f32.mrb[0].mxu0
    %2384 = vdwg.mxu0
    %2385 = vmatprep.subr.mxu0 0.0
    %2386 = vmatpush1.msra.mxu0 %v1397
    %2387 = vmatprep.subr.mxu0 0.0
    %2388 = vmatpush1.msra.mxu0 %v1398
    %2389 = vmatprep.subr.mxu0 0.0
    %2390 = vmatpush1.msra.mxu0 %v1399
    %2391 = vmatprep.subr.mxu0 0.0
    %2392 = vmatpush1.msra.mxu0 %v1400
    %2393 = vmatprep.subr.mxu0 0.0
    %2394 = vmatpush1.msra.mxu0 0.0
    %2395 = vmatprep.subr.mxu0 0.0
    %2396 = vmatpush1.msra.mxu0 0.0
    %2397 = vmatprep.subr.mxu0 0.0
    %2398 = vmatpush1.msra.mxu0 0.0
    %2399 = vmatprep.subr.mxu0 0.0
    %2400 = vmatpush1.msra.mxu0 0.0
    %2401 = vmatprep.subr.mxu0 0.0
    %2402 = vmatpush1.msra.mxu0 0.0
    %2403 = vmatprep.subr.mxu0 0.0
    %2404 = vmatpush1.msra.mxu0 0.0
    %2405 = vmatprep.subr.mxu0 0.0
    %2406 = vmatpush1.msra.mxu0 0.0
    %2407 = vmatprep.subr.mxu0 0.0
    %2408 = vmatpush1.msra.mxu0 0.0
    %2409 = vmatprep.subr.mxu0 0.0
    %2410 = vmatpush1.msra.mxu0 0.0
    %2411 = vmatprep.subr.mxu0 0.0
    %2412 = vmatpush1.msra.mxu0 0.0
    %2413 = vmatprep.subr.mxu0 0.0
    %2414 = vmatpush1.msra.mxu0 0.0
    %2415 = vmatprep.subr.mxu0 0.0
    %2416 = vmatpush1.msra.mxu0 0.0
    %2417 = vmatprep.subr.mxu0 0.0
    %2418 = vmatpush1.msra.mxu0 0.0
    %2419 = vmatprep.subr.mxu0 0.0
    %2420 = vmatpush1.msra.mxu0 0.0
    %2421 = vmatprep.subr.mxu0 0.0
    %2422 = vmatpush1.msra.mxu0 0.0
    %2423 = vmatprep.subr.mxu0 0.0
    %2424 = vmatpush1.msra.mxu0 0.0
    %2425 = vmatprep.subr.mxu0 0.0
    %2426 = vmatpush1.msra.mxu0 0.0
    %2427 = vmatprep.subr.mxu0 0.0
    %2428 = vmatpush1.msra.mxu0 0.0
    %2429 = vmatprep.subr.mxu0 0.0
    %2430 = vmatpush1.msra.mxu0 0.0
    %2431 = vmatprep.subr.mxu0 0.0
    %2432 = vmatpush1.msra.mxu0 0.0
    %2433 = vmatprep.subr.mxu0 0.0
    %2434 = vmatpush1.msra.mxu0 0.0
    %2435 = vmatprep.subr.mxu0 0.0
    %2436 = vmatpush1.msra.mxu0 0.0
    %2437 = vmatprep.subr.mxu0 0.0
    %2438 = vmatpush1.msra.mxu0 0.0
    %2439 = vmatprep.subr.mxu0 0.0
    %2440 = vmatpush1.msra.mxu0 0.0
    %2441 = vmatprep.subr.mxu0 0.0
    %2442 = vmatpush1.msra.mxu0 0.0
    %2443 = vmatprep.subr.mxu0 0.0
    %2444 = vmatpush1.msra.mxu0 0.0
    %2445 = vmatprep.subr.mxu0 0.0
    %2446 = vmatpush1.msra.mxu0 0.0
    %2447 = vmatprep.subr.mxu0 0.0
    %2448 = vmatpush1.msra.mxu0 0.0
    %2449 = vmatprep.mubr.f32.mxu0 0.0
    %2450 = vmatmul.mubr.f32.gmra.mrb[0].mxu0 %v1196
    %v2451 = vpop.f32.mrb[0].mxu0
    %v2452 = vadd.f32 0.0, %v2451
    %v2453 = vpop.f32.mrb[0].mxu0
    %2454 = vdwg.mxu0
    %2455 = vmatprep.subr.mxu0 0.0
    %2456 = vmatpush1.msra.mxu0 %v1401
    %2457 = vmatprep.subr.mxu0 0.0
    %2458 = vmatpush1.msra.mxu0 %v1402
    %2459 = vmatprep.subr.mxu0 0.0
    %2460 = vmatpush1.msra.mxu0 %v1403
    %2461 = vmatprep.subr.mxu0 0.0
    %2462 = vmatpush1.msra.mxu0 %v1404
    %2463 = vmatprep.subr.mxu0 0.0
    %2464 = vmatpush1.msra.mxu0 0.0
    %2465 = vmatprep.subr.mxu0 0.0
    %2466 = vmatpush1.msra.mxu0 0.0
    %2467 = vmatprep.subr.mxu0 0.0
    %2468 = vmatpush1.msra.mxu0 0.0
    %2469 = vmatprep.subr.mxu0 0.0
    %2470 = vmatpush1.msra.mxu0 0.0
    %2471 = vmatprep.subr.mxu0 0.0
    %2472 = vmatpush1.msra.mxu0 0.0
    %2473 = vmatprep.subr.mxu0 0.0
    %2474 = vmatpush1.msra.mxu0 0.0
    %2475 = vmatprep.subr.mxu0 0.0
    %2476 = vmatpush1.msra.mxu0 0.0
    %2477 = vmatprep.subr.mxu0 0.0
    %2478 = vmatpush1.msra.mxu0 0.0
    %2479 = vmatprep.subr.mxu0 0.0
    %2480 = vmatpush1.msra.mxu0 0.0
    %2481 = vmatprep.subr.mxu0 0.0
    %2482 = vmatpush1.msra.mxu0 0.0
    %2483 = vmatprep.subr.mxu0 0.0
    %2484 = vmatpush1.msra.mxu0 0.0
    %2485 = vmatprep.subr.mxu0 0.0
    %2486 = vmatpush1.msra.mxu0 0.0
    %2487 = vmatprep.subr.mxu0 0.0
    %2488 = vmatpush1.msra.mxu0 0.0
    %2489 = vmatprep.subr.mxu0 0.0
    %2490 = vmatpush1.msra.mxu0 0.0
    %2491 = vmatprep.subr.mxu0 0.0
    %2492 = vmatpush1.msra.mxu0 0.0
    %2493 = vmatprep.subr.mxu0 0.0
    %2494 = vmatpush1.msra.mxu0 0.0
    %2495 = vmatprep.subr.mxu0 0.0
    %2496 = vmatpush1.msra.mxu0 0.0
    %2497 = vmatprep.subr.mxu0 0.0
    %2498 = vmatpush1.msra.mxu0 0.0
    %2499 = vmatprep.subr.mxu0 0.0
    %2500 = vmatpush1.msra.mxu0 0.0
    %2501 = vmatprep.subr.mxu0 0.0
    %2502 = vmatpush1.msra.mxu0 0.0
    %2503 = vmatprep.subr.mxu0 0.0
    %2504 = vmatpush1.msra.mxu0 0.0
    %2505 = vmatprep.subr.mxu0 0.0
    %2506 = vmatpush1.msra.mxu0 0.0
    %2507 = vmatprep.subr.mxu0 0.0
    %2508 = vmatpush1.msra.mxu0 0.0
    %2509 = vmatprep.subr.mxu0 0.0
    %2510 = vmatpush1.msra.mxu0 0.0
    %2511 = vmatprep.subr.mxu0 0.0
    %2512 = vmatpush1.msra.mxu0 0.0
    %2513 = vmatprep.subr.mxu0 0.0
    %2514 = vmatpush1.msra.mxu0 0.0
    %2515 = vmatprep.subr.mxu0 0.0
    %2516 = vmatpush1.msra.mxu0 0.0
    %2517 = vmatprep.subr.mxu0 0.0
    %2518 = vmatpush1.msra.mxu0 0.0
    %2519 = vmatprep.mubr.f32.mxu0 0.0
    %2520 = vmatmul.mubr.f32.gmra.mrb[0].mxu0 %v1269
    %v2521 = vpop.f32.mrb[0].mxu0
    %v2522 = vadd.f32 0.0, %v2521
    %v2523 = vpop.f32.mrb[0].mxu0
    %2524 = vdwg.mxu0
    %v2525 = vld [vmem:[#allocation8] sm:$0xff]
    %v2526 = vld [vmem:[#allocation8 + $0x8] sm:$0xff]
    %v2527 = vld [vmem:[#allocation8 + $0x10] sm:$0xff]
    %v2528 = vld [vmem:[#allocation8 + $0x18] sm:$0xff]
    %v2529 = vld [vmem:[#allocation8 + $0x20] sm:$0xff]
    %v2530 = vld [vmem:[#allocation8 + $0x28] sm:$0xff]
    %v2531 = vld [vmem:[#allocation8 + $0x30] sm:$0xff]
    %v2532 = vld [vmem:[#allocation8 + $0x38] sm:$0xff]
    %v2533 = vld [vmem:[#allocation8 + $0x40] sm:$0xff]
    %v2534 = vld [vmem:[#allocation8 + $0x48] sm:$0xff]
    %v2535 = vld [vmem:[#allocation8 + $0x50] sm:$0xff]
    %v2536 = vld [vmem:[#allocation8 + $0x58] sm:$0xff]
    %v2537 = vld [vmem:[#allocation8 + $0x60] sm:$0xff]
    %v2538 = vld [vmem:[#allocation8 + $0x68] sm:$0xff]
    %v2539 = vld [vmem:[#allocation8 + $0x70] sm:$0xff]
    %v2540 = vld [vmem:[#allocation8 + $0x78] sm:$0xff]
    %v2541 = vld [vmem:[#allocation8 + $0x80] sm:$0xff]
    %v2542 = vld [vmem:[#allocation8 + $0x88] sm:$0xff]
    %v2543 = vld [vmem:[#allocation8 + $0x90] sm:$0xff]
    %v2544 = vld [vmem:[#allocation8 + $0x98] sm:$0xff]
    %v2545 = vld [vmem:[#allocation8 + $0xa0] sm:$0xff]
    %v2546 = vld [vmem:[#allocation8 + $0xa8] sm:$0xff]
    %v2547 = vld [vmem:[#allocation8 + $0xb0] sm:$0xff]
    %v2548 = vld [vmem:[#allocation8 + $0xb8] sm:$0xff]
    %v2549 = vld [vmem:[#allocation8 + $0xc0] sm:$0xff]
    %v2550 = vld [vmem:[#allocation8 + $0xc8] sm:$0xff]
    %v2551 = vld [vmem:[#allocation8 + $0xd0] sm:$0xff]
    %v2552 = vld [vmem:[#allocation8 + $0xd8] sm:$0xff]
    %v2553 = vld [vmem:[#allocation8 + $0xe0] sm:$0xff]
    %v2554 = vld [vmem:[#allocation8 + $0xe8] sm:$0xff]
    %v2555 = vld [vmem:[#allocation8 + $0xf0] sm:$0xff]
    %v2556 = vld [vmem:[#allocation8 + $0xf8] sm:$0xff]
    %v2557 = vld [vmem:[#allocation8 + $0x100] sm:$0xff]
    %v2558 = vld [vmem:[#allocation8 + $0x108] sm:$0xff]
    %v2559 = vld [vmem:[#allocation8 + $0x110] sm:$0xff]
    %v2560 = vld [vmem:[#allocation8 + $0x118] sm:$0xff]
    %v2561 = vld [vmem:[#allocation8 + $0x120] sm:$0xff]
    %v2562 = vld [vmem:[#allocation8 + $0x128] sm:$0xff]
    %v2563 = vld [vmem:[#allocation8 + $0x130] sm:$0xff]
    %v2564 = vld [vmem:[#allocation8 + $0x138] sm:$0xff]
    %v2565 = vld [vmem:[#allocation8 + $0x140] sm:$0xff]
    %v2566 = vld [vmem:[#allocation8 + $0x148] sm:$0xff]
    %v2567 = vld [vmem:[#allocation8 + $0x150] sm:$0xff]
    %v2568 = vld [vmem:[#allocation8 + $0x158] sm:$0xff]
    %v2569 = vld [vmem:[#allocation8 + $0x160] sm:$0xff]
    %v2570 = vld [vmem:[#allocation8 + $0x168] sm:$0xff]
    %v2571 = vld [vmem:[#allocation8 + $0x170] sm:$0xff]
    %v2572 = vld [vmem:[#allocation8 + $0x178] sm:$0xff]
    %v2573 = vld [vmem:[#allocation8 + $0x180] sm:$0xff]
    %v2574 = vld [vmem:[#allocation8 + $0x188] sm:$0xff]
    %v2575 = vld [vmem:[#allocation8 + $0x190] sm:$0xff]
    %v2576 = vld [vmem:[#allocation8 + $0x198] sm:$0xff]
    %v2577 = vld [vmem:[#allocation8 + $0x1a0] sm:$0xff]
    %v2578 = vld [vmem:[#allocation8 + $0x1a8] sm:$0xff]
    %v2579 = vld [vmem:[#allocation8 + $0x1b0] sm:$0xff]
    %v2580 = vld [vmem:[#allocation8 + $0x1b8] sm:$0xff]
    %v2581 = vld [vmem:[#allocation8 + $0x1c0] sm:$0xff]
    %v2582 = vld [vmem:[#allocation8 + $0x1c8] sm:$0xff]
    %v2583 = vld [vmem:[#allocation8 + $0x1d0] sm:$0xff]
    %v2584 = vld [vmem:[#allocation8 + $0x1d8] sm:$0xff]
    %v2585 = vld [vmem:[#allocation8 + $0x1e0] sm:$0xff]
    %v2586 = vld [vmem:[#allocation8 + $0x1e8] sm:$0xff]
    %v2587 = vld [vmem:[#allocation8 + $0x1f0] sm:$0xff]
    %v2588 = vld [vmem:[#allocation8 + $0x1f8] sm:$0xff]
    %2589 = vmatprep.subr.mxu0 0.0
    %2590 = vmatpush1.msra.mxu0 %v2525
    %2591 = vmatprep.subr.mxu0 0.0
    %2592 = vmatpush1.msra.mxu0 %v2526
    %2593 = vmatprep.subr.mxu0 0.0
    %2594 = vmatpush1.msra.mxu0 %v2527
    %2595 = vmatprep.subr.mxu0 0.0
    %2596 = vmatpush1.msra.mxu0 %v2528
    %2597 = vmatprep.subr.mxu0 0.0
    %2598 = vmatpush1.msra.mxu0 0.0
    %2599 = vmatprep.subr.mxu0 0.0
    %2600 = vmatpush1.msra.mxu0 0.0
    %2601 = vmatprep.subr.mxu0 0.0
    %2602 = vmatpush1.msra.mxu0 0.0
    %2603 = vmatprep.subr.mxu0 0.0
    %2604 = vmatpush1.msra.mxu0 0.0
    %2605 = vmatprep.subr.mxu0 0.0
    %2606 = vmatpush1.msra.mxu0 0.0
    %2607 = vmatprep.subr.mxu0 0.0
    %2608 = vmatpush1.msra.mxu0 0.0
    %2609 = vmatprep.subr.mxu0 0.0
    %2610 = vmatpush1.msra.mxu0 0.0
    %2611 = vmatprep.subr.mxu0 0.0
    %2612 = vmatpush1.msra.mxu0 0.0
    %2613 = vmatprep.subr.mxu0 0.0
    %2614 = vmatpush1.msra.mxu0 0.0
    %2615 = vmatprep.subr.mxu0 0.0
    %2616 = vmatpush1.msra.mxu0 0.0
    %2617 = vmatprep.subr.mxu0 0.0
    %2618 = vmatpush1.msra.mxu0 0.0
    %2619 = vmatprep.subr.mxu0 0.0
    %2620 = vmatpush1.msra.mxu0 0.0
    %2621 = vmatprep.subr.mxu0 0.0
    %2622 = vmatpush1.msra.mxu0 0.0
    %2623 = vmatprep.subr.mxu0 0.0
    %2624 = vmatpush1.msra.mxu0 0.0
    %2625 = vmatprep.subr.mxu0 0.0
    %2626 = vmatpush1.msra.mxu0 0.0
    %2627 = vmatprep.subr.mxu0 0.0
    %2628 = vmatpush1.msra.mxu0 0.0
    %2629 = vmatprep.subr.mxu0 0.0
    %2630 = vmatpush1.msra.mxu0 0.0
    %2631 = vmatprep.subr.mxu0 0.0
    %2632 = vmatpush1.msra.mxu0 0.0
    %2633 = vmatprep.subr.mxu0 0.0
    %2634 = vmatpush1.msra.mxu0 0.0
    %2635 = vmatprep.subr.mxu0 0.0
    %2636 = vmatpush1.msra.mxu0 0.0
    %2637 = vmatprep.subr.mxu0 0.0
    %2638 = vmatpush1.msra.mxu0 0.0
    %2639 = vmatprep.subr.mxu0 0.0
    %2640 = vmatpush1.msra.mxu0 0.0
    %2641 = vmatprep.subr.mxu0 0.0
    %2642 = vmatpush1.msra.mxu0 0.0
    %2643 = vmatprep.subr.mxu0 0.0
    %2644 = vmatpush1.msra.mxu0 0.0
    %2645 = vmatprep.subr.mxu0 0.0
    %2646 = vmatpush1.msra.mxu0 0.0
    %2647 = vmatprep.subr.mxu0 0.0
    %2648 = vmatpush1.msra.mxu0 0.0
    %2649 = vmatprep.subr.mxu0 0.0
    %2650 = vmatpush1.msra.mxu0 0.0
    %2651 = vmatprep.subr.mxu0 0.0
    %2652 = vmatpush1.msra.mxu0 0.0
    %2653 = vmatprep.mubr.f32.mxu0 0.0
    %2654 = vmatmul.mubr.f32.gmra.mrb[0].mxu0 %v174
    %v2655 = vpop.f32.mrb[0].mxu0
    %v2656 = vadd.f32 0.0, %v2655
    %v2657 = vpop.f32.mrb[0].mxu0
    %2658 = vdwg.mxu0
    %2659 = vmatprep.subr.mxu0 0.0
    %2660 = vmatpush1.msra.mxu0 %v2529
    %2661 = vmatprep.subr.mxu0 0.0
    %2662 = vmatpush1.msra.mxu0 %v2530
    %2663 = vmatprep.subr.mxu0 0.0
    %2664 = vmatpush1.msra.mxu0 %v2531
    %2665 = vmatprep.subr.mxu0 0.0
    %2666 = vmatpush1.msra.mxu0 %v2532
    %2667 = vmatprep.subr.mxu0 0.0
    %2668 = vmatpush1.msra.mxu0 0.0
    %2669 = vmatprep.subr.mxu0 0.0
    %2670 = vmatpush1.msra.mxu0 0.0
    %2671 = vmatprep.subr.mxu0 0.0
    %2672 = vmatpush1.msra.mxu0 0.0
    %2673 = vmatprep.subr.mxu0 0.0
    %2674 = vmatpush1.msra.mxu0 0.0
    %2675 = vmatprep.subr.mxu0 0.0
    %2676 = vmatpush1.msra.mxu0 0.0
    %2677 = vmatprep.subr.mxu0 0.0
    %2678 = vmatpush1.msra.mxu0 0.0
    %2679 = vmatprep.subr.mxu0 0.0
    %2680 = vmatpush1.msra.mxu0 0.0
    %2681 = vmatprep.subr.mxu0 0.0
    %2682 = vmatpush1.msra.mxu0 0.0
    %2683 = vmatprep.subr.mxu0 0.0
    %2684 = vmatpush1.msra.mxu0 0.0
    %2685 = vmatprep.subr.mxu0 0.0
    %2686 = vmatpush1.msra.mxu0 0.0
    %2687 = vmatprep.subr.mxu0 0.0
    %2688 = vmatpush1.msra.mxu0 0.0
    %2689 = vmatprep.subr.mxu0 0.0
    %2690 = vmatpush1.msra.mxu0 0.0
    %2691 = vmatprep.subr.mxu0 0.0
    %2692 = vmatpush1.msra.mxu0 0.0
    %2693 = vmatprep.subr.mxu0 0.0
    %2694 = vmatpush1.msra.mxu0 0.0
    %2695 = vmatprep.subr.mxu0 0.0
    %2696 = vmatpush1.msra.mxu0 0.0
    %2697 = vmatprep.subr.mxu0 0.0
    %2698 = vmatpush1.msra.mxu0 0.0
    %2699 = vmatprep.subr.mxu0 0.0
    %2700 = vmatpush1.msra.mxu0 0.0
    %2701 = vmatprep.subr.mxu0 0.0
    %2702 = vmatpush1.msra.mxu0 0.0
    %2703 = vmatprep.subr.mxu0 0.0
    %2704 = vmatpush1.msra.mxu0 0.0
    %2705 = vmatprep.subr.mxu0 0.0
    %2706 = vmatpush1.msra.mxu0 0.0
    %2707 = vmatprep.subr.mxu0 0.0
    %2708 = vmatpush1.msra.mxu0 0.0
    %2709 = vmatprep.subr.mxu0 0.0
    %2710 = vmatpush1.msra.mxu0 0.0
    %2711 = vmatprep.subr.mxu0 0.0
    %2712 = vmatpush1.msra.mxu0 0.0
    %2713 = vmatprep.subr.mxu0 0.0
    %2714 = vmatpush1.msra.mxu0 0.0
    %2715 = vmatprep.subr.mxu0 0.0
    %2716 = vmatpush1.msra.mxu0 0.0
    %2717 = vmatprep.subr.mxu0 0.0
    %2718 = vmatpush1.msra.mxu0 0.0
    %2719 = vmatprep.subr.mxu0 0.0
    %2720 = vmatpush1.msra.mxu0 0.0
    %2721 = vmatprep.subr.mxu0 0.0
    %2722 = vmatpush1.msra.mxu0 0.0
    %2723 = vmatprep.mubr.f32.mxu0 0.0
    %2724 = vmatmul.mubr.f32.gmra.mrb[0].mxu0 %v247
    %v2725 = vpop.f32.mrb[0].mxu0
    %v2726 = vadd.f32 0.0, %v2725
    %v2727 = vpop.f32.mrb[0].mxu0
    %2728 = vdwg.mxu0
    %2729 = vmatprep.subr.mxu0 0.0
    %2730 = vmatpush1.msra.mxu0 %v2533
    %2731 = vmatprep.subr.mxu0 0.0
    %2732 = vmatpush1.msra.mxu0 %v2534
    %2733 = vmatprep.subr.mxu0 0.0
    %2734 = vmatpush1.msra.mxu0 %v2535
    %2735 = vmatprep.subr.mxu0 0.0
    %2736 = vmatpush1.msra.mxu0 %v2536
    %2737 = vmatprep.subr.mxu0 0.0
    %2738 = vmatpush1.msra.mxu0 0.0
    %2739 = vmatprep.subr.mxu0 0.0
    %2740 = vmatpush1.msra.mxu0 0.0
    %2741 = vmatprep.subr.mxu0 0.0
    %2742 = vmatpush1.msra.mxu0 0.0
    %2743 = vmatprep.subr.mxu0 0.0
    %2744 = vmatpush1.msra.mxu0 0.0
    %2745 = vmatprep.subr.mxu0 0.0
    %2746 = vmatpush1.msra.mxu0 0.0
    %2747 = vmatprep.subr.mxu0 0.0
    %2748 = vmatpush1.msra.mxu0 0.0
    %2749 = vmatprep.subr.mxu0 0.0
    %2750 = vmatpush1.msra.mxu0 0.0
    %2751 = vmatprep.subr.mxu0 0.0
    %2752 = vmatpush1.msra.mxu0 0.0
    %2753 = vmatprep.subr.mxu0 0.0
    %2754 = vmatpush1.msra.mxu0 0.0
    %2755 = vmatprep.subr.mxu0 0.0
    %2756 = vmatpush1.msra.mxu0 0.0
    %2757 = vmatprep.subr.mxu0 0.0
    %2758 = vmatpush1.msra.mxu0 0.0
    %2759 = vmatprep.subr.mxu0 0.0
    %2760 = vmatpush1.msra.mxu0 0.0
    %2761 = vmatprep.subr.mxu0 0.0
    %2762 = vmatpush1.msra.mxu0 0.0
    %2763 = vmatprep.subr.mxu0 0.0
    %2764 = vmatpush1.msra.mxu0 0.0
    %2765 = vmatprep.subr.mxu0 0.0
    %2766 = vmatpush1.msra.mxu0 0.0
    %2767 = vmatprep.subr.mxu0 0.0
    %2768 = vmatpush1.msra.mxu0 0.0
    %2769 = vmatprep.subr.mxu0 0.0
    %2770 = vmatpush1.msra.mxu0 0.0
    %2771 = vmatprep.subr.mxu0 0.0
    %2772 = vmatpush1.msra.mxu0 0.0
    %2773 = vmatprep.subr.mxu0 0.0
    %2774 = vmatpush1.msra.mxu0 0.0
    %2775 = vmatprep.subr.mxu0 0.0
    %2776 = vmatpush1.msra.mxu0 0.0
    %2777 = vmatprep.subr.mxu0 0.0
    %2778 = vmatpush1.msra.mxu0 0.0
    %2779 = vmatprep.subr.mxu0 0.0
    %2780 = vmatpush1.msra.mxu0 0.0
    %2781 = vmatprep.subr.mxu0 0.0
    %2782 = vmatpush1.msra.mxu0 0.0
    %2783 = vmatprep.subr.mxu0 0.0
    %2784 = vmatpush1.msra.mxu0 0.0
    %2785 = vmatprep.subr.mxu0 0.0
    %2786 = vmatpush1.msra.mxu0 0.0
    %2787 = vmatprep.subr.mxu0 0.0
    %2788 = vmatpush1.msra.mxu0 0.0
    %2789 = vmatprep.subr.mxu0 0.0
    %2790 = vmatpush1.msra.mxu0 0.0
    %2791 = vmatprep.subr.mxu0 0.0
    %2792 = vmatpush1.msra.mxu0 0.0
    %2793 = vmatprep.mubr.f32.mxu0 0.0
    %2794 = vmatmul.mubr.f32.gmra.mrb[0].mxu0 %v320
    %v2795 = vpop.f32.mrb[0].mxu0
    %v2796 = vadd.f32 0.0, %v2795
    %v2797 = vpop.f32.mrb[0].mxu0
    %2798 = vdwg.mxu0
    %2799 = vmatprep.subr.mxu0 0.0
    %2800 = vmatpush1.msra.mxu0 %v2537
    %2801 = vmatprep.subr.mxu0 0.0
    %2802 = vmatpush1.msra.mxu0 %v2538
    %2803 = vmatprep.subr.mxu0 0.0
    %2804 = vmatpush1.msra.mxu0 %v2539
    %2805 = vmatprep.subr.mxu0 0.0
    %2806 = vmatpush1.msra.mxu0 %v2540
    %2807 = vmatprep.subr.mxu0 0.0
    %2808 = vmatpush1.msra.mxu0 0.0
    %2809 = vmatprep.subr.mxu0 0.0
    %2810 = vmatpush1.msra.mxu0 0.0
    %2811 = vmatprep.subr.mxu0 0.0
    %2812 = vmatpush1.msra.mxu0 0.0
    %2813 = vmatprep.subr.mxu0 0.0
    %2814 = vmatpush1.msra.mxu0 0.0
    %2815 = vmatprep.subr.mxu0 0.0
    %2816 = vmatpush1.msra.mxu0 0.0
    %2817 = vmatprep.subr.mxu0 0.0
    %2818 = vmatpush1.msra.mxu0 0.0
    %2819 = vmatprep.subr.mxu0 0.0
    %2820 = vmatpush1.msra.mxu0 0.0
    %2821 = vmatprep.subr.mxu0 0.0
    %2822 = vmatpush1.msra.mxu0 0.0
    %2823 = vmatprep.subr.mxu0 0.0
    %2824 = vmatpush1.msra.mxu0 0.0
    %2825 = vmatprep.subr.mxu0 0.0
    %2826 = vmatpush1.msra.mxu0 0.0
    %2827 = vmatprep.subr.mxu0 0.0
    %2828 = vmatpush1.msra.mxu0 0.0
    %2829 = vmatprep.subr.mxu0 0.0
    %2830 = vmatpush1.msra.mxu0 0.0
    %2831 = vmatprep.subr.mxu0 0.0
    %2832 = vmatpush1.msra.mxu0 0.0
    %2833 = vmatprep.subr.mxu0 0.0
    %2834 = vmatpush1.msra.mxu0 0.0
    %2835 = vmatprep.subr.mxu0 0.0
    %2836 = vmatpush1.msra.mxu0 0.0
    %2837 = vmatprep.subr.mxu0 0.0
    %2838 = vmatpush1.msra.mxu0 0.0
    %2839 = vmatprep.subr.mxu0 0.0
    %2840 = vmatpush1.msra.mxu0 0.0
    %2841 = vmatprep.subr.mxu0 0.0
    %2842 = vmatpush1.msra.mxu0 0.0
    %2843 = vmatprep.subr.mxu0 0.0
    %2844 = vmatpush1.msra.mxu0 0.0
    %2845 = vmatprep.subr.mxu0 0.0
    %2846 = vmatpush1.msra.mxu0 0.0
    %2847 = vmatprep.subr.mxu0 0.0
    %2848 = vmatpush1.msra.mxu0 0.0
    %2849 = vmatprep.subr.mxu0 0.0
    %2850 = vmatpush1.msra.mxu0 0.0
    %2851 = vmatprep.subr.mxu0 0.0
    %2852 = vmatpush1.msra.mxu0 0.0
    %2853 = vmatprep.subr.mxu0 0.0
    %2854 = vmatpush1.msra.mxu0 0.0
    %2855 = vmatprep.subr.mxu0 0.0
    %2856 = vmatpush1.msra.mxu0 0.0
    %2857 = vmatprep.subr.mxu0 0.0
    %2858 = vmatpush1.msra.mxu0 0.0
    %2859 = vmatprep.subr.mxu0 0.0
    %2860 = vmatpush1.msra.mxu0 0.0
    %2861 = vmatprep.subr.mxu0 0.0
    %2862 = vmatpush1.msra.mxu0 0.0
    %2863 = vmatprep.mubr.f32.mxu0 0.0
    %2864 = vmatmul.mubr.f32.gmra.mrb[0].mxu0 %v393
    %v2865 = vpop.f32.mrb[0].mxu0
    %v2866 = vadd.f32 0.0, %v2865
    %v2867 = vpop.f32.mrb[0].mxu0
    %2868 = vdwg.mxu0
    %2869 = vmatprep.subr.mxu0 0.0
    %2870 = vmatpush1.msra.mxu0 %v2541
    %2871 = vmatprep.subr.mxu0 0.0
    %2872 = vmatpush1.msra.mxu0 %v2542
    %2873 = vmatprep.subr.mxu0 0.0
    %2874 = vmatpush1.msra.mxu0 %v2543
    %2875 = vmatprep.subr.mxu0 0.0
    %2876 = vmatpush1.msra.mxu0 %v2544
    %2877 = vmatprep.subr.mxu0 0.0
    %2878 = vmatpush1.msra.mxu0 0.0
    %2879 = vmatprep.subr.mxu0 0.0
    %2880 = vmatpush1.msra.mxu0 0.0
    %2881 = vmatprep.subr.mxu0 0.0
    %2882 = vmatpush1.msra.mxu0 0.0
    %2883 = vmatprep.subr.mxu0 0.0
    %2884 = vmatpush1.msra.mxu0 0.0
    %2885 = vmatprep.subr.mxu0 0.0
    %2886 = vmatpush1.msra.mxu0 0.0
    %2887 = vmatprep.subr.mxu0 0.0
    %2888 = vmatpush1.msra.mxu0 0.0
    %2889 = vmatprep.subr.mxu0 0.0
    %2890 = vmatpush1.msra.mxu0 0.0
    %2891 = vmatprep.subr.mxu0 0.0
    %2892 = vmatpush1.msra.mxu0 0.0
    %2893 = vmatprep.subr.mxu0 0.0
    %2894 = vmatpush1.msra.mxu0 0.0
    %2895 = vmatprep.subr.mxu0 0.0
    %2896 = vmatpush1.msra.mxu0 0.0
    %2897 = vmatprep.subr.mxu0 0.0
    %2898 = vmatpush1.msra.mxu0 0.0
    %2899 = vmatprep.subr.mxu0 0.0
    %2900 = vmatpush1.msra.mxu0 0.0
    %2901 = vmatprep.subr.mxu0 0.0
    %2902 = vmatpush1.msra.mxu0 0.0
    %2903 = vmatprep.subr.mxu0 0.0
    %2904 = vmatpush1.msra.mxu0 0.0
    %2905 = vmatprep.subr.mxu0 0.0
    %2906 = vmatpush1.msra.mxu0 0.0
    %2907 = vmatprep.subr.mxu0 0.0
    %2908 = vmatpush1.msra.mxu0 0.0
    %2909 = vmatprep.subr.mxu0 0.0
    %2910 = vmatpush1.msra.mxu0 0.0
    %2911 = vmatprep.subr.mxu0 0.0
    %2912 = vmatpush1.msra.mxu0 0.0
    %2913 = vmatprep.subr.mxu0 0.0
    %2914 = vmatpush1.msra.mxu0 0.0
    %2915 = vmatprep.subr.mxu0 0.0
    %2916 = vmatpush1.msra.mxu0 0.0
    %2917 = vmatprep.subr.mxu0 0.0
    %2918 = vmatpush1.msra.mxu0 0.0
    %2919 = vmatprep.subr.mxu0 0.0
    %2920 = vmatpush1.msra.mxu0 0.0
    %2921 = vmatprep.subr.mxu0 0.0
    %2922 = vmatpush1.msra.mxu0 0.0
    %2923 = vmatprep.subr.mxu0 0.0
    %2924 = vmatpush1.msra.mxu0 0.0
    %2925 = vmatprep.subr.mxu0 0.0
    %2926 = vmatpush1.msra.mxu0 0.0
    %2927 = vmatprep.subr.mxu0 0.0
    %2928 = vmatpush1.msra.mxu0 0.0
    %2929 = vmatprep.subr.mxu0 0.0
    %2930 = vmatpush1.msra.mxu0 0.0
    %2931 = vmatprep.subr.mxu0 0.0
    %2932 = vmatpush1.msra.mxu0 0.0
    %2933 = vmatprep.mubr.f32.mxu0 0.0
    %2934 = vmatmul.mubr.f32.gmra.mrb[0].mxu0 %v466
    %v2935 = vpop.f32.mrb[0].mxu0
    %v2936 = vadd.f32 0.0, %v2935
    %v2937 = vpop.f32.mrb[0].mxu0
    %2938 = vdwg.mxu0
    %2939 = vmatprep.subr.mxu0 0.0
    %2940 = vmatpush1.msra.mxu0 %v2545
    %2941 = vmatprep.subr.mxu0 0.0
    %2942 = vmatpush1.msra.mxu0 %v2546
    %2943 = vmatprep.subr.mxu0 0.0
    %2944 = vmatpush1.msra.mxu0 %v2547
    %2945 = vmatprep.subr.mxu0 0.0
    %2946 = vmatpush1.msra.mxu0 %v2548
    %2947 = vmatprep.subr.mxu0 0.0
    %2948 = vmatpush1.msra.mxu0 0.0
    %2949 = vmatprep.subr.mxu0 0.0
    %2950 = vmatpush1.msra.mxu0 0.0
    %2951 = vmatprep.subr.mxu0 0.0
    %2952 = vmatpush1.msra.mxu0 0.0
    %2953 = vmatprep.subr.mxu0 0.0
    %2954 = vmatpush1.msra.mxu0 0.0
    %2955 = vmatprep.subr.mxu0 0.0
    %2956 = vmatpush1.msra.mxu0 0.0
    %2957 = vmatprep.subr.mxu0 0.0
    %2958 = vmatpush1.msra.mxu0 0.0
    %2959 = vmatprep.subr.mxu0 0.0
    %2960 = vmatpush1.msra.mxu0 0.0
    %2961 = vmatprep.subr.mxu0 0.0
    %2962 = vmatpush1.msra.mxu0 0.0
    %2963 = vmatprep.subr.mxu0 0.0
    %2964 = vmatpush1.msra.mxu0 0.0
    %2965 = vmatprep.subr.mxu0 0.0
    %2966 = vmatpush1.msra.mxu0 0.0
    %2967 = vmatprep.subr.mxu0 0.0
    %2968 = vmatpush1.msra.mxu0 0.0
    %2969 = vmatprep.subr.mxu0 0.0
    %2970 = vmatpush1.msra.mxu0 0.0
    %2971 = vmatprep.subr.mxu0 0.0
    %2972 = vmatpush1.msra.mxu0 0.0
    %2973 = vmatprep.subr.mxu0 0.0
    %2974 = vmatpush1.msra.mxu0 0.0
    %2975 = vmatprep.subr.mxu0 0.0
    %2976 = vmatpush1.msra.mxu0 0.0
    %2977 = vmatprep.subr.mxu0 0.0
    %2978 = vmatpush1.msra.mxu0 0.0
    %2979 = vmatprep.subr.mxu0 0.0
    %2980 = vmatpush1.msra.mxu0 0.0
    %2981 = vmatprep.subr.mxu0 0.0
    %2982 = vmatpush1.msra.mxu0 0.0
    %2983 = vmatprep.subr.mxu0 0.0
    %2984 = vmatpush1.msra.mxu0 0.0
    %2985 = vmatprep.subr.mxu0 0.0
    %2986 = vmatpush1.msra.mxu0 0.0
    %2987 = vmatprep.subr.mxu0 0.0
    %2988 = vmatpush1.msra.mxu0 0.0
    %2989 = vmatprep.subr.mxu0 0.0
    %2990 = vmatpush1.msra.mxu0 0.0
    %2991 = vmatprep.subr.mxu0 0.0
    %2992 = vmatpush1.msra.mxu0 0.0
    %2993 = vmatprep.subr.mxu0 0.0
    %2994 = vmatpush1.msra.mxu0 0.0
    %2995 = vmatprep.subr.mxu0 0.0
    %2996 = vmatpush1.msra.mxu0 0.0
    %2997 = vmatprep.subr.mxu0 0.0
    %2998 = vmatpush1.msra.mxu0 0.0
    %2999 = vmatprep.subr.mxu0 0.0
    %3000 = vmatpush1.msra.mxu0 0.0
    %3001 = vmatprep.subr.mxu0 0.0
    %3002 = vmatpush1.msra.mxu0 0.0
    %3003 = vmatprep.mubr.f32.mxu0 0.0
    %3004 = vmatmul.mubr.f32.gmra.mrb[0].mxu0 %v539
    %v3005 = vpop.f32.mrb[0].mxu0
    %v3006 = vadd.f32 0.0, %v3005
    %v3007 = vpop.f32.mrb[0].mxu0
    %3008 = vdwg.mxu0
    %3009 = vmatprep.subr.mxu0 0.0
    %3010 = vmatpush1.msra.mxu0 %v2549
    %3011 = vmatprep.subr.mxu0 0.0
    %3012 = vmatpush1.msra.mxu0 %v2550
    %3013 = vmatprep.subr.mxu0 0.0
    %3014 = vmatpush1.msra.mxu0 %v2551
    %3015 = vmatprep.subr.mxu0 0.0
    %3016 = vmatpush1.msra.mxu0 %v2552
    %3017 = vmatprep.subr.mxu0 0.0
    %3018 = vmatpush1.msra.mxu0 0.0
    %3019 = vmatprep.subr.mxu0 0.0
    %3020 = vmatpush1.msra.mxu0 0.0
    %3021 = vmatprep.subr.mxu0 0.0
    %3022 = vmatpush1.msra.mxu0 0.0
    %3023 = vmatprep.subr.mxu0 0.0
    %3024 = vmatpush1.msra.mxu0 0.0
    %3025 = vmatprep.subr.mxu0 0.0
    %3026 = vmatpush1.msra.mxu0 0.0
    %3027 = vmatprep.subr.mxu0 0.0
    %3028 = vmatpush1.msra.mxu0 0.0
    %3029 = vmatprep.subr.mxu0 0.0
    %3030 = vmatpush1.msra.mxu0 0.0
    %3031 = vmatprep.subr.mxu0 0.0
    %3032 = vmatpush1.msra.mxu0 0.0
    %3033 = vmatprep.subr.mxu0 0.0
    %3034 = vmatpush1.msra.mxu0 0.0
    %3035 = vmatprep.subr.mxu0 0.0
    %3036 = vmatpush1.msra.mxu0 0.0
    %3037 = vmatprep.subr.mxu0 0.0
    %3038 = vmatpush1.msra.mxu0 0.0
    %3039 = vmatprep.subr.mxu0 0.0
    %3040 = vmatpush1.msra.mxu0 0.0
    %3041 = vmatprep.subr.mxu0 0.0
    %3042 = vmatpush1.msra.mxu0 0.0
    %3043 = vmatprep.subr.mxu0 0.0
    %3044 = vmatpush1.msra.mxu0 0.0
    %3045 = vmatprep.subr.mxu0 0.0
    %3046 = vmatpush1.msra.mxu0 0.0
    %3047 = vmatprep.subr.mxu0 0.0
    %3048 = vmatpush1.msra.mxu0 0.0
    %3049 = vmatprep.subr.mxu0 0.0
    %3050 = vmatpush1.msra.mxu0 0.0
    %3051 = vmatprep.subr.mxu0 0.0
    %3052 = vmatpush1.msra.mxu0 0.0
    %3053 = vmatprep.subr.mxu0 0.0
    %3054 = vmatpush1.msra.mxu0 0.0
    %3055 = vmatprep.subr.mxu0 0.0
    %3056 = vmatpush1.msra.mxu0 0.0
    %3057 = vmatprep.subr.mxu0 0.0
    %3058 = vmatpush1.msra.mxu0 0.0
    %3059 = vmatprep.subr.mxu0 0.0
    %3060 = vmatpush1.msra.mxu0 0.0
    %3061 = vmatprep.subr.mxu0 0.0
    %3062 = vmatpush1.msra.mxu0 0.0
    %3063 = vmatprep.subr.mxu0 0.0
    %3064 = vmatpush1.msra.mxu0 0.0
    %3065 = vmatprep.subr.mxu0 0.0
    %3066 = vmatpush1.msra.mxu0 0.0
    %3067 = vmatprep.subr.mxu0 0.0
    %3068 = vmatpush1.msra.mxu0 0.0
    %3069 = vmatprep.subr.mxu0 0.0
    %3070 = vmatpush1.msra.mxu0 0.0
    %3071 = vmatprep.subr.mxu0 0.0
    %3072 = vmatpush1.msra.mxu0 0.0
    %3073 = vmatprep.mubr.f32.mxu0 0.0
    %3074 = vmatmul.mubr.f32.gmra.mrb[0].mxu0 %v612
    %v3075 = vpop.f32.mrb[0].mxu0
    %v3076 = vadd.f32 0.0, %v3075
    %v3077 = vpop.f32.mrb[0].mxu0
    %3078 = vdwg.mxu0
    %3079 = vmatprep.subr.mxu0 0.0
    %3080 = vmatpush1.msra.mxu0 %v2553
    %3081 = vmatprep.subr.mxu0 0.0
    %3082 = vmatpush1.msra.mxu0 %v2554
    %3083 = vmatprep.subr.mxu0 0.0
    %3084 = vmatpush1.msra.mxu0 %v2555
    %3085 = vmatprep.subr.mxu0 0.0
    %3086 = vmatpush1.msra.mxu0 %v2556
    %3087 = vmatprep.subr.mxu0 0.0
    %3088 = vmatpush1.msra.mxu0 0.0
    %3089 = vmatprep.subr.mxu0 0.0
    %3090 = vmatpush1.msra.mxu0 0.0
    %3091 = vmatprep.subr.mxu0 0.0
    %3092 = vmatpush1.msra.mxu0 0.0
    %3093 = vmatprep.subr.mxu0 0.0
    %3094 = vmatpush1.msra.mxu0 0.0
    %3095 = vmatprep.subr.mxu0 0.0
    %3096 = vmatpush1.msra.mxu0 0.0
    %3097 = vmatprep.subr.mxu0 0.0
    %3098 = vmatpush1.msra.mxu0 0.0
    %3099 = vmatprep.subr.mxu0 0.0
    %3100 = vmatpush1.msra.mxu0 0.0
    %3101 = vmatprep.subr.mxu0 0.0
    %3102 = vmatpush1.msra.mxu0 0.0
    %3103 = vmatprep.subr.mxu0 0.0
    %3104 = vmatpush1.msra.mxu0 0.0
    %3105 = vmatprep.subr.mxu0 0.0
    %3106 = vmatpush1.msra.mxu0 0.0
    %3107 = vmatprep.subr.mxu0 0.0
    %3108 = vmatpush1.msra.mxu0 0.0
    %3109 = vmatprep.subr.mxu0 0.0
    %3110 = vmatpush1.msra.mxu0 0.0
    %3111 = vmatprep.subr.mxu0 0.0
    %3112 = vmatpush1.msra.mxu0 0.0
    %3113 = vmatprep.subr.mxu0 0.0
    %3114 = vmatpush1.msra.mxu0 0.0
    %3115 = vmatprep.subr.mxu0 0.0
    %3116 = vmatpush1.msra.mxu0 0.0
    %3117 = vmatprep.subr.mxu0 0.0
    %3118 = vmatpush1.msra.mxu0 0.0
    %3119 = vmatprep.subr.mxu0 0.0
    %3120 = vmatpush1.msra.mxu0 0.0
    %3121 = vmatprep.subr.mxu0 0.0
    %3122 = vmatpush1.msra.mxu0 0.0
    %3123 = vmatprep.subr.mxu0 0.0
    %3124 = vmatpush1.msra.mxu0 0.0
    %3125 = vmatprep.subr.mxu0 0.0
    %3126 = vmatpush1.msra.mxu0 0.0
    %3127 = vmatprep.subr.mxu0 0.0
    %3128 = vmatpush1.msra.mxu0 0.0
    %3129 = vmatprep.subr.mxu0 0.0
    %3130 = vmatpush1.msra.mxu0 0.0
    %3131 = vmatprep.subr.mxu0 0.0
    %3132 = vmatpush1.msra.mxu0 0.0
    %3133 = vmatprep.subr.mxu0 0.0
    %3134 = vmatpush1.msra.mxu0 0.0
    %3135 = vmatprep.subr.mxu0 0.0
    %3136 = vmatpush1.msra.mxu0 0.0
    %3137 = vmatprep.subr.mxu0 0.0
    %3138 = vmatpush1.msra.mxu0 0.0
    %3139 = vmatprep.subr.mxu0 0.0
    %3140 = vmatpush1.msra.mxu0 0.0
    %3141 = vmatprep.subr.mxu0 0.0
    %3142 = vmatpush1.msra.mxu0 0.0
    %3143 = vmatprep.mubr.f32.mxu0 0.0
    %3144 = vmatmul.mubr.f32.gmra.mrb[0].mxu0 %v685
    %v3145 = vpop.f32.mrb[0].mxu0
    %v3146 = vadd.f32 0.0, %v3145
    %v3147 = vpop.f32.mrb[0].mxu0
    %3148 = vdwg.mxu0
    %3149 = vmatprep.subr.mxu0 0.0
    %3150 = vmatpush1.msra.mxu0 %v2557
    %3151 = vmatprep.subr.mxu0 0.0
    %3152 = vmatpush1.msra.mxu0 %v2558
    %3153 = vmatprep.subr.mxu0 0.0
    %3154 = vmatpush1.msra.mxu0 %v2559
    %3155 = vmatprep.subr.mxu0 0.0
    %3156 = vmatpush1.msra.mxu0 %v2560
    %3157 = vmatprep.subr.mxu0 0.0
    %3158 = vmatpush1.msra.mxu0 0.0
    %3159 = vmatprep.subr.mxu0 0.0
    %3160 = vmatpush1.msra.mxu0 0.0
    %3161 = vmatprep.subr.mxu0 0.0
    %3162 = vmatpush1.msra.mxu0 0.0
    %3163 = vmatprep.subr.mxu0 0.0
    %3164 = vmatpush1.msra.mxu0 0.0
    %3165 = vmatprep.subr.mxu0 0.0
    %3166 = vmatpush1.msra.mxu0 0.0
    %3167 = vmatprep.subr.mxu0 0.0
    %3168 = vmatpush1.msra.mxu0 0.0
    %3169 = vmatprep.subr.mxu0 0.0
    %3170 = vmatpush1.msra.mxu0 0.0
    %3171 = vmatprep.subr.mxu0 0.0
    %3172 = vmatpush1.msra.mxu0 0.0
    %3173 = vmatprep.subr.mxu0 0.0
    %3174 = vmatpush1.msra.mxu0 0.0
    %3175 = vmatprep.subr.mxu0 0.0
    %3176 = vmatpush1.msra.mxu0 0.0
    %3177 = vmatprep.subr.mxu0 0.0
    %3178 = vmatpush1.msra.mxu0 0.0
    %3179 = vmatprep.subr.mxu0 0.0
    %3180 = vmatpush1.msra.mxu0 0.0
    %3181 = vmatprep.subr.mxu0 0.0
    %3182 = vmatpush1.msra.mxu0 0.0
    %3183 = vmatprep.subr.mxu0 0.0
    %3184 = vmatpush1.msra.mxu0 0.0
    %3185 = vmatprep.subr.mxu0 0.0
    %3186 = vmatpush1.msra.mxu0 0.0
    %3187 = vmatprep.subr.mxu0 0.0
    %3188 = vmatpush1.msra.mxu0 0.0
    %3189 = vmatprep.subr.mxu0 0.0
    %3190 = vmatpush1.msra.mxu0 0.0
    %3191 = vmatprep.subr.mxu0 0.0
    %3192 = vmatpush1.msra.mxu0 0.0
    %3193 = vmatprep.subr.mxu0 0.0
    %3194 = vmatpush1.msra.mxu0 0.0
    %3195 = vmatprep.subr.mxu0 0.0
    %3196 = vmatpush1.msra.mxu0 0.0
    %3197 = vmatprep.subr.mxu0 0.0
    %3198 = vmatpush1.msra.mxu0 0.0
    %3199 = vmatprep.subr.mxu0 0.0
    %3200 = vmatpush1.msra.mxu0 0.0
    %3201 = vmatprep.subr.mxu0 0.0
    %3202 = vmatpush1.msra.mxu0 0.0
    %3203 = vmatprep.subr.mxu0 0.0
    %3204 = vmatpush1.msra.mxu0 0.0
    %3205 = vmatprep.subr.mxu0 0.0
    %3206 = vmatpush1.msra.mxu0 0.0
    %3207 = vmatprep.subr.mxu0 0.0
    %3208 = vmatpush1.msra.mxu0 0.0
    %3209 = vmatprep.subr.mxu0 0.0
    %3210 = vmatpush1.msra.mxu0 0.0
    %3211 = vmatprep.subr.mxu0 0.0
    %3212 = vmatpush1.msra.mxu0 0.0
    %3213 = vmatprep.mubr.f32.mxu0 0.0
    %3214 = vmatmul.mubr.f32.gmra.mrb[0].mxu0 %v758
    %v3215 = vpop.f32.mrb[0].mxu0
    %v3216 = vadd.f32 0.0, %v3215
    %v3217 = vpop.f32.mrb[0].mxu0
    %3218 = vdwg.mxu0
    %3219 = vmatprep.subr.mxu0 0.0
    %3220 = vmatpush1.msra.mxu0 %v2561
    %3221 = vmatprep.subr.mxu0 0.0
    %3222 = vmatpush1.msra.mxu0 %v2562
    %3223 = vmatprep.subr.mxu0 0.0
    %3224 = vmatpush1.msra.mxu0 %v2563
    %3225 = vmatprep.subr.mxu0 0.0
    %3226 = vmatpush1.msra.mxu0 %v2564
    %3227 = vmatprep.subr.mxu0 0.0
    %3228 = vmatpush1.msra.mxu0 0.0
    %3229 = vmatprep.subr.mxu0 0.0
    %3230 = vmatpush1.msra.mxu0 0.0
    %3231 = vmatprep.subr.mxu0 0.0
    %3232 = vmatpush1.msra.mxu0 0.0
    %3233 = vmatprep.subr.mxu0 0.0
    %3234 = vmatpush1.msra.mxu0 0.0
    %3235 = vmatprep.subr.mxu0 0.0
    %3236 = vmatpush1.msra.mxu0 0.0
    %3237 = vmatprep.subr.mxu0 0.0
    %3238 = vmatpush1.msra.mxu0 0.0
    %3239 = vmatprep.subr.mxu0 0.0
    %3240 = vmatpush1.msra.mxu0 0.0
    %3241 = vmatprep.subr.mxu0 0.0
    %3242 = vmatpush1.msra.mxu0 0.0
    %3243 = vmatprep.subr.mxu0 0.0
    %3244 = vmatpush1.msra.mxu0 0.0
    %3245 = vmatprep.subr.mxu0 0.0
    %3246 = vmatpush1.msra.mxu0 0.0
    %3247 = vmatprep.subr.mxu0 0.0
    %3248 = vmatpush1.msra.mxu0 0.0
    %3249 = vmatprep.subr.mxu0 0.0
    %3250 = vmatpush1.msra.mxu0 0.0
    %3251 = vmatprep.subr.mxu0 0.0
    %3252 = vmatpush1.msra.mxu0 0.0
    %3253 = vmatprep.subr.mxu0 0.0
    %3254 = vmatpush1.msra.mxu0 0.0
    %3255 = vmatprep.subr.mxu0 0.0
    %3256 = vmatpush1.msra.mxu0 0.0
    %3257 = vmatprep.subr.mxu0 0.0
    %3258 = vmatpush1.msra.mxu0 0.0
    %3259 = vmatprep.subr.mxu0 0.0
    %3260 = vmatpush1.msra.mxu0 0.0
    %3261 = vmatprep.subr.mxu0 0.0
    %3262 = vmatpush1.msra.mxu0 0.0
    %3263 = vmatprep.subr.mxu0 0.0
    %3264 = vmatpush1.msra.mxu0 0.0
    %3265 = vmatprep.subr.mxu0 0.0
    %3266 = vmatpush1.msra.mxu0 0.0
    %3267 = vmatprep.subr.mxu0 0.0
    %3268 = vmatpush1.msra.mxu0 0.0
    %3269 = vmatprep.subr.mxu0 0.0
    %3270 = vmatpush1.msra.mxu0 0.0
    %3271 = vmatprep.subr.mxu0 0.0
    %3272 = vmatpush1.msra.mxu0 0.0
    %3273 = vmatprep.subr.mxu0 0.0
    %3274 = vmatpush1.msra.mxu0 0.0
    %3275 = vmatprep.subr.mxu0 0.0
    %3276 = vmatpush1.msra.mxu0 0.0
    %3277 = vmatprep.subr.mxu0 0.0
    %3278 = vmatpush1.msra.mxu0 0.0
    %3279 = vmatprep.subr.mxu0 0.0
    %3280 = vmatpush1.msra.mxu0 0.0
    %3281 = vmatprep.subr.mxu0 0.0
    %3282 = vmatpush1.msra.mxu0 0.0
    %3283 = vmatprep.mubr.f32.mxu0 0.0
    %3284 = vmatmul.mubr.f32.gmra.mrb[0].mxu0 %v831
    %v3285 = vpop.f32.mrb[0].mxu0
    %v3286 = vadd.f32 0.0, %v3285
    %v3287 = vpop.f32.mrb[0].mxu0
    %3288 = vdwg.mxu0
    %3289 = vmatprep.subr.mxu0 0.0
    %3290 = vmatpush1.msra.mxu0 %v2565
    %3291 = vmatprep.subr.mxu0 0.0
    %3292 = vmatpush1.msra.mxu0 %v2566
    %3293 = vmatprep.subr.mxu0 0.0
    %3294 = vmatpush1.msra.mxu0 %v2567
    %3295 = vmatprep.subr.mxu0 0.0
    %3296 = vmatpush1.msra.mxu0 %v2568
    %3297 = vmatprep.subr.mxu0 0.0
    %3298 = vmatpush1.msra.mxu0 0.0
    %3299 = vmatprep.subr.mxu0 0.0
    %3300 = vmatpush1.msra.mxu0 0.0
    %3301 = vmatprep.subr.mxu0 0.0
    %3302 = vmatpush1.msra.mxu0 0.0
    %3303 = vmatprep.subr.mxu0 0.0
    %3304 = vmatpush1.msra.mxu0 0.0
    %3305 = vmatprep.subr.mxu0 0.0
    %3306 = vmatpush1.msra.mxu0 0.0
    %3307 = vmatprep.subr.mxu0 0.0
    %3308 = vmatpush1.msra.mxu0 0.0
    %3309 = vmatprep.subr.mxu0 0.0
    %3310 = vmatpush1.msra.mxu0 0.0
    %3311 = vmatprep.subr.mxu0 0.0
    %3312 = vmatpush1.msra.mxu0 0.0
    %3313 = vmatprep.subr.mxu0 0.0
    %3314 = vmatpush1.msra.mxu0 0.0
    %3315 = vmatprep.subr.mxu0 0.0
    %3316 = vmatpush1.msra.mxu0 0.0
    %3317 = vmatprep.subr.mxu0 0.0
    %3318 = vmatpush1.msra.mxu0 0.0
    %3319 = vmatprep.subr.mxu0 0.0
    %3320 = vmatpush1.msra.mxu0 0.0
    %3321 = vmatprep.subr.mxu0 0.0
    %3322 = vmatpush1.msra.mxu0 0.0
    %3323 = vmatprep.subr.mxu0 0.0
    %3324 = vmatpush1.msra.mxu0 0.0
    %3325 = vmatprep.subr.mxu0 0.0
    %3326 = vmatpush1.msra.mxu0 0.0
    %3327 = vmatprep.subr.mxu0 0.0
    %3328 = vmatpush1.msra.mxu0 0.0
    %3329 = vmatprep.subr.mxu0 0.0
    %3330 = vmatpush1.msra.mxu0 0.0
    %3331 = vmatprep.subr.mxu0 0.0
    %3332 = vmatpush1.msra.mxu0 0.0
    %3333 = vmatprep.subr.mxu0 0.0
    %3334 = vmatpush1.msra.mxu0 0.0
    %3335 = vmatprep.subr.mxu0 0.0
    %3336 = vmatpush1.msra.mxu0 0.0
    %3337 = vmatprep.subr.mxu0 0.0
    %3338 = vmatpush1.msra.mxu0 0.0
    %3339 = vmatprep.subr.mxu0 0.0
    %3340 = vmatpush1.msra.mxu0 0.0
    %3341 = vmatprep.subr.mxu0 0.0
    %3342 = vmatpush1.msra.mxu0 0.0
    %3343 = vmatprep.subr.mxu0 0.0
    %3344 = vmatpush1.msra.mxu0 0.0
    %3345 = vmatprep.subr.mxu0 0.0
    %3346 = vmatpush1.msra.mxu0 0.0
    %3347 = vmatprep.subr.mxu0 0.0
    %3348 = vmatpush1.msra.mxu0 0.0
    %3349 = vmatprep.subr.mxu0 0.0
    %3350 = vmatpush1.msra.mxu0 0.0
    %3351 = vmatprep.subr.mxu0 0.0
    %3352 = vmatpush1.msra.mxu0 0.0
    %3353 = vmatprep.mubr.f32.mxu0 0.0
    %3354 = vmatmul.mubr.f32.gmra.mrb[0].mxu0 %v904
    %v3355 = vpop.f32.mrb[0].mxu0
    %v3356 = vadd.f32 0.0, %v3355
    %v3357 = vpop.f32.mrb[0].mxu0
    %3358 = vdwg.mxu0
    %3359 = vmatprep.subr.mxu0 0.0
    %3360 = vmatpush1.msra.mxu0 %v2569
    %3361 = vmatprep.subr.mxu0 0.0
    %3362 = vmatpush1.msra.mxu0 %v2570
    %3363 = vmatprep.subr.mxu0 0.0
    %3364 = vmatpush1.msra.mxu0 %v2571
    %3365 = vmatprep.subr.mxu0 0.0
    %3366 = vmatpush1.msra.mxu0 %v2572
    %3367 = vmatprep.subr.mxu0 0.0
    %3368 = vmatpush1.msra.mxu0 0.0
    %3369 = vmatprep.subr.mxu0 0.0
    %3370 = vmatpush1.msra.mxu0 0.0
    %3371 = vmatprep.subr.mxu0 0.0
    %3372 = vmatpush1.msra.mxu0 0.0
    %3373 = vmatprep.subr.mxu0 0.0
    %3374 = vmatpush1.msra.mxu0 0.0
    %3375 = vmatprep.subr.mxu0 0.0
    %3376 = vmatpush1.msra.mxu0 0.0
    %3377 = vmatprep.subr.mxu0 0.0
    %3378 = vmatpush1.msra.mxu0 0.0
    %3379 = vmatprep.subr.mxu0 0.0
    %3380 = vmatpush1.msra.mxu0 0.0
    %3381 = vmatprep.subr.mxu0 0.0
    %3382 = vmatpush1.msra.mxu0 0.0
    %3383 = vmatprep.subr.mxu0 0.0
    %3384 = vmatpush1.msra.mxu0 0.0
    %3385 = vmatprep.subr.mxu0 0.0
    %3386 = vmatpush1.msra.mxu0 0.0
    %3387 = vmatprep.subr.mxu0 0.0
    %3388 = vmatpush1.msra.mxu0 0.0
    %3389 = vmatprep.subr.mxu0 0.0
    %3390 = vmatpush1.msra.mxu0 0.0
    %3391 = vmatprep.subr.mxu0 0.0
    %3392 = vmatpush1.msra.mxu0 0.0
    %3393 = vmatprep.subr.mxu0 0.0
    %3394 = vmatpush1.msra.mxu0 0.0
    %3395 = vmatprep.subr.mxu0 0.0
    %3396 = vmatpush1.msra.mxu0 0.0
    %3397 = vmatprep.subr.mxu0 0.0
    %3398 = vmatpush1.msra.mxu0 0.0
    %3399 = vmatprep.subr.mxu0 0.0
    %3400 = vmatpush1.msra.mxu0 0.0
    %3401 = vmatprep.subr.mxu0 0.0
    %3402 = vmatpush1.msra.mxu0 0.0
    %3403 = vmatprep.subr.mxu0 0.0
    %3404 = vmatpush1.msra.mxu0 0.0
    %3405 = vmatprep.subr.mxu0 0.0
    %3406 = vmatpush1.msra.mxu0 0.0
    %3407 = vmatprep.subr.mxu0 0.0
    %3408 = vmatpush1.msra.mxu0 0.0
    %3409 = vmatprep.subr.mxu0 0.0
    %3410 = vmatpush1.msra.mxu0 0.0
    %3411 = vmatprep.subr.mxu0 0.0
    %3412 = vmatpush1.msra.mxu0 0.0
    %3413 = vmatprep.subr.mxu0 0.0
    %3414 = vmatpush1.msra.mxu0 0.0
    %3415 = vmatprep.subr.mxu0 0.0
    %3416 = vmatpush1.msra.mxu0 0.0
    %3417 = vmatprep.subr.mxu0 0.0
    %3418 = vmatpush1.msra.mxu0 0.0
    %3419 = vmatprep.subr.mxu0 0.0
    %3420 = vmatpush1.msra.mxu0 0.0
    %3421 = vmatprep.subr.mxu0 0.0
    %3422 = vmatpush1.msra.mxu0 0.0
    %3423 = vmatprep.mubr.f32.mxu0 0.0
    %3424 = vmatmul.mubr.f32.gmra.mrb[0].mxu0 %v977
    %v3425 = vpop.f32.mrb[0].mxu0
    %v3426 = vadd.f32 0.0, %v3425
    %v3427 = vpop.f32.mrb[0].mxu0
    %3428 = vdwg.mxu0
    %3429 = vmatprep.subr.mxu0 0.0
    %3430 = vmatpush1.msra.mxu0 %v2573
    %3431 = vmatprep.subr.mxu0 0.0
    %3432 = vmatpush1.msra.mxu0 %v2574
    %3433 = vmatprep.subr.mxu0 0.0
    %3434 = vmatpush1.msra.mxu0 %v2575
    %3435 = vmatprep.subr.mxu0 0.0
    %3436 = vmatpush1.msra.mxu0 %v2576
    %3437 = vmatprep.subr.mxu0 0.0
    %3438 = vmatpush1.msra.mxu0 0.0
    %3439 = vmatprep.subr.mxu0 0.0
    %3440 = vmatpush1.msra.mxu0 0.0
    %3441 = vmatprep.subr.mxu0 0.0
    %3442 = vmatpush1.msra.mxu0 0.0
    %3443 = vmatprep.subr.mxu0 0.0
    %3444 = vmatpush1.msra.mxu0 0.0
    %3445 = vmatprep.subr.mxu0 0.0
    %3446 = vmatpush1.msra.mxu0 0.0
    %3447 = vmatprep.subr.mxu0 0.0
    %3448 = vmatpush1.msra.mxu0 0.0
    %3449 = vmatprep.subr.mxu0 0.0
    %3450 = vmatpush1.msra.mxu0 0.0
    %3451 = vmatprep.subr.mxu0 0.0
    %3452 = vmatpush1.msra.mxu0 0.0
    %3453 = vmatprep.subr.mxu0 0.0
    %3454 = vmatpush1.msra.mxu0 0.0
    %3455 = vmatprep.subr.mxu0 0.0
    %3456 = vmatpush1.msra.mxu0 0.0
    %3457 = vmatprep.subr.mxu0 0.0
    %3458 = vmatpush1.msra.mxu0 0.0
    %3459 = vmatprep.subr.mxu0 0.0
    %3460 = vmatpush1.msra.mxu0 0.0
    %3461 = vmatprep.subr.mxu0 0.0
    %3462 = vmatpush1.msra.mxu0 0.0
    %3463 = vmatprep.subr.mxu0 0.0
    %3464 = vmatpush1.msra.mxu0 0.0
    %3465 = vmatprep.subr.mxu0 0.0
    %3466 = vmatpush1.msra.mxu0 0.0
    %3467 = vmatprep.subr.mxu0 0.0
    %3468 = vmatpush1.msra.mxu0 0.0
    %3469 = vmatprep.subr.mxu0 0.0
    %3470 = vmatpush1.msra.mxu0 0.0
    %3471 = vmatprep.subr.mxu0 0.0
    %3472 = vmatpush1.msra.mxu0 0.0
    %3473 = vmatprep.subr.mxu0 0.0
    %3474 = vmatpush1.msra.mxu0 0.0
    %3475 = vmatprep.subr.mxu0 0.0
    %3476 = vmatpush1.msra.mxu0 0.0
    %3477 = vmatprep.subr.mxu0 0.0
    %3478 = vmatpush1.msra.mxu0 0.0
    %3479 = vmatprep.subr.mxu0 0.0
    %3480 = vmatpush1.msra.mxu0 0.0
    %3481 = vmatprep.subr.mxu0 0.0
    %3482 = vmatpush1.msra.mxu0 0.0
    %3483 = vmatprep.subr.mxu0 0.0
    %3484 = vmatpush1.msra.mxu0 0.0
    %3485 = vmatprep.subr.mxu0 0.0
    %3486 = vmatpush1.msra.mxu0 0.0
    %3487 = vmatprep.subr.mxu0 0.0
    %3488 = vmatpush1.msra.mxu0 0.0
    %3489 = vmatprep.subr.mxu0 0.0
    %3490 = vmatpush1.msra.mxu0 0.0
    %3491 = vmatprep.subr.mxu0 0.0
    %3492 = vmatpush1.msra.mxu0 0.0
    %3493 = vmatprep.mubr.f32.mxu0 0.0
    %3494 = vmatmul.mubr.f32.gmra.mrb[0].mxu0 %v1050
    %v3495 = vpop.f32.mrb[0].mxu0
    %v3496 = vadd.f32 0.0, %v3495
    %v3497 = vpop.f32.mrb[0].mxu0
    %3498 = vdwg.mxu0
    %3499 = vmatprep.subr.mxu0 0.0
    %3500 = vmatpush1.msra.mxu0 %v2577
    %3501 = vmatprep.subr.mxu0 0.0
    %3502 = vmatpush1.msra.mxu0 %v2578
    %3503 = vmatprep.subr.mxu0 0.0
    %3504 = vmatpush1.msra.mxu0 %v2579
    %3505 = vmatprep.subr.mxu0 0.0
    %3506 = vmatpush1.msra.mxu0 %v2580
    %3507 = vmatprep.subr.mxu0 0.0
    %3508 = vmatpush1.msra.mxu0 0.0
    %3509 = vmatprep.subr.mxu0 0.0
    %3510 = vmatpush1.msra.mxu0 0.0
    %3511 = vmatprep.subr.mxu0 0.0
    %3512 = vmatpush1.msra.mxu0 0.0
    %3513 = vmatprep.subr.mxu0 0.0
    %3514 = vmatpush1.msra.mxu0 0.0
    %3515 = vmatprep.subr.mxu0 0.0
    %3516 = vmatpush1.msra.mxu0 0.0
    %3517 = vmatprep.subr.mxu0 0.0
    %3518 = vmatpush1.msra.mxu0 0.0
    %3519 = vmatprep.subr.mxu0 0.0
    %3520 = vmatpush1.msra.mxu0 0.0
    %3521 = vmatprep.subr.mxu0 0.0
    %3522 = vmatpush1.msra.mxu0 0.0
    %3523 = vmatprep.subr.mxu0 0.0
    %3524 = vmatpush1.msra.mxu0 0.0
    %3525 = vmatprep.subr.mxu0 0.0
    %3526 = vmatpush1.msra.mxu0 0.0
    %3527 = vmatprep.subr.mxu0 0.0
    %3528 = vmatpush1.msra.mxu0 0.0
    %3529 = vmatprep.subr.mxu0 0.0
    %3530 = vmatpush1.msra.mxu0 0.0
    %3531 = vmatprep.subr.mxu0 0.0
    %3532 = vmatpush1.msra.mxu0 0.0
    %3533 = vmatprep.subr.mxu0 0.0
    %3534 = vmatpush1.msra.mxu0 0.0
    %3535 = vmatprep.subr.mxu0 0.0
    %3536 = vmatpush1.msra.mxu0 0.0
    %3537 = vmatprep.subr.mxu0 0.0
    %3538 = vmatpush1.msra.mxu0 0.0
    %3539 = vmatprep.subr.mxu0 0.0
    %3540 = vmatpush1.msra.mxu0 0.0
    %3541 = vmatprep.subr.mxu0 0.0
    %3542 = vmatpush1.msra.mxu0 0.0
    %3543 = vmatprep.subr.mxu0 0.0
    %3544 = vmatpush1.msra.mxu0 0.0
    %3545 = vmatprep.subr.mxu0 0.0
    %3546 = vmatpush1.msra.mxu0 0.0
    %3547 = vmatprep.subr.mxu0 0.0
    %3548 = vmatpush1.msra.mxu0 0.0
    %3549 = vmatprep.subr.mxu0 0.0
    %3550 = vmatpush1.msra.mxu0 0.0
    %3551 = vmatprep.subr.mxu0 0.0
    %3552 = vmatpush1.msra.mxu0 0.0
    %3553 = vmatprep.subr.mxu0 0.0
    %3554 = vmatpush1.msra.mxu0 0.0
    %3555 = vmatprep.subr.mxu0 0.0
    %3556 = vmatpush1.msra.mxu0 0.0
    %3557 = vmatprep.subr.mxu0 0.0
    %3558 = vmatpush1.msra.mxu0 0.0
    %3559 = vmatprep.subr.mxu0 0.0
    %3560 = vmatpush1.msra.mxu0 0.0
    %3561 = vmatprep.subr.mxu0 0.0
    %3562 = vmatpush1.msra.mxu0 0.0
    %3563 = vmatprep.mubr.f32.mxu0 0.0
    %3564 = vmatmul.mubr.f32.gmra.mrb[0].mxu0 %v1123
    %v3565 = vpop.f32.mrb[0].mxu0
    %v3566 = vadd.f32 0.0, %v3565
    %v3567 = vpop.f32.mrb[0].mxu0
    %3568 = vdwg.mxu0
    %3569 = vmatprep.subr.mxu0 0.0
    %3570 = vmatpush1.msra.mxu0 %v2581
    %3571 = vmatprep.subr.mxu0 0.0
    %3572 = vmatpush1.msra.mxu0 %v2582
    %3573 = vmatprep.subr.mxu0 0.0
    %3574 = vmatpush1.msra.mxu0 %v2583
    %3575 = vmatprep.subr.mxu0 0.0
    %3576 = vmatpush1.msra.mxu0 %v2584
    %3577 = vmatprep.subr.mxu0 0.0
    %3578 = vmatpush1.msra.mxu0 0.0
    %3579 = vmatprep.subr.mxu0 0.0
    %3580 = vmatpush1.msra.mxu0 0.0
    %3581 = vmatprep.subr.mxu0 0.0
    %3582 = vmatpush1.msra.mxu0 0.0
    %3583 = vmatprep.subr.mxu0 0.0
    %3584 = vmatpush1.msra.mxu0 0.0
    %3585 = vmatprep.subr.mxu0 0.0
    %3586 = vmatpush1.msra.mxu0 0.0
    %3587 = vmatprep.subr.mxu0 0.0
    %3588 = vmatpush1.msra.mxu0 0.0
    %3589 = vmatprep.subr.mxu0 0.0
    %3590 = vmatpush1.msra.mxu0 0.0
    %3591 = vmatprep.subr.mxu0 0.0
    %3592 = vmatpush1.msra.mxu0 0.0
    %3593 = vmatprep.subr.mxu0 0.0
    %3594 = vmatpush1.msra.mxu0 0.0
    %3595 = vmatprep.subr.mxu0 0.0
    %3596 = vmatpush1.msra.mxu0 0.0
    %3597 = vmatprep.subr.mxu0 0.0
    %3598 = vmatpush1.msra.mxu0 0.0
    %3599 = vmatprep.subr.mxu0 0.0
    %3600 = vmatpush1.msra.mxu0 0.0
    %3601 = vmatprep.subr.mxu0 0.0
    %3602 = vmatpush1.msra.mxu0 0.0
    %3603 = vmatprep.subr.mxu0 0.0
    %3604 = vmatpush1.msra.mxu0 0.0
    %3605 = vmatprep.subr.mxu0 0.0
    %3606 = vmatpush1.msra.mxu0 0.0
    %3607 = vmatprep.subr.mxu0 0.0
    %3608 = vmatpush1.msra.mxu0 0.0
    %3609 = vmatprep.subr.mxu0 0.0
    %3610 = vmatpush1.msra.mxu0 0.0
    %3611 = vmatprep.subr.mxu0 0.0
    %3612 = vmatpush1.msra.mxu0 0.0
    %3613 = vmatprep.subr.mxu0 0.0
    %3614 = vmatpush1.msra.mxu0 0.0
    %3615 = vmatprep.subr.mxu0 0.0
    %3616 = vmatpush1.msra.mxu0 0.0
    %3617 = vmatprep.subr.mxu0 0.0
    %3618 = vmatpush1.msra.mxu0 0.0
    %3619 = vmatprep.subr.mxu0 0.0
    %3620 = vmatpush1.msra.mxu0 0.0
    %3621 = vmatprep.subr.mxu0 0.0
    %3622 = vmatpush1.msra.mxu0 0.0
    %3623 = vmatprep.subr.mxu0 0.0
    %3624 = vmatpush1.msra.mxu0 0.0
    %3625 = vmatprep.subr.mxu0 0.0
    %3626 = vmatpush1.msra.mxu0 0.0
    %3627 = vmatprep.subr.mxu0 0.0
    %3628 = vmatpush1.msra.mxu0 0.0
    %3629 = vmatprep.subr.mxu0 0.0
    %3630 = vmatpush1.msra.mxu0 0.0
    %3631 = vmatprep.subr.mxu0 0.0
    %3632 = vmatpush1.msra.mxu0 0.0
    %3633 = vmatprep.mubr.f32.mxu0 0.0
    %3634 = vmatmul.mubr.f32.gmra.mrb[0].mxu0 %v1196
    %v3635 = vpop.f32.mrb[0].mxu0
    %v3636 = vadd.f32 0.0, %v3635
    %v3637 = vpop.f32.mrb[0].mxu0
    %3638 = vdwg.mxu0
    %3639 = vmatprep.subr.mxu0 0.0
    %3640 = vmatpush1.msra.mxu0 %v2585
    %3641 = vmatprep.subr.mxu0 0.0
    %3642 = vmatpush1.msra.mxu0 %v2586
    %3643 = vmatprep.subr.mxu0 0.0
    %3644 = vmatpush1.msra.mxu0 %v2587
    %3645 = vmatprep.subr.mxu0 0.0
    %3646 = vmatpush1.msra.mxu0 %v2588
    %3647 = vmatprep.subr.mxu0 0.0
    %3648 = vmatpush1.msra.mxu0 0.0
    %3649 = vmatprep.subr.mxu0 0.0
    %3650 = vmatpush1.msra.mxu0 0.0
    %3651 = vmatprep.subr.mxu0 0.0
    %3652 = vmatpush1.msra.mxu0 0.0
    %3653 = vmatprep.subr.mxu0 0.0
    %3654 = vmatpush1.msra.mxu0 0.0
    %3655 = vmatprep.subr.mxu0 0.0
    %3656 = vmatpush1.msra.mxu0 0.0
    %3657 = vmatprep.subr.mxu0 0.0
    %3658 = vmatpush1.msra.mxu0 0.0
    %3659 = vmatprep.subr.mxu0 0.0
    %3660 = vmatpush1.msra.mxu0 0.0
    %3661 = vmatprep.subr.mxu0 0.0
    %3662 = vmatpush1.msra.mxu0 0.0
    %3663 = vmatprep.subr.mxu0 0.0
    %3664 = vmatpush1.msra.mxu0 0.0
    %3665 = vmatprep.subr.mxu0 0.0
    %3666 = vmatpush1.msra.mxu0 0.0
    %3667 = vmatprep.subr.mxu0 0.0
    %3668 = vmatpush1.msra.mxu0 0.0
    %3669 = vmatprep.subr.mxu0 0.0
    %3670 = vmatpush1.msra.mxu0 0.0
    %3671 = vmatprep.subr.mxu0 0.0
    %3672 = vmatpush1.msra.mxu0 0.0
    %3673 = vmatprep.subr.mxu0 0.0
    %3674 = vmatpush1.msra.mxu0 0.0
    %3675 = vmatprep.subr.mxu0 0.0
    %3676 = vmatpush1.msra.mxu0 0.0
    %3677 = vmatprep.subr.mxu0 0.0
    %3678 = vmatpush1.msra.mxu0 0.0
    %3679 = vmatprep.subr.mxu0 0.0
    %3680 = vmatpush1.msra.mxu0 0.0
    %3681 = vmatprep.subr.mxu0 0.0
    %3682 = vmatpush1.msra.mxu0 0.0
    %3683 = vmatprep.subr.mxu0 0.0
    %3684 = vmatpush1.msra.mxu0 0.0
    %3685 = vmatprep.subr.mxu0 0.0
    %3686 = vmatpush1.msra.mxu0 0.0
    %3687 = vmatprep.subr.mxu0 0.0
    %3688 = vmatpush1.msra.mxu0 0.0
    %3689 = vmatprep.subr.mxu0 0.0
    %3690 = vmatpush1.msra.mxu0 0.0
    %3691 = vmatprep.subr.mxu0 0.0
    %3692 = vmatpush1.msra.mxu0 0.0
    %3693 = vmatprep.subr.mxu0 0.0
    %3694 = vmatpush1.msra.mxu0 0.0
    %3695 = vmatprep.subr.mxu0 0.0
    %3696 = vmatpush1.msra.mxu0 0.0
    %3697 = vmatprep.subr.mxu0 0.0
    %3698 = vmatpush1.msra.mxu0 0.0
    %3699 = vmatprep.subr.mxu0 0.0
    %3700 = vmatpush1.msra.mxu0 0.0
    %3701 = vmatprep.subr.mxu0 0.0
    %3702 = vmatpush1.msra.mxu0 0.0
    %3703 = vmatprep.mubr.f32.mxu0 0.0
    %3704 = vmatmul.mubr.f32.gmra.mrb[0].mxu0 %v1269
    %v3705 = vpop.f32.mrb[0].mxu0
    %v3706 = vadd.f32 0.0, %v3705
    %v3707 = vpop.f32.mrb[0].mxu0
    %3708 = vdwg.mxu0
    %v3710 = vsel %vm172, %v243, 0
    %v3713 = vsel %vm172, %v1472, 0
    %3715 = vmatprep.subr.mxu0 0.0
    %3716 = vmatpush1.xpose.msra.mxu0 %v3713
    %3717 = vmatprep.subr.mxu0 0.0
    %3718 = vmatpush1.xpose.msra.mxu0 0.0
    %3719 = vmatprep.subr.mxu0 0.0
    %3720 = vmatpush1.xpose.msra.mxu0 0.0
    %3721 = vmatprep.subr.mxu0 0.0
    %3722 = vmatpush1.xpose.msra.mxu0 0.0
    %3723 = vmatprep.subr.mxu0 0.0
    %3724 = vmatpush1.xpose.msra.mxu0 0.0
    %3725 = vmatprep.subr.mxu0 0.0
    %3726 = vmatpush1.xpose.msra.mxu0 0.0
    %3727 = vmatprep.subr.mxu0 0.0
    %3728 = vmatpush1.xpose.msra.mxu0 0.0
    %3729 = vmatprep.subr.mxu0 0.0
    %3730 = vmatpush1.xpose.msra.mxu0 0.0
    %3731 = vmatprep.subr.mxu0 0.0
    %3732 = vmatpush1.xpose.msra.mxu0 0.0
    %3733 = vmatprep.subr.mxu0 0.0
    %3734 = vmatpush1.xpose.msra.mxu0 0.0
    %3735 = vmatprep.subr.mxu0 0.0
    %3736 = vmatpush1.xpose.msra.mxu0 0.0
    %3737 = vmatprep.subr.mxu0 0.0
    %3738 = vmatpush1.xpose.msra.mxu0 0.0
    %3739 = vmatprep.subr.mxu0 0.0
    %3740 = vmatpush1.xpose.msra.mxu0 0.0
    %3741 = vmatprep.subr.mxu0 0.0
    %3742 = vmatpush1.xpose.msra.mxu0 0.0
    %3743 = vmatprep.subr.mxu0 0.0
    %3744 = vmatpush1.xpose.msra.mxu0 0.0
    %3745 = vmatprep.subr.mxu0 0.0
    %3746 = vmatpush1.xpose.msra.mxu0 0.0
    %3747 = vmatprep.subr.mxu0 0.0
    %3748 = vmatpush1.xpose.msra.mxu0 0.0
    %3749 = vmatprep.subr.mxu0 0.0
    %3750 = vmatpush1.xpose.msra.mxu0 0.0
    %3751 = vmatprep.subr.mxu0 0.0
    %3752 = vmatpush1.xpose.msra.mxu0 0.0
    %3753 = vmatprep.subr.mxu0 0.0
    %3754 = vmatpush1.xpose.msra.mxu0 0.0
    %3755 = vmatprep.subr.mxu0 0.0
    %3756 = vmatpush1.xpose.msra.mxu0 0.0
    %3757 = vmatprep.subr.mxu0 0.0
    %3758 = vmatpush1.xpose.msra.mxu0 0.0
    %3759 = vmatprep.subr.mxu0 0.0
    %3760 = vmatpush1.xpose.msra.mxu0 0.0
    %3761 = vmatprep.subr.mxu0 0.0
    %3762 = vmatpush1.xpose.msra.mxu0 0.0
    %3763 = vmatprep.subr.mxu0 0.0
    %3764 = vmatpush1.xpose.msra.mxu0 0.0
    %3765 = vmatprep.subr.mxu0 0.0
    %3766 = vmatpush1.xpose.msra.mxu0 0.0
    %3767 = vmatprep.subr.mxu0 0.0
    %3768 = vmatpush1.xpose.msra.mxu0 0.0
    %3769 = vmatprep.subr.mxu0 0.0
    %3770 = vmatpush1.xpose.msra.mxu0 0.0
    %3771 = vmatprep.subr.mxu0 0.0
    %3772 = vmatpush1.xpose.msra.mxu0 0.0
    %3773 = vmatprep.subr.mxu0 0.0
    %3774 = vmatpush1.xpose.msra.mxu0 0.0
    %3775 = vmatprep.subr.mxu0 0.0
    %3776 = vmatpush1.xpose.msra.mxu0 0.0
    %3777 = vmatprep.subr.mxu0 0.0
    %3778 = vmatpush1.xpose.msra.mxu0 0.0
    %3779 = vmatprep.mubr.f32.mxu0 0.0
    %3780 = vmatmul.mubr.f32.gmra.mrb[0].mxu0 %v3710
    %v3781 = vpop.f32.mrb[0].mxu0
    %v3782 = vadd.f32 0.0, %v3781
    %v3783 = vpop.f32.mrb[0].mxu0
    %3784 = vdwg.mxu0
    %v3786 = vsel %vm172, %v316, 0
    %v3789 = vsel %vm172, %v1542, 0
    %3791 = vmatprep.subr.mxu0 0.0
    %3792 = vmatpush1.xpose.msra.mxu0 %v3789
    %3793 = vmatprep.subr.mxu0 0.0
    %3794 = vmatpush1.xpose.msra.mxu0 0.0
    %3795 = vmatprep.subr.mxu0 0.0
    %3796 = vmatpush1.xpose.msra.mxu0 0.0
    %3797 = vmatprep.subr.mxu0 0.0
    %3798 = vmatpush1.xpose.msra.mxu0 0.0
    %3799 = vmatprep.subr.mxu0 0.0
    %3800 = vmatpush1.xpose.msra.mxu0 0.0
    %3801 = vmatprep.subr.mxu0 0.0
    %3802 = vmatpush1.xpose.msra.mxu0 0.0
    %3803 = vmatprep.subr.mxu0 0.0
    %3804 = vmatpush1.xpose.msra.mxu0 0.0
    %3805 = vmatprep.subr.mxu0 0.0
    %3806 = vmatpush1.xpose.msra.mxu0 0.0
    %3807 = vmatprep.subr.mxu0 0.0
    %3808 = vmatpush1.xpose.msra.mxu0 0.0
    %3809 = vmatprep.subr.mxu0 0.0
    %3810 = vmatpush1.xpose.msra.mxu0 0.0
    %3811 = vmatprep.subr.mxu0 0.0
    %3812 = vmatpush1.xpose.msra.mxu0 0.0
    %3813 = vmatprep.subr.mxu0 0.0
    %3814 = vmatpush1.xpose.msra.mxu0 0.0
    %3815 = vmatprep.subr.mxu0 0.0
    %3816 = vmatpush1.xpose.msra.mxu0 0.0
    %3817 = vmatprep.subr.mxu0 0.0
    %3818 = vmatpush1.xpose.msra.mxu0 0.0
    %3819 = vmatprep.subr.mxu0 0.0
    %3820 = vmatpush1.xpose.msra.mxu0 0.0
    %3821 = vmatprep.subr.mxu0 0.0
    %3822 = vmatpush1.xpose.msra.mxu0 0.0
    %3823 = vmatprep.subr.mxu0 0.0
    %3824 = vmatpush1.xpose.msra.mxu0 0.0
    %3825 = vmatprep.subr.mxu0 0.0
    %3826 = vmatpush1.xpose.msra.mxu0 0.0
    %3827 = vmatprep.subr.mxu0 0.0
    %3828 = vmatpush1.xpose.msra.mxu0 0.0
    %3829 = vmatprep.subr.mxu0 0.0
    %3830 = vmatpush1.xpose.msra.mxu0 0.0
    %3831 = vmatprep.subr.mxu0 0.0
    %3832 = vmatpush1.xpose.msra.mxu0 0.0
    %3833 = vmatprep.subr.mxu0 0.0
    %3834 = vmatpush1.xpose.msra.mxu0 0.0
    %3835 = vmatprep.subr.mxu0 0.0
    %3836 = vmatpush1.xpose.msra.mxu0 0.0
    %3837 = vmatprep.subr.mxu0 0.0
    %3838 = vmatpush1.xpose.msra.mxu0 0.0
    %3839 = vmatprep.subr.mxu0 0.0
    %3840 = vmatpush1.xpose.msra.mxu0 0.0
    %3841 = vmatprep.subr.mxu0 0.0
    %3842 = vmatpush1.xpose.msra.mxu0 0.0
    %3843 = vmatprep.subr.mxu0 0.0
    %3844 = vmatpush1.xpose.msra.mxu0 0.0
    %3845 = vmatprep.subr.mxu0 0.0
    %3846 = vmatpush1.xpose.msra.mxu0 0.0
    %3847 = vmatprep.subr.mxu0 0.0
    %3848 = vmatpush1.xpose.msra.mxu0 0.0
    %3849 = vmatprep.subr.mxu0 0.0
    %3850 = vmatpush1.xpose.msra.mxu0 0.0
    %3851 = vmatprep.subr.mxu0 0.0
    %3852 = vmatpush1.xpose.msra.mxu0 0.0
    %3853 = vmatprep.subr.mxu0 0.0
    %3854 = vmatpush1.xpose.msra.mxu0 0.0
    %3855 = vmatprep.mubr.f32.mxu0 0.0
    %3856 = vmatmul.mubr.f32.gmra.mrb[0].mxu0 %v3786
    %v3857 = vpop.f32.mrb[0].mxu0
    %v3858 = vadd.f32 0.0, %v3857
    %v3859 = vpop.f32.mrb[0].mxu0
    %3860 = vdwg.mxu0
    %v3862 = vsel %vm172, %v389, 0
    %v3865 = vsel %vm172, %v1612, 0
    %3867 = vmatprep.subr.mxu0 0.0
    %3868 = vmatpush1.xpose.msra.mxu0 %v3865
    %3869 = vmatprep.subr.mxu0 0.0
    %3870 = vmatpush1.xpose.msra.mxu0 0.0
    %3871 = vmatprep.subr.mxu0 0.0
    %3872 = vmatpush1.xpose.msra.mxu0 0.0
    %3873 = vmatprep.subr.mxu0 0.0
    %3874 = vmatpush1.xpose.msra.mxu0 0.0
    %3875 = vmatprep.subr.mxu0 0.0
    %3876 = vmatpush1.xpose.msra.mxu0 0.0
    %3877 = vmatprep.subr.mxu0 0.0
    %3878 = vmatpush1.xpose.msra.mxu0 0.0
    %3879 = vmatprep.subr.mxu0 0.0
    %3880 = vmatpush1.xpose.msra.mxu0 0.0
    %3881 = vmatprep.subr.mxu0 0.0
    %3882 = vmatpush1.xpose.msra.mxu0 0.0
    %3883 = vmatprep.subr.mxu0 0.0
    %3884 = vmatpush1.xpose.msra.mxu0 0.0
    %3885 = vmatprep.subr.mxu0 0.0
    %3886 = vmatpush1.xpose.msra.mxu0 0.0
    %3887 = vmatprep.subr.mxu0 0.0
    %3888 = vmatpush1.xpose.msra.mxu0 0.0
    %3889 = vmatprep.subr.mxu0 0.0
    %3890 = vmatpush1.xpose.msra.mxu0 0.0
    %3891 = vmatprep.subr.mxu0 0.0
    %3892 = vmatpush1.xpose.msra.mxu0 0.0
    %3893 = vmatprep.subr.mxu0 0.0
    %3894 = vmatpush1.xpose.msra.mxu0 0.0
    %3895 = vmatprep.subr.mxu0 0.0
    %3896 = vmatpush1.xpose.msra.mxu0 0.0
    %3897 = vmatprep.subr.mxu0 0.0
    %3898 = vmatpush1.xpose.msra.mxu0 0.0
    %3899 = vmatprep.subr.mxu0 0.0
    %3900 = vmatpush1.xpose.msra.mxu0 0.0
    %3901 = vmatprep.subr.mxu0 0.0
    %3902 = vmatpush1.xpose.msra.mxu0 0.0
    %3903 = vmatprep.subr.mxu0 0.0
    %3904 = vmatpush1.xpose.msra.mxu0 0.0
    %3905 = vmatprep.subr.mxu0 0.0
    %3906 = vmatpush1.xpose.msra.mxu0 0.0
    %3907 = vmatprep.subr.mxu0 0.0
    %3908 = vmatpush1.xpose.msra.mxu0 0.0
    %3909 = vmatprep.subr.mxu0 0.0
    %3910 = vmatpush1.xpose.msra.mxu0 0.0
    %3911 = vmatprep.subr.mxu0 0.0
    %3912 = vmatpush1.xpose.msra.mxu0 0.0
    %3913 = vmatprep.subr.mxu0 0.0
    %3914 = vmatpush1.xpose.msra.mxu0 0.0
    %3915 = vmatprep.subr.mxu0 0.0
    %3916 = vmatpush1.xpose.msra.mxu0 0.0
    %3917 = vmatprep.subr.mxu0 0.0
    %3918 = vmatpush1.xpose.msra.mxu0 0.0
    %3919 = vmatprep.subr.mxu0 0.0
    %3920 = vmatpush1.xpose.msra.mxu0 0.0
    %3921 = vmatprep.subr.mxu0 0.0
    %3922 = vmatpush1.xpose.msra.mxu0 0.0
    %3923 = vmatprep.subr.mxu0 0.0
    %3924 = vmatpush1.xpose.msra.mxu0 0.0
    %3925 = vmatprep.subr.mxu0 0.0
    %3926 = vmatpush1.xpose.msra.mxu0 0.0
    %3927 = vmatprep.subr.mxu0 0.0
    %3928 = vmatpush1.xpose.msra.mxu0 0.0
    %3929 = vmatprep.subr.mxu0 0.0
    %3930 = vmatpush1.xpose.msra.mxu0 0.0
    %3931 = vmatprep.mubr.f32.mxu0 0.0
    %3932 = vmatmul.mubr.f32.gmra.mrb[0].mxu0 %v3862
    %v3933 = vpop.f32.mrb[0].mxu0
    %v3934 = vadd.f32 0.0, %v3933
    %v3935 = vpop.f32.mrb[0].mxu0
    %3936 = vdwg.mxu0
    %v3938 = vsel %vm172, %v462, 0
    %v3941 = vsel %vm172, %v1682, 0
    %3943 = vmatprep.subr.mxu0 0.0
    %3944 = vmatpush1.xpose.msra.mxu0 %v3941
    %3945 = vmatprep.subr.mxu0 0.0
    %3946 = vmatpush1.xpose.msra.mxu0 0.0
    %3947 = vmatprep.subr.mxu0 0.0
    %3948 = vmatpush1.xpose.msra.mxu0 0.0
    %3949 = vmatprep.subr.mxu0 0.0
    %3950 = vmatpush1.xpose.msra.mxu0 0.0
    %3951 = vmatprep.subr.mxu0 0.0
    %3952 = vmatpush1.xpose.msra.mxu0 0.0
    %3953 = vmatprep.subr.mxu0 0.0
    %3954 = vmatpush1.xpose.msra.mxu0 0.0
    %3955 = vmatprep.subr.mxu0 0.0
    %3956 = vmatpush1.xpose.msra.mxu0 0.0
    %3957 = vmatprep.subr.mxu0 0.0
    %3958 = vmatpush1.xpose.msra.mxu0 0.0
    %3959 = vmatprep.subr.mxu0 0.0
    %3960 = vmatpush1.xpose.msra.mxu0 0.0
    %3961 = vmatprep.subr.mxu0 0.0
    %3962 = vmatpush1.xpose.msra.mxu0 0.0
    %3963 = vmatprep.subr.mxu0 0.0
    %3964 = vmatpush1.xpose.msra.mxu0 0.0
    %3965 = vmatprep.subr.mxu0 0.0
    %3966 = vmatpush1.xpose.msra.mxu0 0.0
    %3967 = vmatprep.subr.mxu0 0.0
    %3968 = vmatpush1.xpose.msra.mxu0 0.0
    %3969 = vmatprep.subr.mxu0 0.0
    %3970 = vmatpush1.xpose.msra.mxu0 0.0
    %3971 = vmatprep.subr.mxu0 0.0
    %3972 = vmatpush1.xpose.msra.mxu0 0.0
    %3973 = vmatprep.subr.mxu0 0.0
    %3974 = vmatpush1.xpose.msra.mxu0 0.0
    %3975 = vmatprep.subr.mxu0 0.0
    %3976 = vmatpush1.xpose.msra.mxu0 0.0
    %3977 = vmatprep.subr.mxu0 0.0
    %3978 = vmatpush1.xpose.msra.mxu0 0.0
    %3979 = vmatprep.subr.mxu0 0.0
    %3980 = vmatpush1.xpose.msra.mxu0 0.0
    %3981 = vmatprep.subr.mxu0 0.0
    %3982 = vmatpush1.xpose.msra.mxu0 0.0
    %3983 = vmatprep.subr.mxu0 0.0
    %3984 = vmatpush1.xpose.msra.mxu0 0.0
    %3985 = vmatprep.subr.mxu0 0.0
    %3986 = vmatpush1.xpose.msra.mxu0 0.0
    %3987 = vmatprep.subr.mxu0 0.0
    %3988 = vmatpush1.xpose.msra.mxu0 0.0
    %3989 = vmatprep.subr.mxu0 0.0
    %3990 = vmatpush1.xpose.msra.mxu0 0.0
    %3991 = vmatprep.subr.mxu0 0.0
    %3992 = vmatpush1.xpose.msra.mxu0 0.0
    %3993 = vmatprep.subr.mxu0 0.0
    %3994 = vmatpush1.xpose.msra.mxu0 0.0
    %3995 = vmatprep.subr.mxu0 0.0
    %3996 = vmatpush1.xpose.msra.mxu0 0.0
    %3997 = vmatprep.subr.mxu0 0.0
    %3998 = vmatpush1.xpose.msra.mxu0 0.0
    %3999 = vmatprep.subr.mxu0 0.0
    %4000 = vmatpush1.xpose.msra.mxu0 0.0
    %4001 = vmatprep.subr.mxu0 0.0
    %4002 = vmatpush1.xpose.msra.mxu0 0.0
    %4003 = vmatprep.subr.mxu0 0.0
    %4004 = vmatpush1.xpose.msra.mxu0 0.0
    %4005 = vmatprep.subr.mxu0 0.0
    %4006 = vmatpush1.xpose.msra.mxu0 0.0
    %4007 = vmatprep.mubr.f32.mxu0 0.0
    %4008 = vmatmul.mubr.f32.gmra.mrb[0].mxu0 %v3938
    %v4009 = vpop.f32.mrb[0].mxu0
    %v4010 = vadd.f32 0.0, %v4009
    %v4011 = vpop.f32.mrb[0].mxu0
    %4012 = vdwg.mxu0
    %v4014 = vsel %vm172, %v535, 0
    %v4017 = vsel %vm172, %v1752, 0
    %4019 = vmatprep.subr.mxu0 0.0
    %4020 = vmatpush1.xpose.msra.mxu0 %v4017
    %4021 = vmatprep.subr.mxu0 0.0
    %4022 = vmatpush1.xpose.msra.mxu0 0.0
    %4023 = vmatprep.subr.mxu0 0.0
    %4024 = vmatpush1.xpose.msra.mxu0 0.0
    %4025 = vmatprep.subr.mxu0 0.0
    %4026 = vmatpush1.xpose.msra.mxu0 0.0
    %4027 = vmatprep.subr.mxu0 0.0
    %4028 = vmatpush1.xpose.msra.mxu0 0.0
    %4029 = vmatprep.subr.mxu0 0.0
    %4030 = vmatpush1.xpose.msra.mxu0 0.0
    %4031 = vmatprep.subr.mxu0 0.0
    %4032 = vmatpush1.xpose.msra.mxu0 0.0
    %4033 = vmatprep.subr.mxu0 0.0
    %4034 = vmatpush1.xpose.msra.mxu0 0.0
    %4035 = vmatprep.subr.mxu0 0.0
    %4036 = vmatpush1.xpose.msra.mxu0 0.0
    %4037 = vmatprep.subr.mxu0 0.0
    %4038 = vmatpush1.xpose.msra.mxu0 0.0
    %4039 = vmatprep.subr.mxu0 0.0
    %4040 = vmatpush1.xpose.msra.mxu0 0.0
    %4041 = vmatprep.subr.mxu0 0.0
    %4042 = vmatpush1.xpose.msra.mxu0 0.0
    %4043 = vmatprep.subr.mxu0 0.0
    %4044 = vmatpush1.xpose.msra.mxu0 0.0
    %4045 = vmatprep.subr.mxu0 0.0
    %4046 = vmatpush1.xpose.msra.mxu0 0.0
    %4047 = vmatprep.subr.mxu0 0.0
    %4048 = vmatpush1.xpose.msra.mxu0 0.0
    %4049 = vmatprep.subr.mxu0 0.0
    %4050 = vmatpush1.xpose.msra.mxu0 0.0
    %4051 = vmatprep.subr.mxu0 0.0
    %4052 = vmatpush1.xpose.msra.mxu0 0.0
    %4053 = vmatprep.subr.mxu0 0.0
    %4054 = vmatpush1.xpose.msra.mxu0 0.0
    %4055 = vmatprep.subr.mxu0 0.0
    %4056 = vmatpush1.xpose.msra.mxu0 0.0
    %4057 = vmatprep.subr.mxu0 0.0
    %4058 = vmatpush1.xpose.msra.mxu0 0.0
    %4059 = vmatprep.subr.mxu0 0.0
    %4060 = vmatpush1.xpose.msra.mxu0 0.0
    %4061 = vmatprep.subr.mxu0 0.0
    %4062 = vmatpush1.xpose.msra.mxu0 0.0
    %4063 = vmatprep.subr.mxu0 0.0
    %4064 = vmatpush1.xpose.msra.mxu0 0.0
    %4065 = vmatprep.subr.mxu0 0.0
    %4066 = vmatpush1.xpose.msra.mxu0 0.0
    %4067 = vmatprep.subr.mxu0 0.0
    %4068 = vmatpush1.xpose.msra.mxu0 0.0
    %4069 = vmatprep.subr.mxu0 0.0
    %4070 = vmatpush1.xpose.msra.mxu0 0.0
    %4071 = vmatprep.subr.mxu0 0.0
    %4072 = vmatpush1.xpose.msra.mxu0 0.0
    %4073 = vmatprep.subr.mxu0 0.0
    %4074 = vmatpush1.xpose.msra.mxu0 0.0
    %4075 = vmatprep.subr.mxu0 0.0
    %4076 = vmatpush1.xpose.msra.mxu0 0.0
    %4077 = vmatprep.subr.mxu0 0.0
    %4078 = vmatpush1.xpose.msra.mxu0 0.0
    %4079 = vmatprep.subr.mxu0 0.0
    %4080 = vmatpush1.xpose.msra.mxu0 0.0
    %4081 = vmatprep.subr.mxu0 0.0
    %4082 = vmatpush1.xpose.msra.mxu0 0.0
    %4083 = vmatprep.mubr.f32.mxu0 0.0
    %4084 = vmatmul.mubr.f32.gmra.mrb[0].mxu0 %v4014
    %v4085 = vpop.f32.mrb[0].mxu0
    %v4086 = vadd.f32 0.0, %v4085
    %v4087 = vpop.f32.mrb[0].mxu0
    %4088 = vdwg.mxu0
    %v4090 = vsel %vm172, %v608, 0
    %v4093 = vsel %vm172, %v1822, 0
    %4095 = vmatprep.subr.mxu0 0.0
    %4096 = vmatpush1.xpose.msra.mxu0 %v4093
    %4097 = vmatprep.subr.mxu0 0.0
    %4098 = vmatpush1.xpose.msra.mxu0 0.0
    %4099 = vmatprep.subr.mxu0 0.0
    %4100 = vmatpush1.xpose.msra.mxu0 0.0
    %4101 = vmatprep.subr.mxu0 0.0
    %4102 = vmatpush1.xpose.msra.mxu0 0.0
    %4103 = vmatprep.subr.mxu0 0.0
    %4104 = vmatpush1.xpose.msra.mxu0 0.0
    %4105 = vmatprep.subr.mxu0 0.0
    %4106 = vmatpush1.xpose.msra.mxu0 0.0
    %4107 = vmatprep.subr.mxu0 0.0
    %4108 = vmatpush1.xpose.msra.mxu0 0.0
    %4109 = vmatprep.subr.mxu0 0.0
    %4110 = vmatpush1.xpose.msra.mxu0 0.0
    %4111 = vmatprep.subr.mxu0 0.0
    %4112 = vmatpush1.xpose.msra.mxu0 0.0
    %4113 = vmatprep.subr.mxu0 0.0
    %4114 = vmatpush1.xpose.msra.mxu0 0.0
    %4115 = vmatprep.subr.mxu0 0.0
    %4116 = vmatpush1.xpose.msra.mxu0 0.0
    %4117 = vmatprep.subr.mxu0 0.0
    %4118 = vmatpush1.xpose.msra.mxu0 0.0
    %4119 = vmatprep.subr.mxu0 0.0
    %4120 = vmatpush1.xpose.msra.mxu0 0.0
    %4121 = vmatprep.subr.mxu0 0.0
    %4122 = vmatpush1.xpose.msra.mxu0 0.0
    %4123 = vmatprep.subr.mxu0 0.0
    %4124 = vmatpush1.xpose.msra.mxu0 0.0
    %4125 = vmatprep.subr.mxu0 0.0
    %4126 = vmatpush1.xpose.msra.mxu0 0.0
    %4127 = vmatprep.subr.mxu0 0.0
    %4128 = vmatpush1.xpose.msra.mxu0 0.0
    %4129 = vmatprep.subr.mxu0 0.0
    %4130 = vmatpush1.xpose.msra.mxu0 0.0
    %4131 = vmatprep.subr.mxu0 0.0
    %4132 = vmatpush1.xpose.msra.mxu0 0.0
    %4133 = vmatprep.subr.mxu0 0.0
    %4134 = vmatpush1.xpose.msra.mxu0 0.0
    %4135 = vmatprep.subr.mxu0 0.0
    %4136 = vmatpush1.xpose.msra.mxu0 0.0
    %4137 = vmatprep.subr.mxu0 0.0
    %4138 = vmatpush1.xpose.msra.mxu0 0.0
    %4139 = vmatprep.subr.mxu0 0.0
    %4140 = vmatpush1.xpose.msra.mxu0 0.0
    %4141 = vmatprep.subr.mxu0 0.0
    %4142 = vmatpush1.xpose.msra.mxu0 0.0
    %4143 = vmatprep.subr.mxu0 0.0
    %4144 = vmatpush1.xpose.msra.mxu0 0.0
    %4145 = vmatprep.subr.mxu0 0.0
    %4146 = vmatpush1.xpose.msra.mxu0 0.0
    %4147 = vmatprep.subr.mxu0 0.0
    %4148 = vmatpush1.xpose.msra.mxu0 0.0
    %4149 = vmatprep.subr.mxu0 0.0
    %4150 = vmatpush1.xpose.msra.mxu0 0.0
    %4151 = vmatprep.subr.mxu0 0.0
    %4152 = vmatpush1.xpose.msra.mxu0 0.0
    %4153 = vmatprep.subr.mxu0 0.0
    %4154 = vmatpush1.xpose.msra.mxu0 0.0
    %4155 = vmatprep.subr.mxu0 0.0
    %4156 = vmatpush1.xpose.msra.mxu0 0.0
    %4157 = vmatprep.subr.mxu0 0.0
    %4158 = vmatpush1.xpose.msra.mxu0 0.0
    %4159 = vmatprep.mubr.f32.mxu0 0.0
    %4160 = vmatmul.mubr.f32.gmra.mrb[0].mxu0 %v4090
    %v4161 = vpop.f32.mrb[0].mxu0
    %v4162 = vadd.f32 0.0, %v4161
    %v4163 = vpop.f32.mrb[0].mxu0
    %4164 = vdwg.mxu0
    %v4166 = vsel %vm172, %v681, 0
    %v4169 = vsel %vm172, %v1892, 0
    %4171 = vmatprep.subr.mxu0 0.0
    %4172 = vmatpush1.xpose.msra.mxu0 %v4169
    %4173 = vmatprep.subr.mxu0 0.0
    %4174 = vmatpush1.xpose.msra.mxu0 0.0
    %4175 = vmatprep.subr.mxu0 0.0
    %4176 = vmatpush1.xpose.msra.mxu0 0.0
    %4177 = vmatprep.subr.mxu0 0.0
    %4178 = vmatpush1.xpose.msra.mxu0 0.0
    %4179 = vmatprep.subr.mxu0 0.0
    %4180 = vmatpush1.xpose.msra.mxu0 0.0
    %4181 = vmatprep.subr.mxu0 0.0
    %4182 = vmatpush1.xpose.msra.mxu0 0.0
    %4183 = vmatprep.subr.mxu0 0.0
    %4184 = vmatpush1.xpose.msra.mxu0 0.0
    %4185 = vmatprep.subr.mxu0 0.0
    %4186 = vmatpush1.xpose.msra.mxu0 0.0
    %4187 = vmatprep.subr.mxu0 0.0
    %4188 = vmatpush1.xpose.msra.mxu0 0.0
    %4189 = vmatprep.subr.mxu0 0.0
    %4190 = vmatpush1.xpose.msra.mxu0 0.0
    %4191 = vmatprep.subr.mxu0 0.0
    %4192 = vmatpush1.xpose.msra.mxu0 0.0
    %4193 = vmatprep.subr.mxu0 0.0
    %4194 = vmatpush1.xpose.msra.mxu0 0.0
    %4195 = vmatprep.subr.mxu0 0.0
    %4196 = vmatpush1.xpose.msra.mxu0 0.0
    %4197 = vmatprep.subr.mxu0 0.0
    %4198 = vmatpush1.xpose.msra.mxu0 0.0
    %4199 = vmatprep.subr.mxu0 0.0
    %4200 = vmatpush1.xpose.msra.mxu0 0.0
    %4201 = vmatprep.subr.mxu0 0.0
    %4202 = vmatpush1.xpose.msra.mxu0 0.0
    %4203 = vmatprep.subr.mxu0 0.0
    %4204 = vmatpush1.xpose.msra.mxu0 0.0
    %4205 = vmatprep.subr.mxu0 0.0
    %4206 = vmatpush1.xpose.msra.mxu0 0.0
    %4207 = vmatprep.subr.mxu0 0.0
    %4208 = vmatpush1.xpose.msra.mxu0 0.0
    %4209 = vmatprep.subr.mxu0 0.0
    %4210 = vmatpush1.xpose.msra.mxu0 0.0
    %4211 = vmatprep.subr.mxu0 0.0
    %4212 = vmatpush1.xpose.msra.mxu0 0.0
    %4213 = vmatprep.subr.mxu0 0.0
    %4214 = vmatpush1.xpose.msra.mxu0 0.0
    %4215 = vmatprep.subr.mxu0 0.0
    %4216 = vmatpush1.xpose.msra.mxu0 0.0
    %4217 = vmatprep.subr.mxu0 0.0
    %4218 = vmatpush1.xpose.msra.mxu0 0.0
    %4219 = vmatprep.subr.mxu0 0.0
    %4220 = vmatpush1.xpose.msra.mxu0 0.0
    %4221 = vmatprep.subr.mxu0 0.0
    %4222 = vmatpush1.xpose.msra.mxu0 0.0
    %4223 = vmatprep.subr.mxu0 0.0
    %4224 = vmatpush1.xpose.msra.mxu0 0.0
    %4225 = vmatprep.subr.mxu0 0.0
    %4226 = vmatpush1.xpose.msra.mxu0 0.0
    %4227 = vmatprep.subr.mxu0 0.0
    %4228 = vmatpush1.xpose.msra.mxu0 0.0
    %4229 = vmatprep.subr.mxu0 0.0
    %4230 = vmatpush1.xpose.msra.mxu0 0.0
    %4231 = vmatprep.subr.mxu0 0.0
    %4232 = vmatpush1.xpose.msra.mxu0 0.0
    %4233 = vmatprep.subr.mxu0 0.0
    %4234 = vmatpush1.xpose.msra.mxu0 0.0
    %4235 = vmatprep.mubr.f32.mxu0 0.0
    %4236 = vmatmul.mubr.f32.gmra.mrb[0].mxu0 %v4166
    %v4237 = vpop.f32.mrb[0].mxu0
    %v4238 = vadd.f32 0.0, %v4237
    %v4239 = vpop.f32.mrb[0].mxu0
    %4240 = vdwg.mxu0
    %v4242 = vsel %vm172, %v754, 0
    %v4245 = vsel %vm172, %v1962, 0
    %4247 = vmatprep.subr.mxu0 0.0
    %4248 = vmatpush1.xpose.msra.mxu0 %v4245
    %4249 = vmatprep.subr.mxu0 0.0
    %4250 = vmatpush1.xpose.msra.mxu0 0.0
    %4251 = vmatprep.subr.mxu0 0.0
    %4252 = vmatpush1.xpose.msra.mxu0 0.0
    %4253 = vmatprep.subr.mxu0 0.0
    %4254 = vmatpush1.xpose.msra.mxu0 0.0
    %4255 = vmatprep.subr.mxu0 0.0
    %4256 = vmatpush1.xpose.msra.mxu0 0.0
    %4257 = vmatprep.subr.mxu0 0.0
    %4258 = vmatpush1.xpose.msra.mxu0 0.0
    %4259 = vmatprep.subr.mxu0 0.0
    %4260 = vmatpush1.xpose.msra.mxu0 0.0
    %4261 = vmatprep.subr.mxu0 0.0
    %4262 = vmatpush1.xpose.msra.mxu0 0.0
    %4263 = vmatprep.subr.mxu0 0.0
    %4264 = vmatpush1.xpose.msra.mxu0 0.0
    %4265 = vmatprep.subr.mxu0 0.0
    %4266 = vmatpush1.xpose.msra.mxu0 0.0
    %4267 = vmatprep.subr.mxu0 0.0
    %4268 = vmatpush1.xpose.msra.mxu0 0.0
    %4269 = vmatprep.subr.mxu0 0.0
    %4270 = vmatpush1.xpose.msra.mxu0 0.0
    %4271 = vmatprep.subr.mxu0 0.0
    %4272 = vmatpush1.xpose.msra.mxu0 0.0
    %4273 = vmatprep.subr.mxu0 0.0
    %4274 = vmatpush1.xpose.msra.mxu0 0.0
    %4275 = vmatprep.subr.mxu0 0.0
    %4276 = vmatpush1.xpose.msra.mxu0 0.0
    %4277 = vmatprep.subr.mxu0 0.0
    %4278 = vmatpush1.xpose.msra.mxu0 0.0
    %4279 = vmatprep.subr.mxu0 0.0
    %4280 = vmatpush1.xpose.msra.mxu0 0.0
    %4281 = vmatprep.subr.mxu0 0.0
    %4282 = vmatpush1.xpose.msra.mxu0 0.0
    %4283 = vmatprep.subr.mxu0 0.0
    %4284 = vmatpush1.xpose.msra.mxu0 0.0
    %4285 = vmatprep.subr.mxu0 0.0
    %4286 = vmatpush1.xpose.msra.mxu0 0.0
    %4287 = vmatprep.subr.mxu0 0.0
    %4288 = vmatpush1.xpose.msra.mxu0 0.0
    %4289 = vmatprep.subr.mxu0 0.0
    %4290 = vmatpush1.xpose.msra.mxu0 0.0
    %4291 = vmatprep.subr.mxu0 0.0
    %4292 = vmatpush1.xpose.msra.mxu0 0.0
    %4293 = vmatprep.subr.mxu0 0.0
    %4294 = vmatpush1.xpose.msra.mxu0 0.0
    %4295 = vmatprep.subr.mxu0 0.0
    %4296 = vmatpush1.xpose.msra.mxu0 0.0
    %4297 = vmatprep.subr.mxu0 0.0
    %4298 = vmatpush1.xpose.msra.mxu0 0.0
    %4299 = vmatprep.subr.mxu0 0.0
    %4300 = vmatpush1.xpose.msra.mxu0 0.0
    %4301 = vmatprep.subr.mxu0 0.0
    %4302 = vmatpush1.xpose.msra.mxu0 0.0
    %4303 = vmatprep.subr.mxu0 0.0
    %4304 = vmatpush1.xpose.msra.mxu0 0.0
    %4305 = vmatprep.subr.mxu0 0.0
    %4306 = vmatpush1.xpose.msra.mxu0 0.0
    %4307 = vmatprep.subr.mxu0 0.0
    %4308 = vmatpush1.xpose.msra.mxu0 0.0
    %4309 = vmatprep.subr.mxu0 0.0
    %4310 = vmatpush1.xpose.msra.mxu0 0.0
    %4311 = vmatprep.mubr.f32.mxu0 0.0
    %4312 = vmatmul.mubr.f32.gmra.mrb[0].mxu0 %v4242
    %v4313 = vpop.f32.mrb[0].mxu0
    %v4314 = vadd.f32 0.0, %v4313
    %v4315 = vpop.f32.mrb[0].mxu0
    %4316 = vdwg.mxu0
    %v4318 = vsel %vm172, %v827, 0
    %v4321 = vsel %vm172, %v2032, 0
    %4323 = vmatprep.subr.mxu0 0.0
    %4324 = vmatpush1.xpose.msra.mxu0 %v4321
    %4325 = vmatprep.subr.mxu0 0.0
    %4326 = vmatpush1.xpose.msra.mxu0 0.0
    %4327 = vmatprep.subr.mxu0 0.0
    %4328 = vmatpush1.xpose.msra.mxu0 0.0
    %4329 = vmatprep.subr.mxu0 0.0
    %4330 = vmatpush1.xpose.msra.mxu0 0.0
    %4331 = vmatprep.subr.mxu0 0.0
    %4332 = vmatpush1.xpose.msra.mxu0 0.0
    %4333 = vmatprep.subr.mxu0 0.0
    %4334 = vmatpush1.xpose.msra.mxu0 0.0
    %4335 = vmatprep.subr.mxu0 0.0
    %4336 = vmatpush1.xpose.msra.mxu0 0.0
    %4337 = vmatprep.subr.mxu0 0.0
    %4338 = vmatpush1.xpose.msra.mxu0 0.0
    %4339 = vmatprep.subr.mxu0 0.0
    %4340 = vmatpush1.xpose.msra.mxu0 0.0
    %4341 = vmatprep.subr.mxu0 0.0
    %4342 = vmatpush1.xpose.msra.mxu0 0.0
    %4343 = vmatprep.subr.mxu0 0.0
    %4344 = vmatpush1.xpose.msra.mxu0 0.0
    %4345 = vmatprep.subr.mxu0 0.0
    %4346 = vmatpush1.xpose.msra.mxu0 0.0
    %4347 = vmatprep.subr.mxu0 0.0
    %4348 = vmatpush1.xpose.msra.mxu0 0.0
    %4349 = vmatprep.subr.mxu0 0.0
    %4350 = vmatpush1.xpose.msra.mxu0 0.0
    %4351 = vmatprep.subr.mxu0 0.0
    %4352 = vmatpush1.xpose.msra.mxu0 0.0
    %4353 = vmatprep.subr.mxu0 0.0
    %4354 = vmatpush1.xpose.msra.mxu0 0.0
    %4355 = vmatprep.subr.mxu0 0.0
    %4356 = vmatpush1.xpose.msra.mxu0 0.0
    %4357 = vmatprep.subr.mxu0 0.0
    %4358 = vmatpush1.xpose.msra.mxu0 0.0
    %4359 = vmatprep.subr.mxu0 0.0
    %4360 = vmatpush1.xpose.msra.mxu0 0.0
    %4361 = vmatprep.subr.mxu0 0.0
    %4362 = vmatpush1.xpose.msra.mxu0 0.0
    %4363 = vmatprep.subr.mxu0 0.0
    %4364 = vmatpush1.xpose.msra.mxu0 0.0
    %4365 = vmatprep.subr.mxu0 0.0
    %4366 = vmatpush1.xpose.msra.mxu0 0.0
    %4367 = vmatprep.subr.mxu0 0.0
    %4368 = vmatpush1.xpose.msra.mxu0 0.0
    %4369 = vmatprep.subr.mxu0 0.0
    %4370 = vmatpush1.xpose.msra.mxu0 0.0
    %4371 = vmatprep.subr.mxu0 0.0
    %4372 = vmatpush1.xpose.msra.mxu0 0.0
    %4373 = vmatprep.subr.mxu0 0.0
    %4374 = vmatpush1.xpose.msra.mxu0 0.0
    %4375 = vmatprep.subr.mxu0 0.0
    %4376 = vmatpush1.xpose.msra.mxu0 0.0
    %4377 = vmatprep.subr.mxu0 0.0
    %4378 = vmatpush1.xpose.msra.mxu0 0.0
    %4379 = vmatprep.subr.mxu0 0.0
    %4380 = vmatpush1.xpose.msra.mxu0 0.0
    %4381 = vmatprep.subr.mxu0 0.0
    %4382 = vmatpush1.xpose.msra.mxu0 0.0
    %4383 = vmatprep.subr.mxu0 0.0
    %4384 = vmatpush1.xpose.msra.mxu0 0.0
    %4385 = vmatprep.subr.mxu0 0.0
    %4386 = vmatpush1.xpose.msra.mxu0 0.0
    %4387 = vmatprep.mubr.f32.mxu0 0.0
    %4388 = vmatmul.mubr.f32.gmra.mrb[0].mxu0 %v4318
    %v4389 = vpop.f32.mrb[0].mxu0
    %v4390 = vadd.f32 0.0, %v4389
    %v4391 = vpop.f32.mrb[0].mxu0
    %4392 = vdwg.mxu0
    %v4394 = vsel %vm172, %v900, 0
    %v4397 = vsel %vm172, %v2102, 0
    %4399 = vmatprep.subr.mxu0 0.0
    %4400 = vmatpush1.xpose.msra.mxu0 %v4397
    %4401 = vmatprep.subr.mxu0 0.0
    %4402 = vmatpush1.xpose.msra.mxu0 0.0
    %4403 = vmatprep.subr.mxu0 0.0
    %4404 = vmatpush1.xpose.msra.mxu0 0.0
    %4405 = vmatprep.subr.mxu0 0.0
    %4406 = vmatpush1.xpose.msra.mxu0 0.0
    %4407 = vmatprep.subr.mxu0 0.0
    %4408 = vmatpush1.xpose.msra.mxu0 0.0
    %4409 = vmatprep.subr.mxu0 0.0
    %4410 = vmatpush1.xpose.msra.mxu0 0.0
    %4411 = vmatprep.subr.mxu0 0.0
    %4412 = vmatpush1.xpose.msra.mxu0 0.0
    %4413 = vmatprep.subr.mxu0 0.0
    %4414 = vmatpush1.xpose.msra.mxu0 0.0
    %4415 = vmatprep.subr.mxu0 0.0
    %4416 = vmatpush1.xpose.msra.mxu0 0.0
    %4417 = vmatprep.subr.mxu0 0.0
    %4418 = vmatpush1.xpose.msra.mxu0 0.0
    %4419 = vmatprep.subr.mxu0 0.0
    %4420 = vmatpush1.xpose.msra.mxu0 0.0
    %4421 = vmatprep.subr.mxu0 0.0
    %4422 = vmatpush1.xpose.msra.mxu0 0.0
    %4423 = vmatprep.subr.mxu0 0.0
    %4424 = vmatpush1.xpose.msra.mxu0 0.0
    %4425 = vmatprep.subr.mxu0 0.0
    %4426 = vmatpush1.xpose.msra.mxu0 0.0
    %4427 = vmatprep.subr.mxu0 0.0
    %4428 = vmatpush1.xpose.msra.mxu0 0.0
    %4429 = vmatprep.subr.mxu0 0.0
    %4430 = vmatpush1.xpose.msra.mxu0 0.0
    %4431 = vmatprep.subr.mxu0 0.0
    %4432 = vmatpush1.xpose.msra.mxu0 0.0
    %4433 = vmatprep.subr.mxu0 0.0
    %4434 = vmatpush1.xpose.msra.mxu0 0.0
    %4435 = vmatprep.subr.mxu0 0.0
    %4436 = vmatpush1.xpose.msra.mxu0 0.0
    %4437 = vmatprep.subr.mxu0 0.0
    %4438 = vmatpush1.xpose.msra.mxu0 0.0
    %4439 = vmatprep.subr.mxu0 0.0
    %4440 = vmatpush1.xpose.msra.mxu0 0.0
    %4441 = vmatprep.subr.mxu0 0.0
    %4442 = vmatpush1.xpose.msra.mxu0 0.0
    %4443 = vmatprep.subr.mxu0 0.0
    %4444 = vmatpush1.xpose.msra.mxu0 0.0
    %4445 = vmatprep.subr.mxu0 0.0
    %4446 = vmatpush1.xpose.msra.mxu0 0.0
    %4447 = vmatprep.subr.mxu0 0.0
    %4448 = vmatpush1.xpose.msra.mxu0 0.0
    %4449 = vmatprep.subr.mxu0 0.0
    %4450 = vmatpush1.xpose.msra.mxu0 0.0
    %4451 = vmatprep.subr.mxu0 0.0
    %4452 = vmatpush1.xpose.msra.mxu0 0.0
    %4453 = vmatprep.subr.mxu0 0.0
    %4454 = vmatpush1.xpose.msra.mxu0 0.0
    %4455 = vmatprep.subr.mxu0 0.0
    %4456 = vmatpush1.xpose.msra.mxu0 0.0
    %4457 = vmatprep.subr.mxu0 0.0
    %4458 = vmatpush1.xpose.msra.mxu0 0.0
    %4459 = vmatprep.subr.mxu0 0.0
    %4460 = vmatpush1.xpose.msra.mxu0 0.0
    %4461 = vmatprep.subr.mxu0 0.0
    %4462 = vmatpush1.xpose.msra.mxu0 0.0
    %4463 = vmatprep.mubr.f32.mxu0 0.0
    %4464 = vmatmul.mubr.f32.gmra.mrb[0].mxu0 %v4394
    %v4465 = vpop.f32.mrb[0].mxu0
    %v4466 = vadd.f32 0.0, %v4465
    %v4467 = vpop.f32.mrb[0].mxu0
    %4468 = vdwg.mxu0
    %v4470 = vsel %vm172, %v973, 0
    %v4473 = vsel %vm172, %v2172, 0
    %4475 = vmatprep.subr.mxu0 0.0
    %4476 = vmatpush1.xpose.msra.mxu0 %v4473
    %4477 = vmatprep.subr.mxu0 0.0
    %4478 = vmatpush1.xpose.msra.mxu0 0.0
    %4479 = vmatprep.subr.mxu0 0.0
    %4480 = vmatpush1.xpose.msra.mxu0 0.0
    %4481 = vmatprep.subr.mxu0 0.0
    %4482 = vmatpush1.xpose.msra.mxu0 0.0
    %4483 = vmatprep.subr.mxu0 0.0
    %4484 = vmatpush1.xpose.msra.mxu0 0.0
    %4485 = vmatprep.subr.mxu0 0.0
    %4486 = vmatpush1.xpose.msra.mxu0 0.0
    %4487 = vmatprep.subr.mxu0 0.0
    %4488 = vmatpush1.xpose.msra.mxu0 0.0
    %4489 = vmatprep.subr.mxu0 0.0
    %4490 = vmatpush1.xpose.msra.mxu0 0.0
    %4491 = vmatprep.subr.mxu0 0.0
    %4492 = vmatpush1.xpose.msra.mxu0 0.0
    %4493 = vmatprep.subr.mxu0 0.0
    %4494 = vmatpush1.xpose.msra.mxu0 0.0
    %4495 = vmatprep.subr.mxu0 0.0
    %4496 = vmatpush1.xpose.msra.mxu0 0.0
    %4497 = vmatprep.subr.mxu0 0.0
    %4498 = vmatpush1.xpose.msra.mxu0 0.0
    %4499 = vmatprep.subr.mxu0 0.0
    %4500 = vmatpush1.xpose.msra.mxu0 0.0
    %4501 = vmatprep.subr.mxu0 0.0
    %4502 = vmatpush1.xpose.msra.mxu0 0.0
    %4503 = vmatprep.subr.mxu0 0.0
    %4504 = vmatpush1.xpose.msra.mxu0 0.0
    %4505 = vmatprep.subr.mxu0 0.0
    %4506 = vmatpush1.xpose.msra.mxu0 0.0
    %4507 = vmatprep.subr.mxu0 0.0
    %4508 = vmatpush1.xpose.msra.mxu0 0.0
    %4509 = vmatprep.subr.mxu0 0.0
    %4510 = vmatpush1.xpose.msra.mxu0 0.0
    %4511 = vmatprep.subr.mxu0 0.0
    %4512 = vmatpush1.xpose.msra.mxu0 0.0
    %4513 = vmatprep.subr.mxu0 0.0
    %4514 = vmatpush1.xpose.msra.mxu0 0.0
    %4515 = vmatprep.subr.mxu0 0.0
    %4516 = vmatpush1.xpose.msra.mxu0 0.0
    %4517 = vmatprep.subr.mxu0 0.0
    %4518 = vmatpush1.xpose.msra.mxu0 0.0
    %4519 = vmatprep.subr.mxu0 0.0
    %4520 = vmatpush1.xpose.msra.mxu0 0.0
    %4521 = vmatprep.subr.mxu0 0.0
    %4522 = vmatpush1.xpose.msra.mxu0 0.0
    %4523 = vmatprep.subr.mxu0 0.0
    %4524 = vmatpush1.xpose.msra.mxu0 0.0
    %4525 = vmatprep.subr.mxu0 0.0
    %4526 = vmatpush1.xpose.msra.mxu0 0.0
    %4527 = vmatprep.subr.mxu0 0.0
    %4528 = vmatpush1.xpose.msra.mxu0 0.0
    %4529 = vmatprep.subr.mxu0 0.0
    %4530 = vmatpush1.xpose.msra.mxu0 0.0
    %4531 = vmatprep.subr.mxu0 0.0
    %4532 = vmatpush1.xpose.msra.mxu0 0.0
    %4533 = vmatprep.subr.mxu0 0.0
    %4534 = vmatpush1.xpose.msra.mxu0 0.0
    %4535 = vmatprep.subr.mxu0 0.0
    %4536 = vmatpush1.xpose.msra.mxu0 0.0
    %4537 = vmatprep.subr.mxu0 0.0
    %4538 = vmatpush1.xpose.msra.mxu0 0.0
    %4539 = vmatprep.mubr.f32.mxu0 0.0
    %4540 = vmatmul.mubr.f32.gmra.mrb[0].mxu0 %v4470
    %v4541 = vpop.f32.mrb[0].mxu0
    %v4542 = vadd.f32 0.0, %v4541
    %v4543 = vpop.f32.mrb[0].mxu0
    %4544 = vdwg.mxu0
    %v4546 = vsel %vm172, %v1046, 0
    %v4549 = vsel %vm172, %v2242, 0
    %4551 = vmatprep.subr.mxu0 0.0
    %4552 = vmatpush1.xpose.msra.mxu0 %v4549
    %4553 = vmatprep.subr.mxu0 0.0
    %4554 = vmatpush1.xpose.msra.mxu0 0.0
    %4555 = vmatprep.subr.mxu0 0.0
    %4556 = vmatpush1.xpose.msra.mxu0 0.0
    %4557 = vmatprep.subr.mxu0 0.0
    %4558 = vmatpush1.xpose.msra.mxu0 0.0
    %4559 = vmatprep.subr.mxu0 0.0
    %4560 = vmatpush1.xpose.msra.mxu0 0.0
    %4561 = vmatprep.subr.mxu0 0.0
    %4562 = vmatpush1.xpose.msra.mxu0 0.0
    %4563 = vmatprep.subr.mxu0 0.0
    %4564 = vmatpush1.xpose.msra.mxu0 0.0
    %4565 = vmatprep.subr.mxu0 0.0
    %4566 = vmatpush1.xpose.msra.mxu0 0.0
    %4567 = vmatprep.subr.mxu0 0.0
    %4568 = vmatpush1.xpose.msra.mxu0 0.0
    %4569 = vmatprep.subr.mxu0 0.0
    %4570 = vmatpush1.xpose.msra.mxu0 0.0
    %4571 = vmatprep.subr.mxu0 0.0
    %4572 = vmatpush1.xpose.msra.mxu0 0.0
    %4573 = vmatprep.subr.mxu0 0.0
    %4574 = vmatpush1.xpose.msra.mxu0 0.0
    %4575 = vmatprep.subr.mxu0 0.0
    %4576 = vmatpush1.xpose.msra.mxu0 0.0
    %4577 = vmatprep.subr.mxu0 0.0
    %4578 = vmatpush1.xpose.msra.mxu0 0.0
    %4579 = vmatprep.subr.mxu0 0.0
    %4580 = vmatpush1.xpose.msra.mxu0 0.0
    %4581 = vmatprep.subr.mxu0 0.0
    %4582 = vmatpush1.xpose.msra.mxu0 0.0
    %4583 = vmatprep.subr.mxu0 0.0
    %4584 = vmatpush1.xpose.msra.mxu0 0.0
    %4585 = vmatprep.subr.mxu0 0.0
    %4586 = vmatpush1.xpose.msra.mxu0 0.0
    %4587 = vmatprep.subr.mxu0 0.0
    %4588 = vmatpush1.xpose.msra.mxu0 0.0
    %4589 = vmatprep.subr.mxu0 0.0
    %4590 = vmatpush1.xpose.msra.mxu0 0.0
    %4591 = vmatprep.subr.mxu0 0.0
    %4592 = vmatpush1.xpose.msra.mxu0 0.0
    %4593 = vmatprep.subr.mxu0 0.0
    %4594 = vmatpush1.xpose.msra.mxu0 0.0
    %4595 = vmatprep.subr.mxu0 0.0
    %4596 = vmatpush1.xpose.msra.mxu0 0.0
    %4597 = vmatprep.subr.mxu0 0.0
    %4598 = vmatpush1.xpose.msra.mxu0 0.0
    %4599 = vmatprep.subr.mxu0 0.0
    %4600 = vmatpush1.xpose.msra.mxu0 0.0
    %4601 = vmatprep.subr.mxu0 0.0
    %4602 = vmatpush1.xpose.msra.mxu0 0.0
    %4603 = vmatprep.subr.mxu0 0.0
    %4604 = vmatpush1.xpose.msra.mxu0 0.0
    %4605 = vmatprep.subr.mxu0 0.0
    %4606 = vmatpush1.xpose.msra.mxu0 0.0
    %4607 = vmatprep.subr.mxu0 0.0
    %4608 = vmatpush1.xpose.msra.mxu0 0.0
    %4609 = vmatprep.subr.mxu0 0.0
    %4610 = vmatpush1.xpose.msra.mxu0 0.0
    %4611 = vmatprep.subr.mxu0 0.0
    %4612 = vmatpush1.xpose.msra.mxu0 0.0
    %4613 = vmatprep.subr.mxu0 0.0
    %4614 = vmatpush1.xpose.msra.mxu0 0.0
    %4615 = vmatprep.mubr.f32.mxu0 0.0
    %4616 = vmatmul.mubr.f32.gmra.mrb[0].mxu0 %v4546
    %v4617 = vpop.f32.mrb[0].mxu0
    %v4618 = vadd.f32 0.0, %v4617
    %v4619 = vpop.f32.mrb[0].mxu0
    %4620 = vdwg.mxu0
    %v4622 = vsel %vm172, %v1119, 0
    %v4625 = vsel %vm172, %v2312, 0
    %4627 = vmatprep.subr.mxu0 0.0
    %4628 = vmatpush1.xpose.msra.mxu0 %v4625
    %4629 = vmatprep.subr.mxu0 0.0
    %4630 = vmatpush1.xpose.msra.mxu0 0.0
    %4631 = vmatprep.subr.mxu0 0.0
    %4632 = vmatpush1.xpose.msra.mxu0 0.0
    %4633 = vmatprep.subr.mxu0 0.0
    %4634 = vmatpush1.xpose.msra.mxu0 0.0
    %4635 = vmatprep.subr.mxu0 0.0
    %4636 = vmatpush1.xpose.msra.mxu0 0.0
    %4637 = vmatprep.subr.mxu0 0.0
    %4638 = vmatpush1.xpose.msra.mxu0 0.0
    %4639 = vmatprep.subr.mxu0 0.0
    %4640 = vmatpush1.xpose.msra.mxu0 0.0
    %4641 = vmatprep.subr.mxu0 0.0
    %4642 = vmatpush1.xpose.msra.mxu0 0.0
    %4643 = vmatprep.subr.mxu0 0.0
    %4644 = vmatpush1.xpose.msra.mxu0 0.0
    %4645 = vmatprep.subr.mxu0 0.0
    %4646 = vmatpush1.xpose.msra.mxu0 0.0
    %4647 = vmatprep.subr.mxu0 0.0
    %4648 = vmatpush1.xpose.msra.mxu0 0.0
    %4649 = vmatprep.subr.mxu0 0.0
    %4650 = vmatpush1.xpose.msra.mxu0 0.0
    %4651 = vmatprep.subr.mxu0 0.0
    %4652 = vmatpush1.xpose.msra.mxu0 0.0
    %4653 = vmatprep.subr.mxu0 0.0
    %4654 = vmatpush1.xpose.msra.mxu0 0.0
    %4655 = vmatprep.subr.mxu0 0.0
    %4656 = vmatpush1.xpose.msra.mxu0 0.0
    %4657 = vmatprep.subr.mxu0 0.0
    %4658 = vmatpush1.xpose.msra.mxu0 0.0
    %4659 = vmatprep.subr.mxu0 0.0
    %4660 = vmatpush1.xpose.msra.mxu0 0.0
    %4661 = vmatprep.subr.mxu0 0.0
    %4662 = vmatpush1.xpose.msra.mxu0 0.0
    %4663 = vmatprep.subr.mxu0 0.0
    %4664 = vmatpush1.xpose.msra.mxu0 0.0
    %4665 = vmatprep.subr.mxu0 0.0
    %4666 = vmatpush1.xpose.msra.mxu0 0.0
    %4667 = vmatprep.subr.mxu0 0.0
    %4668 = vmatpush1.xpose.msra.mxu0 0.0
    %4669 = vmatprep.subr.mxu0 0.0
    %4670 = vmatpush1.xpose.msra.mxu0 0.0
    %4671 = vmatprep.subr.mxu0 0.0
    %4672 = vmatpush1.xpose.msra.mxu0 0.0
    %4673 = vmatprep.subr.mxu0 0.0
    %4674 = vmatpush1.xpose.msra.mxu0 0.0
    %4675 = vmatprep.subr.mxu0 0.0
    %4676 = vmatpush1.xpose.msra.mxu0 0.0
    %4677 = vmatprep.subr.mxu0 0.0
    %4678 = vmatpush1.xpose.msra.mxu0 0.0
    %4679 = vmatprep.subr.mxu0 0.0
    %4680 = vmatpush1.xpose.msra.mxu0 0.0
    %4681 = vmatprep.subr.mxu0 0.0
    %4682 = vmatpush1.xpose.msra.mxu0 0.0
    %4683 = vmatprep.subr.mxu0 0.0
    %4684 = vmatpush1.xpose.msra.mxu0 0.0
    %4685 = vmatprep.subr.mxu0 0.0
    %4686 = vmatpush1.xpose.msra.mxu0 0.0
    %4687 = vmatprep.subr.mxu0 0.0
    %4688 = vmatpush1.xpose.msra.mxu0 0.0
    %4689 = vmatprep.subr.mxu0 0.0
    %4690 = vmatpush1.xpose.msra.mxu0 0.0
    %4691 = vmatprep.mubr.f32.mxu0 0.0
    %4692 = vmatmul.mubr.f32.gmra.mrb[0].mxu0 %v4622
    %v4693 = vpop.f32.mrb[0].mxu0
    %v4694 = vadd.f32 0.0, %v4693
    %v4695 = vpop.f32.mrb[0].mxu0
    %4696 = vdwg.mxu0
    %v4698 = vsel %vm172, %v1192, 0
    %v4701 = vsel %vm172, %v2382, 0
    %4703 = vmatprep.subr.mxu0 0.0
    %4704 = vmatpush1.xpose.msra.mxu0 %v4701
    %4705 = vmatprep.subr.mxu0 0.0
    %4706 = vmatpush1.xpose.msra.mxu0 0.0
    %4707 = vmatprep.subr.mxu0 0.0
    %4708 = vmatpush1.xpose.msra.mxu0 0.0
    %4709 = vmatprep.subr.mxu0 0.0
    %4710 = vmatpush1.xpose.msra.mxu0 0.0
    %4711 = vmatprep.subr.mxu0 0.0
    %4712 = vmatpush1.xpose.msra.mxu0 0.0
    %4713 = vmatprep.subr.mxu0 0.0
    %4714 = vmatpush1.xpose.msra.mxu0 0.0
    %4715 = vmatprep.subr.mxu0 0.0
    %4716 = vmatpush1.xpose.msra.mxu0 0.0
    %4717 = vmatprep.subr.mxu0 0.0
    %4718 = vmatpush1.xpose.msra.mxu0 0.0
    %4719 = vmatprep.subr.mxu0 0.0
    %4720 = vmatpush1.xpose.msra.mxu0 0.0
    %4721 = vmatprep.subr.mxu0 0.0
    %4722 = vmatpush1.xpose.msra.mxu0 0.0
    %4723 = vmatprep.subr.mxu0 0.0
    %4724 = vmatpush1.xpose.msra.mxu0 0.0
    %4725 = vmatprep.subr.mxu0 0.0
    %4726 = vmatpush1.xpose.msra.mxu0 0.0
    %4727 = vmatprep.subr.mxu0 0.0
    %4728 = vmatpush1.xpose.msra.mxu0 0.0
    %4729 = vmatprep.subr.mxu0 0.0
    %4730 = vmatpush1.xpose.msra.mxu0 0.0
    %4731 = vmatprep.subr.mxu0 0.0
    %4732 = vmatpush1.xpose.msra.mxu0 0.0
    %4733 = vmatprep.subr.mxu0 0.0
    %4734 = vmatpush1.xpose.msra.mxu0 0.0
    %4735 = vmatprep.subr.mxu0 0.0
    %4736 = vmatpush1.xpose.msra.mxu0 0.0
    %4737 = vmatprep.subr.mxu0 0.0
    %4738 = vmatpush1.xpose.msra.mxu0 0.0
    %4739 = vmatprep.subr.mxu0 0.0
    %4740 = vmatpush1.xpose.msra.mxu0 0.0
    %4741 = vmatprep.subr.mxu0 0.0
    %4742 = vmatpush1.xpose.msra.mxu0 0.0
    %4743 = vmatprep.subr.mxu0 0.0
    %4744 = vmatpush1.xpose.msra.mxu0 0.0
    %4745 = vmatprep.subr.mxu0 0.0
    %4746 = vmatpush1.xpose.msra.mxu0 0.0
    %4747 = vmatprep.subr.mxu0 0.0
    %4748 = vmatpush1.xpose.msra.mxu0 0.0
    %4749 = vmatprep.subr.mxu0 0.0
    %4750 = vmatpush1.xpose.msra.mxu0 0.0
    %4751 = vmatprep.subr.mxu0 0.0
    %4752 = vmatpush1.xpose.msra.mxu0 0.0
    %4753 = vmatprep.subr.mxu0 0.0
    %4754 = vmatpush1.xpose.msra.mxu0 0.0
    %4755 = vmatprep.subr.mxu0 0.0
    %4756 = vmatpush1.xpose.msra.mxu0 0.0
    %4757 = vmatprep.subr.mxu0 0.0
    %4758 = vmatpush1.xpose.msra.mxu0 0.0
    %4759 = vmatprep.subr.mxu0 0.0
    %4760 = vmatpush1.xpose.msra.mxu0 0.0
    %4761 = vmatprep.subr.mxu0 0.0
    %4762 = vmatpush1.xpose.msra.mxu0 0.0
    %4763 = vmatprep.subr.mxu0 0.0
    %4764 = vmatpush1.xpose.msra.mxu0 0.0
    %4765 = vmatprep.subr.mxu0 0.0
    %4766 = vmatpush1.xpose.msra.mxu0 0.0
    %4767 = vmatprep.mubr.f32.mxu0 0.0
    %4768 = vmatmul.mubr.f32.gmra.mrb[0].mxu0 %v4698
    %v4769 = vpop.f32.mrb[0].mxu0
    %v4770 = vadd.f32 0.0, %v4769
    %v4771 = vpop.f32.mrb[0].mxu0
    %4772 = vdwg.mxu0
    %v4774 = vsel %vm172, %v1265, 0
    %v4777 = vsel %vm172, %v2452, 0
    %4779 = vmatprep.subr.mxu0 0.0
    %4780 = vmatpush1.xpose.msra.mxu0 %v4777
    %4781 = vmatprep.subr.mxu0 0.0
    %4782 = vmatpush1.xpose.msra.mxu0 0.0
    %4783 = vmatprep.subr.mxu0 0.0
    %4784 = vmatpush1.xpose.msra.mxu0 0.0
    %4785 = vmatprep.subr.mxu0 0.0
    %4786 = vmatpush1.xpose.msra.mxu0 0.0
    %4787 = vmatprep.subr.mxu0 0.0
    %4788 = vmatpush1.xpose.msra.mxu0 0.0
    %4789 = vmatprep.subr.mxu0 0.0
    %4790 = vmatpush1.xpose.msra.mxu0 0.0
    %4791 = vmatprep.subr.mxu0 0.0
    %4792 = vmatpush1.xpose.msra.mxu0 0.0
    %4793 = vmatprep.subr.mxu0 0.0
    %4794 = vmatpush1.xpose.msra.mxu0 0.0
    %4795 = vmatprep.subr.mxu0 0.0
    %4796 = vmatpush1.xpose.msra.mxu0 0.0
    %4797 = vmatprep.subr.mxu0 0.0
    %4798 = vmatpush1.xpose.msra.mxu0 0.0
    %4799 = vmatprep.subr.mxu0 0.0
    %4800 = vmatpush1.xpose.msra.mxu0 0.0
    %4801 = vmatprep.subr.mxu0 0.0
    %4802 = vmatpush1.xpose.msra.mxu0 0.0
    %4803 = vmatprep.subr.mxu0 0.0
    %4804 = vmatpush1.xpose.msra.mxu0 0.0
    %4805 = vmatprep.subr.mxu0 0.0
    %4806 = vmatpush1.xpose.msra.mxu0 0.0
    %4807 = vmatprep.subr.mxu0 0.0
    %4808 = vmatpush1.xpose.msra.mxu0 0.0
    %4809 = vmatprep.subr.mxu0 0.0
    %4810 = vmatpush1.xpose.msra.mxu0 0.0
    %4811 = vmatprep.subr.mxu0 0.0
    %4812 = vmatpush1.xpose.msra.mxu0 0.0
    %4813 = vmatprep.subr.mxu0 0.0
    %4814 = vmatpush1.xpose.msra.mxu0 0.0
    %4815 = vmatprep.subr.mxu0 0.0
    %4816 = vmatpush1.xpose.msra.mxu0 0.0
    %4817 = vmatprep.subr.mxu0 0.0
    %4818 = vmatpush1.xpose.msra.mxu0 0.0
    %4819 = vmatprep.subr.mxu0 0.0
    %4820 = vmatpush1.xpose.msra.mxu0 0.0
    %4821 = vmatprep.subr.mxu0 0.0
    %4822 = vmatpush1.xpose.msra.mxu0 0.0
    %4823 = vmatprep.subr.mxu0 0.0
    %4824 = vmatpush1.xpose.msra.mxu0 0.0
    %4825 = vmatprep.subr.mxu0 0.0
    %4826 = vmatpush1.xpose.msra.mxu0 0.0
    %4827 = vmatprep.subr.mxu0 0.0
    %4828 = vmatpush1.xpose.msra.mxu0 0.0
    %4829 = vmatprep.subr.mxu0 0.0
    %4830 = vmatpush1.xpose.msra.mxu0 0.0
    %4831 = vmatprep.subr.mxu0 0.0
    %4832 = vmatpush1.xpose.msra.mxu0 0.0
    %4833 = vmatprep.subr.mxu0 0.0
    %4834 = vmatpush1.xpose.msra.mxu0 0.0
    %4835 = vmatprep.subr.mxu0 0.0
    %4836 = vmatpush1.xpose.msra.mxu0 0.0
    %4837 = vmatprep.subr.mxu0 0.0
    %4838 = vmatpush1.xpose.msra.mxu0 0.0
    %4839 = vmatprep.subr.mxu0 0.0
    %4840 = vmatpush1.xpose.msra.mxu0 0.0
    %4841 = vmatprep.subr.mxu0 0.0
    %4842 = vmatpush1.xpose.msra.mxu0 0.0
    %4843 = vmatprep.mubr.f32.mxu0 0.0
    %4844 = vmatmul.mubr.f32.gmra.mrb[0].mxu0 %v4774
    %v4845 = vpop.f32.mrb[0].mxu0
    %v4846 = vadd.f32 0.0, %v4845
    %v4847 = vpop.f32.mrb[0].mxu0
    %4848 = vdwg.mxu0
    %v4850 = vsel %vm172, %v1338, 0
    %v4853 = vsel %vm172, %v2522, 0
    %4855 = vmatprep.subr.mxu0 0.0
    %4856 = vmatpush1.xpose.msra.mxu0 %v4853
    %4857 = vmatprep.subr.mxu0 0.0
    %4858 = vmatpush1.xpose.msra.mxu0 0.0
    %4859 = vmatprep.subr.mxu0 0.0
    %4860 = vmatpush1.xpose.msra.mxu0 0.0
    %4861 = vmatprep.subr.mxu0 0.0
    %4862 = vmatpush1.xpose.msra.mxu0 0.0
    %4863 = vmatprep.subr.mxu0 0.0
    %4864 = vmatpush1.xpose.msra.mxu0 0.0
    %4865 = vmatprep.subr.mxu0 0.0
    %4866 = vmatpush1.xpose.msra.mxu0 0.0
    %4867 = vmatprep.subr.mxu0 0.0
    %4868 = vmatpush1.xpose.msra.mxu0 0.0
    %4869 = vmatprep.subr.mxu0 0.0
    %4870 = vmatpush1.xpose.msra.mxu0 0.0
    %4871 = vmatprep.subr.mxu0 0.0
    %4872 = vmatpush1.xpose.msra.mxu0 0.0
    %4873 = vmatprep.subr.mxu0 0.0
    %4874 = vmatpush1.xpose.msra.mxu0 0.0
    %4875 = vmatprep.subr.mxu0 0.0
    %4876 = vmatpush1.xpose.msra.mxu0 0.0
    %4877 = vmatprep.subr.mxu0 0.0
    %4878 = vmatpush1.xpose.msra.mxu0 0.0
    %4879 = vmatprep.subr.mxu0 0.0
    %4880 = vmatpush1.xpose.msra.mxu0 0.0
    %4881 = vmatprep.subr.mxu0 0.0
    %4882 = vmatpush1.xpose.msra.mxu0 0.0
    %4883 = vmatprep.subr.mxu0 0.0
    %4884 = vmatpush1.xpose.msra.mxu0 0.0
    %4885 = vmatprep.subr.mxu0 0.0
    %4886 = vmatpush1.xpose.msra.mxu0 0.0
    %4887 = vmatprep.subr.mxu0 0.0
    %4888 = vmatpush1.xpose.msra.mxu0 0.0
    %4889 = vmatprep.subr.mxu0 0.0
    %4890 = vmatpush1.xpose.msra.mxu0 0.0
    %4891 = vmatprep.subr.mxu0 0.0
    %4892 = vmatpush1.xpose.msra.mxu0 0.0
    %4893 = vmatprep.subr.mxu0 0.0
    %4894 = vmatpush1.xpose.msra.mxu0 0.0
    %4895 = vmatprep.subr.mxu0 0.0
    %4896 = vmatpush1.xpose.msra.mxu0 0.0
    %4897 = vmatprep.subr.mxu0 0.0
    %4898 = vmatpush1.xpose.msra.mxu0 0.0
    %4899 = vmatprep.subr.mxu0 0.0
    %4900 = vmatpush1.xpose.msra.mxu0 0.0
    %4901 = vmatprep.subr.mxu0 0.0
    %4902 = vmatpush1.xpose.msra.mxu0 0.0
    %4903 = vmatprep.subr.mxu0 0.0
    %4904 = vmatpush1.xpose.msra.mxu0 0.0
    %4905 = vmatprep.subr.mxu0 0.0
    %4906 = vmatpush1.xpose.msra.mxu0 0.0
    %4907 = vmatprep.subr.mxu0 0.0
    %4908 = vmatpush1.xpose.msra.mxu0 0.0
    %4909 = vmatprep.subr.mxu0 0.0
    %4910 = vmatpush1.xpose.msra.mxu0 0.0
    %4911 = vmatprep.subr.mxu0 0.0
    %4912 = vmatpush1.xpose.msra.mxu0 0.0
    %4913 = vmatprep.subr.mxu0 0.0
    %4914 = vmatpush1.xpose.msra.mxu0 0.0
    %4915 = vmatprep.subr.mxu0 0.0
    %4916 = vmatpush1.xpose.msra.mxu0 0.0
    %4917 = vmatprep.subr.mxu0 0.0
    %4918 = vmatpush1.xpose.msra.mxu0 0.0
    %4919 = vmatprep.mubr.f32.mxu0 0.0
    %4920 = vmatmul.mubr.f32.gmra.mrb[0].mxu0 %v4850
    %v4921 = vpop.f32.mrb[0].mxu0
    %v4922 = vadd.f32 0.0, %v4921
    %v4923 = vpop.f32.mrb[0].mxu0
    %4924 = vdwg.mxu0
    %v4925 = vmul.f32 %v3782, 0.17677669
    %v4926 = vmul.f32 %v3858, 0.17677669
    %v4927 = vmul.f32 %v3934, 0.17677669
    %v4928 = vmul.f32 %v4010, 0.17677669
    %v4929 = vmul.f32 %v4086, 0.17677669
    %v4930 = vmul.f32 %v4162, 0.17677669
    %v4931 = vmul.f32 %v4238, 0.17677669
    %v4932 = vmul.f32 %v4314, 0.17677669
    %v4933 = vmul.f32 %v4390, 0.17677669
    %v4934 = vmul.f32 %v4466, 0.17677669
    %v4935 = vmul.f32 %v4542, 0.17677669
    %v4936 = vmul.f32 %v4618, 0.17677669
    %v4937 = vmul.f32 %v4694, 0.17677669
    %v4938 = vmul.f32 %v4770, 0.17677669
    %v4939 = vmul.f32 %v4846, 0.17677669
    %v4940 = vmul.f32 %v4922, 0.17677669
    %vm4941 = vcmask 64512
    %v4942 = vsel %vm4941, %v4925, -inf
    %4943 = vmax.xlane.f32.xlu0 %v4942
    %v4944 = vpop.xlane.xlu0 %4943
    %v4945 = vsel %vm4941, %v4926, -inf
    %4946 = vmax.xlane.f32.xlu0 %v4945
    %v4947 = vpop.xlane.xlu0 %4946
    %v4948 = vsel %vm4941, %v4927, -inf
    %4949 = vmax.xlane.f32.xlu0 %v4948
    %v4950 = vpop.xlane.xlu0 %4949
    %v4951 = vsel %vm4941, %v4928, -inf
    %4952 = vmax.xlane.f32.xlu0 %v4951
    %v4953 = vpop.xlane.xlu0 %4952
    %v4954 = vsel %vm4941, %v4929, -inf
    %4955 = vmax.xlane.f32.xlu0 %v4954
    %v4956 = vpop.xlane.xlu0 %4955
    %v4957 = vsel %vm4941, %v4930, -inf
    %4958 = vmax.xlane.f32.xlu0 %v4957
    %v4959 = vpop.xlane.xlu0 %4958
    %v4960 = vsel %vm4941, %v4931, -inf
    %4961 = vmax.xlane.f32.xlu0 %v4960
    %v4962 = vpop.xlane.xlu0 %4961
    %v4963 = vsel %vm4941, %v4932, -inf
    %4964 = vmax.xlane.f32.xlu0 %v4963
    %v4965 = vpop.xlane.xlu0 %4964
    %v4966 = vsel %vm4941, %v4933, -inf
    %4967 = vmax.xlane.f32.xlu0 %v4966
    %v4968 = vpop.xlane.xlu0 %4967
    %v4969 = vsel %vm4941, %v4934, -inf
    %4970 = vmax.xlane.f32.xlu0 %v4969
    %v4971 = vpop.xlane.xlu0 %4970
    %v4972 = vsel %vm4941, %v4935, -inf
    %4973 = vmax.xlane.f32.xlu0 %v4972
    %v4974 = vpop.xlane.xlu0 %4973
    %v4975 = vsel %vm4941, %v4936, -inf
    %4976 = vmax.xlane.f32.xlu0 %v4975
    %v4977 = vpop.xlane.xlu0 %4976
    %v4978 = vsel %vm4941, %v4937, -inf
    %4979 = vmax.xlane.f32.xlu0 %v4978
    %v4980 = vpop.xlane.xlu0 %4979
    %v4981 = vsel %vm4941, %v4938, -inf
    %4982 = vmax.xlane.f32.xlu0 %v4981
    %v4983 = vpop.xlane.xlu0 %4982
    %v4984 = vsel %vm4941, %v4939, -inf
    %4985 = vmax.xlane.f32.xlu0 %v4984
    %v4986 = vpop.xlane.xlu0 %4985
    %v4987 = vsel %vm4941, %v4940, -inf
    %4988 = vmax.xlane.f32.xlu0 %v4987
    %v4989 = vpop.xlane.xlu0 %4988
    %v4990 = vsub.f32 %v4925, %v4944
    %v4991 = vsub.f32 %v4926, %v4947
    %v4992 = vsub.f32 %v4927, %v4950
    %v4993 = vsub.f32 %v4928, %v4953
    %v4994 = vsub.f32 %v4929, %v4956
    %v4995 = vsub.f32 %v4930, %v4959
    %v4996 = vsub.f32 %v4931, %v4962
    %v4997 = vsub.f32 %v4932, %v4965
    %v4998 = vsub.f32 %v4933, %v4968
    %v4999 = vsub.f32 %v4934, %v4971
    %v5000 = vsub.f32 %v4935, %v4974
    %v5001 = vsub.f32 %v4936, %v4977
    %v5002 = vsub.f32 %v4937, %v4980
    %v5003 = vsub.f32 %v4938, %v4983
    %v5004 = vsub.f32 %v4939, %v4986
    %v5005 = vsub.f32 %v4940, %v4989
    %v5006 = vmul.f32 %v4990, 1.442695
    %v5007 = vpow.pop %v5006
    %v5008 = vmul.f32 %v4991, 1.442695
    %v5009 = vpow.pop %v5008
    %v5010 = vmul.f32 %v4992, 1.442695
    %v5011 = vpow.pop %v5010
    %v5012 = vmul.f32 %v4993, 1.442695
    %v5013 = vpow.pop %v5012
    %v5014 = vmul.f32 %v4994, 1.442695
    %v5015 = vpow.pop %v5014
    %v5016 = vmul.f32 %v4995, 1.442695
    %v5017 = vpow.pop %v5016
    %v5018 = vmul.f32 %v4996, 1.442695
    %v5019 = vpow.pop %v5018
    %v5020 = vmul.f32 %v4997, 1.442695
    %v5021 = vpow.pop %v5020
    %v5022 = vmul.f32 %v4998, 1.442695
    %v5023 = vpow.pop %v5022
    %v5024 = vmul.f32 %v4999, 1.442695
    %v5025 = vpow.pop %v5024
    %v5026 = vmul.f32 %v5000, 1.442695
    %v5027 = vpow.pop %v5026
    %v5028 = vmul.f32 %v5001, 1.442695
    %v5029 = vpow.pop %v5028
    %v5030 = vmul.f32 %v5002, 1.442695
    %v5031 = vpow.pop %v5030
    %v5032 = vmul.f32 %v5003, 1.442695
    %v5033 = vpow.pop %v5032
    %v5034 = vmul.f32 %v5004, 1.442695
    %v5035 = vpow.pop %v5034
    %v5036 = vmul.f32 %v5005, 1.442695
    %v5037 = vpow.pop %v5036
    %v5038 = vsel %vm4941, %v5007, 0.0
    %5039 = vadd.xlane.f32.xlu0 %v5038
    %v5040 = vpop.xlane.xlu0 %5039
    %v5041 = vsel %vm4941, %v5009, 0.0
    %5042 = vadd.xlane.f32.xlu0 %v5041
    %v5043 = vpop.xlane.xlu0 %5042
    %v5044 = vsel %vm4941, %v5011, 0.0
    %5045 = vadd.xlane.f32.xlu0 %v5044
    %v5046 = vpop.xlane.xlu0 %5045
    %v5047 = vsel %vm4941, %v5013, 0.0
    %5048 = vadd.xlane.f32.xlu0 %v5047
    %v5049 = vpop.xlane.xlu0 %5048
    %v5050 = vsel %vm4941, %v5015, 0.0
    %5051 = vadd.xlane.f32.xlu0 %v5050
    %v5052 = vpop.xlane.xlu0 %5051
    %v5053 = vsel %vm4941, %v5017, 0.0
    %5054 = vadd.xlane.f32.xlu0 %v5053
    %v5055 = vpop.xlane.xlu0 %5054
    %v5056 = vsel %vm4941, %v5019, 0.0
    %5057 = vadd.xlane.f32.xlu0 %v5056
    %v5058 = vpop.xlane.xlu0 %5057
    %v5059 = vsel %vm4941, %v5021, 0.0
    %5060 = vadd.xlane.f32.xlu0 %v5059
    %v5061 = vpop.xlane.xlu0 %5060
    %v5062 = vsel %vm4941, %v5023, 0.0
    %5063 = vadd.xlane.f32.xlu0 %v5062
    %v5064 = vpop.xlane.xlu0 %5063
    %v5065 = vsel %vm4941, %v5025, 0.0
    %5066 = vadd.xlane.f32.xlu0 %v5065
    %v5067 = vpop.xlane.xlu0 %5066
    %v5068 = vsel %vm4941, %v5027, 0.0
    %5069 = vadd.xlane.f32.xlu0 %v5068
    %v5070 = vpop.xlane.xlu0 %5069
    %v5071 = vsel %vm4941, %v5029, 0.0
    %5072 = vadd.xlane.f32.xlu0 %v5071
    %v5073 = vpop.xlane.xlu0 %5072
    %v5074 = vsel %vm4941, %v5031, 0.0
    %5075 = vadd.xlane.f32.xlu0 %v5074
    %v5076 = vpop.xlane.xlu0 %5075
    %v5077 = vsel %vm4941, %v5033, 0.0
    %5078 = vadd.xlane.f32.xlu0 %v5077
    %v5079 = vpop.xlane.xlu0 %5078
    %v5080 = vsel %vm4941, %v5035, 0.0
    %5081 = vadd.xlane.f32.xlu0 %v5080
    %v5082 = vpop.xlane.xlu0 %5081
    %v5083 = vsel %vm4941, %v5037, 0.0
    %5084 = vadd.xlane.f32.xlu0 %v5083
    %v5085 = vpop.xlane.xlu0 %5084
    %v5086 = vrcp.pop %v5040
    %v5087 = vrcp.pop %v5043
    %v5088 = vrcp.pop %v5046
    %v5089 = vrcp.pop %v5049
    %v5090 = vrcp.pop %v5052
    %v5091 = vrcp.pop %v5055
    %v5092 = vrcp.pop %v5058
    %v5093 = vrcp.pop %v5061
    %v5094 = vrcp.pop %v5064
    %v5095 = vrcp.pop %v5067
    %v5096 = vrcp.pop %v5070
    %v5097 = vrcp.pop %v5073
    %v5098 = vrcp.pop %v5076
    %v5099 = vrcp.pop %v5079
    %v5100 = vrcp.pop %v5082
    %v5101 = vrcp.pop %v5085
    %v5102 = vmul.f32 %v5007, %v5086
    %v5103 = vmul.f32 %v5009, %v5087
    %v5104 = vmul.f32 %v5011, %v5088
    %v5105 = vmul.f32 %v5013, %v5089
    %v5106 = vmul.f32 %v5015, %v5090
    %v5107 = vmul.f32 %v5017, %v5091
    %v5108 = vmul.f32 %v5019, %v5092
    %v5109 = vmul.f32 %v5021, %v5093
    %v5110 = vmul.f32 %v5023, %v5094
    %v5111 = vmul.f32 %v5025, %v5095
    %v5112 = vmul.f32 %v5027, %v5096
    %v5113 = vmul.f32 %v5029, %v5097
    %v5114 = vmul.f32 %v5031, %v5098
    %v5115 = vmul.f32 %v5033, %v5099
    %v5116 = vmul.f32 %v5035, %v5100
    %v5117 = vmul.f32 %v5037, %v5101
    %v5119 = vsel %vm4941, %v5102, 0
    %5121 = vmatprep.subr.mxu0 0.0
    %5122 = vmatpush1.msra.mxu0 %v2656
    %5123 = vmatprep.subr.mxu0 0.0
    %5124 = vmatpush1.msra.mxu0 0.0
    %5125 = vmatprep.subr.mxu0 0.0
    %5126 = vmatpush1.msra.mxu0 0.0
    %5127 = vmatprep.subr.mxu0 0.0
    %5128 = vmatpush1.msra.mxu0 0.0
    %5129 = vmatprep.subr.mxu0 0.0
    %5130 = vmatpush1.msra.mxu0 0.0
    %5131 = vmatprep.subr.mxu0 0.0
    %5132 = vmatpush1.msra.mxu0 0.0
    %5133 = vmatprep.subr.mxu0 0.0
    %5134 = vmatpush1.msra.mxu0 0.0
    %5135 = vmatprep.subr.mxu0 0.0
    %5136 = vmatpush1.msra.mxu0 0.0
    %5137 = vmatprep.subr.mxu0 0.0
    %5138 = vmatpush1.msra.mxu0 0.0
    %5139 = vmatprep.subr.mxu0 0.0
    %5140 = vmatpush1.msra.mxu0 0.0
    %5141 = vmatprep.subr.mxu0 0.0
    %5142 = vmatpush1.msra.mxu0 0.0
    %5143 = vmatprep.subr.mxu0 0.0
    %5144 = vmatpush1.msra.mxu0 0.0
    %5145 = vmatprep.subr.mxu0 0.0
    %5146 = vmatpush1.msra.mxu0 0.0
    %5147 = vmatprep.subr.mxu0 0.0
    %5148 = vmatpush1.msra.mxu0 0.0
    %5149 = vmatprep.subr.mxu0 0.0
    %5150 = vmatpush1.msra.mxu0 0.0
    %5151 = vmatprep.subr.mxu0 0.0
    %5152 = vmatpush1.msra.mxu0 0.0
    %5153 = vmatprep.subr.mxu0 0.0
    %5154 = vmatpush1.msra.mxu0 0.0
    %5155 = vmatprep.subr.mxu0 0.0
    %5156 = vmatpush1.msra.mxu0 0.0
    %5157 = vmatprep.subr.mxu0 0.0
    %5158 = vmatpush1.msra.mxu0 0.0
    %5159 = vmatprep.subr.mxu0 0.0
    %5160 = vmatpush1.msra.mxu0 0.0
    %5161 = vmatprep.subr.mxu0 0.0
    %5162 = vmatpush1.msra.mxu0 0.0
    %5163 = vmatprep.subr.mxu0 0.0
    %5164 = vmatpush1.msra.mxu0 0.0
    %5165 = vmatprep.subr.mxu0 0.0
    %5166 = vmatpush1.msra.mxu0 0.0
    %5167 = vmatprep.subr.mxu0 0.0
    %5168 = vmatpush1.msra.mxu0 0.0
    %5169 = vmatprep.subr.mxu0 0.0
    %5170 = vmatpush1.msra.mxu0 0.0
    %5171 = vmatprep.subr.mxu0 0.0
    %5172 = vmatpush1.msra.mxu0 0.0
    %5173 = vmatprep.subr.mxu0 0.0
    %5174 = vmatpush1.msra.mxu0 0.0
    %5175 = vmatprep.subr.mxu0 0.0
    %5176 = vmatpush1.msra.mxu0 0.0
    %5177 = vmatprep.subr.mxu0 0.0
    %5178 = vmatpush1.msra.mxu0 0.0
    %5179 = vmatprep.subr.mxu0 0.0
    %5180 = vmatpush1.msra.mxu0 0.0
    %5181 = vmatprep.subr.mxu0 0.0
    %5182 = vmatpush1.msra.mxu0 0.0
    %5183 = vmatprep.subr.mxu0 0.0
    %5184 = vmatpush1.msra.mxu0 0.0
    %5185 = vmatprep.mubr.f32.mxu0 0.0
    %5186 = vmatmul.mubr.f32.gmra.mrb[0].mxu0 %v5119
    %v5187 = vpop.f32.mrb[0].mxu0
    %v5188 = vadd.f32 0.0, %v5187
    %v5189 = vpop.f32.mrb[0].mxu0
    %5190 = vdwg.mxu0
    %v5192 = vsel %vm4941, %v5103, 0
    %5194 = vmatprep.subr.mxu0 0.0
    %5195 = vmatpush1.msra.mxu0 %v2726
    %5196 = vmatprep.subr.mxu0 0.0
    %5197 = vmatpush1.msra.mxu0 0.0
    %5198 = vmatprep.subr.mxu0 0.0
    %5199 = vmatpush1.msra.mxu0 0.0
    %5200 = vmatprep.subr.mxu0 0.0
    %5201 = vmatpush1.msra.mxu0 0.0
    %5202 = vmatprep.subr.mxu0 0.0
    %5203 = vmatpush1.msra.mxu0 0.0
    %5204 = vmatprep.subr.mxu0 0.0
    %5205 = vmatpush1.msra.mxu0 0.0
    %5206 = vmatprep.subr.mxu0 0.0
    %5207 = vmatpush1.msra.mxu0 0.0
    %5208 = vmatprep.subr.mxu0 0.0
    %5209 = vmatpush1.msra.mxu0 0.0
    %5210 = vmatprep.subr.mxu0 0.0
    %5211 = vmatpush1.msra.mxu0 0.0
    %5212 = vmatprep.subr.mxu0 0.0
    %5213 = vmatpush1.msra.mxu0 0.0
    %5214 = vmatprep.subr.mxu0 0.0
    %5215 = vmatpush1.msra.mxu0 0.0
    %5216 = vmatprep.subr.mxu0 0.0
    %5217 = vmatpush1.msra.mxu0 0.0
    %5218 = vmatprep.subr.mxu0 0.0
    %5219 = vmatpush1.msra.mxu0 0.0
    %5220 = vmatprep.subr.mxu0 0.0
    %5221 = vmatpush1.msra.mxu0 0.0
    %5222 = vmatprep.subr.mxu0 0.0
    %5223 = vmatpush1.msra.mxu0 0.0
    %5224 = vmatprep.subr.mxu0 0.0
    %5225 = vmatpush1.msra.mxu0 0.0
    %5226 = vmatprep.subr.mxu0 0.0
    %5227 = vmatpush1.msra.mxu0 0.0
    %5228 = vmatprep.subr.mxu0 0.0
    %5229 = vmatpush1.msra.mxu0 0.0
    %5230 = vmatprep.subr.mxu0 0.0
    %5231 = vmatpush1.msra.mxu0 0.0
    %5232 = vmatprep.subr.mxu0 0.0
    %5233 = vmatpush1.msra.mxu0 0.0
    %5234 = vmatprep.subr.mxu0 0.0
    %5235 = vmatpush1.msra.mxu0 0.0
    %5236 = vmatprep.subr.mxu0 0.0
    %5237 = vmatpush1.msra.mxu0 0.0
    %5238 = vmatprep.subr.mxu0 0.0
    %5239 = vmatpush1.msra.mxu0 0.0
    %5240 = vmatprep.subr.mxu0 0.0
    %5241 = vmatpush1.msra.mxu0 0.0
    %5242 = vmatprep.subr.mxu0 0.0
    %5243 = vmatpush1.msra.mxu0 0.0
    %5244 = vmatprep.subr.mxu0 0.0
    %5245 = vmatpush1.msra.mxu0 0.0
    %5246 = vmatprep.subr.mxu0 0.0
    %5247 = vmatpush1.msra.mxu0 0.0
    %5248 = vmatprep.subr.mxu0 0.0
    %5249 = vmatpush1.msra.mxu0 0.0
    %5250 = vmatprep.subr.mxu0 0.0
    %5251 = vmatpush1.msra.mxu0 0.0
    %5252 = vmatprep.subr.mxu0 0.0
    %5253 = vmatpush1.msra.mxu0 0.0
    %5254 = vmatprep.subr.mxu0 0.0
    %5255 = vmatpush1.msra.mxu0 0.0
    %5256 = vmatprep.subr.mxu0 0.0
    %5257 = vmatpush1.msra.mxu0 0.0
    %5258 = vmatprep.mubr.f32.mxu0 0.0
    %5259 = vmatmul.mubr.f32.gmra.mrb[0].mxu0 %v5192
    %v5260 = vpop.f32.mrb[0].mxu0
    %v5261 = vadd.f32 0.0, %v5260
    %v5262 = vpop.f32.mrb[0].mxu0
    %5263 = vdwg.mxu0
    %v5265 = vsel %vm4941, %v5104, 0
    %5267 = vmatprep.subr.mxu0 0.0
    %5268 = vmatpush1.msra.mxu0 %v2796
    %5269 = vmatprep.subr.mxu0 0.0
    %5270 = vmatpush1.msra.mxu0 0.0
    %5271 = vmatprep.subr.mxu0 0.0
    %5272 = vmatpush1.msra.mxu0 0.0
    %5273 = vmatprep.subr.mxu0 0.0
    %5274 = vmatpush1.msra.mxu0 0.0
    %5275 = vmatprep.subr.mxu0 0.0
    %5276 = vmatpush1.msra.mxu0 0.0
    %5277 = vmatprep.subr.mxu0 0.0
    %5278 = vmatpush1.msra.mxu0 0.0
    %5279 = vmatprep.subr.mxu0 0.0
    %5280 = vmatpush1.msra.mxu0 0.0
    %5281 = vmatprep.subr.mxu0 0.0
    %5282 = vmatpush1.msra.mxu0 0.0
    %5283 = vmatprep.subr.mxu0 0.0
    %5284 = vmatpush1.msra.mxu0 0.0
    %5285 = vmatprep.subr.mxu0 0.0
    %5286 = vmatpush1.msra.mxu0 0.0
    %5287 = vmatprep.subr.mxu0 0.0
    %5288 = vmatpush1.msra.mxu0 0.0
    %5289 = vmatprep.subr.mxu0 0.0
    %5290 = vmatpush1.msra.mxu0 0.0
    %5291 = vmatprep.subr.mxu0 0.0
    %5292 = vmatpush1.msra.mxu0 0.0
    %5293 = vmatprep.subr.mxu0 0.0
    %5294 = vmatpush1.msra.mxu0 0.0
    %5295 = vmatprep.subr.mxu0 0.0
    %5296 = vmatpush1.msra.mxu0 0.0
    %5297 = vmatprep.subr.mxu0 0.0
    %5298 = vmatpush1.msra.mxu0 0.0
    %5299 = vmatprep.subr.mxu0 0.0
    %5300 = vmatpush1.msra.mxu0 0.0
    %5301 = vmatprep.subr.mxu0 0.0
    %5302 = vmatpush1.msra.mxu0 0.0
    %5303 = vmatprep.subr.mxu0 0.0
    %5304 = vmatpush1.msra.mxu0 0.0
    %5305 = vmatprep.subr.mxu0 0.0
    %5306 = vmatpush1.msra.mxu0 0.0
    %5307 = vmatprep.subr.mxu0 0.0
    %5308 = vmatpush1.msra.mxu0 0.0
    %5309 = vmatprep.subr.mxu0 0.0
    %5310 = vmatpush1.msra.mxu0 0.0
    %5311 = vmatprep.subr.mxu0 0.0
    %5312 = vmatpush1.msra.mxu0 0.0
    %5313 = vmatprep.subr.mxu0 0.0
    %5314 = vmatpush1.msra.mxu0 0.0
    %5315 = vmatprep.subr.mxu0 0.0
    %5316 = vmatpush1.msra.mxu0 0.0
    %5317 = vmatprep.subr.mxu0 0.0
    %5318 = vmatpush1.msra.mxu0 0.0
    %5319 = vmatprep.subr.mxu0 0.0
    %5320 = vmatpush1.msra.mxu0 0.0
    %5321 = vmatprep.subr.mxu0 0.0
    %5322 = vmatpush1.msra.mxu0 0.0
    %5323 = vmatprep.subr.mxu0 0.0
    %5324 = vmatpush1.msra.mxu0 0.0
    %5325 = vmatprep.subr.mxu0 0.0
    %5326 = vmatpush1.msra.mxu0 0.0
    %5327 = vmatprep.subr.mxu0 0.0
    %5328 = vmatpush1.msra.mxu0 0.0
    %5329 = vmatprep.subr.mxu0 0.0
    %5330 = vmatpush1.msra.mxu0 0.0
    %5331 = vmatprep.mubr.f32.mxu0 0.0
    %5332 = vmatmul.mubr.f32.gmra.mrb[0].mxu0 %v5265
    %v5333 = vpop.f32.mrb[0].mxu0
    %v5334 = vadd.f32 0.0, %v5333
    %v5335 = vpop.f32.mrb[0].mxu0
    %5336 = vdwg.mxu0
    %v5338 = vsel %vm4941, %v5105, 0
    %5340 = vmatprep.subr.mxu0 0.0
    %5341 = vmatpush1.msra.mxu0 %v2866
    %5342 = vmatprep.subr.mxu0 0.0
    %5343 = vmatpush1.msra.mxu0 0.0
    %5344 = vmatprep.subr.mxu0 0.0
    %5345 = vmatpush1.msra.mxu0 0.0
    %5346 = vmatprep.subr.mxu0 0.0
    %5347 = vmatpush1.msra.mxu0 0.0
    %5348 = vmatprep.subr.mxu0 0.0
    %5349 = vmatpush1.msra.mxu0 0.0
    %5350 = vmatprep.subr.mxu0 0.0
    %5351 = vmatpush1.msra.mxu0 0.0
    %5352 = vmatprep.subr.mxu0 0.0
    %5353 = vmatpush1.msra.mxu0 0.0
    %5354 = vmatprep.subr.mxu0 0.0
    %5355 = vmatpush1.msra.mxu0 0.0
    %5356 = vmatprep.subr.mxu0 0.0
    %5357 = vmatpush1.msra.mxu0 0.0
    %5358 = vmatprep.subr.mxu0 0.0
    %5359 = vmatpush1.msra.mxu0 0.0
    %5360 = vmatprep.subr.mxu0 0.0
    %5361 = vmatpush1.msra.mxu0 0.0
    %5362 = vmatprep.subr.mxu0 0.0
    %5363 = vmatpush1.msra.mxu0 0.0
    %5364 = vmatprep.subr.mxu0 0.0
    %5365 = vmatpush1.msra.mxu0 0.0
    %5366 = vmatprep.subr.mxu0 0.0
    %5367 = vmatpush1.msra.mxu0 0.0
    %5368 = vmatprep.subr.mxu0 0.0
    %5369 = vmatpush1.msra.mxu0 0.0
    %5370 = vmatprep.subr.mxu0 0.0
    %5371 = vmatpush1.msra.mxu0 0.0
    %5372 = vmatprep.subr.mxu0 0.0
    %5373 = vmatpush1.msra.mxu0 0.0
    %5374 = vmatprep.subr.mxu0 0.0
    %5375 = vmatpush1.msra.mxu0 0.0
    %5376 = vmatprep.subr.mxu0 0.0
    %5377 = vmatpush1.msra.mxu0 0.0
    %5378 = vmatprep.subr.mxu0 0.0
    %5379 = vmatpush1.msra.mxu0 0.0
    %5380 = vmatprep.subr.mxu0 0.0
    %5381 = vmatpush1.msra.mxu0 0.0
    %5382 = vmatprep.subr.mxu0 0.0
    %5383 = vmatpush1.msra.mxu0 0.0
    %5384 = vmatprep.subr.mxu0 0.0
    %5385 = vmatpush1.msra.mxu0 0.0
    %5386 = vmatprep.subr.mxu0 0.0
    %5387 = vmatpush1.msra.mxu0 0.0
    %5388 = vmatprep.subr.mxu0 0.0
    %5389 = vmatpush1.msra.mxu0 0.0
    %5390 = vmatprep.subr.mxu0 0.0
    %5391 = vmatpush1.msra.mxu0 0.0
    %5392 = vmatprep.subr.mxu0 0.0
    %5393 = vmatpush1.msra.mxu0 0.0
    %5394 = vmatprep.subr.mxu0 0.0
    %5395 = vmatpush1.msra.mxu0 0.0
    %5396 = vmatprep.subr.mxu0 0.0
    %5397 = vmatpush1.msra.mxu0 0.0
    %5398 = vmatprep.subr.mxu0 0.0
    %5399 = vmatpush1.msra.mxu0 0.0
    %5400 = vmatprep.subr.mxu0 0.0
    %5401 = vmatpush1.msra.mxu0 0.0
    %5402 = vmatprep.subr.mxu0 0.0
    %5403 = vmatpush1.msra.mxu0 0.0
    %5404 = vmatprep.mubr.f32.mxu0 0.0
    %5405 = vmatmul.mubr.f32.gmra.mrb[0].mxu0 %v5338
    %v5406 = vpop.f32.mrb[0].mxu0
    %v5407 = vadd.f32 0.0, %v5406
    %v5408 = vpop.f32.mrb[0].mxu0
    %5409 = vdwg.mxu0
    %v5411 = vsel %vm4941, %v5106, 0
    %5413 = vmatprep.subr.mxu0 0.0
    %5414 = vmatpush1.msra.mxu0 %v2936
    %5415 = vmatprep.subr.mxu0 0.0
    %5416 = vmatpush1.msra.mxu0 0.0
    %5417 = vmatprep.subr.mxu0 0.0
    %5418 = vmatpush1.msra.mxu0 0.0
    %5419 = vmatprep.subr.mxu0 0.0
    %5420 = vmatpush1.msra.mxu0 0.0
    %5421 = vmatprep.subr.mxu0 0.0
    %5422 = vmatpush1.msra.mxu0 0.0
    %5423 = vmatprep.subr.mxu0 0.0
    %5424 = vmatpush1.msra.mxu0 0.0
    %5425 = vmatprep.subr.mxu0 0.0
    %5426 = vmatpush1.msra.mxu0 0.0
    %5427 = vmatprep.subr.mxu0 0.0
    %5428 = vmatpush1.msra.mxu0 0.0
    %5429 = vmatprep.subr.mxu0 0.0
    %5430 = vmatpush1.msra.mxu0 0.0
    %5431 = vmatprep.subr.mxu0 0.0
    %5432 = vmatpush1.msra.mxu0 0.0
    %5433 = vmatprep.subr.mxu0 0.0
    %5434 = vmatpush1.msra.mxu0 0.0
    %5435 = vmatprep.subr.mxu0 0.0
    %5436 = vmatpush1.msra.mxu0 0.0
    %5437 = vmatprep.subr.mxu0 0.0
    %5438 = vmatpush1.msra.mxu0 0.0
    %5439 = vmatprep.subr.mxu0 0.0
    %5440 = vmatpush1.msra.mxu0 0.0
    %5441 = vmatprep.subr.mxu0 0.0
    %5442 = vmatpush1.msra.mxu0 0.0
    %5443 = vmatprep.subr.mxu0 0.0
    %5444 = vmatpush1.msra.mxu0 0.0
    %5445 = vmatprep.subr.mxu0 0.0
    %5446 = vmatpush1.msra.mxu0 0.0
    %5447 = vmatprep.subr.mxu0 0.0
    %5448 = vmatpush1.msra.mxu0 0.0
    %5449 = vmatprep.subr.mxu0 0.0
    %5450 = vmatpush1.msra.mxu0 0.0
    %5451 = vmatprep.subr.mxu0 0.0
    %5452 = vmatpush1.msra.mxu0 0.0
    %5453 = vmatprep.subr.mxu0 0.0
    %5454 = vmatpush1.msra.mxu0 0.0
    %5455 = vmatprep.subr.mxu0 0.0
    %5456 = vmatpush1.msra.mxu0 0.0
    %5457 = vmatprep.subr.mxu0 0.0
    %5458 = vmatpush1.msra.mxu0 0.0
    %5459 = vmatprep.subr.mxu0 0.0
    %5460 = vmatpush1.msra.mxu0 0.0
    %5461 = vmatprep.subr.mxu0 0.0
    %5462 = vmatpush1.msra.mxu0 0.0
    %5463 = vmatprep.subr.mxu0 0.0
    %5464 = vmatpush1.msra.mxu0 0.0
    %5465 = vmatprep.subr.mxu0 0.0
    %5466 = vmatpush1.msra.mxu0 0.0
    %5467 = vmatprep.subr.mxu0 0.0
    %5468 = vmatpush1.msra.mxu0 0.0
    %5469 = vmatprep.subr.mxu0 0.0
    %5470 = vmatpush1.msra.mxu0 0.0
    %5471 = vmatprep.subr.mxu0 0.0
    %5472 = vmatpush1.msra.mxu0 0.0
    %5473 = vmatprep.subr.mxu0 0.0
    %5474 = vmatpush1.msra.mxu0 0.0
    %5475 = vmatprep.subr.mxu0 0.0
    %5476 = vmatpush1.msra.mxu0 0.0
    %5477 = vmatprep.mubr.f32.mxu0 0.0
    %5478 = vmatmul.mubr.f32.gmra.mrb[0].mxu0 %v5411
    %v5479 = vpop.f32.mrb[0].mxu0
    %v5480 = vadd.f32 0.0, %v5479
    %v5481 = vpop.f32.mrb[0].mxu0
    %5482 = vdwg.mxu0
    %v5484 = vsel %vm4941, %v5107, 0
    %5486 = vmatprep.subr.mxu0 0.0
    %5487 = vmatpush1.msra.mxu0 %v3006
    %5488 = vmatprep.subr.mxu0 0.0
    %5489 = vmatpush1.msra.mxu0 0.0
    %5490 = vmatprep.subr.mxu0 0.0
    %5491 = vmatpush1.msra.mxu0 0.0
    %5492 = vmatprep.subr.mxu0 0.0
    %5493 = vmatpush1.msra.mxu0 0.0
    %5494 = vmatprep.subr.mxu0 0.0
    %5495 = vmatpush1.msra.mxu0 0.0
    %5496 = vmatprep.subr.mxu0 0.0
    %5497 = vmatpush1.msra.mxu0 0.0
    %5498 = vmatprep.subr.mxu0 0.0
    %5499 = vmatpush1.msra.mxu0 0.0
    %5500 = vmatprep.subr.mxu0 0.0
    %5501 = vmatpush1.msra.mxu0 0.0
    %5502 = vmatprep.subr.mxu0 0.0
    %5503 = vmatpush1.msra.mxu0 0.0
    %5504 = vmatprep.subr.mxu0 0.0
    %5505 = vmatpush1.msra.mxu0 0.0
    %5506 = vmatprep.subr.mxu0 0.0
    %5507 = vmatpush1.msra.mxu0 0.0
    %5508 = vmatprep.subr.mxu0 0.0
    %5509 = vmatpush1.msra.mxu0 0.0
    %5510 = vmatprep.subr.mxu0 0.0
    %5511 = vmatpush1.msra.mxu0 0.0
    %5512 = vmatprep.subr.mxu0 0.0
    %5513 = vmatpush1.msra.mxu0 0.0
    %5514 = vmatprep.subr.mxu0 0.0
    %5515 = vmatpush1.msra.mxu0 0.0
    %5516 = vmatprep.subr.mxu0 0.0
    %5517 = vmatpush1.msra.mxu0 0.0
    %5518 = vmatprep.subr.mxu0 0.0
    %5519 = vmatpush1.msra.mxu0 0.0
    %5520 = vmatprep.subr.mxu0 0.0
    %5521 = vmatpush1.msra.mxu0 0.0
    %5522 = vmatprep.subr.mxu0 0.0
    %5523 = vmatpush1.msra.mxu0 0.0
    %5524 = vmatprep.subr.mxu0 0.0
    %5525 = vmatpush1.msra.mxu0 0.0
    %5526 = vmatprep.subr.mxu0 0.0
    %5527 = vmatpush1.msra.mxu0 0.0
    %5528 = vmatprep.subr.mxu0 0.0
    %5529 = vmatpush1.msra.mxu0 0.0
    %5530 = vmatprep.subr.mxu0 0.0
    %5531 = vmatpush1.msra.mxu0 0.0
    %5532 = vmatprep.subr.mxu0 0.0
    %5533 = vmatpush1.msra.mxu0 0.0
    %5534 = vmatprep.subr.mxu0 0.0
    %5535 = vmatpush1.msra.mxu0 0.0
    %5536 = vmatprep.subr.mxu0 0.0
    %5537 = vmatpush1.msra.mxu0 0.0
    %5538 = vmatprep.subr.mxu0 0.0
    %5539 = vmatpush1.msra.mxu0 0.0
    %5540 = vmatprep.subr.mxu0 0.0
    %5541 = vmatpush1.msra.mxu0 0.0
    %5542 = vmatprep.subr.mxu0 0.0
    %5543 = vmatpush1.msra.mxu0 0.0
    %5544 = vmatprep.subr.mxu0 0.0
    %5545 = vmatpush1.msra.mxu0 0.0
    %5546 = vmatprep.subr.mxu0 0.0
    %5547 = vmatpush1.msra.mxu0 0.0
    %5548 = vmatprep.subr.mxu0 0.0
    %5549 = vmatpush1.msra.mxu0 0.0
    %5550 = vmatprep.mubr.f32.mxu0 0.0
    %5551 = vmatmul.mubr.f32.gmra.mrb[0].mxu0 %v5484
    %v5552 = vpop.f32.mrb[0].mxu0
    %v5553 = vadd.f32 0.0, %v5552
    %v5554 = vpop.f32.mrb[0].mxu0
    %5555 = vdwg.mxu0
    %v5557 = vsel %vm4941, %v5108, 0
    %5559 = vmatprep.subr.mxu0 0.0
    %5560 = vmatpush1.msra.mxu0 %v3076
    %5561 = vmatprep.subr.mxu0 0.0
    %5562 = vmatpush1.msra.mxu0 0.0
    %5563 = vmatprep.subr.mxu0 0.0
    %5564 = vmatpush1.msra.mxu0 0.0
    %5565 = vmatprep.subr.mxu0 0.0
    %5566 = vmatpush1.msra.mxu0 0.0
    %5567 = vmatprep.subr.mxu0 0.0
    %5568 = vmatpush1.msra.mxu0 0.0
    %5569 = vmatprep.subr.mxu0 0.0
    %5570 = vmatpush1.msra.mxu0 0.0
    %5571 = vmatprep.subr.mxu0 0.0
    %5572 = vmatpush1.msra.mxu0 0.0
    %5573 = vmatprep.subr.mxu0 0.0
    %5574 = vmatpush1.msra.mxu0 0.0
    %5575 = vmatprep.subr.mxu0 0.0
    %5576 = vmatpush1.msra.mxu0 0.0
    %5577 = vmatprep.subr.mxu0 0.0
    %5578 = vmatpush1.msra.mxu0 0.0
    %5579 = vmatprep.subr.mxu0 0.0
    %5580 = vmatpush1.msra.mxu0 0.0
    %5581 = vmatprep.subr.mxu0 0.0
    %5582 = vmatpush1.msra.mxu0 0.0
    %5583 = vmatprep.subr.mxu0 0.0
    %5584 = vmatpush1.msra.mxu0 0.0
    %5585 = vmatprep.subr.mxu0 0.0
    %5586 = vmatpush1.msra.mxu0 0.0
    %5587 = vmatprep.subr.mxu0 0.0
    %5588 = vmatpush1.msra.mxu0 0.0
    %5589 = vmatprep.subr.mxu0 0.0
    %5590 = vmatpush1.msra.mxu0 0.0
    %5591 = vmatprep.subr.mxu0 0.0
    %5592 = vmatpush1.msra.mxu0 0.0
    %5593 = vmatprep.subr.mxu0 0.0
    %5594 = vmatpush1.msra.mxu0 0.0
    %5595 = vmatprep.subr.mxu0 0.0
    %5596 = vmatpush1.msra.mxu0 0.0
    %5597 = vmatprep.subr.mxu0 0.0
    %5598 = vmatpush1.msra.mxu0 0.0
    %5599 = vmatprep.subr.mxu0 0.0
    %5600 = vmatpush1.msra.mxu0 0.0
    %5601 = vmatprep.subr.mxu0 0.0
    %5602 = vmatpush1.msra.mxu0 0.0
    %5603 = vmatprep.subr.mxu0 0.0
    %5604 = vmatpush1.msra.mxu0 0.0
    %5605 = vmatprep.subr.mxu0 0.0
    %5606 = vmatpush1.msra.mxu0 0.0
    %5607 = vmatprep.subr.mxu0 0.0
    %5608 = vmatpush1.msra.mxu0 0.0
    %5609 = vmatprep.subr.mxu0 0.0
    %5610 = vmatpush1.msra.mxu0 0.0
    %5611 = vmatprep.subr.mxu0 0.0
    %5612 = vmatpush1.msra.mxu0 0.0
    %5613 = vmatprep.subr.mxu0 0.0
    %5614 = vmatpush1.msra.mxu0 0.0
    %5615 = vmatprep.subr.mxu0 0.0
    %5616 = vmatpush1.msra.mxu0 0.0
    %5617 = vmatprep.subr.mxu0 0.0
    %5618 = vmatpush1.msra.mxu0 0.0
    %5619 = vmatprep.subr.mxu0 0.0
    %5620 = vmatpush1.msra.mxu0 0.0
    %5621 = vmatprep.subr.mxu0 0.0
    %5622 = vmatpush1.msra.mxu0 0.0
    %5623 = vmatprep.mubr.f32.mxu0 0.0
    %5624 = vmatmul.mubr.f32.gmra.mrb[0].mxu0 %v5557
    %v5625 = vpop.f32.mrb[0].mxu0
    %v5626 = vadd.f32 0.0, %v5625
    %v5627 = vpop.f32.mrb[0].mxu0
    %5628 = vdwg.mxu0
    %v5630 = vsel %vm4941, %v5109, 0
    %5632 = vmatprep.subr.mxu0 0.0
    %5633 = vmatpush1.msra.mxu0 %v3146
    %5634 = vmatprep.subr.mxu0 0.0
    %5635 = vmatpush1.msra.mxu0 0.0
    %5636 = vmatprep.subr.mxu0 0.0
    %5637 = vmatpush1.msra.mxu0 0.0
    %5638 = vmatprep.subr.mxu0 0.0
    %5639 = vmatpush1.msra.mxu0 0.0
    %5640 = vmatprep.subr.mxu0 0.0
    %5641 = vmatpush1.msra.mxu0 0.0
    %5642 = vmatprep.subr.mxu0 0.0
    %5643 = vmatpush1.msra.mxu0 0.0
    %5644 = vmatprep.subr.mxu0 0.0
    %5645 = vmatpush1.msra.mxu0 0.0
    %5646 = vmatprep.subr.mxu0 0.0
    %5647 = vmatpush1.msra.mxu0 0.0
    %5648 = vmatprep.subr.mxu0 0.0
    %5649 = vmatpush1.msra.mxu0 0.0
    %5650 = vmatprep.subr.mxu0 0.0
    %5651 = vmatpush1.msra.mxu0 0.0
    %5652 = vmatprep.subr.mxu0 0.0
    %5653 = vmatpush1.msra.mxu0 0.0
    %5654 = vmatprep.subr.mxu0 0.0
    %5655 = vmatpush1.msra.mxu0 0.0
    %5656 = vmatprep.subr.mxu0 0.0
    %5657 = vmatpush1.msra.mxu0 0.0
    %5658 = vmatprep.subr.mxu0 0.0
    %5659 = vmatpush1.msra.mxu0 0.0
    %5660 = vmatprep.subr.mxu0 0.0
    %5661 = vmatpush1.msra.mxu0 0.0
    %5662 = vmatprep.subr.mxu0 0.0
    %5663 = vmatpush1.msra.mxu0 0.0
    %5664 = vmatprep.subr.mxu0 0.0
    %5665 = vmatpush1.msra.mxu0 0.0
    %5666 = vmatprep.subr.mxu0 0.0
    %5667 = vmatpush1.msra.mxu0 0.0
    %5668 = vmatprep.subr.mxu0 0.0
    %5669 = vmatpush1.msra.mxu0 0.0
    %5670 = vmatprep.subr.mxu0 0.0
    %5671 = vmatpush1.msra.mxu0 0.0
    %5672 = vmatprep.subr.mxu0 0.0
    %5673 = vmatpush1.msra.mxu0 0.0
    %5674 = vmatprep.subr.mxu0 0.0
    %5675 = vmatpush1.msra.mxu0 0.0
    %5676 = vmatprep.subr.mxu0 0.0
    %5677 = vmatpush1.msra.mxu0 0.0
    %5678 = vmatprep.subr.mxu0 0.0
    %5679 = vmatpush1.msra.mxu0 0.0
    %5680 = vmatprep.subr.mxu0 0.0
    %5681 = vmatpush1.msra.mxu0 0.0
    %5682 = vmatprep.subr.mxu0 0.0
    %5683 = vmatpush1.msra.mxu0 0.0
    %5684 = vmatprep.subr.mxu0 0.0
    %5685 = vmatpush1.msra.mxu0 0.0
    %5686 = vmatprep.subr.mxu0 0.0
    %5687 = vmatpush1.msra.mxu0 0.0
    %5688 = vmatprep.subr.mxu0 0.0
    %5689 = vmatpush1.msra.mxu0 0.0
    %5690 = vmatprep.subr.mxu0 0.0
    %5691 = vmatpush1.msra.mxu0 0.0
    %5692 = vmatprep.subr.mxu0 0.0
    %5693 = vmatpush1.msra.mxu0 0.0
    %5694 = vmatprep.subr.mxu0 0.0
    %5695 = vmatpush1.msra.mxu0 0.0
    %5696 = vmatprep.mubr.f32.mxu0 0.0
    %5697 = vmatmul.mubr.f32.gmra.mrb[0].mxu0 %v5630
    %v5698 = vpop.f32.mrb[0].mxu0
    %v5699 = vadd.f32 0.0, %v5698
    %v5700 = vpop.f32.mrb[0].mxu0
    %5701 = vdwg.mxu0
    %v5703 = vsel %vm4941, %v5110, 0
    %5705 = vmatprep.subr.mxu0 0.0
    %5706 = vmatpush1.msra.mxu0 %v3216
    %5707 = vmatprep.subr.mxu0 0.0
    %5708 = vmatpush1.msra.mxu0 0.0
    %5709 = vmatprep.subr.mxu0 0.0
    %5710 = vmatpush1.msra.mxu0 0.0
    %5711 = vmatprep.subr.mxu0 0.0
    %5712 = vmatpush1.msra.mxu0 0.0
    %5713 = vmatprep.subr.mxu0 0.0
    %5714 = vmatpush1.msra.mxu0 0.0
    %5715 = vmatprep.subr.mxu0 0.0
    %5716 = vmatpush1.msra.mxu0 0.0
    %5717 = vmatprep.subr.mxu0 0.0
    %5718 = vmatpush1.msra.mxu0 0.0
    %5719 = vmatprep.subr.mxu0 0.0
    %5720 = vmatpush1.msra.mxu0 0.0
    %5721 = vmatprep.subr.mxu0 0.0
    %5722 = vmatpush1.msra.mxu0 0.0
    %5723 = vmatprep.subr.mxu0 0.0
    %5724 = vmatpush1.msra.mxu0 0.0
    %5725 = vmatprep.subr.mxu0 0.0
    %5726 = vmatpush1.msra.mxu0 0.0
    %5727 = vmatprep.subr.mxu0 0.0
    %5728 = vmatpush1.msra.mxu0 0.0
    %5729 = vmatprep.subr.mxu0 0.0
    %5730 = vmatpush1.msra.mxu0 0.0
    %5731 = vmatprep.subr.mxu0 0.0
    %5732 = vmatpush1.msra.mxu0 0.0
    %5733 = vmatprep.subr.mxu0 0.0
    %5734 = vmatpush1.msra.mxu0 0.0
    %5735 = vmatprep.subr.mxu0 0.0
    %5736 = vmatpush1.msra.mxu0 0.0
    %5737 = vmatprep.subr.mxu0 0.0
    %5738 = vmatpush1.msra.mxu0 0.0
    %5739 = vmatprep.subr.mxu0 0.0
    %5740 = vmatpush1.msra.mxu0 0.0
    %5741 = vmatprep.subr.mxu0 0.0
    %5742 = vmatpush1.msra.mxu0 0.0
    %5743 = vmatprep.subr.mxu0 0.0
    %5744 = vmatpush1.msra.mxu0 0.0
    %5745 = vmatprep.subr.mxu0 0.0
    %5746 = vmatpush1.msra.mxu0 0.0
    %5747 = vmatprep.subr.mxu0 0.0
    %5748 = vmatpush1.msra.mxu0 0.0
    %5749 = vmatprep.subr.mxu0 0.0
    %5750 = vmatpush1.msra.mxu0 0.0
    %5751 = vmatprep.subr.mxu0 0.0
    %5752 = vmatpush1.msra.mxu0 0.0
    %5753 = vmatprep.subr.mxu0 0.0
    %5754 = vmatpush1.msra.mxu0 0.0
    %5755 = vmatprep.subr.mxu0 0.0
    %5756 = vmatpush1.msra.mxu0 0.0
    %5757 = vmatprep.subr.mxu0 0.0
    %5758 = vmatpush1.msra.mxu0 0.0
    %5759 = vmatprep.subr.mxu0 0.0
    %5760 = vmatpush1.msra.mxu0 0.0
    %5761 = vmatprep.subr.mxu0 0.0
    %5762 = vmatpush1.msra.mxu0 0.0
    %5763 = vmatprep.subr.mxu0 0.0
    %5764 = vmatpush1.msra.mxu0 0.0
    %5765 = vmatprep.subr.mxu0 0.0
    %5766 = vmatpush1.msra.mxu0 0.0
    %5767 = vmatprep.subr.mxu0 0.0
    %5768 = vmatpush1.msra.mxu0 0.0
    %5769 = vmatprep.mubr.f32.mxu0 0.0
    %5770 = vmatmul.mubr.f32.gmra.mrb[0].mxu0 %v5703
    %v5771 = vpop.f32.mrb[0].mxu0
    %v5772 = vadd.f32 0.0, %v5771
    %v5773 = vpop.f32.mrb[0].mxu0
    %5774 = vdwg.mxu0
    %v5776 = vsel %vm4941, %v5111, 0
    %5778 = vmatprep.subr.mxu0 0.0
    %5779 = vmatpush1.msra.mxu0 %v3286
    %5780 = vmatprep.subr.mxu0 0.0
    %5781 = vmatpush1.msra.mxu0 0.0
    %5782 = vmatprep.subr.mxu0 0.0
    %5783 = vmatpush1.msra.mxu0 0.0
    %5784 = vmatprep.subr.mxu0 0.0
    %5785 = vmatpush1.msra.mxu0 0.0
    %5786 = vmatprep.subr.mxu0 0.0
    %5787 = vmatpush1.msra.mxu0 0.0
    %5788 = vmatprep.subr.mxu0 0.0
    %5789 = vmatpush1.msra.mxu0 0.0
    %5790 = vmatprep.subr.mxu0 0.0
    %5791 = vmatpush1.msra.mxu0 0.0
    %5792 = vmatprep.subr.mxu0 0.0
    %5793 = vmatpush1.msra.mxu0 0.0
    %5794 = vmatprep.subr.mxu0 0.0
    %5795 = vmatpush1.msra.mxu0 0.0
    %5796 = vmatprep.subr.mxu0 0.0
    %5797 = vmatpush1.msra.mxu0 0.0
    %5798 = vmatprep.subr.mxu0 0.0
    %5799 = vmatpush1.msra.mxu0 0.0
    %5800 = vmatprep.subr.mxu0 0.0
    %5801 = vmatpush1.msra.mxu0 0.0
    %5802 = vmatprep.subr.mxu0 0.0
    %5803 = vmatpush1.msra.mxu0 0.0
    %5804 = vmatprep.subr.mxu0 0.0
    %5805 = vmatpush1.msra.mxu0 0.0
    %5806 = vmatprep.subr.mxu0 0.0
    %5807 = vmatpush1.msra.mxu0 0.0
    %5808 = vmatprep.subr.mxu0 0.0
    %5809 = vmatpush1.msra.mxu0 0.0
    %5810 = vmatprep.subr.mxu0 0.0
    %5811 = vmatpush1.msra.mxu0 0.0
    %5812 = vmatprep.subr.mxu0 0.0
    %5813 = vmatpush1.msra.mxu0 0.0
    %5814 = vmatprep.subr.mxu0 0.0
    %5815 = vmatpush1.msra.mxu0 0.0
    %5816 = vmatprep.subr.mxu0 0.0
    %5817 = vmatpush1.msra.mxu0 0.0
    %5818 = vmatprep.subr.mxu0 0.0
    %5819 = vmatpush1.msra.mxu0 0.0
    %5820 = vmatprep.subr.mxu0 0.0
    %5821 = vmatpush1.msra.mxu0 0.0
    %5822 = vmatprep.subr.mxu0 0.0
    %5823 = vmatpush1.msra.mxu0 0.0
    %5824 = vmatprep.subr.mxu0 0.0
    %5825 = vmatpush1.msra.mxu0 0.0
    %5826 = vmatprep.subr.mxu0 0.0
    %5827 = vmatpush1.msra.mxu0 0.0
    %5828 = vmatprep.subr.mxu0 0.0
    %5829 = vmatpush1.msra.mxu0 0.0
    %5830 = vmatprep.subr.mxu0 0.0
    %5831 = vmatpush1.msra.mxu0 0.0
    %5832 = vmatprep.subr.mxu0 0.0
    %5833 = vmatpush1.msra.mxu0 0.0
    %5834 = vmatprep.subr.mxu0 0.0
    %5835 = vmatpush1.msra.mxu0 0.0
    %5836 = vmatprep.subr.mxu0 0.0
    %5837 = vmatpush1.msra.mxu0 0.0
    %5838 = vmatprep.subr.mxu0 0.0
    %5839 = vmatpush1.msra.mxu0 0.0
    %5840 = vmatprep.subr.mxu0 0.0
    %5841 = vmatpush1.msra.mxu0 0.0
    %5842 = vmatprep.mubr.f32.mxu0 0.0
    %5843 = vmatmul.mubr.f32.gmra.mrb[0].mxu0 %v5776
    %v5844 = vpop.f32.mrb[0].mxu0
    %v5845 = vadd.f32 0.0, %v5844
    %v5846 = vpop.f32.mrb[0].mxu0
    %5847 = vdwg.mxu0
    %v5849 = vsel %vm4941, %v5112, 0
    %5851 = vmatprep.subr.mxu0 0.0
    %5852 = vmatpush1.msra.mxu0 %v3356
    %5853 = vmatprep.subr.mxu0 0.0
    %5854 = vmatpush1.msra.mxu0 0.0
    %5855 = vmatprep.subr.mxu0 0.0
    %5856 = vmatpush1.msra.mxu0 0.0
    %5857 = vmatprep.subr.mxu0 0.0
    %5858 = vmatpush1.msra.mxu0 0.0
    %5859 = vmatprep.subr.mxu0 0.0
    %5860 = vmatpush1.msra.mxu0 0.0
    %5861 = vmatprep.subr.mxu0 0.0
    %5862 = vmatpush1.msra.mxu0 0.0
    %5863 = vmatprep.subr.mxu0 0.0
    %5864 = vmatpush1.msra.mxu0 0.0
    %5865 = vmatprep.subr.mxu0 0.0
    %5866 = vmatpush1.msra.mxu0 0.0
    %5867 = vmatprep.subr.mxu0 0.0
    %5868 = vmatpush1.msra.mxu0 0.0
    %5869 = vmatprep.subr.mxu0 0.0
    %5870 = vmatpush1.msra.mxu0 0.0
    %5871 = vmatprep.subr.mxu0 0.0
    %5872 = vmatpush1.msra.mxu0 0.0
    %5873 = vmatprep.subr.mxu0 0.0
    %5874 = vmatpush1.msra.mxu0 0.0
    %5875 = vmatprep.subr.mxu0 0.0
    %5876 = vmatpush1.msra.mxu0 0.0
    %5877 = vmatprep.subr.mxu0 0.0
    %5878 = vmatpush1.msra.mxu0 0.0
    %5879 = vmatprep.subr.mxu0 0.0
    %5880 = vmatpush1.msra.mxu0 0.0
    %5881 = vmatprep.subr.mxu0 0.0
    %5882 = vmatpush1.msra.mxu0 0.0
    %5883 = vmatprep.subr.mxu0 0.0
    %5884 = vmatpush1.msra.mxu0 0.0
    %5885 = vmatprep.subr.mxu0 0.0
    %5886 = vmatpush1.msra.mxu0 0.0
    %5887 = vmatprep.subr.mxu0 0.0
    %5888 = vmatpush1.msra.mxu0 0.0
    %5889 = vmatprep.subr.mxu0 0.0
    %5890 = vmatpush1.msra.mxu0 0.0
    %5891 = vmatprep.subr.mxu0 0.0
    %5892 = vmatpush1.msra.mxu0 0.0
    %5893 = vmatprep.subr.mxu0 0.0
    %5894 = vmatpush1.msra.mxu0 0.0
    %5895 = vmatprep.subr.mxu0 0.0
    %5896 = vmatpush1.msra.mxu0 0.0
    %5897 = vmatprep.subr.mxu0 0.0
    %5898 = vmatpush1.msra.mxu0 0.0
    %5899 = vmatprep.subr.mxu0 0.0
    %5900 = vmatpush1.msra.mxu0 0.0
    %5901 = vmatprep.subr.mxu0 0.0
    %5902 = vmatpush1.msra.mxu0 0.0
    %5903 = vmatprep.subr.mxu0 0.0
    %5904 = vmatpush1.msra.mxu0 0.0
    %5905 = vmatprep.subr.mxu0 0.0
    %5906 = vmatpush1.msra.mxu0 0.0
    %5907 = vmatprep.subr.mxu0 0.0
    %5908 = vmatpush1.msra.mxu0 0.0
    %5909 = vmatprep.subr.mxu0 0.0
    %5910 = vmatpush1.msra.mxu0 0.0
    %5911 = vmatprep.subr.mxu0 0.0
    %5912 = vmatpush1.msra.mxu0 0.0
    %5913 = vmatprep.subr.mxu0 0.0
    %5914 = vmatpush1.msra.mxu0 0.0
    %5915 = vmatprep.mubr.f32.mxu0 0.0
    %5916 = vmatmul.mubr.f32.gmra.mrb[0].mxu0 %v5849
    %v5917 = vpop.f32.mrb[0].mxu0
    %v5918 = vadd.f32 0.0, %v5917
    %v5919 = vpop.f32.mrb[0].mxu0
    %5920 = vdwg.mxu0
    %v5922 = vsel %vm4941, %v5113, 0
    %5924 = vmatprep.subr.mxu0 0.0
    %5925 = vmatpush1.msra.mxu0 %v3426
    %5926 = vmatprep.subr.mxu0 0.0
    %5927 = vmatpush1.msra.mxu0 0.0
    %5928 = vmatprep.subr.mxu0 0.0
    %5929 = vmatpush1.msra.mxu0 0.0
    %5930 = vmatprep.subr.mxu0 0.0
    %5931 = vmatpush1.msra.mxu0 0.0
    %5932 = vmatprep.subr.mxu0 0.0
    %5933 = vmatpush1.msra.mxu0 0.0
    %5934 = vmatprep.subr.mxu0 0.0
    %5935 = vmatpush1.msra.mxu0 0.0
    %5936 = vmatprep.subr.mxu0 0.0
    %5937 = vmatpush1.msra.mxu0 0.0
    %5938 = vmatprep.subr.mxu0 0.0
    %5939 = vmatpush1.msra.mxu0 0.0
    %5940 = vmatprep.subr.mxu0 0.0
    %5941 = vmatpush1.msra.mxu0 0.0
    %5942 = vmatprep.subr.mxu0 0.0
    %5943 = vmatpush1.msra.mxu0 0.0
    %5944 = vmatprep.subr.mxu0 0.0
    %5945 = vmatpush1.msra.mxu0 0.0
    %5946 = vmatprep.subr.mxu0 0.0
    %5947 = vmatpush1.msra.mxu0 0.0
    %5948 = vmatprep.subr.mxu0 0.0
    %5949 = vmatpush1.msra.mxu0 0.0
    %5950 = vmatprep.subr.mxu0 0.0
    %5951 = vmatpush1.msra.mxu0 0.0
    %5952 = vmatprep.subr.mxu0 0.0
    %5953 = vmatpush1.msra.mxu0 0.0
    %5954 = vmatprep.subr.mxu0 0.0
    %5955 = vmatpush1.msra.mxu0 0.0
    %5956 = vmatprep.subr.mxu0 0.0
    %5957 = vmatpush1.msra.mxu0 0.0
    %5958 = vmatprep.subr.mxu0 0.0
    %5959 = vmatpush1.msra.mxu0 0.0
    %5960 = vmatprep.subr.mxu0 0.0
    %5961 = vmatpush1.msra.mxu0 0.0
    %5962 = vmatprep.subr.mxu0 0.0
    %5963 = vmatpush1.msra.mxu0 0.0
    %5964 = vmatprep.subr.mxu0 0.0
    %5965 = vmatpush1.msra.mxu0 0.0
    %5966 = vmatprep.subr.mxu0 0.0
    %5967 = vmatpush1.msra.mxu0 0.0
    %5968 = vmatprep.subr.mxu0 0.0
    %5969 = vmatpush1.msra.mxu0 0.0
    %5970 = vmatprep.subr.mxu0 0.0
    %5971 = vmatpush1.msra.mxu0 0.0
    %5972 = vmatprep.subr.mxu0 0.0
    %5973 = vmatpush1.msra.mxu0 0.0
    %5974 = vmatprep.subr.mxu0 0.0
    %5975 = vmatpush1.msra.mxu0 0.0
    %5976 = vmatprep.subr.mxu0 0.0
    %5977 = vmatpush1.msra.mxu0 0.0
    %5978 = vmatprep.subr.mxu0 0.0
    %5979 = vmatpush1.msra.mxu0 0.0
    %5980 = vmatprep.subr.mxu0 0.0
    %5981 = vmatpush1.msra.mxu0 0.0
    %5982 = vmatprep.subr.mxu0 0.0
    %5983 = vmatpush1.msra.mxu0 0.0
    %5984 = vmatprep.subr.mxu0 0.0
    %5985 = vmatpush1.msra.mxu0 0.0
    %5986 = vmatprep.subr.mxu0 0.0
    %5987 = vmatpush1.msra.mxu0 0.0
    %5988 = vmatprep.mubr.f32.mxu0 0.0
    %5989 = vmatmul.mubr.f32.gmra.mrb[0].mxu0 %v5922
    %v5990 = vpop.f32.mrb[0].mxu0
    %v5991 = vadd.f32 0.0, %v5990
    %v5992 = vpop.f32.mrb[0].mxu0
    %5993 = vdwg.mxu0
    %v5995 = vsel %vm4941, %v5114, 0
    %5997 = vmatprep.subr.mxu0 0.0
    %5998 = vmatpush1.msra.mxu0 %v3496
    %5999 = vmatprep.subr.mxu0 0.0
    %6000 = vmatpush1.msra.mxu0 0.0
    %6001 = vmatprep.subr.mxu0 0.0
    %6002 = vmatpush1.msra.mxu0 0.0
    %6003 = vmatprep.subr.mxu0 0.0
    %6004 = vmatpush1.msra.mxu0 0.0
    %6005 = vmatprep.subr.mxu0 0.0
    %6006 = vmatpush1.msra.mxu0 0.0
    %6007 = vmatprep.subr.mxu0 0.0
    %6008 = vmatpush1.msra.mxu0 0.0
    %6009 = vmatprep.subr.mxu0 0.0
    %6010 = vmatpush1.msra.mxu0 0.0
    %6011 = vmatprep.subr.mxu0 0.0
    %6012 = vmatpush1.msra.mxu0 0.0
    %6013 = vmatprep.subr.mxu0 0.0
    %6014 = vmatpush1.msra.mxu0 0.0
    %6015 = vmatprep.subr.mxu0 0.0
    %6016 = vmatpush1.msra.mxu0 0.0
    %6017 = vmatprep.subr.mxu0 0.0
    %6018 = vmatpush1.msra.mxu0 0.0
    %6019 = vmatprep.subr.mxu0 0.0
    %6020 = vmatpush1.msra.mxu0 0.0
    %6021 = vmatprep.subr.mxu0 0.0
    %6022 = vmatpush1.msra.mxu0 0.0
    %6023 = vmatprep.subr.mxu0 0.0
    %6024 = vmatpush1.msra.mxu0 0.0
    %6025 = vmatprep.subr.mxu0 0.0
    %6026 = vmatpush1.msra.mxu0 0.0
    %6027 = vmatprep.subr.mxu0 0.0
    %6028 = vmatpush1.msra.mxu0 0.0
    %6029 = vmatprep.subr.mxu0 0.0
    %6030 = vmatpush1.msra.mxu0 0.0
    %6031 = vmatprep.subr.mxu0 0.0
    %6032 = vmatpush1.msra.mxu0 0.0
    %6033 = vmatprep.subr.mxu0 0.0
    %6034 = vmatpush1.msra.mxu0 0.0
    %6035 = vmatprep.subr.mxu0 0.0
    %6036 = vmatpush1.msra.mxu0 0.0
    %6037 = vmatprep.subr.mxu0 0.0
    %6038 = vmatpush1.msra.mxu0 0.0
    %6039 = vmatprep.subr.mxu0 0.0
    %6040 = vmatpush1.msra.mxu0 0.0
    %6041 = vmatprep.subr.mxu0 0.0
    %6042 = vmatpush1.msra.mxu0 0.0
    %6043 = vmatprep.subr.mxu0 0.0
    %6044 = vmatpush1.msra.mxu0 0.0
    %6045 = vmatprep.subr.mxu0 0.0
    %6046 = vmatpush1.msra.mxu0 0.0
    %6047 = vmatprep.subr.mxu0 0.0
    %6048 = vmatpush1.msra.mxu0 0.0
    %6049 = vmatprep.subr.mxu0 0.0
    %6050 = vmatpush1.msra.mxu0 0.0
    %6051 = vmatprep.subr.mxu0 0.0
    %6052 = vmatpush1.msra.mxu0 0.0
    %6053 = vmatprep.subr.mxu0 0.0
    %6054 = vmatpush1.msra.mxu0 0.0
    %6055 = vmatprep.subr.mxu0 0.0
    %6056 = vmatpush1.msra.mxu0 0.0
    %6057 = vmatprep.subr.mxu0 0.0
    %6058 = vmatpush1.msra.mxu0 0.0
    %6059 = vmatprep.subr.mxu0 0.0
    %6060 = vmatpush1.msra.mxu0 0.0
    %6061 = vmatprep.mubr.f32.mxu0 0.0
    %6062 = vmatmul.mubr.f32.gmra.mrb[0].mxu0 %v5995
    %v6063 = vpop.f32.mrb[0].mxu0
    %v6064 = vadd.f32 0.0, %v6063
    %v6065 = vpop.f32.mrb[0].mxu0
    %6066 = vdwg.mxu0
    %v6068 = vsel %vm4941, %v5115, 0
    %6070 = vmatprep.subr.mxu0 0.0
    %6071 = vmatpush1.msra.mxu0 %v3566
    %6072 = vmatprep.subr.mxu0 0.0
    %6073 = vmatpush1.msra.mxu0 0.0
    %6074 = vmatprep.subr.mxu0 0.0
    %6075 = vmatpush1.msra.mxu0 0.0
    %6076 = vmatprep.subr.mxu0 0.0
    %6077 = vmatpush1.msra.mxu0 0.0
    %6078 = vmatprep.subr.mxu0 0.0
    %6079 = vmatpush1.msra.mxu0 0.0
    %6080 = vmatprep.subr.mxu0 0.0
    %6081 = vmatpush1.msra.mxu0 0.0
    %6082 = vmatprep.subr.mxu0 0.0
    %6083 = vmatpush1.msra.mxu0 0.0
    %6084 = vmatprep.subr.mxu0 0.0
    %6085 = vmatpush1.msra.mxu0 0.0
    %6086 = vmatprep.subr.mxu0 0.0
    %6087 = vmatpush1.msra.mxu0 0.0
    %6088 = vmatprep.subr.mxu0 0.0
    %6089 = vmatpush1.msra.mxu0 0.0
    %6090 = vmatprep.subr.mxu0 0.0
    %6091 = vmatpush1.msra.mxu0 0.0
    %6092 = vmatprep.subr.mxu0 0.0
    %6093 = vmatpush1.msra.mxu0 0.0
    %6094 = vmatprep.subr.mxu0 0.0
    %6095 = vmatpush1.msra.mxu0 0.0
    %6096 = vmatprep.subr.mxu0 0.0
    %6097 = vmatpush1.msra.mxu0 0.0
    %6098 = vmatprep.subr.mxu0 0.0
    %6099 = vmatpush1.msra.mxu0 0.0
    %6100 = vmatprep.subr.mxu0 0.0
    %6101 = vmatpush1.msra.mxu0 0.0
    %6102 = vmatprep.subr.mxu0 0.0
    %6103 = vmatpush1.msra.mxu0 0.0
    %6104 = vmatprep.subr.mxu0 0.0
    %6105 = vmatpush1.msra.mxu0 0.0
    %6106 = vmatprep.subr.mxu0 0.0
    %6107 = vmatpush1.msra.mxu0 0.0
    %6108 = vmatprep.subr.mxu0 0.0
    %6109 = vmatpush1.msra.mxu0 0.0
    %6110 = vmatprep.subr.mxu0 0.0
    %6111 = vmatpush1.msra.mxu0 0.0
    %6112 = vmatprep.subr.mxu0 0.0
    %6113 = vmatpush1.msra.mxu0 0.0
    %6114 = vmatprep.subr.mxu0 0.0
    %6115 = vmatpush1.msra.mxu0 0.0
    %6116 = vmatprep.subr.mxu0 0.0
    %6117 = vmatpush1.msra.mxu0 0.0
    %6118 = vmatprep.subr.mxu0 0.0
    %6119 = vmatpush1.msra.mxu0 0.0
    %6120 = vmatprep.subr.mxu0 0.0
    %6121 = vmatpush1.msra.mxu0 0.0
    %6122 = vmatprep.subr.mxu0 0.0
    %6123 = vmatpush1.msra.mxu0 0.0
    %6124 = vmatprep.subr.mxu0 0.0
    %6125 = vmatpush1.msra.mxu0 0.0
    %6126 = vmatprep.subr.mxu0 0.0
    %6127 = vmatpush1.msra.mxu0 0.0
    %6128 = vmatprep.subr.mxu0 0.0
    %6129 = vmatpush1.msra.mxu0 0.0
    %6130 = vmatprep.subr.mxu0 0.0
    %6131 = vmatpush1.msra.mxu0 0.0
    %6132 = vmatprep.subr.mxu0 0.0
    %6133 = vmatpush1.msra.mxu0 0.0
    %6134 = vmatprep.mubr.f32.mxu0 0.0
    %6135 = vmatmul.mubr.f32.gmra.mrb[0].mxu0 %v6068
    %v6136 = vpop.f32.mrb[0].mxu0
    %v6137 = vadd.f32 0.0, %v6136
    %v6138 = vpop.f32.mrb[0].mxu0
    %6139 = vdwg.mxu0
    %v6141 = vsel %vm4941, %v5116, 0
    %6143 = vmatprep.subr.mxu0 0.0
    %6144 = vmatpush1.msra.mxu0 %v3636
    %6145 = vmatprep.subr.mxu0 0.0
    %6146 = vmatpush1.msra.mxu0 0.0
    %6147 = vmatprep.subr.mxu0 0.0
    %6148 = vmatpush1.msra.mxu0 0.0
    %6149 = vmatprep.subr.mxu0 0.0
    %6150 = vmatpush1.msra.mxu0 0.0
    %6151 = vmatprep.subr.mxu0 0.0
    %6152 = vmatpush1.msra.mxu0 0.0
    %6153 = vmatprep.subr.mxu0 0.0
    %6154 = vmatpush1.msra.mxu0 0.0
    %6155 = vmatprep.subr.mxu0 0.0
    %6156 = vmatpush1.msra.mxu0 0.0
    %6157 = vmatprep.subr.mxu0 0.0
    %6158 = vmatpush1.msra.mxu0 0.0
    %6159 = vmatprep.subr.mxu0 0.0
    %6160 = vmatpush1.msra.mxu0 0.0
    %6161 = vmatprep.subr.mxu0 0.0
    %6162 = vmatpush1.msra.mxu0 0.0
    %6163 = vmatprep.subr.mxu0 0.0
    %6164 = vmatpush1.msra.mxu0 0.0
    %6165 = vmatprep.subr.mxu0 0.0
    %6166 = vmatpush1.msra.mxu0 0.0
    %6167 = vmatprep.subr.mxu0 0.0
    %6168 = vmatpush1.msra.mxu0 0.0
    %6169 = vmatprep.subr.mxu0 0.0
    %6170 = vmatpush1.msra.mxu0 0.0
    %6171 = vmatprep.subr.mxu0 0.0
    %6172 = vmatpush1.msra.mxu0 0.0
    %6173 = vmatprep.subr.mxu0 0.0
    %6174 = vmatpush1.msra.mxu0 0.0
    %6175 = vmatprep.subr.mxu0 0.0
    %6176 = vmatpush1.msra.mxu0 0.0
    %6177 = vmatprep.subr.mxu0 0.0
    %6178 = vmatpush1.msra.mxu0 0.0
    %6179 = vmatprep.subr.mxu0 0.0
    %6180 = vmatpush1.msra.mxu0 0.0
    %6181 = vmatprep.subr.mxu0 0.0
    %6182 = vmatpush1.msra.mxu0 0.0
    %6183 = vmatprep.subr.mxu0 0.0
    %6184 = vmatpush1.msra.mxu0 0.0
    %6185 = vmatprep.subr.mxu0 0.0
    %6186 = vmatpush1.msra.mxu0 0.0
    %6187 = vmatprep.subr.mxu0 0.0
    %6188 = vmatpush1.msra.mxu0 0.0
    %6189 = vmatprep.subr.mxu0 0.0
    %6190 = vmatpush1.msra.mxu0 0.0
    %6191 = vmatprep.subr.mxu0 0.0
    %6192 = vmatpush1.msra.mxu0 0.0
    %6193 = vmatprep.subr.mxu0 0.0
    %6194 = vmatpush1.msra.mxu0 0.0
    %6195 = vmatprep.subr.mxu0 0.0
    %6196 = vmatpush1.msra.mxu0 0.0
    %6197 = vmatprep.subr.mxu0 0.0
    %6198 = vmatpush1.msra.mxu0 0.0
    %6199 = vmatprep.subr.mxu0 0.0
    %6200 = vmatpush1.msra.mxu0 0.0
    %6201 = vmatprep.subr.mxu0 0.0
    %6202 = vmatpush1.msra.mxu0 0.0
    %6203 = vmatprep.subr.mxu0 0.0
    %6204 = vmatpush1.msra.mxu0 0.0
    %6205 = vmatprep.subr.mxu0 0.0
    %6206 = vmatpush1.msra.mxu0 0.0
    %6207 = vmatprep.mubr.f32.mxu0 0.0
    %6208 = vmatmul.mubr.f32.gmra.mrb[0].mxu0 %v6141
    %v6209 = vpop.f32.mrb[0].mxu0
    %v6210 = vadd.f32 0.0, %v6209
    %v6211 = vpop.f32.mrb[0].mxu0
    %6212 = vdwg.mxu0
    %v6214 = vsel %vm4941, %v5117, 0
    %6216 = vmatprep.subr.mxu0 0.0
    %6217 = vmatpush1.msra.mxu0 %v3706
    %6218 = vmatprep.subr.mxu0 0.0
    %6219 = vmatpush1.msra.mxu0 0.0
    %6220 = vmatprep.subr.mxu0 0.0
    %6221 = vmatpush1.msra.mxu0 0.0
    %6222 = vmatprep.subr.mxu0 0.0
    %6223 = vmatpush1.msra.mxu0 0.0
    %6224 = vmatprep.subr.mxu0 0.0
    %6225 = vmatpush1.msra.mxu0 0.0
    %6226 = vmatprep.subr.mxu0 0.0
    %6227 = vmatpush1.msra.mxu0 0.0
    %6228 = vmatprep.subr.mxu0 0.0
    %6229 = vmatpush1.msra.mxu0 0.0
    %6230 = vmatprep.subr.mxu0 0.0
    %6231 = vmatpush1.msra.mxu0 0.0
    %6232 = vmatprep.subr.mxu0 0.0
    %6233 = vmatpush1.msra.mxu0 0.0
    %6234 = vmatprep.subr.mxu0 0.0
    %6235 = vmatpush1.msra.mxu0 0.0
    %6236 = vmatprep.subr.mxu0 0.0
    %6237 = vmatpush1.msra.mxu0 0.0
    %6238 = vmatprep.subr.mxu0 0.0
    %6239 = vmatpush1.msra.mxu0 0.0
    %6240 = vmatprep.subr.mxu0 0.0
    %6241 = vmatpush1.msra.mxu0 0.0
    %6242 = vmatprep.subr.mxu0 0.0
    %6243 = vmatpush1.msra.mxu0 0.0
    %6244 = vmatprep.subr.mxu0 0.0
    %6245 = vmatpush1.msra.mxu0 0.0
    %6246 = vmatprep.subr.mxu0 0.0
    %6247 = vmatpush1.msra.mxu0 0.0
    %6248 = vmatprep.subr.mxu0 0.0
    %6249 = vmatpush1.msra.mxu0 0.0
    %6250 = vmatprep.subr.mxu0 0.0
    %6251 = vmatpush1.msra.mxu0 0.0
    %6252 = vmatprep.subr.mxu0 0.0
    %6253 = vmatpush1.msra.mxu0 0.0
    %6254 = vmatprep.subr.mxu0 0.0
    %6255 = vmatpush1.msra.mxu0 0.0
    %6256 = vmatprep.subr.mxu0 0.0
    %6257 = vmatpush1.msra.mxu0 0.0
    %6258 = vmatprep.subr.mxu0 0.0
    %6259 = vmatpush1.msra.mxu0 0.0
    %6260 = vmatprep.subr.mxu0 0.0
    %6261 = vmatpush1.msra.mxu0 0.0
    %6262 = vmatprep.subr.mxu0 0.0
    %6263 = vmatpush1.msra.mxu0 0.0
    %6264 = vmatprep.subr.mxu0 0.0
    %6265 = vmatpush1.msra.mxu0 0.0
    %6266 = vmatprep.subr.mxu0 0.0
    %6267 = vmatpush1.msra.mxu0 0.0
    %6268 = vmatprep.subr.mxu0 0.0
    %6269 = vmatpush1.msra.mxu0 0.0
    %6270 = vmatprep.subr.mxu0 0.0
    %6271 = vmatpush1.msra.mxu0 0.0
    %6272 = vmatprep.subr.mxu0 0.0
    %6273 = vmatpush1.msra.mxu0 0.0
    %6274 = vmatprep.subr.mxu0 0.0
    %6275 = vmatpush1.msra.mxu0 0.0
    %6276 = vmatprep.subr.mxu0 0.0
    %6277 = vmatpush1.msra.mxu0 0.0
    %6278 = vmatprep.subr.mxu0 0.0
    %6279 = vmatpush1.msra.mxu0 0.0
    %6280 = vmatprep.mubr.f32.mxu0 0.0
    %6281 = vmatmul.mubr.f32.gmra.mrb[0].mxu0 %v6214
    %v6282 = vpop.f32.mrb[0].mxu0
    %v6283 = vadd.f32 0.0, %v6282
    %v6284 = vpop.f32.mrb[0].mxu0
    %6285 = vdwg.mxu0
    %v6286 = vld [vmem:[#allocation10] sm:$0xff]
    %v6287 = vld [vmem:[#allocation10 + $0x8] sm:$0xff]
    %v6288 = vld [vmem:[#allocation10 + $0x10] sm:$0xff]
    %v6289 = vld [vmem:[#allocation10 + $0x18] sm:$0xff]
    %v6290 = vld [vmem:[#allocation10 + $0x20] sm:$0xff]
    %v6291 = vld [vmem:[#allocation10 + $0x28] sm:$0xff]
    %v6292 = vld [vmem:[#allocation10 + $0x30] sm:$0xff]
    %v6293 = vld [vmem:[#allocation10 + $0x38] sm:$0xff]
    %v6294 = vld [vmem:[#allocation10 + $0x40] sm:$0xff]
    %v6295 = vld [vmem:[#allocation10 + $0x48] sm:$0xff]
    %v6296 = vld [vmem:[#allocation10 + $0x50] sm:$0xff]
    %v6297 = vld [vmem:[#allocation10 + $0x58] sm:$0xff]
    %v6298 = vld [vmem:[#allocation10 + $0x60] sm:$0xff]
    %v6299 = vld [vmem:[#allocation10 + $0x68] sm:$0xff]
    %v6300 = vld [vmem:[#allocation10 + $0x70] sm:$0xff]
    %v6301 = vld [vmem:[#allocation10 + $0x78] sm:$0xff]
    %v6302 = vld [vmem:[#allocation10 + $0x80] sm:$0xff]
    %v6303 = vld [vmem:[#allocation10 + $0x88] sm:$0xff]
    %v6304 = vld [vmem:[#allocation10 + $0x90] sm:$0xff]
    %v6305 = vld [vmem:[#allocation10 + $0x98] sm:$0xff]
    %v6306 = vld [vmem:[#allocation10 + $0xa0] sm:$0xff]
    %v6307 = vld [vmem:[#allocation10 + $0xa8] sm:$0xff]
    %v6308 = vld [vmem:[#allocation10 + $0xb0] sm:$0xff]
    %v6309 = vld [vmem:[#allocation10 + $0xb8] sm:$0xff]
    %v6310 = vld [vmem:[#allocation10 + $0xc0] sm:$0xff]
    %v6311 = vld [vmem:[#allocation10 + $0xc8] sm:$0xff]
    %v6312 = vld [vmem:[#allocation10 + $0xd0] sm:$0xff]
    %v6313 = vld [vmem:[#allocation10 + $0xd8] sm:$0xff]
    %v6314 = vld [vmem:[#allocation10 + $0xe0] sm:$0xff]
    %v6315 = vld [vmem:[#allocation10 + $0xe8] sm:$0xff]
    %v6316 = vld [vmem:[#allocation10 + $0xf0] sm:$0xff]
    %v6317 = vld [vmem:[#allocation10 + $0xf8] sm:$0xff]
    %v6318 = vld [vmem:[#allocation10 + $0x100] sm:$0xff]
    %v6319 = vld [vmem:[#allocation10 + $0x108] sm:$0xff]
    %v6320 = vld [vmem:[#allocation10 + $0x110] sm:$0xff]
    %v6321 = vld [vmem:[#allocation10 + $0x118] sm:$0xff]
    %v6322 = vld [vmem:[#allocation10 + $0x120] sm:$0xff]
    %v6323 = vld [vmem:[#allocation10 + $0x128] sm:$0xff]
    %v6324 = vld [vmem:[#allocation10 + $0x130] sm:$0xff]
    %v6325 = vld [vmem:[#allocation10 + $0x138] sm:$0xff]
    %v6326 = vld [vmem:[#allocation10 + $0x140] sm:$0xff]
    %v6327 = vld [vmem:[#allocation10 + $0x148] sm:$0xff]
    %v6328 = vld [vmem:[#allocation10 + $0x150] sm:$0xff]
    %v6329 = vld [vmem:[#allocation10 + $0x158] sm:$0xff]
    %v6330 = vld [vmem:[#allocation10 + $0x160] sm:$0xff]
    %v6331 = vld [vmem:[#allocation10 + $0x168] sm:$0xff]
    %v6332 = vld [vmem:[#allocation10 + $0x170] sm:$0xff]
    %v6333 = vld [vmem:[#allocation10 + $0x178] sm:$0xff]
    %v6334 = vld [vmem:[#allocation10 + $0x180] sm:$0xff]
    %v6335 = vld [vmem:[#allocation10 + $0x188] sm:$0xff]
    %v6336 = vld [vmem:[#allocation10 + $0x190] sm:$0xff]
    %v6337 = vld [vmem:[#allocation10 + $0x198] sm:$0xff]
    %v6338 = vld [vmem:[#allocation10 + $0x1a0] sm:$0xff]
    %v6339 = vld [vmem:[#allocation10 + $0x1a8] sm:$0xff]
    %v6340 = vld [vmem:[#allocation10 + $0x1b0] sm:$0xff]
    %v6341 = vld [vmem:[#allocation10 + $0x1b8] sm:$0xff]
    %v6342 = vld [vmem:[#allocation10 + $0x1c0] sm:$0xff]
    %v6343 = vld [vmem:[#allocation10 + $0x1c8] sm:$0xff]
    %v6344 = vld [vmem:[#allocation10 + $0x1d0] sm:$0xff]
    %v6345 = vld [vmem:[#allocation10 + $0x1d8] sm:$0xff]
    %v6346 = vld [vmem:[#allocation10 + $0x1e0] sm:$0xff]
    %v6347 = vld [vmem:[#allocation10 + $0x1e8] sm:$0xff]
    %v6348 = vld [vmem:[#allocation10 + $0x1f0] sm:$0xff]
    %v6349 = vld [vmem:[#allocation10 + $0x1f8] sm:$0xff]
    %v6351 = vsel %vm172, %v5188, 0
    %6353 = vmatprep.subr.mxu0 0.0
    %6354 = vmatpush1.msra.mxu0 %v6286
    %6355 = vmatprep.subr.mxu0 0.0
    %6356 = vmatpush1.msra.mxu0 %v6287
    %6357 = vmatprep.subr.mxu0 0.0
    %6358 = vmatpush1.msra.mxu0 %v6288
    %6359 = vmatprep.subr.mxu0 0.0
    %6360 = vmatpush1.msra.mxu0 %v6289
    %6361 = vmatprep.subr.mxu0 0.0
    %6362 = vmatpush1.msra.mxu0 0.0
    %6363 = vmatprep.subr.mxu0 0.0
    %6364 = vmatpush1.msra.mxu0 0.0
    %6365 = vmatprep.subr.mxu0 0.0
    %6366 = vmatpush1.msra.mxu0 0.0
    %6367 = vmatprep.subr.mxu0 0.0
    %6368 = vmatpush1.msra.mxu0 0.0
    %6369 = vmatprep.subr.mxu0 0.0
    %6370 = vmatpush1.msra.mxu0 0.0
    %6371 = vmatprep.subr.mxu0 0.0
    %6372 = vmatpush1.msra.mxu0 0.0
    %6373 = vmatprep.subr.mxu0 0.0
    %6374 = vmatpush1.msra.mxu0 0.0
    %6375 = vmatprep.subr.mxu0 0.0
    %6376 = vmatpush1.msra.mxu0 0.0
    %6377 = vmatprep.subr.mxu0 0.0
    %6378 = vmatpush1.msra.mxu0 0.0
    %6379 = vmatprep.subr.mxu0 0.0
    %6380 = vmatpush1.msra.mxu0 0.0
    %6381 = vmatprep.subr.mxu0 0.0
    %6382 = vmatpush1.msra.mxu0 0.0
    %6383 = vmatprep.subr.mxu0 0.0
    %6384 = vmatpush1.msra.mxu0 0.0
    %6385 = vmatprep.subr.mxu0 0.0
    %6386 = vmatpush1.msra.mxu0 0.0
    %6387 = vmatprep.subr.mxu0 0.0
    %6388 = vmatpush1.msra.mxu0 0.0
    %6389 = vmatprep.subr.mxu0 0.0
    %6390 = vmatpush1.msra.mxu0 0.0
    %6391 = vmatprep.subr.mxu0 0.0
    %6392 = vmatpush1.msra.mxu0 0.0
    %6393 = vmatprep.subr.mxu0 0.0
    %6394 = vmatpush1.msra.mxu0 0.0
    %6395 = vmatprep.subr.mxu0 0.0
    %6396 = vmatpush1.msra.mxu0 0.0
    %6397 = vmatprep.subr.mxu0 0.0
    %6398 = vmatpush1.msra.mxu0 0.0
    %6399 = vmatprep.subr.mxu0 0.0
    %6400 = vmatpush1.msra.mxu0 0.0
    %6401 = vmatprep.subr.mxu0 0.0
    %6402 = vmatpush1.msra.mxu0 0.0
    %6403 = vmatprep.subr.mxu0 0.0
    %6404 = vmatpush1.msra.mxu0 0.0
    %6405 = vmatprep.subr.mxu0 0.0
    %6406 = vmatpush1.msra.mxu0 0.0
    %6407 = vmatprep.subr.mxu0 0.0
    %6408 = vmatpush1.msra.mxu0 0.0
    %6409 = vmatprep.subr.mxu0 0.0
    %6410 = vmatpush1.msra.mxu0 0.0
    %6411 = vmatprep.subr.mxu0 0.0
    %6412 = vmatpush1.msra.mxu0 0.0
    %6413 = vmatprep.subr.mxu0 0.0
    %6414 = vmatpush1.msra.mxu0 0.0
    %6415 = vmatprep.subr.mxu0 0.0
    %6416 = vmatpush1.msra.mxu0 0.0
    %6417 = vmatprep.mubr.f32.mxu0 0.0
    %6418 = vmatmul.mubr.f32.gmra.mrb[0].mxu0 %v6351
    %v6419 = vpop.f32.mrb[0].mxu0
    %v6420 = vadd.f32 0.0, %v6419
    %v6421 = vpop.f32.mrb[0].mxu0
    %6422 = vdwg.mxu0
    %v6424 = vsel %vm172, %v5261, 0
    %6426 = vmatprep.subr.mxu0 0.0
    %6427 = vmatpush1.msra.mxu0 %v6290
    %6428 = vmatprep.subr.mxu0 0.0
    %6429 = vmatpush1.msra.mxu0 %v6291
    %6430 = vmatprep.subr.mxu0 0.0
    %6431 = vmatpush1.msra.mxu0 %v6292
    %6432 = vmatprep.subr.mxu0 0.0
    %6433 = vmatpush1.msra.mxu0 %v6293
    %6434 = vmatprep.subr.mxu0 0.0
    %6435 = vmatpush1.msra.mxu0 0.0
    %6436 = vmatprep.subr.mxu0 0.0
    %6437 = vmatpush1.msra.mxu0 0.0
    %6438 = vmatprep.subr.mxu0 0.0
    %6439 = vmatpush1.msra.mxu0 0.0
    %6440 = vmatprep.subr.mxu0 0.0
    %6441 = vmatpush1.msra.mxu0 0.0
    %6442 = vmatprep.subr.mxu0 0.0
    %6443 = vmatpush1.msra.mxu0 0.0
    %6444 = vmatprep.subr.mxu0 0.0
    %6445 = vmatpush1.msra.mxu0 0.0
    %6446 = vmatprep.subr.mxu0 0.0
    %6447 = vmatpush1.msra.mxu0 0.0
    %6448 = vmatprep.subr.mxu0 0.0
    %6449 = vmatpush1.msra.mxu0 0.0
    %6450 = vmatprep.subr.mxu0 0.0
    %6451 = vmatpush1.msra.mxu0 0.0
    %6452 = vmatprep.subr.mxu0 0.0
    %6453 = vmatpush1.msra.mxu0 0.0
    %6454 = vmatprep.subr.mxu0 0.0
    %6455 = vmatpush1.msra.mxu0 0.0
    %6456 = vmatprep.subr.mxu0 0.0
    %6457 = vmatpush1.msra.mxu0 0.0
    %6458 = vmatprep.subr.mxu0 0.0
    %6459 = vmatpush1.msra.mxu0 0.0
    %6460 = vmatprep.subr.mxu0 0.0
    %6461 = vmatpush1.msra.mxu0 0.0
    %6462 = vmatprep.subr.mxu0 0.0
    %6463 = vmatpush1.msra.mxu0 0.0
    %6464 = vmatprep.subr.mxu0 0.0
    %6465 = vmatpush1.msra.mxu0 0.0
    %6466 = vmatprep.subr.mxu0 0.0
    %6467 = vmatpush1.msra.mxu0 0.0
    %6468 = vmatprep.subr.mxu0 0.0
    %6469 = vmatpush1.msra.mxu0 0.0
    %6470 = vmatprep.subr.mxu0 0.0
    %6471 = vmatpush1.msra.mxu0 0.0
    %6472 = vmatprep.subr.mxu0 0.0
    %6473 = vmatpush1.msra.mxu0 0.0
    %6474 = vmatprep.subr.mxu0 0.0
    %6475 = vmatpush1.msra.mxu0 0.0
    %6476 = vmatprep.subr.mxu0 0.0
    %6477 = vmatpush1.msra.mxu0 0.0
    %6478 = vmatprep.subr.mxu0 0.0
    %6479 = vmatpush1.msra.mxu0 0.0
    %6480 = vmatprep.subr.mxu0 0.0
    %6481 = vmatpush1.msra.mxu0 0.0
    %6482 = vmatprep.subr.mxu0 0.0
    %6483 = vmatpush1.msra.mxu0 0.0
    %6484 = vmatprep.subr.mxu0 0.0
    %6485 = vmatpush1.msra.mxu0 0.0
    %6486 = vmatprep.subr.mxu0 0.0
    %6487 = vmatpush1.msra.mxu0 0.0
    %6488 = vmatprep.subr.mxu0 0.0
    %6489 = vmatpush1.msra.mxu0 0.0
    %6490 = vmatprep.mubr.f32.mxu0 0.0
    %6491 = vmatmul.mubr.f32.gmra.mrb[0].mxu0 %v6424
    %v6492 = vpop.f32.mrb[0].mxu0
    %v6493 = vadd.f32 0.0, %v6492
    %v6494 = vpop.f32.mrb[0].mxu0
    %6495 = vdwg.mxu0
    %v6497 = vsel %vm172, %v5334, 0
    %6499 = vmatprep.subr.mxu0 0.0
    %6500 = vmatpush1.msra.mxu0 %v6294
    %6501 = vmatprep.subr.mxu0 0.0
    %6502 = vmatpush1.msra.mxu0 %v6295
    %6503 = vmatprep.subr.mxu0 0.0
    %6504 = vmatpush1.msra.mxu0 %v6296
    %6505 = vmatprep.subr.mxu0 0.0
    %6506 = vmatpush1.msra.mxu0 %v6297
    %6507 = vmatprep.subr.mxu0 0.0
    %6508 = vmatpush1.msra.mxu0 0.0
    %6509 = vmatprep.subr.mxu0 0.0
    %6510 = vmatpush1.msra.mxu0 0.0
    %6511 = vmatprep.subr.mxu0 0.0
    %6512 = vmatpush1.msra.mxu0 0.0
    %6513 = vmatprep.subr.mxu0 0.0
    %6514 = vmatpush1.msra.mxu0 0.0
    %6515 = vmatprep.subr.mxu0 0.0
    %6516 = vmatpush1.msra.mxu0 0.0
    %6517 = vmatprep.subr.mxu0 0.0
    %6518 = vmatpush1.msra.mxu0 0.0
    %6519 = vmatprep.subr.mxu0 0.0
    %6520 = vmatpush1.msra.mxu0 0.0
    %6521 = vmatprep.subr.mxu0 0.0
    %6522 = vmatpush1.msra.mxu0 0.0
    %6523 = vmatprep.subr.mxu0 0.0
    %6524 = vmatpush1.msra.mxu0 0.0
    %6525 = vmatprep.subr.mxu0 0.0
    %6526 = vmatpush1.msra.mxu0 0.0
    %6527 = vmatprep.subr.mxu0 0.0
    %6528 = vmatpush1.msra.mxu0 0.0
    %6529 = vmatprep.subr.mxu0 0.0
    %6530 = vmatpush1.msra.mxu0 0.0
    %6531 = vmatprep.subr.mxu0 0.0
    %6532 = vmatpush1.msra.mxu0 0.0
    %6533 = vmatprep.subr.mxu0 0.0
    %6534 = vmatpush1.msra.mxu0 0.0
    %6535 = vmatprep.subr.mxu0 0.0
    %6536 = vmatpush1.msra.mxu0 0.0
    %6537 = vmatprep.subr.mxu0 0.0
    %6538 = vmatpush1.msra.mxu0 0.0
    %6539 = vmatprep.subr.mxu0 0.0
    %6540 = vmatpush1.msra.mxu0 0.0
    %6541 = vmatprep.subr.mxu0 0.0
    %6542 = vmatpush1.msra.mxu0 0.0
    %6543 = vmatprep.subr.mxu0 0.0
    %6544 = vmatpush1.msra.mxu0 0.0
    %6545 = vmatprep.subr.mxu0 0.0
    %6546 = vmatpush1.msra.mxu0 0.0
    %6547 = vmatprep.subr.mxu0 0.0
    %6548 = vmatpush1.msra.mxu0 0.0
    %6549 = vmatprep.subr.mxu0 0.0
    %6550 = vmatpush1.msra.mxu0 0.0
    %6551 = vmatprep.subr.mxu0 0.0
    %6552 = vmatpush1.msra.mxu0 0.0
    %6553 = vmatprep.subr.mxu0 0.0
    %6554 = vmatpush1.msra.mxu0 0.0
    %6555 = vmatprep.subr.mxu0 0.0
    %6556 = vmatpush1.msra.mxu0 0.0
    %6557 = vmatprep.subr.mxu0 0.0
    %6558 = vmatpush1.msra.mxu0 0.0
    %6559 = vmatprep.subr.mxu0 0.0
    %6560 = vmatpush1.msra.mxu0 0.0
    %6561 = vmatprep.subr.mxu0 0.0
    %6562 = vmatpush1.msra.mxu0 0.0
    %6563 = vmatprep.mubr.f32.mxu0 0.0
    %6564 = vmatmul.mubr.f32.gmra.mrb[0].mxu0 %v6497
    %v6565 = vpop.f32.mrb[0].mxu0
    %v6566 = vadd.f32 0.0, %v6565
    %v6567 = vpop.f32.mrb[0].mxu0
    %6568 = vdwg.mxu0
    %v6570 = vsel %vm172, %v5407, 0
    %6572 = vmatprep.subr.mxu0 0.0
    %6573 = vmatpush1.msra.mxu0 %v6298
    %6574 = vmatprep.subr.mxu0 0.0
    %6575 = vmatpush1.msra.mxu0 %v6299
    %6576 = vmatprep.subr.mxu0 0.0
    %6577 = vmatpush1.msra.mxu0 %v6300
    %6578 = vmatprep.subr.mxu0 0.0
    %6579 = vmatpush1.msra.mxu0 %v6301
    %6580 = vmatprep.subr.mxu0 0.0
    %6581 = vmatpush1.msra.mxu0 0.0
    %6582 = vmatprep.subr.mxu0 0.0
    %6583 = vmatpush1.msra.mxu0 0.0
    %6584 = vmatprep.subr.mxu0 0.0
    %6585 = vmatpush1.msra.mxu0 0.0
    %6586 = vmatprep.subr.mxu0 0.0
    %6587 = vmatpush1.msra.mxu0 0.0
    %6588 = vmatprep.subr.mxu0 0.0
    %6589 = vmatpush1.msra.mxu0 0.0
    %6590 = vmatprep.subr.mxu0 0.0
    %6591 = vmatpush1.msra.mxu0 0.0
    %6592 = vmatprep.subr.mxu0 0.0
    %6593 = vmatpush1.msra.mxu0 0.0
    %6594 = vmatprep.subr.mxu0 0.0
    %6595 = vmatpush1.msra.mxu0 0.0
    %6596 = vmatprep.subr.mxu0 0.0
    %6597 = vmatpush1.msra.mxu0 0.0
    %6598 = vmatprep.subr.mxu0 0.0
    %6599 = vmatpush1.msra.mxu0 0.0
    %6600 = vmatprep.subr.mxu0 0.0
    %6601 = vmatpush1.msra.mxu0 0.0
    %6602 = vmatprep.subr.mxu0 0.0
    %6603 = vmatpush1.msra.mxu0 0.0
    %6604 = vmatprep.subr.mxu0 0.0
    %6605 = vmatpush1.msra.mxu0 0.0
    %6606 = vmatprep.subr.mxu0 0.0
    %6607 = vmatpush1.msra.mxu0 0.0
    %6608 = vmatprep.subr.mxu0 0.0
    %6609 = vmatpush1.msra.mxu0 0.0
    %6610 = vmatprep.subr.mxu0 0.0
    %6611 = vmatpush1.msra.mxu0 0.0
    %6612 = vmatprep.subr.mxu0 0.0
    %6613 = vmatpush1.msra.mxu0 0.0
    %6614 = vmatprep.subr.mxu0 0.0
    %6615 = vmatpush1.msra.mxu0 0.0
    %6616 = vmatprep.subr.mxu0 0.0
    %6617 = vmatpush1.msra.mxu0 0.0
    %6618 = vmatprep.subr.mxu0 0.0
    %6619 = vmatpush1.msra.mxu0 0.0
    %6620 = vmatprep.subr.mxu0 0.0
    %6621 = vmatpush1.msra.mxu0 0.0
    %6622 = vmatprep.subr.mxu0 0.0
    %6623 = vmatpush1.msra.mxu0 0.0
    %6624 = vmatprep.subr.mxu0 0.0
    %6625 = vmatpush1.msra.mxu0 0.0
    %6626 = vmatprep.subr.mxu0 0.0
    %6627 = vmatpush1.msra.mxu0 0.0
    %6628 = vmatprep.subr.mxu0 0.0
    %6629 = vmatpush1.msra.mxu0 0.0
    %6630 = vmatprep.subr.mxu0 0.0
    %6631 = vmatpush1.msra.mxu0 0.0
    %6632 = vmatprep.subr.mxu0 0.0
    %6633 = vmatpush1.msra.mxu0 0.0
    %6634 = vmatprep.subr.mxu0 0.0
    %6635 = vmatpush1.msra.mxu0 0.0
    %6636 = vmatprep.mubr.f32.mxu0 0.0
    %6637 = vmatmul.mubr.f32.gmra.mrb[0].mxu0 %v6570
    %v6638 = vpop.f32.mrb[0].mxu0
    %v6639 = vadd.f32 0.0, %v6638
    %v6640 = vpop.f32.mrb[0].mxu0
    %6641 = vdwg.mxu0
    %v6643 = vsel %vm172, %v5480, 0
    %6645 = vmatprep.subr.mxu0 0.0
    %6646 = vmatpush1.msra.mxu0 %v6302
    %6647 = vmatprep.subr.mxu0 0.0
    %6648 = vmatpush1.msra.mxu0 %v6303
    %6649 = vmatprep.subr.mxu0 0.0
    %6650 = vmatpush1.msra.mxu0 %v6304
    %6651 = vmatprep.subr.mxu0 0.0
    %6652 = vmatpush1.msra.mxu0 %v6305
    %6653 = vmatprep.subr.mxu0 0.0
    %6654 = vmatpush1.msra.mxu0 0.0
    %6655 = vmatprep.subr.mxu0 0.0
    %6656 = vmatpush1.msra.mxu0 0.0
    %6657 = vmatprep.subr.mxu0 0.0
    %6658 = vmatpush1.msra.mxu0 0.0
    %6659 = vmatprep.subr.mxu0 0.0
    %6660 = vmatpush1.msra.mxu0 0.0
    %6661 = vmatprep.subr.mxu0 0.0
    %6662 = vmatpush1.msra.mxu0 0.0
    %6663 = vmatprep.subr.mxu0 0.0
    %6664 = vmatpush1.msra.mxu0 0.0
    %6665 = vmatprep.subr.mxu0 0.0
    %6666 = vmatpush1.msra.mxu0 0.0
    %6667 = vmatprep.subr.mxu0 0.0
    %6668 = vmatpush1.msra.mxu0 0.0
    %6669 = vmatprep.subr.mxu0 0.0
    %6670 = vmatpush1.msra.mxu0 0.0
    %6671 = vmatprep.subr.mxu0 0.0
    %6672 = vmatpush1.msra.mxu0 0.0
    %6673 = vmatprep.subr.mxu0 0.0
    %6674 = vmatpush1.msra.mxu0 0.0
    %6675 = vmatprep.subr.mxu0 0.0
    %6676 = vmatpush1.msra.mxu0 0.0
    %6677 = vmatprep.subr.mxu0 0.0
    %6678 = vmatpush1.msra.mxu0 0.0
    %6679 = vmatprep.subr.mxu0 0.0
    %6680 = vmatpush1.msra.mxu0 0.0
    %6681 = vmatprep.subr.mxu0 0.0
    %6682 = vmatpush1.msra.mxu0 0.0
    %6683 = vmatprep.subr.mxu0 0.0
    %6684 = vmatpush1.msra.mxu0 0.0
    %6685 = vmatprep.subr.mxu0 0.0
    %6686 = vmatpush1.msra.mxu0 0.0
    %6687 = vmatprep.subr.mxu0 0.0
    %6688 = vmatpush1.msra.mxu0 0.0
    %6689 = vmatprep.subr.mxu0 0.0
    %6690 = vmatpush1.msra.mxu0 0.0
    %6691 = vmatprep.subr.mxu0 0.0
    %6692 = vmatpush1.msra.mxu0 0.0
    %6693 = vmatprep.subr.mxu0 0.0
    %6694 = vmatpush1.msra.mxu0 0.0
    %6695 = vmatprep.subr.mxu0 0.0
    %6696 = vmatpush1.msra.mxu0 0.0
    %6697 = vmatprep.subr.mxu0 0.0
    %6698 = vmatpush1.msra.mxu0 0.0
    %6699 = vmatprep.subr.mxu0 0.0
    %6700 = vmatpush1.msra.mxu0 0.0
    %6701 = vmatprep.subr.mxu0 0.0
    %6702 = vmatpush1.msra.mxu0 0.0
    %6703 = vmatprep.subr.mxu0 0.0
    %6704 = vmatpush1.msra.mxu0 0.0
    %6705 = vmatprep.subr.mxu0 0.0
    %6706 = vmatpush1.msra.mxu0 0.0
    %6707 = vmatprep.subr.mxu0 0.0
    %6708 = vmatpush1.msra.mxu0 0.0
    %6709 = vmatprep.mubr.f32.mxu0 0.0
    %6710 = vmatmul.mubr.f32.gmra.mrb[0].mxu0 %v6643
    %v6711 = vpop.f32.mrb[0].mxu0
    %v6712 = vadd.f32 0.0, %v6711
    %v6713 = vpop.f32.mrb[0].mxu0
    %6714 = vdwg.mxu0
    %v6716 = vsel %vm172, %v5553, 0
    %6718 = vmatprep.subr.mxu0 0.0
    %6719 = vmatpush1.msra.mxu0 %v6306
    %6720 = vmatprep.subr.mxu0 0.0
    %6721 = vmatpush1.msra.mxu0 %v6307
    %6722 = vmatprep.subr.mxu0 0.0
    %6723 = vmatpush1.msra.mxu0 %v6308
    %6724 = vmatprep.subr.mxu0 0.0
    %6725 = vmatpush1.msra.mxu0 %v6309
    %6726 = vmatprep.subr.mxu0 0.0
    %6727 = vmatpush1.msra.mxu0 0.0
    %6728 = vmatprep.subr.mxu0 0.0
    %6729 = vmatpush1.msra.mxu0 0.0
    %6730 = vmatprep.subr.mxu0 0.0
    %6731 = vmatpush1.msra.mxu0 0.0
    %6732 = vmatprep.subr.mxu0 0.0
    %6733 = vmatpush1.msra.mxu0 0.0
    %6734 = vmatprep.subr.mxu0 0.0
    %6735 = vmatpush1.msra.mxu0 0.0
    %6736 = vmatprep.subr.mxu0 0.0
    %6737 = vmatpush1.msra.mxu0 0.0
    %6738 = vmatprep.subr.mxu0 0.0
    %6739 = vmatpush1.msra.mxu0 0.0
    %6740 = vmatprep.subr.mxu0 0.0
    %6741 = vmatpush1.msra.mxu0 0.0
    %6742 = vmatprep.subr.mxu0 0.0
    %6743 = vmatpush1.msra.mxu0 0.0
    %6744 = vmatprep.subr.mxu0 0.0
    %6745 = vmatpush1.msra.mxu0 0.0
    %6746 = vmatprep.subr.mxu0 0.0
    %6747 = vmatpush1.msra.mxu0 0.0
    %6748 = vmatprep.subr.mxu0 0.0
    %6749 = vmatpush1.msra.mxu0 0.0
    %6750 = vmatprep.subr.mxu0 0.0
    %6751 = vmatpush1.msra.mxu0 0.0
    %6752 = vmatprep.subr.mxu0 0.0
    %6753 = vmatpush1.msra.mxu0 0.0
    %6754 = vmatprep.subr.mxu0 0.0
    %6755 = vmatpush1.msra.mxu0 0.0
    %6756 = vmatprep.subr.mxu0 0.0
    %6757 = vmatpush1.msra.mxu0 0.0
    %6758 = vmatprep.subr.mxu0 0.0
    %6759 = vmatpush1.msra.mxu0 0.0
    %6760 = vmatprep.subr.mxu0 0.0
    %6761 = vmatpush1.msra.mxu0 0.0
    %6762 = vmatprep.subr.mxu0 0.0
    %6763 = vmatpush1.msra.mxu0 0.0
    %6764 = vmatprep.subr.mxu0 0.0
    %6765 = vmatpush1.msra.mxu0 0.0
    %6766 = vmatprep.subr.mxu0 0.0
    %6767 = vmatpush1.msra.mxu0 0.0
    %6768 = vmatprep.subr.mxu0 0.0
    %6769 = vmatpush1.msra.mxu0 0.0
    %6770 = vmatprep.subr.mxu0 0.0
    %6771 = vmatpush1.msra.mxu0 0.0
    %6772 = vmatprep.subr.mxu0 0.0
    %6773 = vmatpush1.msra.mxu0 0.0
    %6774 = vmatprep.subr.mxu0 0.0
    %6775 = vmatpush1.msra.mxu0 0.0
    %6776 = vmatprep.subr.mxu0 0.0
    %6777 = vmatpush1.msra.mxu0 0.0
    %6778 = vmatprep.subr.mxu0 0.0
    %6779 = vmatpush1.msra.mxu0 0.0
    %6780 = vmatprep.subr.mxu0 0.0
    %6781 = vmatpush1.msra.mxu0 0.0
    %6782 = vmatprep.mubr.f32.mxu0 0.0
    %6783 = vmatmul.mubr.f32.gmra.mrb[0].mxu0 %v6716
    %v6784 = vpop.f32.mrb[0].mxu0
    %v6785 = vadd.f32 0.0, %v6784
    %v6786 = vpop.f32.mrb[0].mxu0
    %6787 = vdwg.mxu0
    %v6789 = vsel %vm172, %v5626, 0
    %6791 = vmatprep.subr.mxu0 0.0
    %6792 = vmatpush1.msra.mxu0 %v6310
    %6793 = vmatprep.subr.mxu0 0.0
    %6794 = vmatpush1.msra.mxu0 %v6311
    %6795 = vmatprep.subr.mxu0 0.0
    %6796 = vmatpush1.msra.mxu0 %v6312
    %6797 = vmatprep.subr.mxu0 0.0
    %6798 = vmatpush1.msra.mxu0 %v6313
    %6799 = vmatprep.subr.mxu0 0.0
    %6800 = vmatpush1.msra.mxu0 0.0
    %6801 = vmatprep.subr.mxu0 0.0
    %6802 = vmatpush1.msra.mxu0 0.0
    %6803 = vmatprep.subr.mxu0 0.0
    %6804 = vmatpush1.msra.mxu0 0.0
    %6805 = vmatprep.subr.mxu0 0.0
    %6806 = vmatpush1.msra.mxu0 0.0
    %6807 = vmatprep.subr.mxu0 0.0
    %6808 = vmatpush1.msra.mxu0 0.0
    %6809 = vmatprep.subr.mxu0 0.0
    %6810 = vmatpush1.msra.mxu0 0.0
    %6811 = vmatprep.subr.mxu0 0.0
    %6812 = vmatpush1.msra.mxu0 0.0
    %6813 = vmatprep.subr.mxu0 0.0
    %6814 = vmatpush1.msra.mxu0 0.0
    %6815 = vmatprep.subr.mxu0 0.0
    %6816 = vmatpush1.msra.mxu0 0.0
    %6817 = vmatprep.subr.mxu0 0.0
    %6818 = vmatpush1.msra.mxu0 0.0
    %6819 = vmatprep.subr.mxu0 0.0
    %6820 = vmatpush1.msra.mxu0 0.0
    %6821 = vmatprep.subr.mxu0 0.0
    %6822 = vmatpush1.msra.mxu0 0.0
    %6823 = vmatprep.subr.mxu0 0.0
    %6824 = vmatpush1.msra.mxu0 0.0
    %6825 = vmatprep.subr.mxu0 0.0
    %6826 = vmatpush1.msra.mxu0 0.0
    %6827 = vmatprep.subr.mxu0 0.0
    %6828 = vmatpush1.msra.mxu0 0.0
    %6829 = vmatprep.subr.mxu0 0.0
    %6830 = vmatpush1.msra.mxu0 0.0
    %6831 = vmatprep.subr.mxu0 0.0
    %6832 = vmatpush1.msra.mxu0 0.0
    %6833 = vmatprep.subr.mxu0 0.0
    %6834 = vmatpush1.msra.mxu0 0.0
    %6835 = vmatprep.subr.mxu0 0.0
    %6836 = vmatpush1.msra.mxu0 0.0
    %6837 = vmatprep.subr.mxu0 0.0
    %6838 = vmatpush1.msra.mxu0 0.0
    %6839 = vmatprep.subr.mxu0 0.0
    %6840 = vmatpush1.msra.mxu0 0.0
    %6841 = vmatprep.subr.mxu0 0.0
    %6842 = vmatpush1.msra.mxu0 0.0
    %6843 = vmatprep.subr.mxu0 0.0
    %6844 = vmatpush1.msra.mxu0 0.0
    %6845 = vmatprep.subr.mxu0 0.0
    %6846 = vmatpush1.msra.mxu0 0.0
    %6847 = vmatprep.subr.mxu0 0.0
    %6848 = vmatpush1.msra.mxu0 0.0
    %6849 = vmatprep.subr.mxu0 0.0
    %6850 = vmatpush1.msra.mxu0 0.0
    %6851 = vmatprep.subr.mxu0 0.0
    %6852 = vmatpush1.msra.mxu0 0.0
    %6853 = vmatprep.subr.mxu0 0.0
    %6854 = vmatpush1.msra.mxu0 0.0
    %6855 = vmatprep.mubr.f32.mxu0 0.0
    %6856 = vmatmul.mubr.f32.gmra.mrb[0].mxu0 %v6789
    %v6857 = vpop.f32.mrb[0].mxu0
    %v6858 = vadd.f32 0.0, %v6857
    %v6859 = vpop.f32.mrb[0].mxu0
    %6860 = vdwg.mxu0
    %v6862 = vsel %vm172, %v5699, 0
    %6864 = vmatprep.subr.mxu0 0.0
    %6865 = vmatpush1.msra.mxu0 %v6314
    %6866 = vmatprep.subr.mxu0 0.0
    %6867 = vmatpush1.msra.mxu0 %v6315
    %6868 = vmatprep.subr.mxu0 0.0
    %6869 = vmatpush1.msra.mxu0 %v6316
    %6870 = vmatprep.subr.mxu0 0.0
    %6871 = vmatpush1.msra.mxu0 %v6317
    %6872 = vmatprep.subr.mxu0 0.0
    %6873 = vmatpush1.msra.mxu0 0.0
    %6874 = vmatprep.subr.mxu0 0.0
    %6875 = vmatpush1.msra.mxu0 0.0
    %6876 = vmatprep.subr.mxu0 0.0
    %6877 = vmatpush1.msra.mxu0 0.0
    %6878 = vmatprep.subr.mxu0 0.0
    %6879 = vmatpush1.msra.mxu0 0.0
    %6880 = vmatprep.subr.mxu0 0.0
    %6881 = vmatpush1.msra.mxu0 0.0
    %6882 = vmatprep.subr.mxu0 0.0
    %6883 = vmatpush1.msra.mxu0 0.0
    %6884 = vmatprep.subr.mxu0 0.0
    %6885 = vmatpush1.msra.mxu0 0.0
    %6886 = vmatprep.subr.mxu0 0.0
    %6887 = vmatpush1.msra.mxu0 0.0
    %6888 = vmatprep.subr.mxu0 0.0
    %6889 = vmatpush1.msra.mxu0 0.0
    %6890 = vmatprep.subr.mxu0 0.0
    %6891 = vmatpush1.msra.mxu0 0.0
    %6892 = vmatprep.subr.mxu0 0.0
    %6893 = vmatpush1.msra.mxu0 0.0
    %6894 = vmatprep.subr.mxu0 0.0
    %6895 = vmatpush1.msra.mxu0 0.0
    %6896 = vmatprep.subr.mxu0 0.0
    %6897 = vmatpush1.msra.mxu0 0.0
    %6898 = vmatprep.subr.mxu0 0.0
    %6899 = vmatpush1.msra.mxu0 0.0
    %6900 = vmatprep.subr.mxu0 0.0
    %6901 = vmatpush1.msra.mxu0 0.0
    %6902 = vmatprep.subr.mxu0 0.0
    %6903 = vmatpush1.msra.mxu0 0.0
    %6904 = vmatprep.subr.mxu0 0.0
    %6905 = vmatpush1.msra.mxu0 0.0
    %6906 = vmatprep.subr.mxu0 0.0
    %6907 = vmatpush1.msra.mxu0 0.0
    %6908 = vmatprep.subr.mxu0 0.0
    %6909 = vmatpush1.msra.mxu0 0.0
    %6910 = vmatprep.subr.mxu0 0.0
    %6911 = vmatpush1.msra.mxu0 0.0
    %6912 = vmatprep.subr.mxu0 0.0
    %6913 = vmatpush1.msra.mxu0 0.0
    %6914 = vmatprep.subr.mxu0 0.0
    %6915 = vmatpush1.msra.mxu0 0.0
    %6916 = vmatprep.subr.mxu0 0.0
    %6917 = vmatpush1.msra.mxu0 0.0
    %6918 = vmatprep.subr.mxu0 0.0
    %6919 = vmatpush1.msra.mxu0 0.0
    %6920 = vmatprep.subr.mxu0 0.0
    %6921 = vmatpush1.msra.mxu0 0.0
    %6922 = vmatprep.subr.mxu0 0.0
    %6923 = vmatpush1.msra.mxu0 0.0
    %6924 = vmatprep.subr.mxu0 0.0
    %6925 = vmatpush1.msra.mxu0 0.0
    %6926 = vmatprep.subr.mxu0 0.0
    %6927 = vmatpush1.msra.mxu0 0.0
    %6928 = vmatprep.mubr.f32.mxu0 0.0
    %6929 = vmatmul.mubr.f32.gmra.mrb[0].mxu0 %v6862
    %v6930 = vpop.f32.mrb[0].mxu0
    %v6931 = vadd.f32 0.0, %v6930
    %v6932 = vpop.f32.mrb[0].mxu0
    %6933 = vdwg.mxu0
    %v6935 = vsel %vm172, %v5772, 0
    %6937 = vmatprep.subr.mxu0 0.0
    %6938 = vmatpush1.msra.mxu0 %v6318
    %6939 = vmatprep.subr.mxu0 0.0
    %6940 = vmatpush1.msra.mxu0 %v6319
    %6941 = vmatprep.subr.mxu0 0.0
    %6942 = vmatpush1.msra.mxu0 %v6320
    %6943 = vmatprep.subr.mxu0 0.0
    %6944 = vmatpush1.msra.mxu0 %v6321
    %6945 = vmatprep.subr.mxu0 0.0
    %6946 = vmatpush1.msra.mxu0 0.0
    %6947 = vmatprep.subr.mxu0 0.0
    %6948 = vmatpush1.msra.mxu0 0.0
    %6949 = vmatprep.subr.mxu0 0.0
    %6950 = vmatpush1.msra.mxu0 0.0
    %6951 = vmatprep.subr.mxu0 0.0
    %6952 = vmatpush1.msra.mxu0 0.0
    %6953 = vmatprep.subr.mxu0 0.0
    %6954 = vmatpush1.msra.mxu0 0.0
    %6955 = vmatprep.subr.mxu0 0.0
    %6956 = vmatpush1.msra.mxu0 0.0
    %6957 = vmatprep.subr.mxu0 0.0
    %6958 = vmatpush1.msra.mxu0 0.0
    %6959 = vmatprep.subr.mxu0 0.0
    %6960 = vmatpush1.msra.mxu0 0.0
    %6961 = vmatprep.subr.mxu0 0.0
    %6962 = vmatpush1.msra.mxu0 0.0
    %6963 = vmatprep.subr.mxu0 0.0
    %6964 = vmatpush1.msra.mxu0 0.0
    %6965 = vmatprep.subr.mxu0 0.0
    %6966 = vmatpush1.msra.mxu0 0.0
    %6967 = vmatprep.subr.mxu0 0.0
    %6968 = vmatpush1.msra.mxu0 0.0
    %6969 = vmatprep.subr.mxu0 0.0
    %6970 = vmatpush1.msra.mxu0 0.0
    %6971 = vmatprep.subr.mxu0 0.0
    %6972 = vmatpush1.msra.mxu0 0.0
    %6973 = vmatprep.subr.mxu0 0.0
    %6974 = vmatpush1.msra.mxu0 0.0
    %6975 = vmatprep.subr.mxu0 0.0
    %6976 = vmatpush1.msra.mxu0 0.0
    %6977 = vmatprep.subr.mxu0 0.0
    %6978 = vmatpush1.msra.mxu0 0.0
    %6979 = vmatprep.subr.mxu0 0.0
    %6980 = vmatpush1.msra.mxu0 0.0
    %6981 = vmatprep.subr.mxu0 0.0
    %6982 = vmatpush1.msra.mxu0 0.0
    %6983 = vmatprep.subr.mxu0 0.0
    %6984 = vmatpush1.msra.mxu0 0.0
    %6985 = vmatprep.subr.mxu0 0.0
    %6986 = vmatpush1.msra.mxu0 0.0
    %6987 = vmatprep.subr.mxu0 0.0
    %6988 = vmatpush1.msra.mxu0 0.0
    %6989 = vmatprep.subr.mxu0 0.0
    %6990 = vmatpush1.msra.mxu0 0.0
    %6991 = vmatprep.subr.mxu0 0.0
    %6992 = vmatpush1.msra.mxu0 0.0
    %6993 = vmatprep.subr.mxu0 0.0
    %6994 = vmatpush1.msra.mxu0 0.0
    %6995 = vmatprep.subr.mxu0 0.0
    %6996 = vmatpush1.msra.mxu0 0.0
    %6997 = vmatprep.subr.mxu0 0.0
    %6998 = vmatpush1.msra.mxu0 0.0
    %6999 = vmatprep.subr.mxu0 0.0
    %7000 = vmatpush1.msra.mxu0 0.0
    %7001 = vmatprep.mubr.f32.mxu0 0.0
    %7002 = vmatmul.mubr.f32.gmra.mrb[0].mxu0 %v6935
    %v7003 = vpop.f32.mrb[0].mxu0
    %v7004 = vadd.f32 0.0, %v7003
    %v7005 = vpop.f32.mrb[0].mxu0
    %7006 = vdwg.mxu0
    %v7008 = vsel %vm172, %v5845, 0
    %7010 = vmatprep.subr.mxu0 0.0
    %7011 = vmatpush1.msra.mxu0 %v6322
    %7012 = vmatprep.subr.mxu0 0.0
    %7013 = vmatpush1.msra.mxu0 %v6323
    %7014 = vmatprep.subr.mxu0 0.0
    %7015 = vmatpush1.msra.mxu0 %v6324
    %7016 = vmatprep.subr.mxu0 0.0
    %7017 = vmatpush1.msra.mxu0 %v6325
    %7018 = vmatprep.subr.mxu0 0.0
    %7019 = vmatpush1.msra.mxu0 0.0
    %7020 = vmatprep.subr.mxu0 0.0
    %7021 = vmatpush1.msra.mxu0 0.0
    %7022 = vmatprep.subr.mxu0 0.0
    %7023 = vmatpush1.msra.mxu0 0.0
    %7024 = vmatprep.subr.mxu0 0.0
    %7025 = vmatpush1.msra.mxu0 0.0
    %7026 = vmatprep.subr.mxu0 0.0
    %7027 = vmatpush1.msra.mxu0 0.0
    %7028 = vmatprep.subr.mxu0 0.0
    %7029 = vmatpush1.msra.mxu0 0.0
    %7030 = vmatprep.subr.mxu0 0.0
    %7031 = vmatpush1.msra.mxu0 0.0
    %7032 = vmatprep.subr.mxu0 0.0
    %7033 = vmatpush1.msra.mxu0 0.0
    %7034 = vmatprep.subr.mxu0 0.0
    %7035 = vmatpush1.msra.mxu0 0.0
    %7036 = vmatprep.subr.mxu0 0.0
    %7037 = vmatpush1.msra.mxu0 0.0
    %7038 = vmatprep.subr.mxu0 0.0
    %7039 = vmatpush1.msra.mxu0 0.0
    %7040 = vmatprep.subr.mxu0 0.0
    %7041 = vmatpush1.msra.mxu0 0.0
    %7042 = vmatprep.subr.mxu0 0.0
    %7043 = vmatpush1.msra.mxu0 0.0
    %7044 = vmatprep.subr.mxu0 0.0
    %7045 = vmatpush1.msra.mxu0 0.0
    %7046 = vmatprep.subr.mxu0 0.0
    %7047 = vmatpush1.msra.mxu0 0.0
    %7048 = vmatprep.subr.mxu0 0.0
    %7049 = vmatpush1.msra.mxu0 0.0
    %7050 = vmatprep.subr.mxu0 0.0
    %7051 = vmatpush1.msra.mxu0 0.0
    %7052 = vmatprep.subr.mxu0 0.0
    %7053 = vmatpush1.msra.mxu0 0.0
    %7054 = vmatprep.subr.mxu0 0.0
    %7055 = vmatpush1.msra.mxu0 0.0
    %7056 = vmatprep.subr.mxu0 0.0
    %7057 = vmatpush1.msra.mxu0 0.0
    %7058 = vmatprep.subr.mxu0 0.0
    %7059 = vmatpush1.msra.mxu0 0.0
    %7060 = vmatprep.subr.mxu0 0.0
    %7061 = vmatpush1.msra.mxu0 0.0
    %7062 = vmatprep.subr.mxu0 0.0
    %7063 = vmatpush1.msra.mxu0 0.0
    %7064 = vmatprep.subr.mxu0 0.0
    %7065 = vmatpush1.msra.mxu0 0.0
    %7066 = vmatprep.subr.mxu0 0.0
    %7067 = vmatpush1.msra.mxu0 0.0
    %7068 = vmatprep.subr.mxu0 0.0
    %7069 = vmatpush1.msra.mxu0 0.0
    %7070 = vmatprep.subr.mxu0 0.0
    %7071 = vmatpush1.msra.mxu0 0.0
    %7072 = vmatprep.subr.mxu0 0.0
    %7073 = vmatpush1.msra.mxu0 0.0
    %7074 = vmatprep.mubr.f32.mxu0 0.0
    %7075 = vmatmul.mubr.f32.gmra.mrb[0].mxu0 %v7008
    %v7076 = vpop.f32.mrb[0].mxu0
    %v7077 = vadd.f32 0.0, %v7076
    %v7078 = vpop.f32.mrb[0].mxu0
    %7079 = vdwg.mxu0
    %v7081 = vsel %vm172, %v5918, 0
    %7083 = vmatprep.subr.mxu0 0.0
    %7084 = vmatpush1.msra.mxu0 %v6326
    %7085 = vmatprep.subr.mxu0 0.0
    %7086 = vmatpush1.msra.mxu0 %v6327
    %7087 = vmatprep.subr.mxu0 0.0
    %7088 = vmatpush1.msra.mxu0 %v6328
    %7089 = vmatprep.subr.mxu0 0.0
    %7090 = vmatpush1.msra.mxu0 %v6329
    %7091 = vmatprep.subr.mxu0 0.0
    %7092 = vmatpush1.msra.mxu0 0.0
    %7093 = vmatprep.subr.mxu0 0.0
    %7094 = vmatpush1.msra.mxu0 0.0
    %7095 = vmatprep.subr.mxu0 0.0
    %7096 = vmatpush1.msra.mxu0 0.0
    %7097 = vmatprep.subr.mxu0 0.0
    %7098 = vmatpush1.msra.mxu0 0.0
    %7099 = vmatprep.subr.mxu0 0.0
    %7100 = vmatpush1.msra.mxu0 0.0
    %7101 = vmatprep.subr.mxu0 0.0
    %7102 = vmatpush1.msra.mxu0 0.0
    %7103 = vmatprep.subr.mxu0 0.0
    %7104 = vmatpush1.msra.mxu0 0.0
    %7105 = vmatprep.subr.mxu0 0.0
    %7106 = vmatpush1.msra.mxu0 0.0
    %7107 = vmatprep.subr.mxu0 0.0
    %7108 = vmatpush1.msra.mxu0 0.0
    %7109 = vmatprep.subr.mxu0 0.0
    %7110 = vmatpush1.msra.mxu0 0.0
    %7111 = vmatprep.subr.mxu0 0.0
    %7112 = vmatpush1.msra.mxu0 0.0
    %7113 = vmatprep.subr.mxu0 0.0
    %7114 = vmatpush1.msra.mxu0 0.0
    %7115 = vmatprep.subr.mxu0 0.0
    %7116 = vmatpush1.msra.mxu0 0.0
    %7117 = vmatprep.subr.mxu0 0.0
    %7118 = vmatpush1.msra.mxu0 0.0
    %7119 = vmatprep.subr.mxu0 0.0
    %7120 = vmatpush1.msra.mxu0 0.0
    %7121 = vmatprep.subr.mxu0 0.0
    %7122 = vmatpush1.msra.mxu0 0.0
    %7123 = vmatprep.subr.mxu0 0.0
    %7124 = vmatpush1.msra.mxu0 0.0
    %7125 = vmatprep.subr.mxu0 0.0
    %7126 = vmatpush1.msra.mxu0 0.0
    %7127 = vmatprep.subr.mxu0 0.0
    %7128 = vmatpush1.msra.mxu0 0.0
    %7129 = vmatprep.subr.mxu0 0.0
    %7130 = vmatpush1.msra.mxu0 0.0
    %7131 = vmatprep.subr.mxu0 0.0
    %7132 = vmatpush1.msra.mxu0 0.0
    %7133 = vmatprep.subr.mxu0 0.0
    %7134 = vmatpush1.msra.mxu0 0.0
    %7135 = vmatprep.subr.mxu0 0.0
    %7136 = vmatpush1.msra.mxu0 0.0
    %7137 = vmatprep.subr.mxu0 0.0
    %7138 = vmatpush1.msra.mxu0 0.0
    %7139 = vmatprep.subr.mxu0 0.0
    %7140 = vmatpush1.msra.mxu0 0.0
    %7141 = vmatprep.subr.mxu0 0.0
    %7142 = vmatpush1.msra.mxu0 0.0
    %7143 = vmatprep.subr.mxu0 0.0
    %7144 = vmatpush1.msra.mxu0 0.0
    %7145 = vmatprep.subr.mxu0 0.0
    %7146 = vmatpush1.msra.mxu0 0.0
    %7147 = vmatprep.mubr.f32.mxu0 0.0
    %7148 = vmatmul.mubr.f32.gmra.mrb[0].mxu0 %v7081
    %v7149 = vpop.f32.mrb[0].mxu0
    %v7150 = vadd.f32 0.0, %v7149
    %v7151 = vpop.f32.mrb[0].mxu0
    %7152 = vdwg.mxu0
    %v7154 = vsel %vm172, %v5991, 0
    %7156 = vmatprep.subr.mxu0 0.0
    %7157 = vmatpush1.msra.mxu0 %v6330
    %7158 = vmatprep.subr.mxu0 0.0
    %7159 = vmatpush1.msra.mxu0 %v6331
    %7160 = vmatprep.subr.mxu0 0.0
    %7161 = vmatpush1.msra.mxu0 %v6332
    %7162 = vmatprep.subr.mxu0 0.0
    %7163 = vmatpush1.msra.mxu0 %v6333
    %7164 = vmatprep.subr.mxu0 0.0
    %7165 = vmatpush1.msra.mxu0 0.0
    %7166 = vmatprep.subr.mxu0 0.0
    %7167 = vmatpush1.msra.mxu0 0.0
    %7168 = vmatprep.subr.mxu0 0.0
    %7169 = vmatpush1.msra.mxu0 0.0
    %7170 = vmatprep.subr.mxu0 0.0
    %7171 = vmatpush1.msra.mxu0 0.0
    %7172 = vmatprep.subr.mxu0 0.0
    %7173 = vmatpush1.msra.mxu0 0.0
    %7174 = vmatprep.subr.mxu0 0.0
    %7175 = vmatpush1.msra.mxu0 0.0
    %7176 = vmatprep.subr.mxu0 0.0
    %7177 = vmatpush1.msra.mxu0 0.0
    %7178 = vmatprep.subr.mxu0 0.0
    %7179 = vmatpush1.msra.mxu0 0.0
    %7180 = vmatprep.subr.mxu0 0.0
    %7181 = vmatpush1.msra.mxu0 0.0
    %7182 = vmatprep.subr.mxu0 0.0
    %7183 = vmatpush1.msra.mxu0 0.0
    %7184 = vmatprep.subr.mxu0 0.0
    %7185 = vmatpush1.msra.mxu0 0.0
    %7186 = vmatprep.subr.mxu0 0.0
    %7187 = vmatpush1.msra.mxu0 0.0
    %7188 = vmatprep.subr.mxu0 0.0
    %7189 = vmatpush1.msra.mxu0 0.0
    %7190 = vmatprep.subr.mxu0 0.0
    %7191 = vmatpush1.msra.mxu0 0.0
    %7192 = vmatprep.subr.mxu0 0.0
    %7193 = vmatpush1.msra.mxu0 0.0
    %7194 = vmatprep.subr.mxu0 0.0
    %7195 = vmatpush1.msra.mxu0 0.0
    %7196 = vmatprep.subr.mxu0 0.0
    %7197 = vmatpush1.msra.mxu0 0.0
    %7198 = vmatprep.subr.mxu0 0.0
    %7199 = vmatpush1.msra.mxu0 0.0
    %7200 = vmatprep.subr.mxu0 0.0
    %7201 = vmatpush1.msra.mxu0 0.0
    %7202 = vmatprep.subr.mxu0 0.0
    %7203 = vmatpush1.msra.mxu0 0.0
    %7204 = vmatprep.subr.mxu0 0.0
    %7205 = vmatpush1.msra.mxu0 0.0
    %7206 = vmatprep.subr.mxu0 0.0
    %7207 = vmatpush1.msra.mxu0 0.0
    %7208 = vmatprep.subr.mxu0 0.0
    %7209 = vmatpush1.msra.mxu0 0.0
    %7210 = vmatprep.subr.mxu0 0.0
    %7211 = vmatpush1.msra.mxu0 0.0
    %7212 = vmatprep.subr.mxu0 0.0
    %7213 = vmatpush1.msra.mxu0 0.0
    %7214 = vmatprep.subr.mxu0 0.0
    %7215 = vmatpush1.msra.mxu0 0.0
    %7216 = vmatprep.subr.mxu0 0.0
    %7217 = vmatpush1.msra.mxu0 0.0
    %7218 = vmatprep.subr.mxu0 0.0
    %7219 = vmatpush1.msra.mxu0 0.0
    %7220 = vmatprep.mubr.f32.mxu0 0.0
    %7221 = vmatmul.mubr.f32.gmra.mrb[0].mxu0 %v7154
    %v7222 = vpop.f32.mrb[0].mxu0
    %v7223 = vadd.f32 0.0, %v7222
    %v7224 = vpop.f32.mrb[0].mxu0
    %7225 = vdwg.mxu0
    %v7227 = vsel %vm172, %v6064, 0
    %7229 = vmatprep.subr.mxu0 0.0
    %7230 = vmatpush1.msra.mxu0 %v6334
    %7231 = vmatprep.subr.mxu0 0.0
    %7232 = vmatpush1.msra.mxu0 %v6335
    %7233 = vmatprep.subr.mxu0 0.0
    %7234 = vmatpush1.msra.mxu0 %v6336
    %7235 = vmatprep.subr.mxu0 0.0
    %7236 = vmatpush1.msra.mxu0 %v6337
    %7237 = vmatprep.subr.mxu0 0.0
    %7238 = vmatpush1.msra.mxu0 0.0
    %7239 = vmatprep.subr.mxu0 0.0
    %7240 = vmatpush1.msra.mxu0 0.0
    %7241 = vmatprep.subr.mxu0 0.0
    %7242 = vmatpush1.msra.mxu0 0.0
    %7243 = vmatprep.subr.mxu0 0.0
    %7244 = vmatpush1.msra.mxu0 0.0
    %7245 = vmatprep.subr.mxu0 0.0
    %7246 = vmatpush1.msra.mxu0 0.0
    %7247 = vmatprep.subr.mxu0 0.0
    %7248 = vmatpush1.msra.mxu0 0.0
    %7249 = vmatprep.subr.mxu0 0.0
    %7250 = vmatpush1.msra.mxu0 0.0
    %7251 = vmatprep.subr.mxu0 0.0
    %7252 = vmatpush1.msra.mxu0 0.0
    %7253 = vmatprep.subr.mxu0 0.0
    %7254 = vmatpush1.msra.mxu0 0.0
    %7255 = vmatprep.subr.mxu0 0.0
    %7256 = vmatpush1.msra.mxu0 0.0
    %7257 = vmatprep.subr.mxu0 0.0
    %7258 = vmatpush1.msra.mxu0 0.0
    %7259 = vmatprep.subr.mxu0 0.0
    %7260 = vmatpush1.msra.mxu0 0.0
    %7261 = vmatprep.subr.mxu0 0.0
    %7262 = vmatpush1.msra.mxu0 0.0
    %7263 = vmatprep.subr.mxu0 0.0
    %7264 = vmatpush1.msra.mxu0 0.0
    %7265 = vmatprep.subr.mxu0 0.0
    %7266 = vmatpush1.msra.mxu0 0.0
    %7267 = vmatprep.subr.mxu0 0.0
    %7268 = vmatpush1.msra.mxu0 0.0
    %7269 = vmatprep.subr.mxu0 0.0
    %7270 = vmatpush1.msra.mxu0 0.0
    %7271 = vmatprep.subr.mxu0 0.0
    %7272 = vmatpush1.msra.mxu0 0.0
    %7273 = vmatprep.subr.mxu0 0.0
    %7274 = vmatpush1.msra.mxu0 0.0
    %7275 = vmatprep.subr.mxu0 0.0
    %7276 = vmatpush1.msra.mxu0 0.0
    %7277 = vmatprep.subr.mxu0 0.0
    %7278 = vmatpush1.msra.mxu0 0.0
    %7279 = vmatprep.subr.mxu0 0.0
    %7280 = vmatpush1.msra.mxu0 0.0
    %7281 = vmatprep.subr.mxu0 0.0
    %7282 = vmatpush1.msra.mxu0 0.0
    %7283 = vmatprep.subr.mxu0 0.0
    %7284 = vmatpush1.msra.mxu0 0.0
    %7285 = vmatprep.subr.mxu0 0.0
    %7286 = vmatpush1.msra.mxu0 0.0
    %7287 = vmatprep.subr.mxu0 0.0
    %7288 = vmatpush1.msra.mxu0 0.0
    %7289 = vmatprep.subr.mxu0 0.0
    %7290 = vmatpush1.msra.mxu0 0.0
    %7291 = vmatprep.subr.mxu0 0.0
    %7292 = vmatpush1.msra.mxu0 0.0
    %7293 = vmatprep.mubr.f32.mxu0 0.0
    %7294 = vmatmul.mubr.f32.gmra.mrb[0].mxu0 %v7227
    %v7295 = vpop.f32.mrb[0].mxu0
    %v7296 = vadd.f32 0.0, %v7295
    %v7297 = vpop.f32.mrb[0].mxu0
    %7298 = vdwg.mxu0
    %v7300 = vsel %vm172, %v6137, 0
    %7302 = vmatprep.subr.mxu0 0.0
    %7303 = vmatpush1.msra.mxu0 %v6338
    %7304 = vmatprep.subr.mxu0 0.0
    %7305 = vmatpush1.msra.mxu0 %v6339
    %7306 = vmatprep.subr.mxu0 0.0
    %7307 = vmatpush1.msra.mxu0 %v6340
    %7308 = vmatprep.subr.mxu0 0.0
    %7309 = vmatpush1.msra.mxu0 %v6341
    %7310 = vmatprep.subr.mxu0 0.0
    %7311 = vmatpush1.msra.mxu0 0.0
    %7312 = vmatprep.subr.mxu0 0.0
    %7313 = vmatpush1.msra.mxu0 0.0
    %7314 = vmatprep.subr.mxu0 0.0
    %7315 = vmatpush1.msra.mxu0 0.0
    %7316 = vmatprep.subr.mxu0 0.0
    %7317 = vmatpush1.msra.mxu0 0.0
    %7318 = vmatprep.subr.mxu0 0.0
    %7319 = vmatpush1.msra.mxu0 0.0
    %7320 = vmatprep.subr.mxu0 0.0
    %7321 = vmatpush1.msra.mxu0 0.0
    %7322 = vmatprep.subr.mxu0 0.0
    %7323 = vmatpush1.msra.mxu0 0.0
    %7324 = vmatprep.subr.mxu0 0.0
    %7325 = vmatpush1.msra.mxu0 0.0
    %7326 = vmatprep.subr.mxu0 0.0
    %7327 = vmatpush1.msra.mxu0 0.0
    %7328 = vmatprep.subr.mxu0 0.0
    %7329 = vmatpush1.msra.mxu0 0.0
    %7330 = vmatprep.subr.mxu0 0.0
    %7331 = vmatpush1.msra.mxu0 0.0
    %7332 = vmatprep.subr.mxu0 0.0
    %7333 = vmatpush1.msra.mxu0 0.0
    %7334 = vmatprep.subr.mxu0 0.0
    %7335 = vmatpush1.msra.mxu0 0.0
    %7336 = vmatprep.subr.mxu0 0.0
    %7337 = vmatpush1.msra.mxu0 0.0
    %7338 = vmatprep.subr.mxu0 0.0
    %7339 = vmatpush1.msra.mxu0 0.0
    %7340 = vmatprep.subr.mxu0 0.0
    %7341 = vmatpush1.msra.mxu0 0.0
    %7342 = vmatprep.subr.mxu0 0.0
    %7343 = vmatpush1.msra.mxu0 0.0
    %7344 = vmatprep.subr.mxu0 0.0
    %7345 = vmatpush1.msra.mxu0 0.0
    %7346 = vmatprep.subr.mxu0 0.0
    %7347 = vmatpush1.msra.mxu0 0.0
    %7348 = vmatprep.subr.mxu0 0.0
    %7349 = vmatpush1.msra.mxu0 0.0
    %7350 = vmatprep.subr.mxu0 0.0
    %7351 = vmatpush1.msra.mxu0 0.0
    %7352 = vmatprep.subr.mxu0 0.0
    %7353 = vmatpush1.msra.mxu0 0.0
    %7354 = vmatprep.subr.mxu0 0.0
    %7355 = vmatpush1.msra.mxu0 0.0
    %7356 = vmatprep.subr.mxu0 0.0
    %7357 = vmatpush1.msra.mxu0 0.0
    %7358 = vmatprep.subr.mxu0 0.0
    %7359 = vmatpush1.msra.mxu0 0.0
    %7360 = vmatprep.subr.mxu0 0.0
    %7361 = vmatpush1.msra.mxu0 0.0
    %7362 = vmatprep.subr.mxu0 0.0
    %7363 = vmatpush1.msra.mxu0 0.0
    %7364 = vmatprep.subr.mxu0 0.0
    %7365 = vmatpush1.msra.mxu0 0.0
    %7366 = vmatprep.mubr.f32.mxu0 0.0
    %7367 = vmatmul.mubr.f32.gmra.mrb[0].mxu0 %v7300
    %v7368 = vpop.f32.mrb[0].mxu0
    %v7369 = vadd.f32 0.0, %v7368
    %v7370 = vpop.f32.mrb[0].mxu0
    %7371 = vdwg.mxu0
    %v7373 = vsel %vm172, %v6210, 0
    %7375 = vmatprep.subr.mxu0 0.0
    %7376 = vmatpush1.msra.mxu0 %v6342
    %7377 = vmatprep.subr.mxu0 0.0
    %7378 = vmatpush1.msra.mxu0 %v6343
    %7379 = vmatprep.subr.mxu0 0.0
    %7380 = vmatpush1.msra.mxu0 %v6344
    %7381 = vmatprep.subr.mxu0 0.0
    %7382 = vmatpush1.msra.mxu0 %v6345
    %7383 = vmatprep.subr.mxu0 0.0
    %7384 = vmatpush1.msra.mxu0 0.0
    %7385 = vmatprep.subr.mxu0 0.0
    %7386 = vmatpush1.msra.mxu0 0.0
    %7387 = vmatprep.subr.mxu0 0.0
    %7388 = vmatpush1.msra.mxu0 0.0
    %7389 = vmatprep.subr.mxu0 0.0
    %7390 = vmatpush1.msra.mxu0 0.0
    %7391 = vmatprep.subr.mxu0 0.0
    %7392 = vmatpush1.msra.mxu0 0.0
    %7393 = vmatprep.subr.mxu0 0.0
    %7394 = vmatpush1.msra.mxu0 0.0
    %7395 = vmatprep.subr.mxu0 0.0
    %7396 = vmatpush1.msra.mxu0 0.0
    %7397 = vmatprep.subr.mxu0 0.0
    %7398 = vmatpush1.msra.mxu0 0.0
    %7399 = vmatprep.subr.mxu0 0.0
    %7400 = vmatpush1.msra.mxu0 0.0
    %7401 = vmatprep.subr.mxu0 0.0
    %7402 = vmatpush1.msra.mxu0 0.0
    %7403 = vmatprep.subr.mxu0 0.0
    %7404 = vmatpush1.msra.mxu0 0.0
    %7405 = vmatprep.subr.mxu0 0.0
    %7406 = vmatpush1.msra.mxu0 0.0
    %7407 = vmatprep.subr.mxu0 0.0
    %7408 = vmatpush1.msra.mxu0 0.0
    %7409 = vmatprep.subr.mxu0 0.0
    %7410 = vmatpush1.msra.mxu0 0.0
    %7411 = vmatprep.subr.mxu0 0.0
    %7412 = vmatpush1.msra.mxu0 0.0
    %7413 = vmatprep.subr.mxu0 0.0
    %7414 = vmatpush1.msra.mxu0 0.0
    %7415 = vmatprep.subr.mxu0 0.0
    %7416 = vmatpush1.msra.mxu0 0.0
    %7417 = vmatprep.subr.mxu0 0.0
    %7418 = vmatpush1.msra.mxu0 0.0
    %7419 = vmatprep.subr.mxu0 0.0
    %7420 = vmatpush1.msra.mxu0 0.0
    %7421 = vmatprep.subr.mxu0 0.0
    %7422 = vmatpush1.msra.mxu0 0.0
    %7423 = vmatprep.subr.mxu0 0.0
    %7424 = vmatpush1.msra.mxu0 0.0
    %7425 = vmatprep.subr.mxu0 0.0
    %7426 = vmatpush1.msra.mxu0 0.0
    %7427 = vmatprep.subr.mxu0 0.0
    %7428 = vmatpush1.msra.mxu0 0.0
    %7429 = vmatprep.subr.mxu0 0.0
    %7430 = vmatpush1.msra.mxu0 0.0
    %7431 = vmatprep.subr.mxu0 0.0
    %7432 = vmatpush1.msra.mxu0 0.0
    %7433 = vmatprep.subr.mxu0 0.0
    %7434 = vmatpush1.msra.mxu0 0.0
    %7435 = vmatprep.subr.mxu0 0.0
    %7436 = vmatpush1.msra.mxu0 0.0
    %7437 = vmatprep.subr.mxu0 0.0
    %7438 = vmatpush1.msra.mxu0 0.0
    %7439 = vmatprep.mubr.f32.mxu0 0.0
    %7440 = vmatmul.mubr.f32.gmra.mrb[0].mxu0 %v7373
    %v7441 = vpop.f32.mrb[0].mxu0
    %v7442 = vadd.f32 0.0, %v7441
    %v7443 = vpop.f32.mrb[0].mxu0
    %7444 = vdwg.mxu0
    %v7446 = vsel %vm172, %v6283, 0
    %7448 = vmatprep.subr.mxu0 0.0
    %7449 = vmatpush1.msra.mxu0 %v6346
    %7450 = vmatprep.subr.mxu0 0.0
    %7451 = vmatpush1.msra.mxu0 %v6347
    %7452 = vmatprep.subr.mxu0 0.0
    %7453 = vmatpush1.msra.mxu0 %v6348
    %7454 = vmatprep.subr.mxu0 0.0
    %7455 = vmatpush1.msra.mxu0 %v6349
    %7456 = vmatprep.subr.mxu0 0.0
    %7457 = vmatpush1.msra.mxu0 0.0
    %7458 = vmatprep.subr.mxu0 0.0
    %7459 = vmatpush1.msra.mxu0 0.0
    %7460 = vmatprep.subr.mxu0 0.0
    %7461 = vmatpush1.msra.mxu0 0.0
    %7462 = vmatprep.subr.mxu0 0.0
    %7463 = vmatpush1.msra.mxu0 0.0
    %7464 = vmatprep.subr.mxu0 0.0
    %7465 = vmatpush1.msra.mxu0 0.0
    %7466 = vmatprep.subr.mxu0 0.0
    %7467 = vmatpush1.msra.mxu0 0.0
    %7468 = vmatprep.subr.mxu0 0.0
    %7469 = vmatpush1.msra.mxu0 0.0
    %7470 = vmatprep.subr.mxu0 0.0
    %7471 = vmatpush1.msra.mxu0 0.0
    %7472 = vmatprep.subr.mxu0 0.0
    %7473 = vmatpush1.msra.mxu0 0.0
    %7474 = vmatprep.subr.mxu0 0.0
    %7475 = vmatpush1.msra.mxu0 0.0
    %7476 = vmatprep.subr.mxu0 0.0
    %7477 = vmatpush1.msra.mxu0 0.0
    %7478 = vmatprep.subr.mxu0 0.0
    %7479 = vmatpush1.msra.mxu0 0.0
    %7480 = vmatprep.subr.mxu0 0.0
    %7481 = vmatpush1.msra.mxu0 0.0
    %7482 = vmatprep.subr.mxu0 0.0
    %7483 = vmatpush1.msra.mxu0 0.0
    %7484 = vmatprep.subr.mxu0 0.0
    %7485 = vmatpush1.msra.mxu0 0.0
    %7486 = vmatprep.subr.mxu0 0.0
    %7487 = vmatpush1.msra.mxu0 0.0
    %7488 = vmatprep.subr.mxu0 0.0
    %7489 = vmatpush1.msra.mxu0 0.0
    %7490 = vmatprep.subr.mxu0 0.0
    %7491 = vmatpush1.msra.mxu0 0.0
    %7492 = vmatprep.subr.mxu0 0.0
    %7493 = vmatpush1.msra.mxu0 0.0
    %7494 = vmatprep.subr.mxu0 0.0
    %7495 = vmatpush1.msra.mxu0 0.0
    %7496 = vmatprep.subr.mxu0 0.0
    %7497 = vmatpush1.msra.mxu0 0.0
    %7498 = vmatprep.subr.mxu0 0.0
    %7499 = vmatpush1.msra.mxu0 0.0
    %7500 = vmatprep.subr.mxu0 0.0
    %7501 = vmatpush1.msra.mxu0 0.0
    %7502 = vmatprep.subr.mxu0 0.0
    %7503 = vmatpush1.msra.mxu0 0.0
    %7504 = vmatprep.subr.mxu0 0.0
    %7505 = vmatpush1.msra.mxu0 0.0
    %7506 = vmatprep.subr.mxu0 0.0
    %7507 = vmatpush1.msra.mxu0 0.0
    %7508 = vmatprep.subr.mxu0 0.0
    %7509 = vmatpush1.msra.mxu0 0.0
    %7510 = vmatprep.subr.mxu0 0.0
    %7511 = vmatpush1.msra.mxu0 0.0
    %7512 = vmatprep.mubr.f32.mxu0 0.0
    %7513 = vmatmul.mubr.f32.gmra.mrb[0].mxu0 %v7446
    %v7514 = vpop.f32.mrb[0].mxu0
    %v7515 = vadd.f32 0.0, %v7514
    %v7516 = vpop.f32.mrb[0].mxu0
    %7517 = vdwg.mxu0
    %v7518 = vld [vmem:[%s5] sm:$0x1]
    %v7519 = vsel %vm172, %v6420, 0.0
    %v7520 = vsel %vm172, %v6493, 0.0
    %v7521 = vadd.f32 %v7519, %v7520
    %v7522 = vsel %vm172, %v6566, 0.0
    %v7523 = vadd.f32 %v7521, %v7522
    %v7524 = vsel %vm172, %v6639, 0.0
    %v7525 = vadd.f32 %v7523, %v7524
    %v7526 = vsel %vm172, %v6712, 0.0
    %v7527 = vadd.f32 %v7525, %v7526
    %v7528 = vsel %vm172, %v6785, 0.0
    %v7529 = vadd.f32 %v7527, %v7528
    %v7530 = vsel %vm172, %v6858, 0.0
    %v7531 = vadd.f32 %v7529, %v7530
    %v7532 = vsel %vm172, %v6931, 0.0
    %v7533 = vadd.f32 %v7531, %v7532
    %v7535 = vlaneseq
    %v7536 = vshrl.u32 %v7535, 7
    %v7537 = vsub.s32 0, %v7536
    %v7538 = vrot.slane %v7518, %v7537
    %v7540 = vadd.f32 %v7533, %v7538
    %7541 = vst.msk [vmem:[#allocation11] sm:$0xff] %vm172, %v7540
    %v7542 = vsel %vm172, %v7004, 0.0
    %v7543 = vsel %vm172, %v7077, 0.0
    %v7544 = vadd.f32 %v7542, %v7543
    %v7545 = vsel %vm172, %v7150, 0.0
    %v7546 = vadd.f32 %v7544, %v7545
    %v7547 = vsel %vm172, %v7223, 0.0
    %v7548 = vadd.f32 %v7546, %v7547
    %v7549 = vsel %vm172, %v7296, 0.0
    %v7550 = vadd.f32 %v7548, %v7549
    %v7551 = vsel %vm172, %v7369, 0.0
    %v7552 = vadd.f32 %v7550, %v7551
    %v7553 = vsel %vm172, %v7442, 0.0
    %v7554 = vadd.f32 %v7552, %v7553
    %v7555 = vsel %vm172, %v7515, 0.0
    %v7556 = vadd.f32 %v7554, %v7555
    %v7557 = vadd.f32 %v7556, %v7538
    %7558 = vst.msk [vmem:[#allocation11 + $0x8] sm:$0xff] %vm172, %v7557
    // Predicated region
    $region46: #{tpu_custom_call.1} parent=1 // pred_check
      _
    $region47: #{tpu_custom_call.1} parent=1 // pred_check_branch
      %7560 = sbr.rel (0) target = $region49
    $region48: #{tpu_custom_call.1} parent=1 // pred_region
      %s7562 = ssub.s32 256, 256
      %7563 = vsyncadd [#allocation4], %s7562
      %s7564 = sshll.u32 [#allocation11], 4
      %s7565 = int_to_ptr.vmem [resolvable:$true] %s7564
      %7570 = dma.vmem_to_hbm [thread:$0]  %s7565, 256, %s6, [#allocation4], 128, 128, 8
    $region49: #{tpu_custom_call.1} parent=1 // pred_fallthru
      _
    // Predicated region
    $region50: #{tpu_custom_call.1} parent=1 // pred_check
      _
    $region51: #{tpu_custom_call.1} parent=1 // pred_check_branch
      %7572 = sbr.rel (0) target = $region53
    $region52: #{tpu_custom_call.1} parent=1 // pred_region
      %7573 = dma.done [#allocation4], 256
    $region53: #{tpu_custom_call.1} parent=1 // pred_fallthru
      _
    %7574 = vsyncpa [#allocation3], 1
    %7575 = vsyncpa [#allocation6], 1
    %7576 = vsyncpa [#allocation9], 1
    %7577 = vsyncpa [#allocation4], 1

</llo_original>
